<compile_context>
chip_gen: v6e
topology: v6e:2x2x1
jax: 0.10.0
libtpu: 0.0.40
codegen_flags: <defaults>
</compile_context>

<pallas_src>
import functools

import jax
import jax.numpy as jnp
from jax import lax
from jax.experimental import pallas as pl
from jax.experimental.pallas import tpu as pltpu

PADL = 8  # left zero-pad of the W (sublane) axis -> interior stores are tile-aligned


# ----------------------------------------------------------------------------
# The fused kernel.
# ----------------------------------------------------------------------------
def _net_kernel(xp_ref, w1_ref, b1_ref, w2_ref, b2_ref, w3_ref, b3_ref,
                wh_ref, bh_ref, wfa_ref, ba_ref, wfv_ref, bv1_ref,
                wv2_ref, bv2_ref,
                pol_ref, val_ref,
                p1_ref, p2_ref,
                *, bt, h, w):
    hw = h * w
    m = bt * hw

    def conv3x3_relu(src_ref, w9_ref, b_ref):
        """3x3 / pad=1 conv as 9 shifted matmuls over a padded NHWC VMEM tile."""
        cin = src_ref.shape[-1]
        cout = w9_ref.shape[-1]
        acc = jnp.zeros((m, cout), jnp.float32)
        for kh in range(3):
            for kw in range(3):
                c0 = PADL - 1 + kw
                patch = src_ref[:, kh:kh + h, c0:c0 + w, :]      # (bt, h, w, cin)
                patch = patch.reshape(m, cin).astype(jnp.bfloat16)
                acc = acc + jnp.dot(patch, w9_ref[kh * 3 + kw],
                                    preferred_element_type=jnp.float32)
        return jnp.maximum(acc + b_ref[...], 0.0)                 # (m, cout) f32

    def store_padded(dst_ref, val):
        """Write conv output into the zero-padded NHWC scratch (aligned store)."""
        cout = dst_ref.shape[-1]
        dst_ref[...] = jnp.zeros(dst_ref.shape, dst_ref.dtype)
        dst_ref[:, 1:h + 1, PADL:PADL + w, :] = val.reshape(bt, h, w, cout)

    # ---- trunk: conv1 -> conv2 -> conv3 (activations never leave VMEM) ----
    a1 = conv3x3_relu(xp_ref, w1_ref, b1_ref)     # (m, 32)
    store_padded(p1_ref, a1)
    a2 = conv3x3_relu(p1_ref, w2_ref, b2_ref)     # (m, 64)
    store_padded(p2_ref, a2)
    t = conv3x3_relu(p2_ref, w3_ref, b3_ref)      # (m, 128) f32
    t3 = t.reshape(bt, hw, 128)                   # channels stay on the lane axis

    # ---- fused 1x1 head convs: channels 0..3 = policy, 4..5 = value ----
    # VPU multiply + lane-reduce puts each head channel directly into the
    # (bt, hw) layout the FC layers need (no reshapes / transposes).
    s = []
    for c in range(6):
        red = jnp.sum(t3 * wh_ref[c], axis=-1) + bh_ref[c]        # (bt, hw)
        s.append(jnp.maximum(red, 0.0))

    # ---- policy head: act_fc1 + log_softmax (f32 epilogue) ----
    pol = jnp.zeros((bt, hw), jnp.float32)
    for c in range(4):
        pol = pol + jnp.dot(s[c].astype(jnp.bfloat16), wfa_ref[c],
                            preferred_element_type=jnp.float32)
    pol = pol + ba_ref[...]
    mx = jnp.max(pol, axis=-1, keepdims=True)
    z = pol - mx
    lse = jnp.log(jnp.sum(jnp.exp(z), axis=-1, keepdims=True))
    pol_ref[...] = (z - lse).astype(pol_ref.dtype)

    # ---- value head: val_fc1 + relu, val_fc2 + tanh (f32 epilogue) ----
    v = jnp.zeros((bt, 64), jnp.float32)
    for c in range(2):
        v = v + jnp.dot(s[4 + c].astype(jnp.bfloat16), wfv_ref[c],
                        preferred_element_type=jnp.float32)
    v = jnp.maximum(v + bv1_ref[...], 0.0)                        # (bt, 64)
    val = jnp.sum(v * wv2_ref[...], axis=-1, keepdims=True) + bv2_ref[...]
    val_ref[...] = jnp.tanh(val).astype(val_ref.dtype)


# ----------------------------------------------------------------------------
# Wrapper: only layout glue left in XLA is NCHW->NHWC + zero-padding of the
# tiny network input; everything else is inside the single pallas_call.
# ----------------------------------------------------------------------------
def net_forward(prep, x_nchw, *, width, height, batch_tile=None):
    B = x_nchw.shape[0]
    H, W = height, width
    assert W % 8 == 0, "kernel keeps W on the sublane axis; needs W % 8 == 0"
    bt = B if batch_tile is None else batch_tile
    assert B % bt == 0 and (bt == B or bt % 8 == 0)
    hw = H * W
    wp = W + PADL + 1

    x = jnp.transpose(x_nchw, (0, 2, 3, 1)).astype(jnp.float32)   # NCHW -> NHWC
    xp = jnp.pad(x, ((0, 0), (1, 1), (PADL, 1), (0, 0)))          # padded input

    def const_spec(a):
        zeros = (0,) * a.ndim
        return pl.BlockSpec(a.shape, lambda i: zeros)

    in_specs = (
        pl.BlockSpec((bt, H + 2, wp, 4), lambda i: (i, 0, 0, 0)),
        const_spec(prep["w1"]), const_spec(prep["b1"]),
        const_spec(prep["w2"]), const_spec(prep["b2"]),
        const_spec(prep["w3"]), const_spec(prep["b3"]),
        const_spec(prep["wh"]), const_spec(prep["bh"]),
        const_spec(prep["wfa"]), const_spec(prep["ba"]),
        const_spec(prep["wfv"]), const_spec(prep["bv1"]),
        const_spec(prep["wv2"]), const_spec(prep["bv2"]),
    )
    out_specs = (
        pl.BlockSpec((bt, hw), lambda i: (i, 0)),
        pl.BlockSpec((bt, 1), lambda i: (i, 0)),
    )

    kernel = functools.partial(_net_kernel, bt=bt, h=H, w=W)
    pol, val = pl.pallas_call(
        kernel,
        out_shape=(jax.ShapeDtypeStruct((B, hw), jnp.float32),
                   jax.ShapeDtypeStruct((B, 1), jnp.float32)),
        grid_spec=pltpu.PrefetchScalarGridSpec(
            num_scalar_prefetch=0,
            grid=(B // bt,),
            in_specs=in_specs,
            out_specs=out_specs,
            scratch_shapes=[
                pltpu.VMEM((bt, H + 2, wp, 32), jnp.float32),   # padded conv1 out
                pltpu.VMEM((bt, H + 2, wp, 64), jnp.float32),   # padded conv2 out
            ]),
        compiler_params=pltpu.CompilerParams(
            dimension_semantics=("parallel",)),
    )(xp, prep["w1"], prep["b1"], prep["w2"], prep["b2"],
      prep["w3"], prep["b3"], prep["wh"], prep["bh"],
      prep["wfa"], prep["ba"], prep["wfv"], prep["bv1"],
      prep["wv2"], prep["bv2"])
    return pol, val


# ----------------------------------------------------------------------------
# Synthetic parameters in PyTorch layout + one-time kernel-layout preparation.
# ----------------------------------------------------------------------------
def init_params(key, width, height):
    ks = jax.random.split(key, 16)
    hw = width * height

    def conv_w(k, cout, cin, ksz):
        fan_in = cin * ksz * ksz
        return jax.random.normal(k, (cout, cin, ksz, ksz), jnp.float32) / jnp.sqrt(fan_in)

    def lin_w(k, out_f, in_f):          # PyTorch nn.Linear layout: (out, in)
        return jax.random.normal(k, (out_f, in_f), jnp.float32) / jnp.sqrt(in_f)

    def bias(k, n):
        return 0.01 * jax.random.normal(k, (n,), jnp.float32)

    return {
        "conv1_w": conv_w(ks[0], 32, 4, 3),       "conv1_b": bias(ks[1], 32),
        "conv2_w": conv_w(ks[2], 64, 32, 3),      "conv2_b": bias(ks[3], 64),
        "conv3_w": conv_w(ks[4], 128, 64, 3),     "conv3_b": bias(ks[5], 128),
        "act_conv1_w": conv_w(ks[6], 4, 128, 1),  "act_conv1_b": bias(ks[7], 4),
        "act_fc1_w": lin_w(ks[8], hw, 4 * hw),    "act_fc1_b": bias(ks[9], hw),
        "val_conv1_w": conv_w(ks[10], 2, 128, 1), "val_conv1_b": bias(ks[11], 2),
        "val_fc1_w": lin_w(ks[12], 64, 2 * hw),   "val_fc1_b": bias(ks[13], 64),
        "val_fc2_w": lin_w(ks[14], 1, 64),        "val_fc2_b": bias(ks[15], 1),
    }


def prepare_params(p, width, height):
    """One-time weight prep (outside the hot path): 3x3 taps as (9,Cin,Cout)
    bf16, both 1x1 heads fused into one 6-channel block, FC weights with the
    PyTorch NCHW-flatten permutation folded into a (channel, hw, out) layout."""
    hw = width * height

    def conv9(wt):                                  # (Cout,Cin,3,3) -> (9,Cin,Cout)
        cout, cin = wt.shape[0], wt.shape[1]
        return jnp.transpose(wt, (2, 3, 1, 0)).reshape(9, cin, cout).astype(jnp.bfloat16)

    wh = jnp.concatenate([p["act_conv1_w"][:, :, 0, 0],
                          p["val_conv1_w"][:, :, 0, 0]], axis=0)         # (6, 128)
    bh = jnp.concatenate([p["act_conv1_b"], p["val_conv1_b"]], axis=0)   # (6,)

    wfa = jnp.transpose(p["act_fc1_w"].reshape(hw, 4, hw), (1, 2, 0))    # (4,hw,hw)
    wfv = jnp.transpose(p["val_fc1_w"].reshape(64, 2, hw), (1, 2, 0))    # (2,hw,64)

    return {
        "w1": conv9(p["conv1_w"]), "b1": p["conv1_b"].reshape(1, 32),
        "w2": conv9(p["conv2_w"]), "b2": p["conv2_b"].reshape(1, 64),
        "w3": conv9(p["conv3_w"]), "b3": p["conv3_b"].reshape(1, 128),
        "wh": wh.reshape(6, 1, 128).astype(jnp.float32),
        "bh": jnp.tile(bh[:, None, None], (1, 1, hw)).astype(jnp.float32),
        "wfa": wfa.astype(jnp.bfloat16), "ba": p["act_fc1_b"].reshape(1, hw),
        "wfv": wfv.astype(jnp.bfloat16), "bv1": p["val_fc1_b"].reshape(1, 64),
        "wv2": p["val_fc2_w"].reshape(1, 64).astype(jnp.float32),
        "bv2": p["val_fc2_b"].reshape(1, 1).astype(jnp.float32),
    }


# ----------------------------------------------------------------------------
# Pure-JAX f32 reference (mirrors the PyTorch module exactly).
# ----------------------------------------------------------------------------
def net_reference(p, x_nchw):
    dn = ("NCHW", "OIHW", "NCHW")

    def conv(x, wt, b, pad):
        y = lax.conv_general_dilated(x, wt, (1, 1), [(pad, pad), (pad, pad)],
                                     dimension_numbers=dn)
        return y + b[None, :, None, None]

    x = jax.nn.relu(conv(x_nchw, p["conv1_w"], p["conv1_b"], 1))
    x = jax.nn.relu(conv(x, p["conv2_w"], p["conv2_b"], 1))
    x = jax.nn.relu(conv(x, p["conv3_w"], p["conv3_b"], 1))
    xa = jax.nn.relu(conv(x, p["act_conv1_w"], p["act_conv1_b"], 0))
    xa = xa.reshape(xa.shape[0], -1)
    xa = jax.nn.log_softmax(xa @ p["act_fc1_w"].T + p["act_fc1_b"], axis=-1)
    xv = jax.nn.relu(conv(x, p["val_conv1_w"], p["val_conv1_b"], 0))
    xv = xv.reshape(xv.shape[0], -1)
    xv = jax.nn.relu(xv @ p["val_fc1_w"].T + p["val_fc1_b"])
    xv = jnp.tanh(xv @ p["val_fc2_w"].T + p["val_fc2_b"])
    return xa, xv


if __name__ == "__main__":
    width = height = 8          # small spatial size (W must be a multiple of 8)
    batch = 2

    key = jax.random.PRNGKey(0)
    pkey, xkey = jax.random.split(key)
    params = init_params(pkey, width, height)
    prep = prepare_params(params, width, height)
    x = jax.random.normal(xkey, (batch, 4, height, width), jnp.float32)

    fwd = jax.jit(functools.partial(net_forward, width=width, height=height))
    log_probs, value = fwd(prep, x)
    jax.block_until_ready((log_probs, value))

    assert log_probs.shape == (batch, width * height)
    assert value.shape == (batch, 1)
    # structural checks: rows of exp(log_probs) sum to 1, value in [-1, 1]
    assert bool(jnp.all(jnp.abs(jnp.sum(jnp.exp(log_probs), axis=-1) - 1.0) < 1e-4))
    assert bool(jnp.all(jnp.abs(value) <= 1.0))

    # numerical check against a pure-JAX f32 reference (kernel uses bf16 MXU
    # operands, so tolerances are loose but far above the expected ~1e-2 error)
    ref_lp, ref_v = jax.jit(net_reference)(params, x)
    assert bool(jnp.max(jnp.abs(log_probs - ref_lp)) < 0.1)
    assert bool(jnp.max(jnp.abs(value - ref_v)) < 0.05)

    print("KERNEL_OK")
</pallas_src>

<mosaic_0001>
module attributes {stable_mosaic.version = 11 : i64} {
  func.func @_net_kernel(%arg0: i32, %arg1: memref<2x10x17x4xf32, #tpu.memory_space<vmem>>, %arg2: memref<9x4x32xbf16, #tpu.memory_space<vmem>>, %arg3: memref<1x32xf32, #tpu.memory_space<vmem>>, %arg4: memref<9x32x64xbf16, #tpu.memory_space<vmem>>, %arg5: memref<1x64xf32, #tpu.memory_space<vmem>>, %arg6: memref<9x64x128xbf16, #tpu.memory_space<vmem>>, %arg7: memref<1x128xf32, #tpu.memory_space<vmem>>, %arg8: memref<6x1x128xf32, #tpu.memory_space<vmem>>, %arg9: memref<6x1x64xf32, #tpu.memory_space<vmem>>, %arg10: memref<4x64x64xbf16, #tpu.memory_space<vmem>>, %arg11: memref<1x64xf32, #tpu.memory_space<vmem>>, %arg12: memref<2x64x64xbf16, #tpu.memory_space<vmem>>, %arg13: memref<1x64xf32, #tpu.memory_space<vmem>>, %arg14: memref<1x64xf32, #tpu.memory_space<vmem>>, %arg15: memref<1x1xf32, #tpu.memory_space<vmem>>, %arg16: memref<2x64xf32, #tpu.memory_space<vmem>>, %arg17: memref<2x1xf32, #tpu.memory_space<vmem>>, %arg18: memref<2x10x17x32xf32, #tpu.memory_space<vmem>>, %arg19: memref<2x10x17x64xf32, #tpu.memory_space<vmem>>) attributes {dimension_semantics = [#tpu.dimension_semantics<parallel>], iteration_bounds = array<i64: 1>, scalar_prefetch = 0 : i64, scratch_operands = 2 : i64, tpu.core_type = #tpu.core_type<tc>, window_params = [{transform_indices = @transform_0, window_bounds = array<i64: 2, 10, 17, 4>}, {pipeline_mode = #tpu.pipeline_mode<synchronous>, transform_indices = @transform_1, window_bounds = array<i64: 9, 4, 32>}, {pipeline_mode = #tpu.pipeline_mode<synchronous>, transform_indices = @transform_2, window_bounds = array<i64: 1, 32>}, {pipeline_mode = #tpu.pipeline_mode<synchronous>, transform_indices = @transform_3, window_bounds = array<i64: 9, 32, 64>}, {pipeline_mode = #tpu.pipeline_mode<synchronous>, transform_indices = @transform_4, window_bounds = array<i64: 1, 64>}, {pipeline_mode = #tpu.pipeline_mode<synchronous>, transform_indices = @transform_5, window_bounds = array<i64: 9, 64, 128>}, {pipeline_mode = #tpu.pipeline_mode<synchronous>, transform_indices = @transform_6, window_bounds = array<i64: 1, 128>}, {pipeline_mode = #tpu.pipeline_mode<synchronous>, transform_indices = @transform_7, window_bounds = array<i64: 6, 1, 128>}, {pipeline_mode = #tpu.pipeline_mode<synchronous>, transform_indices = @transform_8, window_bounds = array<i64: 6, 1, 64>}, {pipeline_mode = #tpu.pipeline_mode<synchronous>, transform_indices = @transform_9, window_bounds = array<i64: 4, 64, 64>}, {pipeline_mode = #tpu.pipeline_mode<synchronous>, transform_indices = @transform_10, window_bounds = array<i64: 1, 64>}, {pipeline_mode = #tpu.pipeline_mode<synchronous>, transform_indices = @transform_11, window_bounds = array<i64: 2, 64, 64>}, {pipeline_mode = #tpu.pipeline_mode<synchronous>, transform_indices = @transform_12, window_bounds = array<i64: 1, 64>}, {pipeline_mode = #tpu.pipeline_mode<synchronous>, transform_indices = @transform_13, window_bounds = array<i64: 1, 64>}, {pipeline_mode = #tpu.pipeline_mode<synchronous>, transform_indices = @transform_14, window_bounds = array<i64: 1, 1>}, {transform_indices = @transform_15, window_bounds = array<i64: 2, 64>}, {transform_indices = @transform_16, window_bounds = array<i64: 2, 1>}]} {
    %cst = arith.constant 0.000000e+00 : f32
    %0 = vector.broadcast %cst : f32 to vector<128x32xf32>
    %c0 = arith.constant 0 : index
    %c0_0 = arith.constant 0 : index
    %c7 = arith.constant 7 : index
    %c0_1 = arith.constant 0 : index
    %1 = vector.load %arg1[%c0, %c0_0, %c7, %c0_1] : memref<2x10x17x4xf32, #tpu.memory_space<vmem>>, vector<2x8x8x4xf32>
    %2 = vector.shape_cast %1 : vector<2x8x8x4xf32> to vector<128x4xf32>
    %3 = arith.truncf %2 : vector<128x4xf32> to vector<128x4xbf16>
    %c0_2 = arith.constant 0 : index
    %c0_3 = arith.constant 0 : index
    %c0_4 = arith.constant 0 : index
    %4 = vector.load %arg2[%c0_2, %c0_3, %c0_4] : memref<9x4x32xbf16, #tpu.memory_space<vmem>>, vector<1x4x32xbf16>
    %5 = vector.shape_cast %4 : vector<1x4x32xbf16> to vector<4x32xbf16>
    %cst_5 = arith.constant dense<0.000000e+00> : vector<128x32xf32>
    %6 = tpu.matmul %3, %5, %cst_5 {dimension_numbers = #tpu.dot_dimension_numbers<[1], [0], [0], [1], [0, 0, 1, 1], [], []>} : vector<128x4xbf16>, vector<4x32xbf16>, vector<128x32xf32> -> vector<128x32xf32>
    %7 = arith.addf %0, %6 : vector<128x32xf32>
    %c0_6 = arith.constant 0 : index
    %c0_7 = arith.constant 0 : index
    %c8 = arith.constant 8 : index
    %c0_8 = arith.constant 0 : index
    %8 = vector.load %arg1[%c0_6, %c0_7, %c8, %c0_8] : memref<2x10x17x4xf32, #tpu.memory_space<vmem>>, vector<2x8x8x4xf32>
    %9 = vector.shape_cast %8 : vector<2x8x8x4xf32> to vector<128x4xf32>
    %10 = arith.truncf %9 : vector<128x4xf32> to vector<128x4xbf16>
    %c1 = arith.constant 1 : index
    %c0_9 = arith.constant 0 : index
    %c0_10 = arith.constant 0 : index
    %11 = vector.load %arg2[%c1, %c0_9, %c0_10] : memref<9x4x32xbf16, #tpu.memory_space<vmem>>, vector<1x4x32xbf16>
    %12 = vector.shape_cast %11 : vector<1x4x32xbf16> to vector<4x32xbf16>
    %cst_11 = arith.constant dense<0.000000e+00> : vector<128x32xf32>
    %13 = tpu.matmul %10, %12, %cst_11 {dimension_numbers = #tpu.dot_dimension_numbers<[1], [0], [0], [1], [0, 0, 1, 1], [], []>} : vector<128x4xbf16>, vector<4x32xbf16>, vector<128x32xf32> -> vector<128x32xf32>
    %14 = arith.addf %7, %13 : vector<128x32xf32>
    %c0_12 = arith.constant 0 : index
    %c0_13 = arith.constant 0 : index
    %c9 = arith.constant 9 : index
    %c0_14 = arith.constant 0 : index
    %15 = vector.load %arg1[%c0_12, %c0_13, %c9, %c0_14] : memref<2x10x17x4xf32, #tpu.memory_space<vmem>>, vector<2x8x8x4xf32>
    %16 = vector.shape_cast %15 : vector<2x8x8x4xf32> to vector<128x4xf32>
    %17 = arith.truncf %16 : vector<128x4xf32> to vector<128x4xbf16>
    %c2 = arith.constant 2 : index
    %c0_15 = arith.constant 0 : index
    %c0_16 = arith.constant 0 : index
    %18 = vector.load %arg2[%c2, %c0_15, %c0_16] : memref<9x4x32xbf16, #tpu.memory_space<vmem>>, vector<1x4x32xbf16>
    %19 = vector.shape_cast %18 : vector<1x4x32xbf16> to vector<4x32xbf16>
    %cst_17 = arith.constant dense<0.000000e+00> : vector<128x32xf32>
    %20 = tpu.matmul %17, %19, %cst_17 {dimension_numbers = #tpu.dot_dimension_numbers<[1], [0], [0], [1], [0, 0, 1, 1], [], []>} : vector<128x4xbf16>, vector<4x32xbf16>, vector<128x32xf32> -> vector<128x32xf32>
    %21 = arith.addf %14, %20 : vector<128x32xf32>
    %c0_18 = arith.constant 0 : index
    %c1_19 = arith.constant 1 : index
    %c7_20 = arith.constant 7 : index
    %c0_21 = arith.constant 0 : index
    %22 = vector.load %arg1[%c0_18, %c1_19, %c7_20, %c0_21] : memref<2x10x17x4xf32, #tpu.memory_space<vmem>>, vector<2x8x8x4xf32>
    %23 = vector.shape_cast %22 : vector<2x8x8x4xf32> to vector<128x4xf32>
    %24 = arith.truncf %23 : vector<128x4xf32> to vector<128x4xbf16>
    %c3 = arith.constant 3 : index
    %c0_22 = arith.constant 0 : index
    %c0_23 = arith.constant 0 : index
    %25 = vector.load %arg2[%c3, %c0_22, %c0_23] : memref<9x4x32xbf16, #tpu.memory_space<vmem>>, vector<1x4x32xbf16>
    %26 = vector.shape_cast %25 : vector<1x4x32xbf16> to vector<4x32xbf16>
    %cst_24 = arith.constant dense<0.000000e+00> : vector<128x32xf32>
    %27 = tpu.matmul %24, %26, %cst_24 {dimension_numbers = #tpu.dot_dimension_numbers<[1], [0], [0], [1], [0, 0, 1, 1], [], []>} : vector<128x4xbf16>, vector<4x32xbf16>, vector<128x32xf32> -> vector<128x32xf32>
    %28 = arith.addf %21, %27 : vector<128x32xf32>
    %c0_25 = arith.constant 0 : index
    %c1_26 = arith.constant 1 : index
    %c8_27 = arith.constant 8 : index
    %c0_28 = arith.constant 0 : index
    %29 = vector.load %arg1[%c0_25, %c1_26, %c8_27, %c0_28] : memref<2x10x17x4xf32, #tpu.memory_space<vmem>>, vector<2x8x8x4xf32>
    %30 = vector.shape_cast %29 : vector<2x8x8x4xf32> to vector<128x4xf32>
    %31 = arith.truncf %30 : vector<128x4xf32> to vector<128x4xbf16>
    %c4 = arith.constant 4 : index
    %c0_29 = arith.constant 0 : index
    %c0_30 = arith.constant 0 : index
    %32 = vector.load %arg2[%c4, %c0_29, %c0_30] : memref<9x4x32xbf16, #tpu.memory_space<vmem>>, vector<1x4x32xbf16>
    %33 = vector.shape_cast %32 : vector<1x4x32xbf16> to vector<4x32xbf16>
    %cst_31 = arith.constant dense<0.000000e+00> : vector<128x32xf32>
    %34 = tpu.matmul %31, %33, %cst_31 {dimension_numbers = #tpu.dot_dimension_numbers<[1], [0], [0], [1], [0, 0, 1, 1], [], []>} : vector<128x4xbf16>, vector<4x32xbf16>, vector<128x32xf32> -> vector<128x32xf32>
    %35 = arith.addf %28, %34 : vector<128x32xf32>
    %c0_32 = arith.constant 0 : index
    %c1_33 = arith.constant 1 : index
    %c9_34 = arith.constant 9 : index
    %c0_35 = arith.constant 0 : index
    %36 = vector.load %arg1[%c0_32, %c1_33, %c9_34, %c0_35] : memref<2x10x17x4xf32, #tpu.memory_space<vmem>>, vector<2x8x8x4xf32>
    %37 = vector.shape_cast %36 : vector<2x8x8x4xf32> to vector<128x4xf32>
    %38 = arith.truncf %37 : vector<128x4xf32> to vector<128x4xbf16>
    %c5 = arith.constant 5 : index
    %c0_36 = arith.constant 0 : index
    %c0_37 = arith.constant 0 : index
    %39 = vector.load %arg2[%c5, %c0_36, %c0_37] : memref<9x4x32xbf16, #tpu.memory_space<vmem>>, vector<1x4x32xbf16>
    %40 = vector.shape_cast %39 : vector<1x4x32xbf16> to vector<4x32xbf16>
    %cst_38 = arith.constant dense<0.000000e+00> : vector<128x32xf32>
    %41 = tpu.matmul %38, %40, %cst_38 {dimension_numbers = #tpu.dot_dimension_numbers<[1], [0], [0], [1], [0, 0, 1, 1], [], []>} : vector<128x4xbf16>, vector<4x32xbf16>, vector<128x32xf32> -> vector<128x32xf32>
    %42 = arith.addf %35, %41 : vector<128x32xf32>
    %c0_39 = arith.constant 0 : index
    %c2_40 = arith.constant 2 : index
    %c7_41 = arith.constant 7 : index
    %c0_42 = arith.constant 0 : index
    %43 = vector.load %arg1[%c0_39, %c2_40, %c7_41, %c0_42] : memref<2x10x17x4xf32, #tpu.memory_space<vmem>>, vector<2x8x8x4xf32>
    %44 = vector.shape_cast %43 : vector<2x8x8x4xf32> to vector<128x4xf32>
    %45 = arith.truncf %44 : vector<128x4xf32> to vector<128x4xbf16>
    %c6 = arith.constant 6 : index
    %c0_43 = arith.constant 0 : index
    %c0_44 = arith.constant 0 : index
    %46 = vector.load %arg2[%c6, %c0_43, %c0_44] : memref<9x4x32xbf16, #tpu.memory_space<vmem>>, vector<1x4x32xbf16>
    %47 = vector.shape_cast %46 : vector<1x4x32xbf16> to vector<4x32xbf16>
    %cst_45 = arith.constant dense<0.000000e+00> : vector<128x32xf32>
    %48 = tpu.matmul %45, %47, %cst_45 {dimension_numbers = #tpu.dot_dimension_numbers<[1], [0], [0], [1], [0, 0, 1, 1], [], []>} : vector<128x4xbf16>, vector<4x32xbf16>, vector<128x32xf32> -> vector<128x32xf32>
    %49 = arith.addf %42, %48 : vector<128x32xf32>
    %c0_46 = arith.constant 0 : index
    %c2_47 = arith.constant 2 : index
    %c8_48 = arith.constant 8 : index
    %c0_49 = arith.constant 0 : index
    %50 = vector.load %arg1[%c0_46, %c2_47, %c8_48, %c0_49] : memref<2x10x17x4xf32, #tpu.memory_space<vmem>>, vector<2x8x8x4xf32>
    %51 = vector.shape_cast %50 : vector<2x8x8x4xf32> to vector<128x4xf32>
    %52 = arith.truncf %51 : vector<128x4xf32> to vector<128x4xbf16>
    %c7_50 = arith.constant 7 : index
    %c0_51 = arith.constant 0 : index
    %c0_52 = arith.constant 0 : index
    %53 = vector.load %arg2[%c7_50, %c0_51, %c0_52] : memref<9x4x32xbf16, #tpu.memory_space<vmem>>, vector<1x4x32xbf16>
    %54 = vector.shape_cast %53 : vector<1x4x32xbf16> to vector<4x32xbf16>
    %cst_53 = arith.constant dense<0.000000e+00> : vector<128x32xf32>
    %55 = tpu.matmul %52, %54, %cst_53 {dimension_numbers = #tpu.dot_dimension_numbers<[1], [0], [0], [1], [0, 0, 1, 1], [], []>} : vector<128x4xbf16>, vector<4x32xbf16>, vector<128x32xf32> -> vector<128x32xf32>
    %56 = arith.addf %49, %55 : vector<128x32xf32>
    %c0_54 = arith.constant 0 : index
    %c2_55 = arith.constant 2 : index
    %c9_56 = arith.constant 9 : index
    %c0_57 = arith.constant 0 : index
    %57 = vector.load %arg1[%c0_54, %c2_55, %c9_56, %c0_57] : memref<2x10x17x4xf32, #tpu.memory_space<vmem>>, vector<2x8x8x4xf32>
    %58 = vector.shape_cast %57 : vector<2x8x8x4xf32> to vector<128x4xf32>
    %59 = arith.truncf %58 : vector<128x4xf32> to vector<128x4xbf16>
    %c8_58 = arith.constant 8 : index
    %c0_59 = arith.constant 0 : index
    %c0_60 = arith.constant 0 : index
    %60 = vector.load %arg2[%c8_58, %c0_59, %c0_60] : memref<9x4x32xbf16, #tpu.memory_space<vmem>>, vector<1x4x32xbf16>
    %61 = vector.shape_cast %60 : vector<1x4x32xbf16> to vector<4x32xbf16>
    %cst_61 = arith.constant dense<0.000000e+00> : vector<128x32xf32>
    %62 = tpu.matmul %59, %61, %cst_61 {dimension_numbers = #tpu.dot_dimension_numbers<[1], [0], [0], [1], [0, 0, 1, 1], [], []>} : vector<128x4xbf16>, vector<4x32xbf16>, vector<128x32xf32> -> vector<128x32xf32>
    %63 = arith.addf %56, %62 : vector<128x32xf32>
    %c0_62 = arith.constant 0 : index
    %c0_63 = arith.constant 0 : index
    %64 = vector.load %arg3[%c0_62, %c0_63] : memref<1x32xf32, #tpu.memory_space<vmem>>, vector<1x32xf32>
    %65 = vector.broadcast %64 : vector<1x32xf32> to vector<128x32xf32>
    %66 = arith.addf %63, %65 : vector<128x32xf32>
    %cst_64 = arith.constant 0.000000e+00 : f32
    %67 = vector.broadcast %cst_64 : f32 to vector<128x32xf32>
    %68 = arith.maximumf %66, %67 : vector<128x32xf32>
    %cst_65 = arith.constant 0.000000e+00 : f32
    %69 = vector.broadcast %cst_65 : f32 to vector<2x10x17x32xf32>
    %c0_66 = arith.constant 0 : index
    %c0_67 = arith.constant 0 : index
    %c0_68 = arith.constant 0 : index
    %c0_69 = arith.constant 0 : index
    %70 = vector.load %arg18[%c0_66, %c0_67, %c0_68, %c0_69] : memref<2x10x17x32xf32, #tpu.memory_space<vmem>>, vector<2x10x17x32xf32>
    tpu.vector_store %arg18[%c0_66, %c0_67, %c0_68, %c0_69], %69 {strides = array<i32>} : memref<2x10x17x32xf32, #tpu.memory_space<vmem>>, vector<2x10x17x32xf32>,
    %71 = vector.shape_cast %68 : vector<128x32xf32> to vector<2x8x8x32xf32>
    %c0_70 = arith.constant 0 : index
    %c1_71 = arith.constant 1 : index
    %c8_72 = arith.constant 8 : index
    %c0_73 = arith.constant 0 : index
    %72 = vector.load %arg18[%c0_70, %c1_71, %c8_72, %c0_73] : memref<2x10x17x32xf32, #tpu.memory_space<vmem>>, vector<2x8x8x32xf32>
    tpu.vector_store %arg18[%c0_70, %c1_71, %c8_72, %c0_73], %71 {strides = array<i32>} : memref<2x10x17x32xf32, #tpu.memory_space<vmem>>, vector<2x8x8x32xf32>,
    %cst_74 = arith.constant 0.000000e+00 : f32
    %73 = vector.broadcast %cst_74 : f32 to vector<128x64xf32>
    %c0_75 = arith.constant 0 : index
    %c0_76 = arith.constant 0 : index
    %c7_77 = arith.constant 7 : index
    %c0_78 = arith.constant 0 : index
    %74 = vector.load %arg18[%c0_75, %c0_76, %c7_77, %c0_78] : memref<2x10x17x32xf32, #tpu.memory_space<vmem>>, vector<2x8x8x32xf32>
    %75 = vector.shape_cast %74 : vector<2x8x8x32xf32> to vector<128x32xf32>
    %76 = arith.truncf %75 : vector<128x32xf32> to vector<128x32xbf16>
    %c0_79 = arith.constant 0 : index
    %c0_80 = arith.constant 0 : index
    %c0_81 = arith.constant 0 : index
    %77 = vector.load %arg4[%c0_79, %c0_80, %c0_81] : memref<9x32x64xbf16, #tpu.memory_space<vmem>>, vector<1x32x64xbf16>
    %78 = vector.shape_cast %77 : vector<1x32x64xbf16> to vector<32x64xbf16>
    %cst_82 = arith.constant dense<0.000000e+00> : vector<128x64xf32>
    %79 = tpu.matmul %76, %78, %cst_82 {dimension_numbers = #tpu.dot_dimension_numbers<[1], [0], [0], [1], [0, 0, 1, 1], [], []>} : vector<128x32xbf16>, vector<32x64xbf16>, vector<128x64xf32> -> vector<128x64xf32>
    %80 = arith.addf %73, %79 : vector<128x64xf32>
    %c0_83 = arith.constant 0 : index
    %c0_84 = arith.constant 0 : index
    %c8_85 = arith.constant 8 : index
    %c0_86 = arith.constant 0 : index
    %81 = vector.load %arg18[%c0_83, %c0_84, %c8_85, %c0_86] : memref<2x10x17x32xf32, #tpu.memory_space<vmem>>, vector<2x8x8x32xf32>
    %82 = vector.shape_cast %81 : vector<2x8x8x32xf32> to vector<128x32xf32>
    %83 = arith.truncf %82 : vector<128x32xf32> to vector<128x32xbf16>
    %c1_87 = arith.constant 1 : index
    %c0_88 = arith.constant 0 : index
    %c0_89 = arith.constant 0 : index
    %84 = vector.load %arg4[%c1_87, %c0_88, %c0_89] : memref<9x32x64xbf16, #tpu.memory_space<vmem>>, vector<1x32x64xbf16>
    %85 = vector.shape_cast %84 : vector<1x32x64xbf16> to vector<32x64xbf16>
    %cst_90 = arith.constant dense<0.000000e+00> : vector<128x64xf32>
    %86 = tpu.matmul %83, %85, %cst_90 {dimension_numbers = #tpu.dot_dimension_numbers<[1], [0], [0], [1], [0, 0, 1, 1], [], []>} : vector<128x32xbf16>, vector<32x64xbf16>, vector<128x64xf32> -> vector<128x64xf32>
    %87 = arith.addf %80, %86 : vector<128x64xf32>
    %c0_91 = arith.constant 0 : index
    %c0_92 = arith.constant 0 : index
    %c9_93 = arith.constant 9 : index
    %c0_94 = arith.constant 0 : index
    %88 = vector.load %arg18[%c0_91, %c0_92, %c9_93, %c0_94] : memref<2x10x17x32xf32, #tpu.memory_space<vmem>>, vector<2x8x8x32xf32>
    %89 = vector.shape_cast %88 : vector<2x8x8x32xf32> to vector<128x32xf32>
    %90 = arith.truncf %89 : vector<128x32xf32> to vector<128x32xbf16>
    %c2_95 = arith.constant 2 : index
    %c0_96 = arith.constant 0 : index
    %c0_97 = arith.constant 0 : index
    %91 = vector.load %arg4[%c2_95, %c0_96, %c0_97] : memref<9x32x64xbf16, #tpu.memory_space<vmem>>, vector<1x32x64xbf16>
    %92 = vector.shape_cast %91 : vector<1x32x64xbf16> to vector<32x64xbf16>
    %cst_98 = arith.constant dense<0.000000e+00> : vector<128x64xf32>
    %93 = tpu.matmul %90, %92, %cst_98 {dimension_numbers = #tpu.dot_dimension_numbers<[1], [0], [0], [1], [0, 0, 1, 1], [], []>} : vector<128x32xbf16>, vector<32x64xbf16>, vector<128x64xf32> -> vector<128x64xf32>
    %94 = arith.addf %87, %93 : vector<128x64xf32>
    %c0_99 = arith.constant 0 : index
    %c1_100 = arith.constant 1 : index
    %c7_101 = arith.constant 7 : index
    %c0_102 = arith.constant 0 : index
    %95 = vector.load %arg18[%c0_99, %c1_100, %c7_101, %c0_102] : memref<2x10x17x32xf32, #tpu.memory_space<vmem>>, vector<2x8x8x32xf32>
    %96 = vector.shape_cast %95 : vector<2x8x8x32xf32> to vector<128x32xf32>
    %97 = arith.truncf %96 : vector<128x32xf32> to vector<128x32xbf16>
    %c3_103 = arith.constant 3 : index
    %c0_104 = arith.constant 0 : index
    %c0_105 = arith.constant 0 : index
    %98 = vector.load %arg4[%c3_103, %c0_104, %c0_105] : memref<9x32x64xbf16, #tpu.memory_space<vmem>>, vector<1x32x64xbf16>
    %99 = vector.shape_cast %98 : vector<1x32x64xbf16> to vector<32x64xbf16>
    %cst_106 = arith.constant dense<0.000000e+00> : vector<128x64xf32>
    %100 = tpu.matmul %97, %99, %cst_106 {dimension_numbers = #tpu.dot_dimension_numbers<[1], [0], [0], [1], [0, 0, 1, 1], [], []>} : vector<128x32xbf16>, vector<32x64xbf16>, vector<128x64xf32> -> vector<128x64xf32>
    %101 = arith.addf %94, %100 : vector<128x64xf32>
    %c0_107 = arith.constant 0 : index
    %c1_108 = arith.constant 1 : index
    %c8_109 = arith.constant 8 : index
    %c0_110 = arith.constant 0 : index
    %102 = vector.load %arg18[%c0_107, %c1_108, %c8_109, %c0_110] : memref<2x10x17x32xf32, #tpu.memory_space<vmem>>, vector<2x8x8x32xf32>
    %103 = vector.shape_cast %102 : vector<2x8x8x32xf32> to vector<128x32xf32>
    %104 = arith.truncf %103 : vector<128x32xf32> to vector<128x32xbf16>
    %c4_111 = arith.constant 4 : index
    %c0_112 = arith.constant 0 : index
    %c0_113 = arith.constant 0 : index
    %105 = vector.load %arg4[%c4_111, %c0_112, %c0_113] : memref<9x32x64xbf16, #tpu.memory_space<vmem>>, vector<1x32x64xbf16>
    %106 = vector.shape_cast %105 : vector<1x32x64xbf16> to vector<32x64xbf16>
    %cst_114 = arith.constant dense<0.000000e+00> : vector<128x64xf32>
    %107 = tpu.matmul %104, %106, %cst_114 {dimension_numbers = #tpu.dot_dimension_numbers<[1], [0], [0], [1], [0, 0, 1, 1], [], []>} : vector<128x32xbf16>, vector<32x64xbf16>, vector<128x64xf32> -> vector<128x64xf32>
    %108 = arith.addf %101, %107 : vector<128x64xf32>
    %c0_115 = arith.constant 0 : index
    %c1_116 = arith.constant 1 : index
    %c9_117 = arith.constant 9 : index
    %c0_118 = arith.constant 0 : index
    %109 = vector.load %arg18[%c0_115, %c1_116, %c9_117, %c0_118] : memref<2x10x17x32xf32, #tpu.memory_space<vmem>>, vector<2x8x8x32xf32>
    %110 = vector.shape_cast %109 : vector<2x8x8x32xf32> to vector<128x32xf32>
    %111 = arith.truncf %110 : vector<128x32xf32> to vector<128x32xbf16>
    %c5_119 = arith.constant 5 : index
    %c0_120 = arith.constant 0 : index
    %c0_121 = arith.constant 0 : index
    %112 = vector.load %arg4[%c5_119, %c0_120, %c0_121] : memref<9x32x64xbf16, #tpu.memory_space<vmem>>, vector<1x32x64xbf16>
    %113 = vector.shape_cast %112 : vector<1x32x64xbf16> to vector<32x64xbf16>
    %cst_122 = arith.constant dense<0.000000e+00> : vector<128x64xf32>
    %114 = tpu.matmul %111, %113, %cst_122 {dimension_numbers = #tpu.dot_dimension_numbers<[1], [0], [0], [1], [0, 0, 1, 1], [], []>} : vector<128x32xbf16>, vector<32x64xbf16>, vector<128x64xf32> -> vector<128x64xf32>
    %115 = arith.addf %108, %114 : vector<128x64xf32>
    %c0_123 = arith.constant 0 : index
    %c2_124 = arith.constant 2 : index
    %c7_125 = arith.constant 7 : index
    %c0_126 = arith.constant 0 : index
    %116 = vector.load %arg18[%c0_123, %c2_124, %c7_125, %c0_126] : memref<2x10x17x32xf32, #tpu.memory_space<vmem>>, vector<2x8x8x32xf32>
    %117 = vector.shape_cast %116 : vector<2x8x8x32xf32> to vector<128x32xf32>
    %118 = arith.truncf %117 : vector<128x32xf32> to vector<128x32xbf16>
    %c6_127 = arith.constant 6 : index
    %c0_128 = arith.constant 0 : index
    %c0_129 = arith.constant 0 : index
    %119 = vector.load %arg4[%c6_127, %c0_128, %c0_129] : memref<9x32x64xbf16, #tpu.memory_space<vmem>>, vector<1x32x64xbf16>
    %120 = vector.shape_cast %119 : vector<1x32x64xbf16> to vector<32x64xbf16>
    %cst_130 = arith.constant dense<0.000000e+00> : vector<128x64xf32>
    %121 = tpu.matmul %118, %120, %cst_130 {dimension_numbers = #tpu.dot_dimension_numbers<[1], [0], [0], [1], [0, 0, 1, 1], [], []>} : vector<128x32xbf16>, vector<32x64xbf16>, vector<128x64xf32> -> vector<128x64xf32>
    %122 = arith.addf %115, %121 : vector<128x64xf32>
    %c0_131 = arith.constant 0 : index
    %c2_132 = arith.constant 2 : index
    %c8_133 = arith.constant 8 : index
    %c0_134 = arith.constant 0 : index
    %123 = vector.load %arg18[%c0_131, %c2_132, %c8_133, %c0_134] : memref<2x10x17x32xf32, #tpu.memory_space<vmem>>, vector<2x8x8x32xf32>
    %124 = vector.shape_cast %123 : vector<2x8x8x32xf32> to vector<128x32xf32>
    %125 = arith.truncf %124 : vector<128x32xf32> to vector<128x32xbf16>
    %c7_135 = arith.constant 7 : index
    %c0_136 = arith.constant 0 : index
    %c0_137 = arith.constant 0 : index
    %126 = vector.load %arg4[%c7_135, %c0_136, %c0_137] : memref<9x32x64xbf16, #tpu.memory_space<vmem>>, vector<1x32x64xbf16>
    %127 = vector.shape_cast %126 : vector<1x32x64xbf16> to vector<32x64xbf16>
    %cst_138 = arith.constant dense<0.000000e+00> : vector<128x64xf32>
    %128 = tpu.matmul %125, %127, %cst_138 {dimension_numbers = #tpu.dot_dimension_numbers<[1], [0], [0], [1], [0, 0, 1, 1], [], []>} : vector<128x32xbf16>, vector<32x64xbf16>, vector<128x64xf32> -> vector<128x64xf32>
    %129 = arith.addf %122, %128 : vector<128x64xf32>
    %c0_139 = arith.constant 0 : index
    %c2_140 = arith.constant 2 : index
    %c9_141 = arith.constant 9 : index
    %c0_142 = arith.constant 0 : index
    %130 = vector.load %arg18[%c0_139, %c2_140, %c9_141, %c0_142] : memref<2x10x17x32xf32, #tpu.memory_space<vmem>>, vector<2x8x8x32xf32>
    %131 = vector.shape_cast %130 : vector<2x8x8x32xf32> to vector<128x32xf32>
    %132 = arith.truncf %131 : vector<128x32xf32> to vector<128x32xbf16>
    %c8_143 = arith.constant 8 : index
    %c0_144 = arith.constant 0 : index
    %c0_145 = arith.constant 0 : index
    %133 = vector.load %arg4[%c8_143, %c0_144, %c0_145] : memref<9x32x64xbf16, #tpu.memory_space<vmem>>, vector<1x32x64xbf16>
    %134 = vector.shape_cast %133 : vector<1x32x64xbf16> to vector<32x64xbf16>
    %cst_146 = arith.constant dense<0.000000e+00> : vector<128x64xf32>
    %135 = tpu.matmul %132, %134, %cst_146 {dimension_numbers = #tpu.dot_dimension_numbers<[1], [0], [0], [1], [0, 0, 1, 1], [], []>} : vector<128x32xbf16>, vector<32x64xbf16>, vector<128x64xf32> -> vector<128x64xf32>
    %136 = arith.addf %129, %135 : vector<128x64xf32>
    %c0_147 = arith.constant 0 : index
    %c0_148 = arith.constant 0 : index
    %137 = vector.load %arg5[%c0_147, %c0_148] : memref<1x64xf32, #tpu.memory_space<vmem>>, vector<1x64xf32>
    %138 = vector.broadcast %137 : vector<1x64xf32> to vector<128x64xf32>
    %139 = arith.addf %136, %138 : vector<128x64xf32>
    %cst_149 = arith.constant 0.000000e+00 : f32
    %140 = vector.broadcast %cst_149 : f32 to vector<128x64xf32>
    %141 = arith.maximumf %139, %140 : vector<128x64xf32>
    %cst_150 = arith.constant 0.000000e+00 : f32
    %142 = vector.broadcast %cst_150 : f32 to vector<2x10x17x64xf32>
    %c0_151 = arith.constant 0 : index
    %c0_152 = arith.constant 0 : index
    %c0_153 = arith.constant 0 : index
    %c0_154 = arith.constant 0 : index
    %143 = vector.load %arg19[%c0_151, %c0_152, %c0_153, %c0_154] : memref<2x10x17x64xf32, #tpu.memory_space<vmem>>, vector<2x10x17x64xf32>
    tpu.vector_store %arg19[%c0_151, %c0_152, %c0_153, %c0_154], %142 {strides = array<i32>} : memref<2x10x17x64xf32, #tpu.memory_space<vmem>>, vector<2x10x17x64xf32>,
    %144 = vector.shape_cast %141 : vector<128x64xf32> to vector<2x8x8x64xf32>
    %c0_155 = arith.constant 0 : index
    %c1_156 = arith.constant 1 : index
    %c8_157 = arith.constant 8 : index
    %c0_158 = arith.constant 0 : index
    %145 = vector.load %arg19[%c0_155, %c1_156, %c8_157, %c0_158] : memref<2x10x17x64xf32, #tpu.memory_space<vmem>>, vector<2x8x8x64xf32>
    tpu.vector_store %arg19[%c0_155, %c1_156, %c8_157, %c0_158], %144 {strides = array<i32>} : memref<2x10x17x64xf32, #tpu.memory_space<vmem>>, vector<2x8x8x64xf32>,
    %cst_159 = arith.constant 0.000000e+00 : f32
    %146 = vector.broadcast %cst_159 : f32 to vector<128x128xf32>
    %c0_160 = arith.constant 0 : index
    %c0_161 = arith.constant 0 : index
    %c7_162 = arith.constant 7 : index
    %c0_163 = arith.constant 0 : index
    %147 = vector.load %arg19[%c0_160, %c0_161, %c7_162, %c0_163] : memref<2x10x17x64xf32, #tpu.memory_space<vmem>>, vector<2x8x8x64xf32>
    %148 = vector.shape_cast %147 : vector<2x8x8x64xf32> to vector<128x64xf32>
    %149 = arith.truncf %148 : vector<128x64xf32> to vector<128x64xbf16>
    %c0_164 = arith.constant 0 : index
    %c0_165 = arith.constant 0 : index
    %c0_166 = arith.constant 0 : index
    %150 = vector.load %arg6[%c0_164, %c0_165, %c0_166] : memref<9x64x128xbf16, #tpu.memory_space<vmem>>, vector<1x64x128xbf16>
    %151 = vector.shape_cast %150 : vector<1x64x128xbf16> to vector<64x128xbf16>
    %cst_167 = arith.constant dense<0.000000e+00> : vector<128x128xf32>
    %152 = tpu.matmul %149, %151, %cst_167 {dimension_numbers = #tpu.dot_dimension_numbers<[1], [0], [0], [1], [0, 0, 1, 1], [], []>} : vector<128x64xbf16>, vector<64x128xbf16>, vector<128x128xf32> -> vector<128x128xf32>
    %153 = arith.addf %146, %152 : vector<128x128xf32>
    %c0_168 = arith.constant 0 : index
    %c0_169 = arith.constant 0 : index
    %c8_170 = arith.constant 8 : index
    %c0_171 = arith.constant 0 : index
    %154 = vector.load %arg19[%c0_168, %c0_169, %c8_170, %c0_171] : memref<2x10x17x64xf32, #tpu.memory_space<vmem>>, vector<2x8x8x64xf32>
    %155 = vector.shape_cast %154 : vector<2x8x8x64xf32> to vector<128x64xf32>
    %156 = arith.truncf %155 : vector<128x64xf32> to vector<128x64xbf16>
    %c1_172 = arith.constant 1 : index
    %c0_173 = arith.constant 0 : index
    %c0_174 = arith.constant 0 : index
    %157 = vector.load %arg6[%c1_172, %c0_173, %c0_174] : memref<9x64x128xbf16, #tpu.memory_space<vmem>>, vector<1x64x128xbf16>
    %158 = vector.shape_cast %157 : vector<1x64x128xbf16> to vector<64x128xbf16>
    %cst_175 = arith.constant dense<0.000000e+00> : vector<128x128xf32>
    %159 = tpu.matmul %156, %158, %cst_175 {dimension_numbers = #tpu.dot_dimension_numbers<[1], [0], [0], [1], [0, 0, 1, 1], [], []>} : vector<128x64xbf16>, vector<64x128xbf16>, vector<128x128xf32> -> vector<128x128xf32>
    %160 = arith.addf %153, %159 : vector<128x128xf32>
    %c0_176 = arith.constant 0 : index
    %c0_177 = arith.constant 0 : index
    %c9_178 = arith.constant 9 : index
    %c0_179 = arith.constant 0 : index
    %161 = vector.load %arg19[%c0_176, %c0_177, %c9_178, %c0_179] : memref<2x10x17x64xf32, #tpu.memory_space<vmem>>, vector<2x8x8x64xf32>
    %162 = vector.shape_cast %161 : vector<2x8x8x64xf32> to vector<128x64xf32>
    %163 = arith.truncf %162 : vector<128x64xf32> to vector<128x64xbf16>
    %c2_180 = arith.constant 2 : index
    %c0_181 = arith.constant 0 : index
    %c0_182 = arith.constant 0 : index
    %164 = vector.load %arg6[%c2_180, %c0_181, %c0_182] : memref<9x64x128xbf16, #tpu.memory_space<vmem>>, vector<1x64x128xbf16>
    %165 = vector.shape_cast %164 : vector<1x64x128xbf16> to vector<64x128xbf16>
    %cst_183 = arith.constant dense<0.000000e+00> : vector<128x128xf32>
    %166 = tpu.matmul %163, %165, %cst_183 {dimension_numbers = #tpu.dot_dimension_numbers<[1], [0], [0], [1], [0, 0, 1, 1], [], []>} : vector<128x64xbf16>, vector<64x128xbf16>, vector<128x128xf32> -> vector<128x128xf32>
    %167 = arith.addf %160, %166 : vector<128x128xf32>
    %c0_184 = arith.constant 0 : index
    %c1_185 = arith.constant 1 : index
    %c7_186 = arith.constant 7 : index
    %c0_187 = arith.constant 0 : index
    %168 = vector.load %arg19[%c0_184, %c1_185, %c7_186, %c0_187] : memref<2x10x17x64xf32, #tpu.memory_space<vmem>>, vector<2x8x8x64xf32>
    %169 = vector.shape_cast %168 : vector<2x8x8x64xf32> to vector<128x64xf32>
    %170 = arith.truncf %169 : vector<128x64xf32> to vector<128x64xbf16>
    %c3_188 = arith.constant 3 : index
    %c0_189 = arith.constant 0 : index
    %c0_190 = arith.constant 0 : index
    %171 = vector.load %arg6[%c3_188, %c0_189, %c0_190] : memref<9x64x128xbf16, #tpu.memory_space<vmem>>, vector<1x64x128xbf16>
    %172 = vector.shape_cast %171 : vector<1x64x128xbf16> to vector<64x128xbf16>
    %cst_191 = arith.constant dense<0.000000e+00> : vector<128x128xf32>
    %173 = tpu.matmul %170, %172, %cst_191 {dimension_numbers = #tpu.dot_dimension_numbers<[1], [0], [0], [1], [0, 0, 1, 1], [], []>} : vector<128x64xbf16>, vector<64x128xbf16>, vector<128x128xf32> -> vector<128x128xf32>
    %174 = arith.addf %167, %173 : vector<128x128xf32>
    %c0_192 = arith.constant 0 : index
    %c1_193 = arith.constant 1 : index
    %c8_194 = arith.constant 8 : index
    %c0_195 = arith.constant 0 : index
    %175 = vector.load %arg19[%c0_192, %c1_193, %c8_194, %c0_195] : memref<2x10x17x64xf32, #tpu.memory_space<vmem>>, vector<2x8x8x64xf32>
    %176 = vector.shape_cast %175 : vector<2x8x8x64xf32> to vector<128x64xf32>
    %177 = arith.truncf %176 : vector<128x64xf32> to vector<128x64xbf16>
    %c4_196 = arith.constant 4 : index
    %c0_197 = arith.constant 0 : index
    %c0_198 = arith.constant 0 : index
    %178 = vector.load %arg6[%c4_196, %c0_197, %c0_198] : memref<9x64x128xbf16, #tpu.memory_space<vmem>>, vector<1x64x128xbf16>
    %179 = vector.shape_cast %178 : vector<1x64x128xbf16> to vector<64x128xbf16>
    %cst_199 = arith.constant dense<0.000000e+00> : vector<128x128xf32>
    %180 = tpu.matmul %177, %179, %cst_199 {dimension_numbers = #tpu.dot_dimension_numbers<[1], [0], [0], [1], [0, 0, 1, 1], [], []>} : vector<128x64xbf16>, vector<64x128xbf16>, vector<128x128xf32> -> vector<128x128xf32>
    %181 = arith.addf %174, %180 : vector<128x128xf32>
    %c0_200 = arith.constant 0 : index
    %c1_201 = arith.constant 1 : index
    %c9_202 = arith.constant 9 : index
    %c0_203 = arith.constant 0 : index
    %182 = vector.load %arg19[%c0_200, %c1_201, %c9_202, %c0_203] : memref<2x10x17x64xf32, #tpu.memory_space<vmem>>, vector<2x8x8x64xf32>
    %183 = vector.shape_cast %182 : vector<2x8x8x64xf32> to vector<128x64xf32>
    %184 = arith.truncf %183 : vector<128x64xf32> to vector<128x64xbf16>
    %c5_204 = arith.constant 5 : index
    %c0_205 = arith.constant 0 : index
    %c0_206 = arith.constant 0 : index
    %185 = vector.load %arg6[%c5_204, %c0_205, %c0_206] : memref<9x64x128xbf16, #tpu.memory_space<vmem>>, vector<1x64x128xbf16>
    %186 = vector.shape_cast %185 : vector<1x64x128xbf16> to vector<64x128xbf16>
    %cst_207 = arith.constant dense<0.000000e+00> : vector<128x128xf32>
    %187 = tpu.matmul %184, %186, %cst_207 {dimension_numbers = #tpu.dot_dimension_numbers<[1], [0], [0], [1], [0, 0, 1, 1], [], []>} : vector<128x64xbf16>, vector<64x128xbf16>, vector<128x128xf32> -> vector<128x128xf32>
    %188 = arith.addf %181, %187 : vector<128x128xf32>
    %c0_208 = arith.constant 0 : index
    %c2_209 = arith.constant 2 : index
    %c7_210 = arith.constant 7 : index
    %c0_211 = arith.constant 0 : index
    %189 = vector.load %arg19[%c0_208, %c2_209, %c7_210, %c0_211] : memref<2x10x17x64xf32, #tpu.memory_space<vmem>>, vector<2x8x8x64xf32>
    %190 = vector.shape_cast %189 : vector<2x8x8x64xf32> to vector<128x64xf32>
    %191 = arith.truncf %190 : vector<128x64xf32> to vector<128x64xbf16>
    %c6_212 = arith.constant 6 : index
    %c0_213 = arith.constant 0 : index
    %c0_214 = arith.constant 0 : index
    %192 = vector.load %arg6[%c6_212, %c0_213, %c0_214] : memref<9x64x128xbf16, #tpu.memory_space<vmem>>, vector<1x64x128xbf16>
    %193 = vector.shape_cast %192 : vector<1x64x128xbf16> to vector<64x128xbf16>
    %cst_215 = arith.constant dense<0.000000e+00> : vector<128x128xf32>
    %194 = tpu.matmul %191, %193, %cst_215 {dimension_numbers = #tpu.dot_dimension_numbers<[1], [0], [0], [1], [0, 0, 1, 1], [], []>} : vector<128x64xbf16>, vector<64x128xbf16>, vector<128x128xf32> -> vector<128x128xf32>
    %195 = arith.addf %188, %194 : vector<128x128xf32>
    %c0_216 = arith.constant 0 : index
    %c2_217 = arith.constant 2 : index
    %c8_218 = arith.constant 8 : index
    %c0_219 = arith.constant 0 : index
    %196 = vector.load %arg19[%c0_216, %c2_217, %c8_218, %c0_219] : memref<2x10x17x64xf32, #tpu.memory_space<vmem>>, vector<2x8x8x64xf32>
    %197 = vector.shape_cast %196 : vector<2x8x8x64xf32> to vector<128x64xf32>
    %198 = arith.truncf %197 : vector<128x64xf32> to vector<128x64xbf16>
    %c7_220 = arith.constant 7 : index
    %c0_221 = arith.constant 0 : index
    %c0_222 = arith.constant 0 : index
    %199 = vector.load %arg6[%c7_220, %c0_221, %c0_222] : memref<9x64x128xbf16, #tpu.memory_space<vmem>>, vector<1x64x128xbf16>
    %200 = vector.shape_cast %199 : vector<1x64x128xbf16> to vector<64x128xbf16>
    %cst_223 = arith.constant dense<0.000000e+00> : vector<128x128xf32>
    %201 = tpu.matmul %198, %200, %cst_223 {dimension_numbers = #tpu.dot_dimension_numbers<[1], [0], [0], [1], [0, 0, 1, 1], [], []>} : vector<128x64xbf16>, vector<64x128xbf16>, vector<128x128xf32> -> vector<128x128xf32>
    %202 = arith.addf %195, %201 : vector<128x128xf32>
    %c0_224 = arith.constant 0 : index
    %c2_225 = arith.constant 2 : index
    %c9_226 = arith.constant 9 : index
    %c0_227 = arith.constant 0 : index
    %203 = vector.load %arg19[%c0_224, %c2_225, %c9_226, %c0_227] : memref<2x10x17x64xf32, #tpu.memory_space<vmem>>, vector<2x8x8x64xf32>
    %204 = vector.shape_cast %203 : vector<2x8x8x64xf32> to vector<128x64xf32>
    %205 = arith.truncf %204 : vector<128x64xf32> to vector<128x64xbf16>
    %c8_228 = arith.constant 8 : index
    %c0_229 = arith.constant 0 : index
    %c0_230 = arith.constant 0 : index
    %206 = vector.load %arg6[%c8_228, %c0_229, %c0_230] : memref<9x64x128xbf16, #tpu.memory_space<vmem>>, vector<1x64x128xbf16>
    %207 = vector.shape_cast %206 : vector<1x64x128xbf16> to vector<64x128xbf16>
    %cst_231 = arith.constant dense<0.000000e+00> : vector<128x128xf32>
    %208 = tpu.matmul %205, %207, %cst_231 {dimension_numbers = #tpu.dot_dimension_numbers<[1], [0], [0], [1], [0, 0, 1, 1], [], []>} : vector<128x64xbf16>, vector<64x128xbf16>, vector<128x128xf32> -> vector<128x128xf32>
    %209 = arith.addf %202, %208 : vector<128x128xf32>
    %c0_232 = arith.constant 0 : index
    %c0_233 = arith.constant 0 : index
    %210 = vector.load %arg7[%c0_232, %c0_233] : memref<1x128xf32, #tpu.memory_space<vmem>>, vector<1x128xf32>
    %211 = vector.broadcast %210 : vector<1x128xf32> to vector<128x128xf32>
    %212 = arith.addf %209, %211 : vector<128x128xf32>
    %cst_234 = arith.constant 0.000000e+00 : f32
    %213 = vector.broadcast %cst_234 : f32 to vector<128x128xf32>
    %214 = arith.maximumf %212, %213 : vector<128x128xf32>
    %215 = vector.shape_cast %214 : vector<128x128xf32> to vector<2x64x128xf32>
    %c0_235 = arith.constant 0 : index
    %c0_236 = arith.constant 0 : index
    %c0_237 = arith.constant 0 : index
    %216 = vector.load %arg8[%c0_235, %c0_236, %c0_237] : memref<6x1x128xf32, #tpu.memory_space<vmem>>, vector<1x1x128xf32>
    %217 = vector.shape_cast %216 : vector<1x1x128xf32> to vector<1x128xf32>
    %218 = vector.shape_cast %217 : vector<1x128xf32> to vector<1x1x128xf32>
    %219 = vector.broadcast %218 : vector<1x1x128xf32> to vector<2x64x128xf32>
    %220 = arith.mulf %215, %219 : vector<2x64x128xf32>
    %cst_238 = arith.constant dense<0.000000e+00> : vector<2x64xf32>
    %221 = vector.multi_reduction <add>, %220, %cst_238 [2] : vector<2x64x128xf32> to vector<2x64xf32>
    %c0_239 = arith.constant 0 : index
    %c0_240 = arith.constant 0 : index
    %c0_241 = arith.constant 0 : index
    %222 = vector.load %arg9[%c0_239, %c0_240, %c0_241] : memref<6x1x64xf32, #tpu.memory_space<vmem>>, vector<1x1x64xf32>
    %223 = vector.shape_cast %222 : vector<1x1x64xf32> to vector<1x64xf32>
    %224 = vector.broadcast %223 : vector<1x64xf32> to vector<2x64xf32>
    %225 = arith.addf %221, %224 : vector<2x64xf32>
    %cst_242 = arith.constant 0.000000e+00 : f32
    %226 = vector.broadcast %cst_242 : f32 to vector<2x64xf32>
    %227 = arith.maximumf %225, %226 : vector<2x64xf32>
    %c1_243 = arith.constant 1 : index
    %c0_244 = arith.constant 0 : index
    %c0_245 = arith.constant 0 : index
    %228 = vector.load %arg8[%c1_243, %c0_244, %c0_245] : memref<6x1x128xf32, #tpu.memory_space<vmem>>, vector<1x1x128xf32>
    %229 = vector.shape_cast %228 : vector<1x1x128xf32> to vector<1x128xf32>
    %230 = vector.shape_cast %229 : vector<1x128xf32> to vector<1x1x128xf32>
    %231 = vector.broadcast %230 : vector<1x1x128xf32> to vector<2x64x128xf32>
    %232 = arith.mulf %215, %231 : vector<2x64x128xf32>
    %cst_246 = arith.constant dense<0.000000e+00> : vector<2x64xf32>
    %233 = vector.multi_reduction <add>, %232, %cst_246 [2] : vector<2x64x128xf32> to vector<2x64xf32>
    %c1_247 = arith.constant 1 : index
    %c0_248 = arith.constant 0 : index
    %c0_249 = arith.constant 0 : index
    %234 = vector.load %arg9[%c1_247, %c0_248, %c0_249] : memref<6x1x64xf32, #tpu.memory_space<vmem>>, vector<1x1x64xf32>
    %235 = vector.shape_cast %234 : vector<1x1x64xf32> to vector<1x64xf32>
    %236 = vector.broadcast %235 : vector<1x64xf32> to vector<2x64xf32>
    %237 = arith.addf %233, %236 : vector<2x64xf32>
    %cst_250 = arith.constant 0.000000e+00 : f32
    %238 = vector.broadcast %cst_250 : f32 to vector<2x64xf32>
    %239 = arith.maximumf %237, %238 : vector<2x64xf32>
    %c2_251 = arith.constant 2 : index
    %c0_252 = arith.constant 0 : index
    %c0_253 = arith.constant 0 : index
    %240 = vector.load %arg8[%c2_251, %c0_252, %c0_253] : memref<6x1x128xf32, #tpu.memory_space<vmem>>, vector<1x1x128xf32>
    %241 = vector.shape_cast %240 : vector<1x1x128xf32> to vector<1x128xf32>
    %242 = vector.shape_cast %241 : vector<1x128xf32> to vector<1x1x128xf32>
    %243 = vector.broadcast %242 : vector<1x1x128xf32> to vector<2x64x128xf32>
    %244 = arith.mulf %215, %243 : vector<2x64x128xf32>
    %cst_254 = arith.constant dense<0.000000e+00> : vector<2x64xf32>
    %245 = vector.multi_reduction <add>, %244, %cst_254 [2] : vector<2x64x128xf32> to vector<2x64xf32>
    %c2_255 = arith.constant 2 : index
    %c0_256 = arith.constant 0 : index
    %c0_257 = arith.constant 0 : index
    %246 = vector.load %arg9[%c2_255, %c0_256, %c0_257] : memref<6x1x64xf32, #tpu.memory_space<vmem>>, vector<1x1x64xf32>
    %247 = vector.shape_cast %246 : vector<1x1x64xf32> to vector<1x64xf32>
    %248 = vector.broadcast %247 : vector<1x64xf32> to vector<2x64xf32>
    %249 = arith.addf %245, %248 : vector<2x64xf32>
    %cst_258 = arith.constant 0.000000e+00 : f32
    %250 = vector.broadcast %cst_258 : f32 to vector<2x64xf32>
    %251 = arith.maximumf %249, %250 : vector<2x64xf32>
    %c3_259 = arith.constant 3 : index
    %c0_260 = arith.constant 0 : index
    %c0_261 = arith.constant 0 : index
    %252 = vector.load %arg8[%c3_259, %c0_260, %c0_261] : memref<6x1x128xf32, #tpu.memory_space<vmem>>, vector<1x1x128xf32>
    %253 = vector.shape_cast %252 : vector<1x1x128xf32> to vector<1x128xf32>
    %254 = vector.shape_cast %253 : vector<1x128xf32> to vector<1x1x128xf32>
    %255 = vector.broadcast %254 : vector<1x1x128xf32> to vector<2x64x128xf32>
    %256 = arith.mulf %215, %255 : vector<2x64x128xf32>
    %cst_262 = arith.constant dense<0.000000e+00> : vector<2x64xf32>
    %257 = vector.multi_reduction <add>, %256, %cst_262 [2] : vector<2x64x128xf32> to vector<2x64xf32>
    %c3_263 = arith.constant 3 : index
    %c0_264 = arith.constant 0 : index
    %c0_265 = arith.constant 0 : index
    %258 = vector.load %arg9[%c3_263, %c0_264, %c0_265] : memref<6x1x64xf32, #tpu.memory_space<vmem>>, vector<1x1x64xf32>
    %259 = vector.shape_cast %258 : vector<1x1x64xf32> to vector<1x64xf32>
    %260 = vector.broadcast %259 : vector<1x64xf32> to vector<2x64xf32>
    %261 = arith.addf %257, %260 : vector<2x64xf32>
    %cst_266 = arith.constant 0.000000e+00 : f32
    %262 = vector.broadcast %cst_266 : f32 to vector<2x64xf32>
    %263 = arith.maximumf %261, %262 : vector<2x64xf32>
    %c4_267 = arith.constant 4 : index
    %c0_268 = arith.constant 0 : index
    %c0_269 = arith.constant 0 : index
    %264 = vector.load %arg8[%c4_267, %c0_268, %c0_269] : memref<6x1x128xf32, #tpu.memory_space<vmem>>, vector<1x1x128xf32>
    %265 = vector.shape_cast %264 : vector<1x1x128xf32> to vector<1x128xf32>
    %266 = vector.shape_cast %265 : vector<1x128xf32> to vector<1x1x128xf32>
    %267 = vector.broadcast %266 : vector<1x1x128xf32> to vector<2x64x128xf32>
    %268 = arith.mulf %215, %267 : vector<2x64x128xf32>
    %cst_270 = arith.constant dense<0.000000e+00> : vector<2x64xf32>
    %269 = vector.multi_reduction <add>, %268, %cst_270 [2] : vector<2x64x128xf32> to vector<2x64xf32>
    %c4_271 = arith.constant 4 : index
    %c0_272 = arith.constant 0 : index
    %c0_273 = arith.constant 0 : index
    %270 = vector.load %arg9[%c4_271, %c0_272, %c0_273] : memref<6x1x64xf32, #tpu.memory_space<vmem>>, vector<1x1x64xf32>
    %271 = vector.shape_cast %270 : vector<1x1x64xf32> to vector<1x64xf32>
    %272 = vector.broadcast %271 : vector<1x64xf32> to vector<2x64xf32>
    %273 = arith.addf %269, %272 : vector<2x64xf32>
    %cst_274 = arith.constant 0.000000e+00 : f32
    %274 = vector.broadcast %cst_274 : f32 to vector<2x64xf32>
    %275 = arith.maximumf %273, %274 : vector<2x64xf32>
    %c5_275 = arith.constant 5 : index
    %c0_276 = arith.constant 0 : index
    %c0_277 = arith.constant 0 : index
    %276 = vector.load %arg8[%c5_275, %c0_276, %c0_277] : memref<6x1x128xf32, #tpu.memory_space<vmem>>, vector<1x1x128xf32>
    %277 = vector.shape_cast %276 : vector<1x1x128xf32> to vector<1x128xf32>
    %278 = vector.shape_cast %277 : vector<1x128xf32> to vector<1x1x128xf32>
    %279 = vector.broadcast %278 : vector<1x1x128xf32> to vector<2x64x128xf32>
    %280 = arith.mulf %215, %279 : vector<2x64x128xf32>
    %cst_278 = arith.constant dense<0.000000e+00> : vector<2x64xf32>
    %281 = vector.multi_reduction <add>, %280, %cst_278 [2] : vector<2x64x128xf32> to vector<2x64xf32>
    %c5_279 = arith.constant 5 : index
    %c0_280 = arith.constant 0 : index
    %c0_281 = arith.constant 0 : index
    %282 = vector.load %arg9[%c5_279, %c0_280, %c0_281] : memref<6x1x64xf32, #tpu.memory_space<vmem>>, vector<1x1x64xf32>
    %283 = vector.shape_cast %282 : vector<1x1x64xf32> to vector<1x64xf32>
    %284 = vector.broadcast %283 : vector<1x64xf32> to vector<2x64xf32>
    %285 = arith.addf %281, %284 : vector<2x64xf32>
    %cst_282 = arith.constant 0.000000e+00 : f32
    %286 = vector.broadcast %cst_282 : f32 to vector<2x64xf32>
    %287 = arith.maximumf %285, %286 : vector<2x64xf32>
    %cst_283 = arith.constant 0.000000e+00 : f32
    %288 = vector.broadcast %cst_283 : f32 to vector<2x64xf32>
    %289 = arith.truncf %227 : vector<2x64xf32> to vector<2x64xbf16>
    %c0_284 = arith.constant 0 : index
    %c0_285 = arith.constant 0 : index
    %c0_286 = arith.constant 0 : index
    %290 = vector.load %arg10[%c0_284, %c0_285, %c0_286] : memref<4x64x64xbf16, #tpu.memory_space<vmem>>, vector<1x64x64xbf16>
    %291 = vector.shape_cast %290 : vector<1x64x64xbf16> to vector<64x64xbf16>
    %cst_287 = arith.constant dense<0.000000e+00> : vector<2x64xf32>
    %292 = tpu.matmul %289, %291, %cst_287 {dimension_numbers = #tpu.dot_dimension_numbers<[1], [0], [0], [1], [0, 0, 1, 1], [], []>} : vector<2x64xbf16>, vector<64x64xbf16>, vector<2x64xf32> -> vector<2x64xf32>
    %293 = arith.addf %288, %292 : vector<2x64xf32>
    %294 = arith.truncf %239 : vector<2x64xf32> to vector<2x64xbf16>
    %c1_288 = arith.constant 1 : index
    %c0_289 = arith.constant 0 : index
    %c0_290 = arith.constant 0 : index
    %295 = vector.load %arg10[%c1_288, %c0_289, %c0_290] : memref<4x64x64xbf16, #tpu.memory_space<vmem>>, vector<1x64x64xbf16>
    %296 = vector.shape_cast %295 : vector<1x64x64xbf16> to vector<64x64xbf16>
    %cst_291 = arith.constant dense<0.000000e+00> : vector<2x64xf32>
    %297 = tpu.matmul %294, %296, %cst_291 {dimension_numbers = #tpu.dot_dimension_numbers<[1], [0], [0], [1], [0, 0, 1, 1], [], []>} : vector<2x64xbf16>, vector<64x64xbf16>, vector<2x64xf32> -> vector<2x64xf32>
    %298 = arith.addf %293, %297 : vector<2x64xf32>
    %299 = arith.truncf %251 : vector<2x64xf32> to vector<2x64xbf16>
    %c2_292 = arith.constant 2 : index
    %c0_293 = arith.constant 0 : index
    %c0_294 = arith.constant 0 : index
    %300 = vector.load %arg10[%c2_292, %c0_293, %c0_294] : memref<4x64x64xbf16, #tpu.memory_space<vmem>>, vector<1x64x64xbf16>
    %301 = vector.shape_cast %300 : vector<1x64x64xbf16> to vector<64x64xbf16>
    %cst_295 = arith.constant dense<0.000000e+00> : vector<2x64xf32>
    %302 = tpu.matmul %299, %301, %cst_295 {dimension_numbers = #tpu.dot_dimension_numbers<[1], [0], [0], [1], [0, 0, 1, 1], [], []>} : vector<2x64xbf16>, vector<64x64xbf16>, vector<2x64xf32> -> vector<2x64xf32>
    %303 = arith.addf %298, %302 : vector<2x64xf32>
    %304 = arith.truncf %263 : vector<2x64xf32> to vector<2x64xbf16>
    %c3_296 = arith.constant 3 : index
    %c0_297 = arith.constant 0 : index
    %c0_298 = arith.constant 0 : index
    %305 = vector.load %arg10[%c3_296, %c0_297, %c0_298] : memref<4x64x64xbf16, #tpu.memory_space<vmem>>, vector<1x64x64xbf16>
    %306 = vector.shape_cast %305 : vector<1x64x64xbf16> to vector<64x64xbf16>
    %cst_299 = arith.constant dense<0.000000e+00> : vector<2x64xf32>
    %307 = tpu.matmul %304, %306, %cst_299 {dimension_numbers = #tpu.dot_dimension_numbers<[1], [0], [0], [1], [0, 0, 1, 1], [], []>} : vector<2x64xbf16>, vector<64x64xbf16>, vector<2x64xf32> -> vector<2x64xf32>
    %308 = arith.addf %303, %307 : vector<2x64xf32>
    %c0_300 = arith.constant 0 : index
    %c0_301 = arith.constant 0 : index
    %309 = vector.load %arg11[%c0_300, %c0_301] : memref<1x64xf32, #tpu.memory_space<vmem>>, vector<1x64xf32>
    %310 = vector.broadcast %309 : vector<1x64xf32> to vector<2x64xf32>
    %311 = arith.addf %308, %310 : vector<2x64xf32>
    %cst_302 = arith.constant dense<0xFF800000> : vector<2xf32>
    %312 = vector.multi_reduction <maximumf>, %311, %cst_302 [1] : vector<2x64xf32> to vector<2xf32>
    %313 = vector.shape_cast %312 : vector<2xf32> to vector<2x1xf32>
    %314 = vector.broadcast %313 : vector<2x1xf32> to vector<2x64xf32>
    %315 = arith.subf %311, %314 : vector<2x64xf32>
    %316 = math.exp %315 : vector<2x64xf32>
    %cst_303 = arith.constant dense<0.000000e+00> : vector<2xf32>
    %317 = vector.multi_reduction <add>, %316, %cst_303 [1] : vector<2x64xf32> to vector<2xf32>
    %318 = vector.shape_cast %317 : vector<2xf32> to vector<2x1xf32>
    %319 = math.log %318 : vector<2x1xf32>
    %320 = vector.broadcast %319 : vector<2x1xf32> to vector<2x64xf32>
    %321 = arith.subf %315, %320 : vector<2x64xf32>
    %c0_304 = arith.constant 0 : index
    %c0_305 = arith.constant 0 : index
    %322 = vector.load %arg16[%c0_304, %c0_305] : memref<2x64xf32, #tpu.memory_space<vmem>>, vector<2x64xf32>
    tpu.vector_store %arg16[%c0_304, %c0_305], %321 {strides = array<i32>} : memref<2x64xf32, #tpu.memory_space<vmem>>, vector<2x64xf32>,
    %cst_306 = arith.constant 0.000000e+00 : f32
    %323 = vector.broadcast %cst_306 : f32 to vector<2x64xf32>
    %324 = arith.truncf %275 : vector<2x64xf32> to vector<2x64xbf16>
    %c0_307 = arith.constant 0 : index
    %c0_308 = arith.constant 0 : index
    %c0_309 = arith.constant 0 : index
    %325 = vector.load %arg12[%c0_307, %c0_308, %c0_309] : memref<2x64x64xbf16, #tpu.memory_space<vmem>>, vector<1x64x64xbf16>
    %326 = vector.shape_cast %325 : vector<1x64x64xbf16> to vector<64x64xbf16>
    %cst_310 = arith.constant dense<0.000000e+00> : vector<2x64xf32>
    %327 = tpu.matmul %324, %326, %cst_310 {dimension_numbers = #tpu.dot_dimension_numbers<[1], [0], [0], [1], [0, 0, 1, 1], [], []>} : vector<2x64xbf16>, vector<64x64xbf16>, vector<2x64xf32> -> vector<2x64xf32>
    %328 = arith.addf %323, %327 : vector<2x64xf32>
    %329 = arith.truncf %287 : vector<2x64xf32> to vector<2x64xbf16>
    %c1_311 = arith.constant 1 : index
    %c0_312 = arith.constant 0 : index
    %c0_313 = arith.constant 0 : index
    %330 = vector.load %arg12[%c1_311, %c0_312, %c0_313] : memref<2x64x64xbf16, #tpu.memory_space<vmem>>, vector<1x64x64xbf16>
    %331 = vector.shape_cast %330 : vector<1x64x64xbf16> to vector<64x64xbf16>
    %cst_314 = arith.constant dense<0.000000e+00> : vector<2x64xf32>
    %332 = tpu.matmul %329, %331, %cst_314 {dimension_numbers = #tpu.dot_dimension_numbers<[1], [0], [0], [1], [0, 0, 1, 1], [], []>} : vector<2x64xbf16>, vector<64x64xbf16>, vector<2x64xf32> -> vector<2x64xf32>
    %333 = arith.addf %328, %332 : vector<2x64xf32>
    %c0_315 = arith.constant 0 : index
    %c0_316 = arith.constant 0 : index
    %334 = vector.load %arg13[%c0_315, %c0_316] : memref<1x64xf32, #tpu.memory_space<vmem>>, vector<1x64xf32>
    %335 = vector.broadcast %334 : vector<1x64xf32> to vector<2x64xf32>
    %336 = arith.addf %333, %335 : vector<2x64xf32>
    %cst_317 = arith.constant 0.000000e+00 : f32
    %337 = vector.broadcast %cst_317 : f32 to vector<2x64xf32>
    %338 = arith.maximumf %336, %337 : vector<2x64xf32>
    %c0_318 = arith.constant 0 : index
    %c0_319 = arith.constant 0 : index
    %339 = vector.load %arg14[%c0_318, %c0_319] : memref<1x64xf32, #tpu.memory_space<vmem>>, vector<1x64xf32>
    %340 = vector.broadcast %339 : vector<1x64xf32> to vector<2x64xf32>
    %341 = arith.mulf %338, %340 : vector<2x64xf32>
    %cst_320 = arith.constant dense<0.000000e+00> : vector<2xf32>
    %342 = vector.multi_reduction <add>, %341, %cst_320 [1] : vector<2x64xf32> to vector<2xf32>
    %343 = vector.shape_cast %342 : vector<2xf32> to vector<2x1xf32>
    %c0_321 = arith.constant 0 : index
    %c0_322 = arith.constant 0 : index
    %344 = vector.load %arg15[%c0_321, %c0_322] : memref<1x1xf32, #tpu.memory_space<vmem>>, vector<1x1xf32>
    %345 = vector.broadcast %344 : vector<1x1xf32> to vector<2x1xf32>
    %346 = arith.addf %343, %345 : vector<2x1xf32>
    %347 = math.tanh %346 : vector<2x1xf32>
    %c0_323 = arith.constant 0 : index
    %c0_324 = arith.constant 0 : index
    %348 = vector.load %arg17[%c0_323, %c0_324] : memref<2x1xf32, #tpu.memory_space<vmem>>, vector<2x1xf32>
    tpu.vector_store %arg17[%c0_323, %c0_324], %347 {strides = array<i32>} : memref<2x1xf32, #tpu.memory_space<vmem>>, vector<2x1xf32>,
    return
  }
  func.func @transform_0(%arg0: i32) -> (i32, i32, i32, i32) {
    %c0_i32 = arith.constant 0 : i32
    %c0_i32_0 = arith.constant 0 : i32
    %c0_i32_1 = arith.constant 0 : i32
    %c0_i32_2 = arith.constant 0 : i32
    return %arg0, %c0_i32, %c0_i32_0, %c0_i32_1 : i32, i32, i32, i32
  }
  func.func @transform_1(%arg0: i32) -> (i32, i32, i32) {
    %c0_i32 = arith.constant 0 : i32
    %c0_i32_0 = arith.constant 0 : i32
    %c0_i32_1 = arith.constant 0 : i32
    %c0_i32_2 = arith.constant 0 : i32
    return %c0_i32, %c0_i32_0, %c0_i32_1 : i32, i32, i32
  }
  func.func @transform_2(%arg0: i32) -> (i32, i32) {
    %c0_i32 = arith.constant 0 : i32
    %c0_i32_0 = arith.constant 0 : i32
    %c0_i32_1 = arith.constant 0 : i32
    return %c0_i32, %c0_i32_0 : i32, i32
  }
  func.func @transform_3(%arg0: i32) -> (i32, i32, i32) {
    %c0_i32 = arith.constant 0 : i32
    %c0_i32_0 = arith.constant 0 : i32
    %c0_i32_1 = arith.constant 0 : i32
    %c0_i32_2 = arith.constant 0 : i32
    return %c0_i32, %c0_i32_0, %c0_i32_1 : i32, i32, i32
  }
  func.func @transform_4(%arg0: i32) -> (i32, i32) {
    %c0_i32 = arith.constant 0 : i32
    %c0_i32_0 = arith.constant 0 : i32
    %c0_i32_1 = arith.constant 0 : i32
    return %c0_i32, %c0_i32_0 : i32, i32
  }
  func.func @transform_5(%arg0: i32) -> (i32, i32, i32) {
    %c0_i32 = arith.constant 0 : i32
    %c0_i32_0 = arith.constant 0 : i32
    %c0_i32_1 = arith.constant 0 : i32
    %c0_i32_2 = arith.constant 0 : i32
    return %c0_i32, %c0_i32_0, %c0_i32_1 : i32, i32, i32
  }
  func.func @transform_6(%arg0: i32) -> (i32, i32) {
    %c0_i32 = arith.constant 0 : i32
    %c0_i32_0 = arith.constant 0 : i32
    %c0_i32_1 = arith.constant 0 : i32
    return %c0_i32, %c0_i32_0 : i32, i32
  }
  func.func @transform_7(%arg0: i32) -> (i32, i32, i32) {
    %c0_i32 = arith.constant 0 : i32
    %c0_i32_0 = arith.constant 0 : i32
    %c0_i32_1 = arith.constant 0 : i32
    %c0_i32_2 = arith.constant 0 : i32
    return %c0_i32, %c0_i32_0, %c0_i32_1 : i32, i32, i32
  }
  func.func @transform_8(%arg0: i32) -> (i32, i32, i32) {
    %c0_i32 = arith.constant 0 : i32
    %c0_i32_0 = arith.constant 0 : i32
    %c0_i32_1 = arith.constant 0 : i32
    %c0_i32_2 = arith.constant 0 : i32
    return %c0_i32, %c0_i32_0, %c0_i32_1 : i32, i32, i32
  }
  func.func @transform_9(%arg0: i32) -> (i32, i32, i32) {
    %c0_i32 = arith.constant 0 : i32
    %c0_i32_0 = arith.constant 0 : i32
    %c0_i32_1 = arith.constant 0 : i32
    %c0_i32_2 = arith.constant 0 : i32
    return %c0_i32, %c0_i32_0, %c0_i32_1 : i32, i32, i32
  }
  func.func @transform_10(%arg0: i32) -> (i32, i32) {
    %c0_i32 = arith.constant 0 : i32
    %c0_i32_0 = arith.constant 0 : i32
    %c0_i32_1 = arith.constant 0 : i32
    return %c0_i32, %c0_i32_0 : i32, i32
  }
  func.func @transform_11(%arg0: i32) -> (i32, i32, i32) {
    %c0_i32 = arith.constant 0 : i32
    %c0_i32_0 = arith.constant 0 : i32
    %c0_i32_1 = arith.constant 0 : i32
    %c0_i32_2 = arith.constant 0 : i32
    return %c0_i32, %c0_i32_0, %c0_i32_1 : i32, i32, i32
  }
  func.func @transform_12(%arg0: i32) -> (i32, i32) {
    %c0_i32 = arith.constant 0 : i32
    %c0_i32_0 = arith.constant 0 : i32
    %c0_i32_1 = arith.constant 0 : i32
    return %c0_i32, %c0_i32_0 : i32, i32
  }
  func.func @transform_13(%arg0: i32) -> (i32, i32) {
    %c0_i32 = arith.constant 0 : i32
    %c0_i32_0 = arith.constant 0 : i32
    %c0_i32_1 = arith.constant 0 : i32
    return %c0_i32, %c0_i32_0 : i32, i32
  }
  func.func @transform_14(%arg0: i32) -> (i32, i32) {
    %c0_i32 = arith.constant 0 : i32
    %c0_i32_0 = arith.constant 0 : i32
    %c0_i32_1 = arith.constant 0 : i32
    return %c0_i32, %c0_i32_0 : i32, i32
  }
  func.func @transform_15(%arg0: i32) -> (i32, i32) {
    %c0_i32 = arith.constant 0 : i32
    %c0_i32_0 = arith.constant 0 : i32
    return %arg0, %c0_i32 : i32, i32
  }
  func.func @transform_16(%arg0: i32) -> (i32, i32) {
    %c0_i32 = arith.constant 0 : i32
    %c0_i32_0 = arith.constant 0 : i32
    return %arg0, %c0_i32 : i32, i32
  }
}

</mosaic_0001>

<llo_original>
// kernel: net_forward.1
$region0: #{net_forward.1}
  #allocation0 [shape = 'u32[]', space=smem, size = 0x4, offset = 0x4, fixed_abs, tag = 'smem constant byte address 0x4 - core index']
  #allocation1 [shape = 'u32[144,128]{1,0:T(1,128)}', space=vmem, size = 0x12000, scoped, tag = 'internal scratch']
  #allocation2 [shape = 'f32[2,10,17,32]{3,2,1,0:T(8,128)}', space=vmem, size = 0x3c000, scoped, tag = 'scratch operand']
  #allocation3 [shape = 'f32[2,10,17,64]{3,2,1,0:T(8,128)}', space=vmem, size = 0x3c000, scoped, tag = 'scratch operand']
  #allocation4 [shape = 'f32[1,1]{1,0:T(1,128)S(1)}', space=vmem, size = 0x200, scoped, tag = 'scoped memory for net_forward.1']
  %s0 = inlined_call_operand.vmem [shape: f32[2,10,17,4], index: 0, kind: input, shape index: {}]
  %s1 = inlined_call_operand.vmem [shape: bf16[9,4,32], index: 1, kind: input, shape index: {}]
  %s2 = inlined_call_operand.vmem [shape: f32[1,32], index: 2, kind: input, shape index: {}]
  %s3 = inlined_call_operand.vmem [shape: bf16[9,32,64], index: 3, kind: input, shape index: {}]
  %s4 = inlined_call_operand.vmem [shape: f32[1,64], index: 4, kind: input, shape index: {}]
  %s5 = inlined_call_operand.vmem [shape: bf16[9,64,128], index: 5, kind: input, shape index: {}]
  %s6 = inlined_call_operand.vmem [shape: f32[1,128], index: 6, kind: input, shape index: {}]
  %s7 = inlined_call_operand.vmem [shape: f32[6,1,128], index: 7, kind: input, shape index: {}]
  %s8 = inlined_call_operand.vmem [shape: f32[6,1,64], index: 8, kind: input, shape index: {}]
  %s9 = inlined_call_operand.vmem [shape: bf16[4,64,64], index: 9, kind: input, shape index: {}]
  %s10 = inlined_call_operand.vmem [shape: f32[1,64], index: 10, kind: input, shape index: {}]
  %s11 = inlined_call_operand.vmem [shape: bf16[2,64,64], index: 11, kind: input, shape index: {}]
  %s12 = inlined_call_operand.vmem [shape: f32[1,64], index: 12, kind: input, shape index: {}]
  %s13 = inlined_call_operand.vmem [shape: f32[1,64], index: 13, kind: input, shape index: {}]
  %s14 = inlined_call_operand.<no memory space> [shape: f32[1,1], index: 14, kind: input, shape index: {}]
  %s15 = inlined_call_operand.hbm [shape: f32[2,64], index: 15, kind: output, shape index: {0}]
  %s16 = inlined_call_operand.vmem [shape: f32[2,1], index: 16, kind: output, shape index: {1}]
  %17 = xla_tuple %s15, %s16
  %s18 = sld [smem:[#allocation0]]
  $region78: #{net_forward.1} parent=0
    _
  %s20 = ssub.s32 1, %s18
  %s21 = scalar_select 0, %s20, %s18
  %v22 = vstv %s14
  %23 = vst [vmem:[#allocation4] sm:$0x1] %v22
  $region1: #{net_forward.1} parent=0
    #allocation5 [shape = 'u8[1024]{0}', space=vmem, size = 0x400, scoped, tag = 'output window, operand 0, single buffered']
    #allocation6 [shape = 's32[1]{0}', space=sflag, size = 0x4, scoped, tag = 'scoped memory for net_forward.1']
    %24 = vsyncpa [#allocation6], 0
    // Predicated region
    $region2: #{net_forward.1} parent=1 // pred_check
      _
    $region3: #{net_forward.1} parent=1 // pred_check_branch
      %26 = sbr.rel (0) target = $region5
    $region4: #{net_forward.1} parent=1 // pred_region
      _
    $region5: #{net_forward.1} parent=1 // pred_fallthru
      _
    // Predicated region
    $region6: #{net_forward.1} parent=1 // pred_check
      _
    $region7: #{net_forward.1} parent=1 // pred_check_branch
      %28 = sbr.rel (0) target = $region9
    $region8: #{net_forward.1} parent=1 // pred_region
      _
    $region9: #{net_forward.1} parent=1 // pred_fallthru
      _
    // Predicated region
    $region10: #{net_forward.1} parent=1 // pred_check
      _
    $region11: #{net_forward.1} parent=1 // pred_check_branch
      %30 = sbr.rel (0) target = $region13
    $region12: #{net_forward.1} parent=1 // pred_region
      _
    $region13: #{net_forward.1} parent=1 // pred_fallthru
      _
    // Predicated region
    $region14: #{net_forward.1} parent=1 // pred_check
      _
    $region15: #{net_forward.1} parent=1 // pred_check_branch
      %32 = sbr.rel (0) target = $region17
    $region16: #{net_forward.1} parent=1 // pred_region
      _
    $region17: #{net_forward.1} parent=1 // pred_fallthru
      _
    // Predicated region
    $region18: #{net_forward.1} parent=1 // pred_check
      _
    $region19: #{net_forward.1} parent=1 // pred_check_branch
      %34 = sbr.rel (0) target = $region21
    $region20: #{net_forward.1} parent=1 // pred_region
      _
    $region21: #{net_forward.1} parent=1 // pred_fallthru
      _
    // Predicated region
    $region22: #{net_forward.1} parent=1 // pred_check
      _
    $region23: #{net_forward.1} parent=1 // pred_check_branch
      %36 = sbr.rel (0) target = $region25
    $region24: #{net_forward.1} parent=1 // pred_region
      _
    $region25: #{net_forward.1} parent=1 // pred_fallthru
      _
    // Predicated region
    $region26: #{net_forward.1} parent=1 // pred_check
      _
    $region27: #{net_forward.1} parent=1 // pred_check_branch
      %38 = sbr.rel (0) target = $region29
    $region28: #{net_forward.1} parent=1 // pred_region
      _
    $region29: #{net_forward.1} parent=1 // pred_fallthru
      _
    // Predicated region
    $region30: #{net_forward.1} parent=1 // pred_check
      _
    $region31: #{net_forward.1} parent=1 // pred_check_branch
      %40 = sbr.rel (0) target = $region33
    $region32: #{net_forward.1} parent=1 // pred_region
      _
    $region33: #{net_forward.1} parent=1 // pred_fallthru
      _
    // Predicated region
    $region34: #{net_forward.1} parent=1 // pred_check
      _
    $region35: #{net_forward.1} parent=1 // pred_check_branch
      %42 = sbr.rel (0) target = $region37
    $region36: #{net_forward.1} parent=1 // pred_region
      _
    $region37: #{net_forward.1} parent=1 // pred_fallthru
      _
    // Predicated region
    $region38: #{net_forward.1} parent=1 // pred_check
      _
    $region39: #{net_forward.1} parent=1 // pred_check_branch
      %44 = sbr.rel (0) target = $region41
    $region40: #{net_forward.1} parent=1 // pred_region
      _
    $region41: #{net_forward.1} parent=1 // pred_fallthru
      _
    // Predicated region
    $region42: #{net_forward.1} parent=1 // pred_check
      _
    $region43: #{net_forward.1} parent=1 // pred_check_branch
      %46 = sbr.rel (0) target = $region45
    $region44: #{net_forward.1} parent=1 // pred_region
      _
    $region45: #{net_forward.1} parent=1 // pred_fallthru
      _
    // Predicated region
    $region46: #{net_forward.1} parent=1 // pred_check
      _
    $region47: #{net_forward.1} parent=1 // pred_check_branch
      %48 = sbr.rel (0) target = $region49
    $region48: #{net_forward.1} parent=1 // pred_region
      _
    $region49: #{net_forward.1} parent=1 // pred_fallthru
      _
    // Predicated region
    $region50: #{net_forward.1} parent=1 // pred_check
      _
    $region51: #{net_forward.1} parent=1 // pred_check_branch
      %50 = sbr.rel (0) target = $region53
    $region52: #{net_forward.1} parent=1 // pred_region
      _
    $region53: #{net_forward.1} parent=1 // pred_fallthru
      _
    // Predicated region
    $region54: #{net_forward.1} parent=1 // pred_check
      _
    $region55: #{net_forward.1} parent=1 // pred_check_branch
      %52 = sbr.rel (0) target = $region57
    $region56: #{net_forward.1} parent=1 // pred_region
      _
    $region57: #{net_forward.1} parent=1 // pred_fallthru
      _
    // Predicated region
    $region58: #{net_forward.1} parent=1 // pred_check
      _
    $region59: #{net_forward.1} parent=1 // pred_check_branch
      %54 = sbr.rel (0) target = $region61
    $region60: #{net_forward.1} parent=1 // pred_region
      _
    $region61: #{net_forward.1} parent=1 // pred_fallthru
      _
    %v56 = vld [vmem:[%s0 + $0x7] sm:$0xff]
    %v57 = vld [vmem:[%s0 + $0x1f] sm:$0xff]
    %v58 = vld [vmem:[%s0 + $0x37] sm:$0xff]
    %v59 = vld [vmem:[%s0 + $0x4f] sm:$0xff]
    %v60 = vld [vmem:[%s0 + $0x67] sm:$0xff]
    %v61 = vld [vmem:[%s0 + $0x7f] sm:$0xff]
    %v62 = vld [vmem:[%s0 + $0x97] sm:$0xff]
    %v63 = vld [vmem:[%s0 + $0xaf] sm:$0xff]
    %v64 = vld [vmem:[%s0 + $0xf7] sm:$0xff]
    %v65 = vld [vmem:[%s0 + $0x10f] sm:$0xff]
    %v66 = vld [vmem:[%s0 + $0x127] sm:$0xff]
    %v67 = vld [vmem:[%s0 + $0x13f] sm:$0xff]
    %v68 = vld [vmem:[%s0 + $0x157] sm:$0xff]
    %v69 = vld [vmem:[%s0 + $0x16f] sm:$0xff]
    %v70 = vld [vmem:[%s0 + $0x187] sm:$0xff]
    %v71 = vld [vmem:[%s0 + $0x19f] sm:$0xff]
    %v72 = vpack.c.bf16 %v57, %v56
    %v73 = vpack.c.bf16 %v59, %v58
    %v74 = vpack.c.bf16 %v61, %v60
    %v75 = vpack.c.bf16 %v63, %v62
    %v76 = vpack.c.bf16 %v65, %v64
    %v77 = vpack.c.bf16 %v67, %v66
    %v78 = vpack.c.bf16 %v69, %v68
    %v79 = vpack.c.bf16 %v71, %v70
    %v80 = vld [vmem:[%s1] sm:$0x3]
    %v81 = vld [vmem:[%s0 + $0x8] sm:$0xff]
    %v82 = vld [vmem:[%s0 + $0x20] sm:$0xff]
    %v83 = vld [vmem:[%s0 + $0x38] sm:$0xff]
    %v84 = vld [vmem:[%s0 + $0x50] sm:$0xff]
    %v85 = vld [vmem:[%s0 + $0x68] sm:$0xff]
    %v86 = vld [vmem:[%s0 + $0x80] sm:$0xff]
    %v87 = vld [vmem:[%s0 + $0x98] sm:$0xff]
    %v88 = vld [vmem:[%s0 + $0xb0] sm:$0xff]
    %v89 = vld [vmem:[%s0 + $0xf8] sm:$0xff]
    %v90 = vld [vmem:[%s0 + $0x110] sm:$0xff]
    %v91 = vld [vmem:[%s0 + $0x128] sm:$0xff]
    %v92 = vld [vmem:[%s0 + $0x140] sm:$0xff]
    %v93 = vld [vmem:[%s0 + $0x158] sm:$0xff]
    %v94 = vld [vmem:[%s0 + $0x170] sm:$0xff]
    %v95 = vld [vmem:[%s0 + $0x188] sm:$0xff]
    %v96 = vld [vmem:[%s0 + $0x1a0] sm:$0xff]
    %v97 = vpack.c.bf16 %v82, %v81
    %v98 = vpack.c.bf16 %v84, %v83
    %v99 = vpack.c.bf16 %v86, %v85
    %v100 = vpack.c.bf16 %v88, %v87
    %v101 = vpack.c.bf16 %v90, %v89
    %v102 = vpack.c.bf16 %v92, %v91
    %v103 = vpack.c.bf16 %v94, %v93
    %v104 = vpack.c.bf16 %v96, %v95
    %s105 = scalar_lea.vmem %s1, 2
    %v106 = vld [vmem:[%s105] sm:$0x3]
    %vm107 = vcmask 31744
    %v109 = vsel %vm107, %v97, 0
    %v112 = vsel %vm107, %v98, 0
    %v115 = vsel %vm107, %v99, 0
    %v118 = vsel %vm107, %v100, 0
    %v121 = vsel %vm107, %v101, 0
    %v124 = vsel %vm107, %v102, 0
    %v127 = vsel %vm107, %v103, 0
    %v130 = vsel %vm107, %v104, 0
    %vm132 = vcmask 1041408
    %v134 = vsel %vm132, %v106, 0
    %136 = vmatprep.subr.bf16.mxu0 0
    %137 = vmatpush1.bf16.msra.mxu0 0
    %138 = vmatprep.subr.bf16.mxu0 0
    %139 = vmatpush1.bf16.msra.mxu0 0
    %140 = vmatprep.subr.bf16.mxu0 0
    %141 = vmatpush1.bf16.msra.mxu0 0
    %142 = vmatprep.subr.bf16.mxu0 0
    %143 = vmatpush1.bf16.msra.mxu0 0
    %144 = vmatprep.subr.bf16.mxu0 0
    %145 = vmatpush1.bf16.msra.mxu0 0
    %146 = vmatprep.subr.bf16.mxu0 0
    %147 = vmatpush1.bf16.msra.mxu0 0
    %148 = vmatprep.subr.bf16.mxu0 0
    %149 = vmatpush1.bf16.msra.mxu0 0
    %150 = vmatprep.subr.bf16.mxu0 0
    %151 = vmatpush1.bf16.msra.mxu0 %v134
    %152 = vmatprep.subr.bf16.mxu0 0
    %153 = vmatpush2.bf16.msra.mxu0 0
    %154 = vmatprep.subr.bf16.mxu0 0
    %155 = vmatpush2.bf16.msra.mxu0 0
    %156 = vmatprep.subr.bf16.mxu0 0
    %157 = vmatpush2.bf16.msra.mxu0 0
    %158 = vmatprep.subr.bf16.mxu0 0
    %159 = vmatpush2.bf16.msra.mxu0 0
    %160 = vmatprep.subr.bf16.mxu0 0
    %161 = vmatpush2.bf16.msra.mxu0 0
    %162 = vmatprep.subr.bf16.mxu0 0
    %163 = vmatpush2.bf16.msra.mxu0 0
    %164 = vmatprep.subr.bf16.mxu0 0
    %165 = vmatpush2.bf16.msra.mxu0 0
    %166 = vmatprep.subr.bf16.mxu0 0
    %167 = vmatpush2.bf16.msra.mxu0 0
    %168 = vmatprep.mubr.bf16.mxu0 0
    %169 = vmatmul.mubr.bf16.gmra.mxu0 %v109
    %v170 = vpop.f32.mrf.mxu0
    %v171 = vadd.f32 0.0, %v170
    %v172 = vpop.f32.mrf.mxu0
    %v173 = vpop.f32.mrf.mxu0
    %v174 = vadd.f32 0.0, %v173
    %v175 = vpop.f32.mrf.mxu0
    %176 = vmatprep.mubr.bf16.mxu0 0
    %177 = vmatmul.mubr.bf16.gmra.mxu0 %v112
    %v178 = vpop.f32.mrf.mxu0
    %v179 = vadd.f32 0.0, %v178
    %v180 = vpop.f32.mrf.mxu0
    %v181 = vpop.f32.mrf.mxu0
    %v182 = vadd.f32 0.0, %v181
    %v183 = vpop.f32.mrf.mxu0
    %184 = vmatprep.mubr.bf16.mxu0 0
    %185 = vmatmul.mubr.bf16.gmra.mxu0 %v115
    %v186 = vpop.f32.mrf.mxu0
    %v187 = vadd.f32 0.0, %v186
    %v188 = vpop.f32.mrf.mxu0
    %v189 = vpop.f32.mrf.mxu0
    %v190 = vadd.f32 0.0, %v189
    %v191 = vpop.f32.mrf.mxu0
    %192 = vmatprep.mubr.bf16.mxu0 0
    %193 = vmatmul.mubr.bf16.gmra.mxu0 %v118
    %v194 = vpop.f32.mrf.mxu0
    %v195 = vadd.f32 0.0, %v194
    %v196 = vpop.f32.mrf.mxu0
    %v197 = vpop.f32.mrf.mxu0
    %v198 = vadd.f32 0.0, %v197
    %v199 = vpop.f32.mrf.mxu0
    %200 = vmatprep.mubr.bf16.mxu0 0
    %201 = vmatmul.mubr.bf16.gmra.mxu0 %v121
    %v202 = vpop.f32.mrf.mxu0
    %v203 = vadd.f32 0.0, %v202
    %v204 = vpop.f32.mrf.mxu0
    %v205 = vpop.f32.mrf.mxu0
    %v206 = vadd.f32 0.0, %v205
    %v207 = vpop.f32.mrf.mxu0
    %208 = vmatprep.mubr.bf16.mxu0 0
    %209 = vmatmul.mubr.bf16.gmra.mxu0 %v124
    %v210 = vpop.f32.mrf.mxu0
    %v211 = vadd.f32 0.0, %v210
    %v212 = vpop.f32.mrf.mxu0
    %v213 = vpop.f32.mrf.mxu0
    %v214 = vadd.f32 0.0, %v213
    %v215 = vpop.f32.mrf.mxu0
    %216 = vmatprep.mubr.bf16.mxu0 0
    %217 = vmatmul.mubr.bf16.gmra.mxu0 %v127
    %v218 = vpop.f32.mrf.mxu0
    %v219 = vadd.f32 0.0, %v218
    %v220 = vpop.f32.mrf.mxu0
    %v221 = vpop.f32.mrf.mxu0
    %v222 = vadd.f32 0.0, %v221
    %v223 = vpop.f32.mrf.mxu0
    %224 = vmatprep.mubr.bf16.mxu0 0
    %225 = vmatmul.mubr.bf16.gmra.mxu0 %v130
    %v226 = vpop.f32.mrf.mxu0
    %v227 = vadd.f32 0.0, %v226
    %v228 = vpop.f32.mrf.mxu0
    %v229 = vpop.f32.mrf.mxu0
    %v230 = vadd.f32 0.0, %v229
    %v231 = vpop.f32.mrf.mxu0
    %232 = vdwg.mxu0
    %v234 = vsel %vm107, %v72, 0
    %v237 = vsel %vm107, %v73, 0
    %v240 = vsel %vm107, %v74, 0
    %v243 = vsel %vm107, %v75, 0
    %v246 = vsel %vm107, %v76, 0
    %v249 = vsel %vm107, %v77, 0
    %v252 = vsel %vm107, %v78, 0
    %v255 = vsel %vm107, %v79, 0
    %v258 = vsel %vm132, %v80, 0
    %260 = vmatprep.subr.bf16.mxu0 0
    %261 = vmatpush1.bf16.msra.mxu0 0
    %262 = vmatprep.subr.bf16.mxu0 0
    %263 = vmatpush1.bf16.msra.mxu0 0
    %264 = vmatprep.subr.bf16.mxu0 0
    %265 = vmatpush1.bf16.msra.mxu0 0
    %266 = vmatprep.subr.bf16.mxu0 0
    %267 = vmatpush1.bf16.msra.mxu0 0
    %268 = vmatprep.subr.bf16.mxu0 0
    %269 = vmatpush1.bf16.msra.mxu0 0
    %270 = vmatprep.subr.bf16.mxu0 0
    %271 = vmatpush1.bf16.msra.mxu0 0
    %272 = vmatprep.subr.bf16.mxu0 0
    %273 = vmatpush1.bf16.msra.mxu0 0
    %274 = vmatprep.subr.bf16.mxu0 0
    %275 = vmatpush1.bf16.msra.mxu0 %v258
    %276 = vmatprep.subr.bf16.mxu0 0
    %277 = vmatpush2.bf16.msra.mxu0 0
    %278 = vmatprep.subr.bf16.mxu0 0
    %279 = vmatpush2.bf16.msra.mxu0 0
    %280 = vmatprep.subr.bf16.mxu0 0
    %281 = vmatpush2.bf16.msra.mxu0 0
    %282 = vmatprep.subr.bf16.mxu0 0
    %283 = vmatpush2.bf16.msra.mxu0 0
    %284 = vmatprep.subr.bf16.mxu0 0
    %285 = vmatpush2.bf16.msra.mxu0 0
    %286 = vmatprep.subr.bf16.mxu0 0
    %287 = vmatpush2.bf16.msra.mxu0 0
    %288 = vmatprep.subr.bf16.mxu0 0
    %289 = vmatpush2.bf16.msra.mxu0 0
    %290 = vmatprep.subr.bf16.mxu0 0
    %291 = vmatpush2.bf16.msra.mxu0 0
    %292 = vmatprep.mubr.bf16.mxu0 0
    %293 = vmatmul.mubr.bf16.gmra.mxu0 %v234
    %v294 = vpop.f32.mrf.mxu0
    %v295 = vadd.f32 %v171, %v294
    %v296 = vpop.f32.mrf.mxu0
    %v297 = vpop.f32.mrf.mxu0
    %v298 = vadd.f32 %v174, %v297
    %v299 = vpop.f32.mrf.mxu0
    %300 = vmatprep.mubr.bf16.mxu0 0
    %301 = vmatmul.mubr.bf16.gmra.mxu0 %v237
    %v302 = vpop.f32.mrf.mxu0
    %v303 = vadd.f32 %v179, %v302
    %v304 = vpop.f32.mrf.mxu0
    %v305 = vpop.f32.mrf.mxu0
    %v306 = vadd.f32 %v182, %v305
    %v307 = vpop.f32.mrf.mxu0
    %308 = vmatprep.mubr.bf16.mxu0 0
    %309 = vmatmul.mubr.bf16.gmra.mxu0 %v240
    %v310 = vpop.f32.mrf.mxu0
    %v311 = vadd.f32 %v187, %v310
    %v312 = vpop.f32.mrf.mxu0
    %v313 = vpop.f32.mrf.mxu0
    %v314 = vadd.f32 %v190, %v313
    %v315 = vpop.f32.mrf.mxu0
    %316 = vmatprep.mubr.bf16.mxu0 0
    %317 = vmatmul.mubr.bf16.gmra.mxu0 %v243
    %v318 = vpop.f32.mrf.mxu0
    %v319 = vadd.f32 %v195, %v318
    %v320 = vpop.f32.mrf.mxu0
    %v321 = vpop.f32.mrf.mxu0
    %v322 = vadd.f32 %v198, %v321
    %v323 = vpop.f32.mrf.mxu0
    %324 = vmatprep.mubr.bf16.mxu0 0
    %325 = vmatmul.mubr.bf16.gmra.mxu0 %v246
    %v326 = vpop.f32.mrf.mxu0
    %v327 = vadd.f32 %v203, %v326
    %v328 = vpop.f32.mrf.mxu0
    %v329 = vpop.f32.mrf.mxu0
    %v330 = vadd.f32 %v206, %v329
    %v331 = vpop.f32.mrf.mxu0
    %332 = vmatprep.mubr.bf16.mxu0 0
    %333 = vmatmul.mubr.bf16.gmra.mxu0 %v249
    %v334 = vpop.f32.mrf.mxu0
    %v335 = vadd.f32 %v211, %v334
    %v336 = vpop.f32.mrf.mxu0
    %v337 = vpop.f32.mrf.mxu0
    %v338 = vadd.f32 %v214, %v337
    %v339 = vpop.f32.mrf.mxu0
    %340 = vmatprep.mubr.bf16.mxu0 0
    %341 = vmatmul.mubr.bf16.gmra.mxu0 %v252
    %v342 = vpop.f32.mrf.mxu0
    %v343 = vadd.f32 %v219, %v342
    %v344 = vpop.f32.mrf.mxu0
    %v345 = vpop.f32.mrf.mxu0
    %v346 = vadd.f32 %v222, %v345
    %v347 = vpop.f32.mrf.mxu0
    %348 = vmatprep.mubr.bf16.mxu0 0
    %349 = vmatmul.mubr.bf16.gmra.mxu0 %v255
    %v350 = vpop.f32.mrf.mxu0
    %v351 = vadd.f32 %v227, %v350
    %v352 = vpop.f32.mrf.mxu0
    %v353 = vpop.f32.mrf.mxu0
    %v354 = vadd.f32 %v230, %v353
    %v355 = vpop.f32.mrf.mxu0
    %356 = vdwg.mxu0
    %v357 = vld [vmem:[%s0 + $0x9] sm:$0xff]
    %v358 = vld [vmem:[%s0 + $0x21] sm:$0xff]
    %v359 = vld [vmem:[%s0 + $0x39] sm:$0xff]
    %v360 = vld [vmem:[%s0 + $0x51] sm:$0xff]
    %v361 = vld [vmem:[%s0 + $0x69] sm:$0xff]
    %v362 = vld [vmem:[%s0 + $0x81] sm:$0xff]
    %v363 = vld [vmem:[%s0 + $0x99] sm:$0xff]
    %v364 = vld [vmem:[%s0 + $0xb1] sm:$0xff]
    %v365 = vld [vmem:[%s0 + $0xf9] sm:$0xff]
    %v366 = vld [vmem:[%s0 + $0x111] sm:$0xff]
    %v367 = vld [vmem:[%s0 + $0x129] sm:$0xff]
    %v368 = vld [vmem:[%s0 + $0x141] sm:$0xff]
    %v369 = vld [vmem:[%s0 + $0x159] sm:$0xff]
    %v370 = vld [vmem:[%s0 + $0x171] sm:$0xff]
    %v371 = vld [vmem:[%s0 + $0x189] sm:$0xff]
    %v372 = vld [vmem:[%s0 + $0x1a1] sm:$0xff]
    %v373 = vpack.c.bf16 %v358, %v357
    %v374 = vpack.c.bf16 %v360, %v359
    %v375 = vpack.c.bf16 %v362, %v361
    %v376 = vpack.c.bf16 %v364, %v363
    %v377 = vpack.c.bf16 %v366, %v365
    %v378 = vpack.c.bf16 %v368, %v367
    %v379 = vpack.c.bf16 %v370, %v369
    %v380 = vpack.c.bf16 %v372, %v371
    %s381 = scalar_lea.vmem %s1, 4
    %v382 = vld [vmem:[%s381] sm:$0x3]
    %v384 = vsel %vm107, %v373, 0
    %v387 = vsel %vm107, %v374, 0
    %v390 = vsel %vm107, %v375, 0
    %v393 = vsel %vm107, %v376, 0
    %v396 = vsel %vm107, %v377, 0
    %v399 = vsel %vm107, %v378, 0
    %v402 = vsel %vm107, %v379, 0
    %v405 = vsel %vm107, %v380, 0
    %v408 = vsel %vm132, %v382, 0
    %410 = vmatprep.subr.bf16.mxu0 0
    %411 = vmatpush1.bf16.msra.mxu0 0
    %412 = vmatprep.subr.bf16.mxu0 0
    %413 = vmatpush1.bf16.msra.mxu0 0
    %414 = vmatprep.subr.bf16.mxu0 0
    %415 = vmatpush1.bf16.msra.mxu0 0
    %416 = vmatprep.subr.bf16.mxu0 0
    %417 = vmatpush1.bf16.msra.mxu0 0
    %418 = vmatprep.subr.bf16.mxu0 0
    %419 = vmatpush1.bf16.msra.mxu0 0
    %420 = vmatprep.subr.bf16.mxu0 0
    %421 = vmatpush1.bf16.msra.mxu0 0
    %422 = vmatprep.subr.bf16.mxu0 0
    %423 = vmatpush1.bf16.msra.mxu0 0
    %424 = vmatprep.subr.bf16.mxu0 0
    %425 = vmatpush1.bf16.msra.mxu0 %v408
    %426 = vmatprep.subr.bf16.mxu0 0
    %427 = vmatpush2.bf16.msra.mxu0 0
    %428 = vmatprep.subr.bf16.mxu0 0
    %429 = vmatpush2.bf16.msra.mxu0 0
    %430 = vmatprep.subr.bf16.mxu0 0
    %431 = vmatpush2.bf16.msra.mxu0 0
    %432 = vmatprep.subr.bf16.mxu0 0
    %433 = vmatpush2.bf16.msra.mxu0 0
    %434 = vmatprep.subr.bf16.mxu0 0
    %435 = vmatpush2.bf16.msra.mxu0 0
    %436 = vmatprep.subr.bf16.mxu0 0
    %437 = vmatpush2.bf16.msra.mxu0 0
    %438 = vmatprep.subr.bf16.mxu0 0
    %439 = vmatpush2.bf16.msra.mxu0 0
    %440 = vmatprep.subr.bf16.mxu0 0
    %441 = vmatpush2.bf16.msra.mxu0 0
    %442 = vmatprep.mubr.bf16.mxu0 0
    %443 = vmatmul.mubr.bf16.gmra.mxu0 %v384
    %v444 = vpop.f32.mrf.mxu0
    %v445 = vadd.f32 0.0, %v444
    %v446 = vpop.f32.mrf.mxu0
    %v447 = vpop.f32.mrf.mxu0
    %v448 = vadd.f32 0.0, %v447
    %v449 = vpop.f32.mrf.mxu0
    %450 = vmatprep.mubr.bf16.mxu0 0
    %451 = vmatmul.mubr.bf16.gmra.mxu0 %v387
    %v452 = vpop.f32.mrf.mxu0
    %v453 = vadd.f32 0.0, %v452
    %v454 = vpop.f32.mrf.mxu0
    %v455 = vpop.f32.mrf.mxu0
    %v456 = vadd.f32 0.0, %v455
    %v457 = vpop.f32.mrf.mxu0
    %458 = vmatprep.mubr.bf16.mxu0 0
    %459 = vmatmul.mubr.bf16.gmra.mxu0 %v390
    %v460 = vpop.f32.mrf.mxu0
    %v461 = vadd.f32 0.0, %v460
    %v462 = vpop.f32.mrf.mxu0
    %v463 = vpop.f32.mrf.mxu0
    %v464 = vadd.f32 0.0, %v463
    %v465 = vpop.f32.mrf.mxu0
    %466 = vmatprep.mubr.bf16.mxu0 0
    %467 = vmatmul.mubr.bf16.gmra.mxu0 %v393
    %v468 = vpop.f32.mrf.mxu0
    %v469 = vadd.f32 0.0, %v468
    %v470 = vpop.f32.mrf.mxu0
    %v471 = vpop.f32.mrf.mxu0
    %v472 = vadd.f32 0.0, %v471
    %v473 = vpop.f32.mrf.mxu0
    %474 = vmatprep.mubr.bf16.mxu0 0
    %475 = vmatmul.mubr.bf16.gmra.mxu0 %v396
    %v476 = vpop.f32.mrf.mxu0
    %v477 = vadd.f32 0.0, %v476
    %v478 = vpop.f32.mrf.mxu0
    %v479 = vpop.f32.mrf.mxu0
    %v480 = vadd.f32 0.0, %v479
    %v481 = vpop.f32.mrf.mxu0
    %482 = vmatprep.mubr.bf16.mxu0 0
    %483 = vmatmul.mubr.bf16.gmra.mxu0 %v399
    %v484 = vpop.f32.mrf.mxu0
    %v485 = vadd.f32 0.0, %v484
    %v486 = vpop.f32.mrf.mxu0
    %v487 = vpop.f32.mrf.mxu0
    %v488 = vadd.f32 0.0, %v487
    %v489 = vpop.f32.mrf.mxu0
    %490 = vmatprep.mubr.bf16.mxu0 0
    %491 = vmatmul.mubr.bf16.gmra.mxu0 %v402
    %v492 = vpop.f32.mrf.mxu0
    %v493 = vadd.f32 0.0, %v492
    %v494 = vpop.f32.mrf.mxu0
    %v495 = vpop.f32.mrf.mxu0
    %v496 = vadd.f32 0.0, %v495
    %v497 = vpop.f32.mrf.mxu0
    %498 = vmatprep.mubr.bf16.mxu0 0
    %499 = vmatmul.mubr.bf16.gmra.mxu0 %v405
    %v500 = vpop.f32.mrf.mxu0
    %v501 = vadd.f32 0.0, %v500
    %v502 = vpop.f32.mrf.mxu0
    %v503 = vpop.f32.mrf.mxu0
    %v504 = vadd.f32 0.0, %v503
    %v505 = vpop.f32.mrf.mxu0
    %506 = vdwg.mxu0
    %v507 = vadd.f32 %v295, %v445
    %v508 = vadd.f32 %v298, %v448
    %v509 = vadd.f32 %v303, %v453
    %v510 = vadd.f32 %v306, %v456
    %v511 = vadd.f32 %v311, %v461
    %v512 = vadd.f32 %v314, %v464
    %v513 = vadd.f32 %v319, %v469
    %v514 = vadd.f32 %v322, %v472
    %v515 = vadd.f32 %v327, %v477
    %v516 = vadd.f32 %v330, %v480
    %v517 = vadd.f32 %v335, %v485
    %v518 = vadd.f32 %v338, %v488
    %v519 = vadd.f32 %v343, %v493
    %v520 = vadd.f32 %v346, %v496
    %v521 = vadd.f32 %v351, %v501
    %v522 = vadd.f32 %v354, %v504
    %s523 = scalar_lea.vmem %s0, 24
    %v524 = vld [vmem:[%s523 + $0x7] sm:$0xff]
    %v525 = vld [vmem:[%s523 + $0x1f] sm:$0xff]
    %v526 = vld [vmem:[%s523 + $0x37] sm:$0xff]
    %v527 = vld [vmem:[%s523 + $0x4f] sm:$0xff]
    %v528 = vld [vmem:[%s523 + $0x67] sm:$0xff]
    %v529 = vld [vmem:[%s523 + $0x7f] sm:$0xff]
    %v530 = vld [vmem:[%s523 + $0x97] sm:$0xff]
    %v531 = vld [vmem:[%s523 + $0xaf] sm:$0xff]
    %v532 = vld [vmem:[%s523 + $0xf7] sm:$0xff]
    %v533 = vld [vmem:[%s523 + $0x10f] sm:$0xff]
    %v534 = vld [vmem:[%s523 + $0x127] sm:$0xff]
    %v535 = vld [vmem:[%s523 + $0x13f] sm:$0xff]
    %v536 = vld [vmem:[%s523 + $0x157] sm:$0xff]
    %v537 = vld [vmem:[%s523 + $0x16f] sm:$0xff]
    %v538 = vld [vmem:[%s523 + $0x187] sm:$0xff]
    %v539 = vld [vmem:[%s523 + $0x19f] sm:$0xff]
    %v540 = vpack.c.bf16 %v525, %v524
    %v541 = vpack.c.bf16 %v527, %v526
    %v542 = vpack.c.bf16 %v529, %v528
    %v543 = vpack.c.bf16 %v531, %v530
    %v544 = vpack.c.bf16 %v533, %v532
    %v545 = vpack.c.bf16 %v535, %v534
    %v546 = vpack.c.bf16 %v537, %v536
    %v547 = vpack.c.bf16 %v539, %v538
    %s548 = scalar_lea.vmem %s1, 6
    %v549 = vld [vmem:[%s548] sm:$0x3]
    %v551 = vsel %vm107, %v540, 0
    %v554 = vsel %vm107, %v541, 0
    %v557 = vsel %vm107, %v542, 0
    %v560 = vsel %vm107, %v543, 0
    %v563 = vsel %vm107, %v544, 0
    %v566 = vsel %vm107, %v545, 0
    %v569 = vsel %vm107, %v546, 0
    %v572 = vsel %vm107, %v547, 0
    %v575 = vsel %vm132, %v549, 0
    %577 = vmatprep.subr.bf16.mxu0 0
    %578 = vmatpush1.bf16.msra.mxu0 0
    %579 = vmatprep.subr.bf16.mxu0 0
    %580 = vmatpush1.bf16.msra.mxu0 0
    %581 = vmatprep.subr.bf16.mxu0 0
    %582 = vmatpush1.bf16.msra.mxu0 0
    %583 = vmatprep.subr.bf16.mxu0 0
    %584 = vmatpush1.bf16.msra.mxu0 0
    %585 = vmatprep.subr.bf16.mxu0 0
    %586 = vmatpush1.bf16.msra.mxu0 0
    %587 = vmatprep.subr.bf16.mxu0 0
    %588 = vmatpush1.bf16.msra.mxu0 0
    %589 = vmatprep.subr.bf16.mxu0 0
    %590 = vmatpush1.bf16.msra.mxu0 0
    %591 = vmatprep.subr.bf16.mxu0 0
    %592 = vmatpush1.bf16.msra.mxu0 %v575
    %593 = vmatprep.subr.bf16.mxu0 0
    %594 = vmatpush2.bf16.msra.mxu0 0
    %595 = vmatprep.subr.bf16.mxu0 0
    %596 = vmatpush2.bf16.msra.mxu0 0
    %597 = vmatprep.subr.bf16.mxu0 0
    %598 = vmatpush2.bf16.msra.mxu0 0
    %599 = vmatprep.subr.bf16.mxu0 0
    %600 = vmatpush2.bf16.msra.mxu0 0
    %601 = vmatprep.subr.bf16.mxu0 0
    %602 = vmatpush2.bf16.msra.mxu0 0
    %603 = vmatprep.subr.bf16.mxu0 0
    %604 = vmatpush2.bf16.msra.mxu0 0
    %605 = vmatprep.subr.bf16.mxu0 0
    %606 = vmatpush2.bf16.msra.mxu0 0
    %607 = vmatprep.subr.bf16.mxu0 0
    %608 = vmatpush2.bf16.msra.mxu0 0
    %609 = vmatprep.mubr.bf16.mxu0 0
    %610 = vmatmul.mubr.bf16.gmra.mxu0 %v551
    %v611 = vpop.f32.mrf.mxu0
    %v612 = vadd.f32 0.0, %v611
    %v613 = vpop.f32.mrf.mxu0
    %v614 = vpop.f32.mrf.mxu0
    %v615 = vadd.f32 0.0, %v614
    %v616 = vpop.f32.mrf.mxu0
    %617 = vmatprep.mubr.bf16.mxu0 0
    %618 = vmatmul.mubr.bf16.gmra.mxu0 %v554
    %v619 = vpop.f32.mrf.mxu0
    %v620 = vadd.f32 0.0, %v619
    %v621 = vpop.f32.mrf.mxu0
    %v622 = vpop.f32.mrf.mxu0
    %v623 = vadd.f32 0.0, %v622
    %v624 = vpop.f32.mrf.mxu0
    %625 = vmatprep.mubr.bf16.mxu0 0
    %626 = vmatmul.mubr.bf16.gmra.mxu0 %v557
    %v627 = vpop.f32.mrf.mxu0
    %v628 = vadd.f32 0.0, %v627
    %v629 = vpop.f32.mrf.mxu0
    %v630 = vpop.f32.mrf.mxu0
    %v631 = vadd.f32 0.0, %v630
    %v632 = vpop.f32.mrf.mxu0
    %633 = vmatprep.mubr.bf16.mxu0 0
    %634 = vmatmul.mubr.bf16.gmra.mxu0 %v560
    %v635 = vpop.f32.mrf.mxu0
    %v636 = vadd.f32 0.0, %v635
    %v637 = vpop.f32.mrf.mxu0
    %v638 = vpop.f32.mrf.mxu0
    %v639 = vadd.f32 0.0, %v638
    %v640 = vpop.f32.mrf.mxu0
    %641 = vmatprep.mubr.bf16.mxu0 0
    %642 = vmatmul.mubr.bf16.gmra.mxu0 %v563
    %v643 = vpop.f32.mrf.mxu0
    %v644 = vadd.f32 0.0, %v643
    %v645 = vpop.f32.mrf.mxu0
    %v646 = vpop.f32.mrf.mxu0
    %v647 = vadd.f32 0.0, %v646
    %v648 = vpop.f32.mrf.mxu0
    %649 = vmatprep.mubr.bf16.mxu0 0
    %650 = vmatmul.mubr.bf16.gmra.mxu0 %v566
    %v651 = vpop.f32.mrf.mxu0
    %v652 = vadd.f32 0.0, %v651
    %v653 = vpop.f32.mrf.mxu0
    %v654 = vpop.f32.mrf.mxu0
    %v655 = vadd.f32 0.0, %v654
    %v656 = vpop.f32.mrf.mxu0
    %657 = vmatprep.mubr.bf16.mxu0 0
    %658 = vmatmul.mubr.bf16.gmra.mxu0 %v569
    %v659 = vpop.f32.mrf.mxu0
    %v660 = vadd.f32 0.0, %v659
    %v661 = vpop.f32.mrf.mxu0
    %v662 = vpop.f32.mrf.mxu0
    %v663 = vadd.f32 0.0, %v662
    %v664 = vpop.f32.mrf.mxu0
    %665 = vmatprep.mubr.bf16.mxu0 0
    %666 = vmatmul.mubr.bf16.gmra.mxu0 %v572
    %v667 = vpop.f32.mrf.mxu0
    %v668 = vadd.f32 0.0, %v667
    %v669 = vpop.f32.mrf.mxu0
    %v670 = vpop.f32.mrf.mxu0
    %v671 = vadd.f32 0.0, %v670
    %v672 = vpop.f32.mrf.mxu0
    %673 = vdwg.mxu0
    %v674 = vadd.f32 %v507, %v612
    %v675 = vadd.f32 %v508, %v615
    %v676 = vadd.f32 %v509, %v620
    %v677 = vadd.f32 %v510, %v623
    %v678 = vadd.f32 %v511, %v628
    %v679 = vadd.f32 %v512, %v631
    %v680 = vadd.f32 %v513, %v636
    %v681 = vadd.f32 %v514, %v639
    %v682 = vadd.f32 %v515, %v644
    %v683 = vadd.f32 %v516, %v647
    %v684 = vadd.f32 %v517, %v652
    %v685 = vadd.f32 %v518, %v655
    %v686 = vadd.f32 %v519, %v660
    %v687 = vadd.f32 %v520, %v663
    %v688 = vadd.f32 %v521, %v668
    %v689 = vadd.f32 %v522, %v671
    %v690 = vld [vmem:[%s523 + $0x8] sm:$0xff]
    %v691 = vld [vmem:[%s523 + $0x20] sm:$0xff]
    %v692 = vld [vmem:[%s523 + $0x38] sm:$0xff]
    %v693 = vld [vmem:[%s523 + $0x50] sm:$0xff]
    %v694 = vld [vmem:[%s523 + $0x68] sm:$0xff]
    %v695 = vld [vmem:[%s523 + $0x80] sm:$0xff]
    %v696 = vld [vmem:[%s523 + $0x98] sm:$0xff]
    %v697 = vld [vmem:[%s523 + $0xb0] sm:$0xff]
    %v698 = vld [vmem:[%s523 + $0xf8] sm:$0xff]
    %v699 = vld [vmem:[%s523 + $0x110] sm:$0xff]
    %v700 = vld [vmem:[%s523 + $0x128] sm:$0xff]
    %v701 = vld [vmem:[%s523 + $0x140] sm:$0xff]
    %v702 = vld [vmem:[%s523 + $0x158] sm:$0xff]
    %v703 = vld [vmem:[%s523 + $0x170] sm:$0xff]
    %v704 = vld [vmem:[%s523 + $0x188] sm:$0xff]
    %v705 = vld [vmem:[%s523 + $0x1a0] sm:$0xff]
    %v706 = vpack.c.bf16 %v691, %v690
    %v707 = vpack.c.bf16 %v693, %v692
    %v708 = vpack.c.bf16 %v695, %v694
    %v709 = vpack.c.bf16 %v697, %v696
    %v710 = vpack.c.bf16 %v699, %v698
    %v711 = vpack.c.bf16 %v701, %v700
    %v712 = vpack.c.bf16 %v703, %v702
    %v713 = vpack.c.bf16 %v705, %v704
    %s714 = scalar_lea.vmem %s1, 8
    %v715 = vld [vmem:[%s714] sm:$0x3]
    %v717 = vsel %vm107, %v706, 0
    %v720 = vsel %vm107, %v707, 0
    %v723 = vsel %vm107, %v708, 0
    %v726 = vsel %vm107, %v709, 0
    %v729 = vsel %vm107, %v710, 0
    %v732 = vsel %vm107, %v711, 0
    %v735 = vsel %vm107, %v712, 0
    %v738 = vsel %vm107, %v713, 0
    %v741 = vsel %vm132, %v715, 0
    %743 = vmatprep.subr.bf16.mxu0 0
    %744 = vmatpush1.bf16.msra.mxu0 0
    %745 = vmatprep.subr.bf16.mxu0 0
    %746 = vmatpush1.bf16.msra.mxu0 0
    %747 = vmatprep.subr.bf16.mxu0 0
    %748 = vmatpush1.bf16.msra.mxu0 0
    %749 = vmatprep.subr.bf16.mxu0 0
    %750 = vmatpush1.bf16.msra.mxu0 0
    %751 = vmatprep.subr.bf16.mxu0 0
    %752 = vmatpush1.bf16.msra.mxu0 0
    %753 = vmatprep.subr.bf16.mxu0 0
    %754 = vmatpush1.bf16.msra.mxu0 0
    %755 = vmatprep.subr.bf16.mxu0 0
    %756 = vmatpush1.bf16.msra.mxu0 0
    %757 = vmatprep.subr.bf16.mxu0 0
    %758 = vmatpush1.bf16.msra.mxu0 %v741
    %759 = vmatprep.subr.bf16.mxu0 0
    %760 = vmatpush2.bf16.msra.mxu0 0
    %761 = vmatprep.subr.bf16.mxu0 0
    %762 = vmatpush2.bf16.msra.mxu0 0
    %763 = vmatprep.subr.bf16.mxu0 0
    %764 = vmatpush2.bf16.msra.mxu0 0
    %765 = vmatprep.subr.bf16.mxu0 0
    %766 = vmatpush2.bf16.msra.mxu0 0
    %767 = vmatprep.subr.bf16.mxu0 0
    %768 = vmatpush2.bf16.msra.mxu0 0
    %769 = vmatprep.subr.bf16.mxu0 0
    %770 = vmatpush2.bf16.msra.mxu0 0
    %771 = vmatprep.subr.bf16.mxu0 0
    %772 = vmatpush2.bf16.msra.mxu0 0
    %773 = vmatprep.subr.bf16.mxu0 0
    %774 = vmatpush2.bf16.msra.mxu0 0
    %775 = vmatprep.mubr.bf16.mxu0 0
    %776 = vmatmul.mubr.bf16.gmra.mxu0 %v717
    %v777 = vpop.f32.mrf.mxu0
    %v778 = vadd.f32 0.0, %v777
    %v779 = vpop.f32.mrf.mxu0
    %v780 = vpop.f32.mrf.mxu0
    %v781 = vadd.f32 0.0, %v780
    %v782 = vpop.f32.mrf.mxu0
    %783 = vmatprep.mubr.bf16.mxu0 0
    %784 = vmatmul.mubr.bf16.gmra.mxu0 %v720
    %v785 = vpop.f32.mrf.mxu0
    %v786 = vadd.f32 0.0, %v785
    %v787 = vpop.f32.mrf.mxu0
    %v788 = vpop.f32.mrf.mxu0
    %v789 = vadd.f32 0.0, %v788
    %v790 = vpop.f32.mrf.mxu0
    %791 = vmatprep.mubr.bf16.mxu0 0
    %792 = vmatmul.mubr.bf16.gmra.mxu0 %v723
    %v793 = vpop.f32.mrf.mxu0
    %v794 = vadd.f32 0.0, %v793
    %v795 = vpop.f32.mrf.mxu0
    %v796 = vpop.f32.mrf.mxu0
    %v797 = vadd.f32 0.0, %v796
    %v798 = vpop.f32.mrf.mxu0
    %799 = vmatprep.mubr.bf16.mxu0 0
    %800 = vmatmul.mubr.bf16.gmra.mxu0 %v726
    %v801 = vpop.f32.mrf.mxu0
    %v802 = vadd.f32 0.0, %v801
    %v803 = vpop.f32.mrf.mxu0
    %v804 = vpop.f32.mrf.mxu0
    %v805 = vadd.f32 0.0, %v804
    %v806 = vpop.f32.mrf.mxu0
    %807 = vmatprep.mubr.bf16.mxu0 0
    %808 = vmatmul.mubr.bf16.gmra.mxu0 %v729
    %v809 = vpop.f32.mrf.mxu0
    %v810 = vadd.f32 0.0, %v809
    %v811 = vpop.f32.mrf.mxu0
    %v812 = vpop.f32.mrf.mxu0
    %v813 = vadd.f32 0.0, %v812
    %v814 = vpop.f32.mrf.mxu0
    %815 = vmatprep.mubr.bf16.mxu0 0
    %816 = vmatmul.mubr.bf16.gmra.mxu0 %v732
    %v817 = vpop.f32.mrf.mxu0
    %v818 = vadd.f32 0.0, %v817
    %v819 = vpop.f32.mrf.mxu0
    %v820 = vpop.f32.mrf.mxu0
    %v821 = vadd.f32 0.0, %v820
    %v822 = vpop.f32.mrf.mxu0
    %823 = vmatprep.mubr.bf16.mxu0 0
    %824 = vmatmul.mubr.bf16.gmra.mxu0 %v735
    %v825 = vpop.f32.mrf.mxu0
    %v826 = vadd.f32 0.0, %v825
    %v827 = vpop.f32.mrf.mxu0
    %v828 = vpop.f32.mrf.mxu0
    %v829 = vadd.f32 0.0, %v828
    %v830 = vpop.f32.mrf.mxu0
    %831 = vmatprep.mubr.bf16.mxu0 0
    %832 = vmatmul.mubr.bf16.gmra.mxu0 %v738
    %v833 = vpop.f32.mrf.mxu0
    %v834 = vadd.f32 0.0, %v833
    %v835 = vpop.f32.mrf.mxu0
    %v836 = vpop.f32.mrf.mxu0
    %v837 = vadd.f32 0.0, %v836
    %v838 = vpop.f32.mrf.mxu0
    %839 = vdwg.mxu0
    %v840 = vadd.f32 %v674, %v778
    %v841 = vadd.f32 %v675, %v781
    %v842 = vadd.f32 %v676, %v786
    %v843 = vadd.f32 %v677, %v789
    %v844 = vadd.f32 %v678, %v794
    %v845 = vadd.f32 %v679, %v797
    %v846 = vadd.f32 %v680, %v802
    %v847 = vadd.f32 %v681, %v805
    %v848 = vadd.f32 %v682, %v810
    %v849 = vadd.f32 %v683, %v813
    %v850 = vadd.f32 %v684, %v818
    %v851 = vadd.f32 %v685, %v821
    %v852 = vadd.f32 %v686, %v826
    %v853 = vadd.f32 %v687, %v829
    %v854 = vadd.f32 %v688, %v834
    %v855 = vadd.f32 %v689, %v837
    %v856 = vld [vmem:[%s523 + $0x9] sm:$0xff]
    %v857 = vld [vmem:[%s523 + $0x21] sm:$0xff]
    %v858 = vld [vmem:[%s523 + $0x39] sm:$0xff]
    %v859 = vld [vmem:[%s523 + $0x51] sm:$0xff]
    %v860 = vld [vmem:[%s523 + $0x69] sm:$0xff]
    %v861 = vld [vmem:[%s523 + $0x81] sm:$0xff]
    %v862 = vld [vmem:[%s523 + $0x99] sm:$0xff]
    %v863 = vld [vmem:[%s523 + $0xb1] sm:$0xff]
    %v864 = vld [vmem:[%s523 + $0xf9] sm:$0xff]
    %v865 = vld [vmem:[%s523 + $0x111] sm:$0xff]
    %v866 = vld [vmem:[%s523 + $0x129] sm:$0xff]
    %v867 = vld [vmem:[%s523 + $0x141] sm:$0xff]
    %v868 = vld [vmem:[%s523 + $0x159] sm:$0xff]
    %v869 = vld [vmem:[%s523 + $0x171] sm:$0xff]
    %v870 = vld [vmem:[%s523 + $0x189] sm:$0xff]
    %v871 = vld [vmem:[%s523 + $0x1a1] sm:$0xff]
    %v872 = vpack.c.bf16 %v857, %v856
    %v873 = vpack.c.bf16 %v859, %v858
    %v874 = vpack.c.bf16 %v861, %v860
    %v875 = vpack.c.bf16 %v863, %v862
    %v876 = vpack.c.bf16 %v865, %v864
    %v877 = vpack.c.bf16 %v867, %v866
    %v878 = vpack.c.bf16 %v869, %v868
    %v879 = vpack.c.bf16 %v871, %v870
    %s880 = scalar_lea.vmem %s1, 10
    %v881 = vld [vmem:[%s880] sm:$0x3]
    %v883 = vsel %vm107, %v872, 0
    %v886 = vsel %vm107, %v873, 0
    %v889 = vsel %vm107, %v874, 0
    %v892 = vsel %vm107, %v875, 0
    %v895 = vsel %vm107, %v876, 0
    %v898 = vsel %vm107, %v877, 0
    %v901 = vsel %vm107, %v878, 0
    %v904 = vsel %vm107, %v879, 0
    %v907 = vsel %vm132, %v881, 0
    %909 = vmatprep.subr.bf16.mxu0 0
    %910 = vmatpush1.bf16.msra.mxu0 0
    %911 = vmatprep.subr.bf16.mxu0 0
    %912 = vmatpush1.bf16.msra.mxu0 0
    %913 = vmatprep.subr.bf16.mxu0 0
    %914 = vmatpush1.bf16.msra.mxu0 0
    %915 = vmatprep.subr.bf16.mxu0 0
    %916 = vmatpush1.bf16.msra.mxu0 0
    %917 = vmatprep.subr.bf16.mxu0 0
    %918 = vmatpush1.bf16.msra.mxu0 0
    %919 = vmatprep.subr.bf16.mxu0 0
    %920 = vmatpush1.bf16.msra.mxu0 0
    %921 = vmatprep.subr.bf16.mxu0 0
    %922 = vmatpush1.bf16.msra.mxu0 0
    %923 = vmatprep.subr.bf16.mxu0 0
    %924 = vmatpush1.bf16.msra.mxu0 %v907
    %925 = vmatprep.subr.bf16.mxu0 0
    %926 = vmatpush2.bf16.msra.mxu0 0
    %927 = vmatprep.subr.bf16.mxu0 0
    %928 = vmatpush2.bf16.msra.mxu0 0
    %929 = vmatprep.subr.bf16.mxu0 0
    %930 = vmatpush2.bf16.msra.mxu0 0
    %931 = vmatprep.subr.bf16.mxu0 0
    %932 = vmatpush2.bf16.msra.mxu0 0
    %933 = vmatprep.subr.bf16.mxu0 0
    %934 = vmatpush2.bf16.msra.mxu0 0
    %935 = vmatprep.subr.bf16.mxu0 0
    %936 = vmatpush2.bf16.msra.mxu0 0
    %937 = vmatprep.subr.bf16.mxu0 0
    %938 = vmatpush2.bf16.msra.mxu0 0
    %939 = vmatprep.subr.bf16.mxu0 0
    %940 = vmatpush2.bf16.msra.mxu0 0
    %941 = vmatprep.mubr.bf16.mxu0 0
    %942 = vmatmul.mubr.bf16.gmra.mxu0 %v883
    %v943 = vpop.f32.mrf.mxu0
    %v944 = vadd.f32 0.0, %v943
    %v945 = vpop.f32.mrf.mxu0
    %v946 = vpop.f32.mrf.mxu0
    %v947 = vadd.f32 0.0, %v946
    %v948 = vpop.f32.mrf.mxu0
    %949 = vmatprep.mubr.bf16.mxu0 0
    %950 = vmatmul.mubr.bf16.gmra.mxu0 %v886
    %v951 = vpop.f32.mrf.mxu0
    %v952 = vadd.f32 0.0, %v951
    %v953 = vpop.f32.mrf.mxu0
    %v954 = vpop.f32.mrf.mxu0
    %v955 = vadd.f32 0.0, %v954
    %v956 = vpop.f32.mrf.mxu0
    %957 = vmatprep.mubr.bf16.mxu0 0
    %958 = vmatmul.mubr.bf16.gmra.mxu0 %v889
    %v959 = vpop.f32.mrf.mxu0
    %v960 = vadd.f32 0.0, %v959
    %v961 = vpop.f32.mrf.mxu0
    %v962 = vpop.f32.mrf.mxu0
    %v963 = vadd.f32 0.0, %v962
    %v964 = vpop.f32.mrf.mxu0
    %965 = vmatprep.mubr.bf16.mxu0 0
    %966 = vmatmul.mubr.bf16.gmra.mxu0 %v892
    %v967 = vpop.f32.mrf.mxu0
    %v968 = vadd.f32 0.0, %v967
    %v969 = vpop.f32.mrf.mxu0
    %v970 = vpop.f32.mrf.mxu0
    %v971 = vadd.f32 0.0, %v970
    %v972 = vpop.f32.mrf.mxu0
    %973 = vmatprep.mubr.bf16.mxu0 0
    %974 = vmatmul.mubr.bf16.gmra.mxu0 %v895
    %v975 = vpop.f32.mrf.mxu0
    %v976 = vadd.f32 0.0, %v975
    %v977 = vpop.f32.mrf.mxu0
    %v978 = vpop.f32.mrf.mxu0
    %v979 = vadd.f32 0.0, %v978
    %v980 = vpop.f32.mrf.mxu0
    %981 = vmatprep.mubr.bf16.mxu0 0
    %982 = vmatmul.mubr.bf16.gmra.mxu0 %v898
    %v983 = vpop.f32.mrf.mxu0
    %v984 = vadd.f32 0.0, %v983
    %v985 = vpop.f32.mrf.mxu0
    %v986 = vpop.f32.mrf.mxu0
    %v987 = vadd.f32 0.0, %v986
    %v988 = vpop.f32.mrf.mxu0
    %989 = vmatprep.mubr.bf16.mxu0 0
    %990 = vmatmul.mubr.bf16.gmra.mxu0 %v901
    %v991 = vpop.f32.mrf.mxu0
    %v992 = vadd.f32 0.0, %v991
    %v993 = vpop.f32.mrf.mxu0
    %v994 = vpop.f32.mrf.mxu0
    %v995 = vadd.f32 0.0, %v994
    %v996 = vpop.f32.mrf.mxu0
    %997 = vmatprep.mubr.bf16.mxu0 0
    %998 = vmatmul.mubr.bf16.gmra.mxu0 %v904
    %v999 = vpop.f32.mrf.mxu0
    %v1000 = vadd.f32 0.0, %v999
    %v1001 = vpop.f32.mrf.mxu0
    %v1002 = vpop.f32.mrf.mxu0
    %v1003 = vadd.f32 0.0, %v1002
    %v1004 = vpop.f32.mrf.mxu0
    %1005 = vdwg.mxu0
    %v1006 = vadd.f32 %v840, %v944
    %v1007 = vadd.f32 %v841, %v947
    %v1008 = vadd.f32 %v842, %v952
    %v1009 = vadd.f32 %v843, %v955
    %v1010 = vadd.f32 %v844, %v960
    %v1011 = vadd.f32 %v845, %v963
    %v1012 = vadd.f32 %v846, %v968
    %v1013 = vadd.f32 %v847, %v971
    %v1014 = vadd.f32 %v848, %v976
    %v1015 = vadd.f32 %v849, %v979
    %v1016 = vadd.f32 %v850, %v984
    %v1017 = vadd.f32 %v851, %v987
    %v1018 = vadd.f32 %v852, %v992
    %v1019 = vadd.f32 %v853, %v995
    %v1020 = vadd.f32 %v854, %v1000
    %v1021 = vadd.f32 %v855, %v1003
    %s1022 = scalar_lea.vmem %s0, 48
    %v1023 = vld [vmem:[%s1022 + $0x7] sm:$0xff]
    %v1024 = vld [vmem:[%s1022 + $0x1f] sm:$0xff]
    %v1025 = vld [vmem:[%s1022 + $0x37] sm:$0xff]
    %v1026 = vld [vmem:[%s1022 + $0x4f] sm:$0xff]
    %v1027 = vld [vmem:[%s1022 + $0x67] sm:$0xff]
    %v1028 = vld [vmem:[%s1022 + $0x7f] sm:$0xff]
    %v1029 = vld [vmem:[%s1022 + $0x97] sm:$0xff]
    %v1030 = vld [vmem:[%s1022 + $0xaf] sm:$0xff]
    %v1031 = vld [vmem:[%s1022 + $0xf7] sm:$0xff]
    %v1032 = vld [vmem:[%s1022 + $0x10f] sm:$0xff]
    %v1033 = vld [vmem:[%s1022 + $0x127] sm:$0xff]
    %v1034 = vld [vmem:[%s1022 + $0x13f] sm:$0xff]
    %v1035 = vld [vmem:[%s1022 + $0x157] sm:$0xff]
    %v1036 = vld [vmem:[%s1022 + $0x16f] sm:$0xff]
    %v1037 = vld [vmem:[%s1022 + $0x187] sm:$0xff]
    %v1038 = vld [vmem:[%s1022 + $0x19f] sm:$0xff]
    %v1039 = vpack.c.bf16 %v1024, %v1023
    %v1040 = vpack.c.bf16 %v1026, %v1025
    %v1041 = vpack.c.bf16 %v1028, %v1027
    %v1042 = vpack.c.bf16 %v1030, %v1029
    %v1043 = vpack.c.bf16 %v1032, %v1031
    %v1044 = vpack.c.bf16 %v1034, %v1033
    %v1045 = vpack.c.bf16 %v1036, %v1035
    %v1046 = vpack.c.bf16 %v1038, %v1037
    %s1047 = scalar_lea.vmem %s1, 12
    %v1048 = vld [vmem:[%s1047] sm:$0x3]
    %v1050 = vsel %vm107, %v1039, 0
    %v1053 = vsel %vm107, %v1040, 0
    %v1056 = vsel %vm107, %v1041, 0
    %v1059 = vsel %vm107, %v1042, 0
    %v1062 = vsel %vm107, %v1043, 0
    %v1065 = vsel %vm107, %v1044, 0
    %v1068 = vsel %vm107, %v1045, 0
    %v1071 = vsel %vm107, %v1046, 0
    %v1074 = vsel %vm132, %v1048, 0
    %1076 = vmatprep.subr.bf16.mxu0 0
    %1077 = vmatpush1.bf16.msra.mxu0 0
    %1078 = vmatprep.subr.bf16.mxu0 0
    %1079 = vmatpush1.bf16.msra.mxu0 0
    %1080 = vmatprep.subr.bf16.mxu0 0
    %1081 = vmatpush1.bf16.msra.mxu0 0
    %1082 = vmatprep.subr.bf16.mxu0 0
    %1083 = vmatpush1.bf16.msra.mxu0 0
    %1084 = vmatprep.subr.bf16.mxu0 0
    %1085 = vmatpush1.bf16.msra.mxu0 0
    %1086 = vmatprep.subr.bf16.mxu0 0
    %1087 = vmatpush1.bf16.msra.mxu0 0
    %1088 = vmatprep.subr.bf16.mxu0 0
    %1089 = vmatpush1.bf16.msra.mxu0 0
    %1090 = vmatprep.subr.bf16.mxu0 0
    %1091 = vmatpush1.bf16.msra.mxu0 %v1074
    %1092 = vmatprep.subr.bf16.mxu0 0
    %1093 = vmatpush2.bf16.msra.mxu0 0
    %1094 = vmatprep.subr.bf16.mxu0 0
    %1095 = vmatpush2.bf16.msra.mxu0 0
    %1096 = vmatprep.subr.bf16.mxu0 0
    %1097 = vmatpush2.bf16.msra.mxu0 0
    %1098 = vmatprep.subr.bf16.mxu0 0
    %1099 = vmatpush2.bf16.msra.mxu0 0
    %1100 = vmatprep.subr.bf16.mxu0 0
    %1101 = vmatpush2.bf16.msra.mxu0 0
    %1102 = vmatprep.subr.bf16.mxu0 0
    %1103 = vmatpush2.bf16.msra.mxu0 0
    %1104 = vmatprep.subr.bf16.mxu0 0
    %1105 = vmatpush2.bf16.msra.mxu0 0
    %1106 = vmatprep.subr.bf16.mxu0 0
    %1107 = vmatpush2.bf16.msra.mxu0 0
    %1108 = vmatprep.mubr.bf16.mxu0 0
    %1109 = vmatmul.mubr.bf16.gmra.mxu0 %v1050
    %v1110 = vpop.f32.mrf.mxu0
    %v1111 = vadd.f32 0.0, %v1110
    %v1112 = vpop.f32.mrf.mxu0
    %v1113 = vpop.f32.mrf.mxu0
    %v1114 = vadd.f32 0.0, %v1113
    %v1115 = vpop.f32.mrf.mxu0
    %1116 = vmatprep.mubr.bf16.mxu0 0
    %1117 = vmatmul.mubr.bf16.gmra.mxu0 %v1053
    %v1118 = vpop.f32.mrf.mxu0
    %v1119 = vadd.f32 0.0, %v1118
    %v1120 = vpop.f32.mrf.mxu0
    %v1121 = vpop.f32.mrf.mxu0
    %v1122 = vadd.f32 0.0, %v1121
    %v1123 = vpop.f32.mrf.mxu0
    %1124 = vmatprep.mubr.bf16.mxu0 0
    %1125 = vmatmul.mubr.bf16.gmra.mxu0 %v1056
    %v1126 = vpop.f32.mrf.mxu0
    %v1127 = vadd.f32 0.0, %v1126
    %v1128 = vpop.f32.mrf.mxu0
    %v1129 = vpop.f32.mrf.mxu0
    %v1130 = vadd.f32 0.0, %v1129
    %v1131 = vpop.f32.mrf.mxu0
    %1132 = vmatprep.mubr.bf16.mxu0 0
    %1133 = vmatmul.mubr.bf16.gmra.mxu0 %v1059
    %v1134 = vpop.f32.mrf.mxu0
    %v1135 = vadd.f32 0.0, %v1134
    %v1136 = vpop.f32.mrf.mxu0
    %v1137 = vpop.f32.mrf.mxu0
    %v1138 = vadd.f32 0.0, %v1137
    %v1139 = vpop.f32.mrf.mxu0
    %1140 = vmatprep.mubr.bf16.mxu0 0
    %1141 = vmatmul.mubr.bf16.gmra.mxu0 %v1062
    %v1142 = vpop.f32.mrf.mxu0
    %v1143 = vadd.f32 0.0, %v1142
    %v1144 = vpop.f32.mrf.mxu0
    %v1145 = vpop.f32.mrf.mxu0
    %v1146 = vadd.f32 0.0, %v1145
    %v1147 = vpop.f32.mrf.mxu0
    %1148 = vmatprep.mubr.bf16.mxu0 0
    %1149 = vmatmul.mubr.bf16.gmra.mxu0 %v1065
    %v1150 = vpop.f32.mrf.mxu0
    %v1151 = vadd.f32 0.0, %v1150
    %v1152 = vpop.f32.mrf.mxu0
    %v1153 = vpop.f32.mrf.mxu0
    %v1154 = vadd.f32 0.0, %v1153
    %v1155 = vpop.f32.mrf.mxu0
    %1156 = vmatprep.mubr.bf16.mxu0 0
    %1157 = vmatmul.mubr.bf16.gmra.mxu0 %v1068
    %v1158 = vpop.f32.mrf.mxu0
    %v1159 = vadd.f32 0.0, %v1158
    %v1160 = vpop.f32.mrf.mxu0
    %v1161 = vpop.f32.mrf.mxu0
    %v1162 = vadd.f32 0.0, %v1161
    %v1163 = vpop.f32.mrf.mxu0
    %1164 = vmatprep.mubr.bf16.mxu0 0
    %1165 = vmatmul.mubr.bf16.gmra.mxu0 %v1071
    %v1166 = vpop.f32.mrf.mxu0
    %v1167 = vadd.f32 0.0, %v1166
    %v1168 = vpop.f32.mrf.mxu0
    %v1169 = vpop.f32.mrf.mxu0
    %v1170 = vadd.f32 0.0, %v1169
    %v1171 = vpop.f32.mrf.mxu0
    %1172 = vdwg.mxu0
    %v1173 = vadd.f32 %v1006, %v1111
    %v1174 = vadd.f32 %v1007, %v1114
    %v1175 = vadd.f32 %v1008, %v1119
    %v1176 = vadd.f32 %v1009, %v1122
    %v1177 = vadd.f32 %v1010, %v1127
    %v1178 = vadd.f32 %v1011, %v1130
    %v1179 = vadd.f32 %v1012, %v1135
    %v1180 = vadd.f32 %v1013, %v1138
    %v1181 = vadd.f32 %v1014, %v1143
    %v1182 = vadd.f32 %v1015, %v1146
    %v1183 = vadd.f32 %v1016, %v1151
    %v1184 = vadd.f32 %v1017, %v1154
    %v1185 = vadd.f32 %v1018, %v1159
    %v1186 = vadd.f32 %v1019, %v1162
    %v1187 = vadd.f32 %v1020, %v1167
    %v1188 = vadd.f32 %v1021, %v1170
    %v1189 = vld [vmem:[%s1022 + $0x8] sm:$0xff]
    %v1190 = vld [vmem:[%s1022 + $0x20] sm:$0xff]
    %v1191 = vld [vmem:[%s1022 + $0x38] sm:$0xff]
    %v1192 = vld [vmem:[%s1022 + $0x50] sm:$0xff]
    %v1193 = vld [vmem:[%s1022 + $0x68] sm:$0xff]
    %v1194 = vld [vmem:[%s1022 + $0x80] sm:$0xff]
    %v1195 = vld [vmem:[%s1022 + $0x98] sm:$0xff]
    %v1196 = vld [vmem:[%s1022 + $0xb0] sm:$0xff]
    %v1197 = vld [vmem:[%s1022 + $0xf8] sm:$0xff]
    %v1198 = vld [vmem:[%s1022 + $0x110] sm:$0xff]
    %v1199 = vld [vmem:[%s1022 + $0x128] sm:$0xff]
    %v1200 = vld [vmem:[%s1022 + $0x140] sm:$0xff]
    %v1201 = vld [vmem:[%s1022 + $0x158] sm:$0xff]
    %v1202 = vld [vmem:[%s1022 + $0x170] sm:$0xff]
    %v1203 = vld [vmem:[%s1022 + $0x188] sm:$0xff]
    %v1204 = vld [vmem:[%s1022 + $0x1a0] sm:$0xff]
    %v1205 = vpack.c.bf16 %v1190, %v1189
    %v1206 = vpack.c.bf16 %v1192, %v1191
    %v1207 = vpack.c.bf16 %v1194, %v1193
    %v1208 = vpack.c.bf16 %v1196, %v1195
    %v1209 = vpack.c.bf16 %v1198, %v1197
    %v1210 = vpack.c.bf16 %v1200, %v1199
    %v1211 = vpack.c.bf16 %v1202, %v1201
    %v1212 = vpack.c.bf16 %v1204, %v1203
    %s1213 = scalar_lea.vmem %s1, 14
    %v1214 = vld [vmem:[%s1213] sm:$0x3]
    %v1216 = vsel %vm107, %v1205, 0
    %v1219 = vsel %vm107, %v1206, 0
    %v1222 = vsel %vm107, %v1207, 0
    %v1225 = vsel %vm107, %v1208, 0
    %v1228 = vsel %vm107, %v1209, 0
    %v1231 = vsel %vm107, %v1210, 0
    %v1234 = vsel %vm107, %v1211, 0
    %v1237 = vsel %vm107, %v1212, 0
    %v1240 = vsel %vm132, %v1214, 0
    %1242 = vmatprep.subr.bf16.mxu0 0
    %1243 = vmatpush1.bf16.msra.mxu0 0
    %1244 = vmatprep.subr.bf16.mxu0 0
    %1245 = vmatpush1.bf16.msra.mxu0 0
    %1246 = vmatprep.subr.bf16.mxu0 0
    %1247 = vmatpush1.bf16.msra.mxu0 0
    %1248 = vmatprep.subr.bf16.mxu0 0
    %1249 = vmatpush1.bf16.msra.mxu0 0
    %1250 = vmatprep.subr.bf16.mxu0 0
    %1251 = vmatpush1.bf16.msra.mxu0 0
    %1252 = vmatprep.subr.bf16.mxu0 0
    %1253 = vmatpush1.bf16.msra.mxu0 0
    %1254 = vmatprep.subr.bf16.mxu0 0
    %1255 = vmatpush1.bf16.msra.mxu0 0
    %1256 = vmatprep.subr.bf16.mxu0 0
    %1257 = vmatpush1.bf16.msra.mxu0 %v1240
    %1258 = vmatprep.subr.bf16.mxu0 0
    %1259 = vmatpush2.bf16.msra.mxu0 0
    %1260 = vmatprep.subr.bf16.mxu0 0
    %1261 = vmatpush2.bf16.msra.mxu0 0
    %1262 = vmatprep.subr.bf16.mxu0 0
    %1263 = vmatpush2.bf16.msra.mxu0 0
    %1264 = vmatprep.subr.bf16.mxu0 0
    %1265 = vmatpush2.bf16.msra.mxu0 0
    %1266 = vmatprep.subr.bf16.mxu0 0
    %1267 = vmatpush2.bf16.msra.mxu0 0
    %1268 = vmatprep.subr.bf16.mxu0 0
    %1269 = vmatpush2.bf16.msra.mxu0 0
    %1270 = vmatprep.subr.bf16.mxu0 0
    %1271 = vmatpush2.bf16.msra.mxu0 0
    %1272 = vmatprep.subr.bf16.mxu0 0
    %1273 = vmatpush2.bf16.msra.mxu0 0
    %1274 = vmatprep.mubr.bf16.mxu0 0
    %1275 = vmatmul.mubr.bf16.gmra.mxu0 %v1216
    %v1276 = vpop.f32.mrf.mxu0
    %v1277 = vadd.f32 0.0, %v1276
    %v1278 = vpop.f32.mrf.mxu0
    %v1279 = vpop.f32.mrf.mxu0
    %v1280 = vadd.f32 0.0, %v1279
    %v1281 = vpop.f32.mrf.mxu0
    %1282 = vmatprep.mubr.bf16.mxu0 0
    %1283 = vmatmul.mubr.bf16.gmra.mxu0 %v1219
    %v1284 = vpop.f32.mrf.mxu0
    %v1285 = vadd.f32 0.0, %v1284
    %v1286 = vpop.f32.mrf.mxu0
    %v1287 = vpop.f32.mrf.mxu0
    %v1288 = vadd.f32 0.0, %v1287
    %v1289 = vpop.f32.mrf.mxu0
    %1290 = vmatprep.mubr.bf16.mxu0 0
    %1291 = vmatmul.mubr.bf16.gmra.mxu0 %v1222
    %v1292 = vpop.f32.mrf.mxu0
    %v1293 = vadd.f32 0.0, %v1292
    %v1294 = vpop.f32.mrf.mxu0
    %v1295 = vpop.f32.mrf.mxu0
    %v1296 = vadd.f32 0.0, %v1295
    %v1297 = vpop.f32.mrf.mxu0
    %1298 = vmatprep.mubr.bf16.mxu0 0
    %1299 = vmatmul.mubr.bf16.gmra.mxu0 %v1225
    %v1300 = vpop.f32.mrf.mxu0
    %v1301 = vadd.f32 0.0, %v1300
    %v1302 = vpop.f32.mrf.mxu0
    %v1303 = vpop.f32.mrf.mxu0
    %v1304 = vadd.f32 0.0, %v1303
    %v1305 = vpop.f32.mrf.mxu0
    %1306 = vmatprep.mubr.bf16.mxu0 0
    %1307 = vmatmul.mubr.bf16.gmra.mxu0 %v1228
    %v1308 = vpop.f32.mrf.mxu0
    %v1309 = vadd.f32 0.0, %v1308
    %v1310 = vpop.f32.mrf.mxu0
    %v1311 = vpop.f32.mrf.mxu0
    %v1312 = vadd.f32 0.0, %v1311
    %v1313 = vpop.f32.mrf.mxu0
    %1314 = vmatprep.mubr.bf16.mxu0 0
    %1315 = vmatmul.mubr.bf16.gmra.mxu0 %v1231
    %v1316 = vpop.f32.mrf.mxu0
    %v1317 = vadd.f32 0.0, %v1316
    %v1318 = vpop.f32.mrf.mxu0
    %v1319 = vpop.f32.mrf.mxu0
    %v1320 = vadd.f32 0.0, %v1319
    %v1321 = vpop.f32.mrf.mxu0
    %1322 = vmatprep.mubr.bf16.mxu0 0
    %1323 = vmatmul.mubr.bf16.gmra.mxu0 %v1234
    %v1324 = vpop.f32.mrf.mxu0
    %v1325 = vadd.f32 0.0, %v1324
    %v1326 = vpop.f32.mrf.mxu0
    %v1327 = vpop.f32.mrf.mxu0
    %v1328 = vadd.f32 0.0, %v1327
    %v1329 = vpop.f32.mrf.mxu0
    %1330 = vmatprep.mubr.bf16.mxu0 0
    %1331 = vmatmul.mubr.bf16.gmra.mxu0 %v1237
    %v1332 = vpop.f32.mrf.mxu0
    %v1333 = vadd.f32 0.0, %v1332
    %v1334 = vpop.f32.mrf.mxu0
    %v1335 = vpop.f32.mrf.mxu0
    %v1336 = vadd.f32 0.0, %v1335
    %v1337 = vpop.f32.mrf.mxu0
    %1338 = vdwg.mxu0
    %v1339 = vadd.f32 %v1173, %v1277
    %v1340 = vadd.f32 %v1174, %v1280
    %v1341 = vadd.f32 %v1175, %v1285
    %v1342 = vadd.f32 %v1176, %v1288
    %v1343 = vadd.f32 %v1177, %v1293
    %v1344 = vadd.f32 %v1178, %v1296
    %v1345 = vadd.f32 %v1179, %v1301
    %v1346 = vadd.f32 %v1180, %v1304
    %v1347 = vadd.f32 %v1181, %v1309
    %v1348 = vadd.f32 %v1182, %v1312
    %v1349 = vadd.f32 %v1183, %v1317
    %v1350 = vadd.f32 %v1184, %v1320
    %v1351 = vadd.f32 %v1185, %v1325
    %v1352 = vadd.f32 %v1186, %v1328
    %v1353 = vadd.f32 %v1187, %v1333
    %v1354 = vadd.f32 %v1188, %v1336
    %v1355 = vld [vmem:[%s1022 + $0x9] sm:$0xff]
    %v1356 = vld [vmem:[%s1022 + $0x21] sm:$0xff]
    %v1357 = vld [vmem:[%s1022 + $0x39] sm:$0xff]
    %v1358 = vld [vmem:[%s1022 + $0x51] sm:$0xff]
    %v1359 = vld [vmem:[%s1022 + $0x69] sm:$0xff]
    %v1360 = vld [vmem:[%s1022 + $0x81] sm:$0xff]
    %v1361 = vld [vmem:[%s1022 + $0x99] sm:$0xff]
    %v1362 = vld [vmem:[%s1022 + $0xb1] sm:$0xff]
    %v1363 = vld [vmem:[%s1022 + $0xf9] sm:$0xff]
    %v1364 = vld [vmem:[%s1022 + $0x111] sm:$0xff]
    %v1365 = vld [vmem:[%s1022 + $0x129] sm:$0xff]
    %v1366 = vld [vmem:[%s1022 + $0x141] sm:$0xff]
    %v1367 = vld [vmem:[%s1022 + $0x159] sm:$0xff]
    %v1368 = vld [vmem:[%s1022 + $0x171] sm:$0xff]
    %v1369 = vld [vmem:[%s1022 + $0x189] sm:$0xff]
    %v1370 = vld [vmem:[%s1022 + $0x1a1] sm:$0xff]
    %v1371 = vpack.c.bf16 %v1356, %v1355
    %v1372 = vpack.c.bf16 %v1358, %v1357
    %v1373 = vpack.c.bf16 %v1360, %v1359
    %v1374 = vpack.c.bf16 %v1362, %v1361
    %v1375 = vpack.c.bf16 %v1364, %v1363
    %v1376 = vpack.c.bf16 %v1366, %v1365
    %v1377 = vpack.c.bf16 %v1368, %v1367
    %v1378 = vpack.c.bf16 %v1370, %v1369
    %s1379 = scalar_lea.vmem %s1, 16
    %v1380 = vld [vmem:[%s1379] sm:$0x3]
    %v1382 = vsel %vm107, %v1371, 0
    %v1385 = vsel %vm107, %v1372, 0
    %v1388 = vsel %vm107, %v1373, 0
    %v1391 = vsel %vm107, %v1374, 0
    %v1394 = vsel %vm107, %v1375, 0
    %v1397 = vsel %vm107, %v1376, 0
    %v1400 = vsel %vm107, %v1377, 0
    %v1403 = vsel %vm107, %v1378, 0
    %v1406 = vsel %vm132, %v1380, 0
    %1408 = vmatprep.subr.bf16.mxu0 0
    %1409 = vmatpush1.bf16.msra.mxu0 0
    %1410 = vmatprep.subr.bf16.mxu0 0
    %1411 = vmatpush1.bf16.msra.mxu0 0
    %1412 = vmatprep.subr.bf16.mxu0 0
    %1413 = vmatpush1.bf16.msra.mxu0 0
    %1414 = vmatprep.subr.bf16.mxu0 0
    %1415 = vmatpush1.bf16.msra.mxu0 0
    %1416 = vmatprep.subr.bf16.mxu0 0
    %1417 = vmatpush1.bf16.msra.mxu0 0
    %1418 = vmatprep.subr.bf16.mxu0 0
    %1419 = vmatpush1.bf16.msra.mxu0 0
    %1420 = vmatprep.subr.bf16.mxu0 0
    %1421 = vmatpush1.bf16.msra.mxu0 0
    %1422 = vmatprep.subr.bf16.mxu0 0
    %1423 = vmatpush1.bf16.msra.mxu0 %v1406
    %1424 = vmatprep.subr.bf16.mxu0 0
    %1425 = vmatpush2.bf16.msra.mxu0 0
    %1426 = vmatprep.subr.bf16.mxu0 0
    %1427 = vmatpush2.bf16.msra.mxu0 0
    %1428 = vmatprep.subr.bf16.mxu0 0
    %1429 = vmatpush2.bf16.msra.mxu0 0
    %1430 = vmatprep.subr.bf16.mxu0 0
    %1431 = vmatpush2.bf16.msra.mxu0 0
    %1432 = vmatprep.subr.bf16.mxu0 0
    %1433 = vmatpush2.bf16.msra.mxu0 0
    %1434 = vmatprep.subr.bf16.mxu0 0
    %1435 = vmatpush2.bf16.msra.mxu0 0
    %1436 = vmatprep.subr.bf16.mxu0 0
    %1437 = vmatpush2.bf16.msra.mxu0 0
    %1438 = vmatprep.subr.bf16.mxu0 0
    %1439 = vmatpush2.bf16.msra.mxu0 0
    %1440 = vmatprep.mubr.bf16.mxu0 0
    %1441 = vmatmul.mubr.bf16.gmra.mxu0 %v1382
    %v1442 = vpop.f32.mrf.mxu0
    %v1443 = vadd.f32 0.0, %v1442
    %v1444 = vpop.f32.mrf.mxu0
    %v1445 = vpop.f32.mrf.mxu0
    %v1446 = vadd.f32 0.0, %v1445
    %v1447 = vpop.f32.mrf.mxu0
    %1448 = vmatprep.mubr.bf16.mxu0 0
    %1449 = vmatmul.mubr.bf16.gmra.mxu0 %v1385
    %v1450 = vpop.f32.mrf.mxu0
    %v1451 = vadd.f32 0.0, %v1450
    %v1452 = vpop.f32.mrf.mxu0
    %v1453 = vpop.f32.mrf.mxu0
    %v1454 = vadd.f32 0.0, %v1453
    %v1455 = vpop.f32.mrf.mxu0
    %1456 = vmatprep.mubr.bf16.mxu0 0
    %1457 = vmatmul.mubr.bf16.gmra.mxu0 %v1388
    %v1458 = vpop.f32.mrf.mxu0
    %v1459 = vadd.f32 0.0, %v1458
    %v1460 = vpop.f32.mrf.mxu0
    %v1461 = vpop.f32.mrf.mxu0
    %v1462 = vadd.f32 0.0, %v1461
    %v1463 = vpop.f32.mrf.mxu0
    %1464 = vmatprep.mubr.bf16.mxu0 0
    %1465 = vmatmul.mubr.bf16.gmra.mxu0 %v1391
    %v1466 = vpop.f32.mrf.mxu0
    %v1467 = vadd.f32 0.0, %v1466
    %v1468 = vpop.f32.mrf.mxu0
    %v1469 = vpop.f32.mrf.mxu0
    %v1470 = vadd.f32 0.0, %v1469
    %v1471 = vpop.f32.mrf.mxu0
    %1472 = vmatprep.mubr.bf16.mxu0 0
    %1473 = vmatmul.mubr.bf16.gmra.mxu0 %v1394
    %v1474 = vpop.f32.mrf.mxu0
    %v1475 = vadd.f32 0.0, %v1474
    %v1476 = vpop.f32.mrf.mxu0
    %v1477 = vpop.f32.mrf.mxu0
    %v1478 = vadd.f32 0.0, %v1477
    %v1479 = vpop.f32.mrf.mxu0
    %1480 = vmatprep.mubr.bf16.mxu0 0
    %1481 = vmatmul.mubr.bf16.gmra.mxu0 %v1397
    %v1482 = vpop.f32.mrf.mxu0
    %v1483 = vadd.f32 0.0, %v1482
    %v1484 = vpop.f32.mrf.mxu0
    %v1485 = vpop.f32.mrf.mxu0
    %v1486 = vadd.f32 0.0, %v1485
    %v1487 = vpop.f32.mrf.mxu0
    %1488 = vmatprep.mubr.bf16.mxu0 0
    %1489 = vmatmul.mubr.bf16.gmra.mxu0 %v1400
    %v1490 = vpop.f32.mrf.mxu0
    %v1491 = vadd.f32 0.0, %v1490
    %v1492 = vpop.f32.mrf.mxu0
    %v1493 = vpop.f32.mrf.mxu0
    %v1494 = vadd.f32 0.0, %v1493
    %v1495 = vpop.f32.mrf.mxu0
    %1496 = vmatprep.mubr.bf16.mxu0 0
    %1497 = vmatmul.mubr.bf16.gmra.mxu0 %v1403
    %v1498 = vpop.f32.mrf.mxu0
    %v1499 = vadd.f32 0.0, %v1498
    %v1500 = vpop.f32.mrf.mxu0
    %v1501 = vpop.f32.mrf.mxu0
    %v1502 = vadd.f32 0.0, %v1501
    %v1503 = vpop.f32.mrf.mxu0
    %1504 = vdwg.mxu0
    %v1505 = vadd.f32 %v1339, %v1443
    %v1506 = vadd.f32 %v1340, %v1446
    %v1507 = vadd.f32 %v1341, %v1451
    %v1508 = vadd.f32 %v1342, %v1454
    %v1509 = vadd.f32 %v1343, %v1459
    %v1510 = vadd.f32 %v1344, %v1462
    %v1511 = vadd.f32 %v1345, %v1467
    %v1512 = vadd.f32 %v1346, %v1470
    %v1513 = vadd.f32 %v1347, %v1475
    %v1514 = vadd.f32 %v1348, %v1478
    %v1515 = vadd.f32 %v1349, %v1483
    %v1516 = vadd.f32 %v1350, %v1486
    %v1517 = vadd.f32 %v1351, %v1491
    %v1518 = vadd.f32 %v1352, %v1494
    %v1519 = vadd.f32 %v1353, %v1499
    %v1520 = vadd.f32 %v1354, %v1502
    %v1521 = vld [vmem:[%s2] sm:$0x1]
    %v1523 = vlaneseq
    %v1524 = vshrl.u32 %v1523, 7
    %v1525 = vsub.s32 0, %v1524
    %v1526 = vrot.slane %v1521, %v1525
    %v1528 = vadd.f32 %v1505, %v1526
    %v1529 = vadd.f32 %v1506, %v1526
    %v1530 = vadd.f32 %v1507, %v1526
    %v1531 = vadd.f32 %v1508, %v1526
    %v1532 = vadd.f32 %v1509, %v1526
    %v1533 = vadd.f32 %v1510, %v1526
    %v1534 = vadd.f32 %v1511, %v1526
    %v1535 = vadd.f32 %v1512, %v1526
    %v1536 = vadd.f32 %v1513, %v1526
    %v1537 = vadd.f32 %v1514, %v1526
    %v1538 = vadd.f32 %v1515, %v1526
    %v1539 = vadd.f32 %v1516, %v1526
    %v1540 = vadd.f32 %v1517, %v1526
    %v1541 = vadd.f32 %v1518, %v1526
    %v1542 = vadd.f32 %v1519, %v1526
    %v1543 = vadd.f32 %v1520, %v1526
    %v1544 = vmax.f32 %v1528, 0.0
    %v1545 = vmax.f32 %v1529, 0.0
    %v1546 = vmax.f32 %v1530, 0.0
    %v1547 = vmax.f32 %v1531, 0.0
    %v1548 = vmax.f32 %v1532, 0.0
    %v1549 = vmax.f32 %v1533, 0.0
    %v1550 = vmax.f32 %v1534, 0.0
    %v1551 = vmax.f32 %v1535, 0.0
    %v1552 = vmax.f32 %v1536, 0.0
    %v1553 = vmax.f32 %v1537, 0.0
    %v1554 = vmax.f32 %v1538, 0.0
    %v1555 = vmax.f32 %v1539, 0.0
    %v1556 = vmax.f32 %v1540, 0.0
    %v1557 = vmax.f32 %v1541, 0.0
    %v1558 = vmax.f32 %v1542, 0.0
    %v1559 = vmax.f32 %v1543, 0.0
    %vm1560 = vcmask 261120
    %1561 = vst.msk [vmem:[#allocation2] sm:$0xff] %vm1560, 0.0
    %1562 = vst.msk [vmem:[#allocation2 + $0x8] sm:$0xff] %vm1560, 0.0
    %vm1563 = vcmask 253952
    %1564 = vst.msk [vmem:[#allocation2 + $0x10] sm:$0x1] %vm1563, 0.0
    %1565 = vst.msk [vmem:[#allocation2 + $0x18] sm:$0xff] %vm1560, 0.0
    %1566 = vst.msk [vmem:[#allocation2 + $0x20] sm:$0xff] %vm1560, 0.0
    %1567 = vst.msk [vmem:[#allocation2 + $0x28] sm:$0x1] %vm1563, 0.0
    %1568 = vst.msk [vmem:[#allocation2 + $0x30] sm:$0xff] %vm1560, 0.0
    %1569 = vst.msk [vmem:[#allocation2 + $0x38] sm:$0xff] %vm1560, 0.0
    %1570 = vst.msk [vmem:[#allocation2 + $0x40] sm:$0x1] %vm1563, 0.0
    %1571 = vst.msk [vmem:[#allocation2 + $0x48] sm:$0xff] %vm1560, 0.0
    %1572 = vst.msk [vmem:[#allocation2 + $0x50] sm:$0xff] %vm1560, 0.0
    %1573 = vst.msk [vmem:[#allocation2 + $0x58] sm:$0x1] %vm1563, 0.0
    %1574 = vst.msk [vmem:[#allocation2 + $0x60] sm:$0xff] %vm1560, 0.0
    %1575 = vst.msk [vmem:[#allocation2 + $0x68] sm:$0xff] %vm1560, 0.0
    %1576 = vst.msk [vmem:[#allocation2 + $0x70] sm:$0x1] %vm1563, 0.0
    %1577 = vst.msk [vmem:[#allocation2 + $0x78] sm:$0xff] %vm1560, 0.0
    %1578 = vst.msk [vmem:[#allocation2 + $0x80] sm:$0xff] %vm1560, 0.0
    %1579 = vst.msk [vmem:[#allocation2 + $0x88] sm:$0x1] %vm1563, 0.0
    %1580 = vst.msk [vmem:[#allocation2 + $0x90] sm:$0xff] %vm1560, 0.0
    %1581 = vst.msk [vmem:[#allocation2 + $0x98] sm:$0xff] %vm1560, 0.0
    %1582 = vst.msk [vmem:[#allocation2 + $0xa0] sm:$0x1] %vm1563, 0.0
    %1583 = vst.msk [vmem:[#allocation2 + $0xa8] sm:$0xff] %vm1560, 0.0
    %1584 = vst.msk [vmem:[#allocation2 + $0xb0] sm:$0xff] %vm1560, 0.0
    %1585 = vst.msk [vmem:[#allocation2 + $0xb8] sm:$0x1] %vm1563, 0.0
    %1586 = vst.msk [vmem:[#allocation2 + $0xc0] sm:$0xff] %vm1560, 0.0
    %1587 = vst.msk [vmem:[#allocation2 + $0xc8] sm:$0xff] %vm1560, 0.0
    %1588 = vst.msk [vmem:[#allocation2 + $0xd0] sm:$0x1] %vm1563, 0.0
    %1589 = vst.msk [vmem:[#allocation2 + $0xd8] sm:$0xff] %vm1560, 0.0
    %1590 = vst.msk [vmem:[#allocation2 + $0xe0] sm:$0xff] %vm1560, 0.0
    %1591 = vst.msk [vmem:[#allocation2 + $0xe8] sm:$0x1] %vm1563, 0.0
    %1592 = vst.msk [vmem:[#allocation2 + $0xf0] sm:$0xff] %vm1560, 0.0
    %1593 = vst.msk [vmem:[#allocation2 + $0xf8] sm:$0xff] %vm1560, 0.0
    %1594 = vst.msk [vmem:[#allocation2 + $0x100] sm:$0x1] %vm1563, 0.0
    %1595 = vst.msk [vmem:[#allocation2 + $0x108] sm:$0xff] %vm1560, 0.0
    %1596 = vst.msk [vmem:[#allocation2 + $0x110] sm:$0xff] %vm1560, 0.0
    %1597 = vst.msk [vmem:[#allocation2 + $0x118] sm:$0x1] %vm1563, 0.0
    %1598 = vst.msk [vmem:[#allocation2 + $0x120] sm:$0xff] %vm1560, 0.0
    %1599 = vst.msk [vmem:[#allocation2 + $0x128] sm:$0xff] %vm1560, 0.0
    %1600 = vst.msk [vmem:[#allocation2 + $0x130] sm:$0x1] %vm1563, 0.0
    %1601 = vst.msk [vmem:[#allocation2 + $0x138] sm:$0xff] %vm1560, 0.0
    %1602 = vst.msk [vmem:[#allocation2 + $0x140] sm:$0xff] %vm1560, 0.0
    %1603 = vst.msk [vmem:[#allocation2 + $0x148] sm:$0x1] %vm1563, 0.0
    %1604 = vst.msk [vmem:[#allocation2 + $0x150] sm:$0xff] %vm1560, 0.0
    %1605 = vst.msk [vmem:[#allocation2 + $0x158] sm:$0xff] %vm1560, 0.0
    %1606 = vst.msk [vmem:[#allocation2 + $0x160] sm:$0x1] %vm1563, 0.0
    %1607 = vst.msk [vmem:[#allocation2 + $0x168] sm:$0xff] %vm1560, 0.0
    %1608 = vst.msk [vmem:[#allocation2 + $0x170] sm:$0xff] %vm1560, 0.0
    %1609 = vst.msk [vmem:[#allocation2 + $0x178] sm:$0x1] %vm1563, 0.0
    %1610 = vst.msk [vmem:[#allocation2 + $0x180] sm:$0xff] %vm1560, 0.0
    %1611 = vst.msk [vmem:[#allocation2 + $0x188] sm:$0xff] %vm1560, 0.0
    %1612 = vst.msk [vmem:[#allocation2 + $0x190] sm:$0x1] %vm1563, 0.0
    %1613 = vst.msk [vmem:[#allocation2 + $0x198] sm:$0xff] %vm1560, 0.0
    %1614 = vst.msk [vmem:[#allocation2 + $0x1a0] sm:$0xff] %vm1560, 0.0
    %1615 = vst.msk [vmem:[#allocation2 + $0x1a8] sm:$0x1] %vm1563, 0.0
    %1616 = vst.msk [vmem:[#allocation2 + $0x1b0] sm:$0xff] %vm1560, 0.0
    %1617 = vst.msk [vmem:[#allocation2 + $0x1b8] sm:$0xff] %vm1560, 0.0
    %1618 = vst.msk [vmem:[#allocation2 + $0x1c0] sm:$0x1] %vm1563, 0.0
    %1619 = vst.msk [vmem:[#allocation2 + $0x1c8] sm:$0xff] %vm1560, 0.0
    %1620 = vst.msk [vmem:[#allocation2 + $0x1d0] sm:$0xff] %vm1560, 0.0
    %1621 = vst.msk [vmem:[#allocation2 + $0x1d8] sm:$0x1] %vm1563, 0.0
    %s1622 = scalar_lea.vmem [#allocation2], 24
    %1623 = vst.msk [vmem:[%s1622 + $0x8] sm:$0xff] %vm1560, %v1544
    %1624 = vst.msk [vmem:[%s1622 + $0x20] sm:$0xff] %vm1560, %v1545
    %1625 = vst.msk [vmem:[%s1622 + $0x38] sm:$0xff] %vm1560, %v1546
    %1626 = vst.msk [vmem:[%s1622 + $0x50] sm:$0xff] %vm1560, %v1547
    %1627 = vst.msk [vmem:[%s1622 + $0x68] sm:$0xff] %vm1560, %v1548
    %1628 = vst.msk [vmem:[%s1622 + $0x80] sm:$0xff] %vm1560, %v1549
    %1629 = vst.msk [vmem:[%s1622 + $0x98] sm:$0xff] %vm1560, %v1550
    %1630 = vst.msk [vmem:[%s1622 + $0xb0] sm:$0xff] %vm1560, %v1551
    %1631 = vst.msk [vmem:[%s1622 + $0xf8] sm:$0xff] %vm1560, %v1552
    %1632 = vst.msk [vmem:[%s1622 + $0x110] sm:$0xff] %vm1560, %v1553
    %1633 = vst.msk [vmem:[%s1622 + $0x128] sm:$0xff] %vm1560, %v1554
    %1634 = vst.msk [vmem:[%s1622 + $0x140] sm:$0xff] %vm1560, %v1555
    %1635 = vst.msk [vmem:[%s1622 + $0x158] sm:$0xff] %vm1560, %v1556
    %1636 = vst.msk [vmem:[%s1622 + $0x170] sm:$0xff] %vm1560, %v1557
    %1637 = vst.msk [vmem:[%s1622 + $0x188] sm:$0xff] %vm1560, %v1558
    %1638 = vst.msk [vmem:[%s1622 + $0x1a0] sm:$0xff] %vm1560, %v1559
    %v1639 = vld [vmem:[#allocation2 + $0x7] sm:$0xff]
    %v1640 = vld [vmem:[#allocation2 + $0x1f] sm:$0xff]
    %v1641 = vld [vmem:[#allocation2 + $0x37] sm:$0xff]
    %v1642 = vld [vmem:[#allocation2 + $0x4f] sm:$0xff]
    %v1643 = vld [vmem:[#allocation2 + $0x67] sm:$0xff]
    %v1644 = vld [vmem:[#allocation2 + $0x7f] sm:$0xff]
    %v1645 = vld [vmem:[#allocation2 + $0x97] sm:$0xff]
    %v1646 = vld [vmem:[#allocation2 + $0xaf] sm:$0xff]
    %v1647 = vld [vmem:[#allocation2 + $0xf7] sm:$0xff]
    %v1648 = vld [vmem:[#allocation2 + $0x10f] sm:$0xff]
    %v1649 = vld [vmem:[#allocation2 + $0x127] sm:$0xff]
    %v1650 = vld [vmem:[#allocation2 + $0x13f] sm:$0xff]
    %v1651 = vld [vmem:[#allocation2 + $0x157] sm:$0xff]
    %v1652 = vld [vmem:[#allocation2 + $0x16f] sm:$0xff]
    %v1653 = vld [vmem:[#allocation2 + $0x187] sm:$0xff]
    %v1654 = vld [vmem:[#allocation2 + $0x19f] sm:$0xff]
    %v1655 = vpack.c.bf16 %v1640, %v1639
    %v1656 = vpack.c.bf16 %v1642, %v1641
    %v1657 = vpack.c.bf16 %v1644, %v1643
    %v1658 = vpack.c.bf16 %v1646, %v1645
    %v1659 = vpack.c.bf16 %v1648, %v1647
    %v1660 = vpack.c.bf16 %v1650, %v1649
    %v1661 = vpack.c.bf16 %v1652, %v1651
    %v1662 = vpack.c.bf16 %v1654, %v1653
    %v1663 = vld [vmem:[%s3] sm:$0xf]
    %v1664 = vld [vmem:[%s3 + $0x4] sm:$0xf]
    %v1665 = vld [vmem:[%s3 + $0x8] sm:$0xf]
    %v1666 = vld [vmem:[%s3 + $0xc] sm:$0xf]
    %v1667 = vld [vmem:[#allocation2 + $0x8] sm:$0xff]
    %v1668 = vld [vmem:[#allocation2 + $0x20] sm:$0xff]
    %v1669 = vld [vmem:[#allocation2 + $0x38] sm:$0xff]
    %v1670 = vld [vmem:[#allocation2 + $0x50] sm:$0xff]
    %v1671 = vld [vmem:[#allocation2 + $0x68] sm:$0xff]
    %v1672 = vld [vmem:[#allocation2 + $0x80] sm:$0xff]
    %v1673 = vld [vmem:[#allocation2 + $0x98] sm:$0xff]
    %v1674 = vld [vmem:[#allocation2 + $0xb0] sm:$0xff]
    %v1675 = vld [vmem:[#allocation2 + $0xf8] sm:$0xff]
    %v1676 = vld [vmem:[#allocation2 + $0x110] sm:$0xff]
    %v1677 = vld [vmem:[#allocation2 + $0x128] sm:$0xff]
    %v1678 = vld [vmem:[#allocation2 + $0x140] sm:$0xff]
    %v1679 = vld [vmem:[#allocation2 + $0x158] sm:$0xff]
    %v1680 = vld [vmem:[#allocation2 + $0x170] sm:$0xff]
    %v1681 = vld [vmem:[#allocation2 + $0x188] sm:$0xff]
    %v1682 = vld [vmem:[#allocation2 + $0x1a0] sm:$0xff]
    %v1683 = vpack.c.bf16 %v1668, %v1667
    %v1684 = vpack.c.bf16 %v1670, %v1669
    %v1685 = vpack.c.bf16 %v1672, %v1671
    %v1686 = vpack.c.bf16 %v1674, %v1673
    %v1687 = vpack.c.bf16 %v1676, %v1675
    %v1688 = vpack.c.bf16 %v1678, %v1677
    %v1689 = vpack.c.bf16 %v1680, %v1679
    %v1690 = vpack.c.bf16 %v1682, %v1681
    %s1691 = scalar_lea.vmem %s3, 16
    %v1692 = vld [vmem:[%s1691] sm:$0xf]
    %v1693 = vld [vmem:[%s1691 + $0x4] sm:$0xf]
    %v1694 = vld [vmem:[%s1691 + $0x8] sm:$0xf]
    %v1695 = vld [vmem:[%s1691 + $0xc] sm:$0xf]
    %v1700 = vunpack.c.l.b16 %v1692
    %v1701 = vunpack.c.l.b16 %v1693
    %v1702 = vunpack.c.l.b16 %v1694
    %v1703 = vunpack.c.l.b16 %v1695
    %v1704 = vpack.c.b16 %v1701, %v1700
    %v1705 = vpack.c.b16 %v1703, %v1702
    %v1709 = vsel %vm1560, %v1683, 0
    %v1712 = vsel %vm1560, %v1684, 0
    %v1715 = vsel %vm1560, %v1685, 0
    %v1718 = vsel %vm1560, %v1686, 0
    %v1721 = vsel %vm1560, %v1687, 0
    %v1724 = vsel %vm1560, %v1688, 0
    %v1727 = vsel %vm1560, %v1689, 0
    %v1730 = vsel %vm1560, %v1690, 0
    %1732 = vmatprep.subr.bf16.mxu0 0
    %1733 = vmatpush1.bf16.msra.mxu0 0
    %1734 = vmatprep.subr.bf16.mxu0 0
    %1735 = vmatpush1.bf16.msra.mxu0 0
    %1736 = vmatprep.subr.bf16.mxu0 0
    %1737 = vmatpush1.bf16.msra.mxu0 0
    %1738 = vmatprep.subr.bf16.mxu0 0
    %1739 = vmatpush1.bf16.msra.mxu0 0
    %1740 = vmatprep.subr.bf16.mxu0 0
    %1741 = vmatpush1.bf16.msra.mxu0 0
    %1742 = vmatprep.subr.bf16.mxu0 0
    %1743 = vmatpush1.bf16.msra.mxu0 0
    %1744 = vmatprep.subr.bf16.mxu0 0
    %1745 = vmatpush1.bf16.msra.mxu0 %v1705
    %1746 = vmatprep.subr.bf16.mxu0 0
    %1747 = vmatpush1.bf16.msra.mxu0 %v1704
    %1748 = vmatprep.subr.bf16.mxu0 0
    %1749 = vmatpush2.bf16.msra.mxu0 0
    %1750 = vmatprep.subr.bf16.mxu0 0
    %1751 = vmatpush2.bf16.msra.mxu0 0
    %1752 = vmatprep.subr.bf16.mxu0 0
    %1753 = vmatpush2.bf16.msra.mxu0 0
    %1754 = vmatprep.subr.bf16.mxu0 0
    %1755 = vmatpush2.bf16.msra.mxu0 0
    %1756 = vmatprep.subr.bf16.mxu0 0
    %1757 = vmatpush2.bf16.msra.mxu0 0
    %1758 = vmatprep.subr.bf16.mxu0 0
    %1759 = vmatpush2.bf16.msra.mxu0 0
    %1760 = vmatprep.subr.bf16.mxu0 0
    %1761 = vmatpush2.bf16.msra.mxu0 0
    %1762 = vmatprep.subr.bf16.mxu0 0
    %1763 = vmatpush2.bf16.msra.mxu0 0
    %1764 = vmatprep.mubr.bf16.mxu0 0
    %1765 = vmatmul.mubr.bf16.gmra.mxu0 %v1709
    %v1766 = vpop.f32.mrf.mxu0
    %v1767 = vadd.f32 0.0, %v1766
    %v1768 = vpop.f32.mrf.mxu0
    %v1769 = vpop.f32.mrf.mxu0
    %v1770 = vadd.f32 0.0, %v1769
    %v1771 = vpop.f32.mrf.mxu0
    %1772 = vmatprep.mubr.bf16.mxu0 0
    %1773 = vmatmul.mubr.bf16.gmra.mxu0 %v1712
    %v1774 = vpop.f32.mrf.mxu0
    %v1775 = vadd.f32 0.0, %v1774
    %v1776 = vpop.f32.mrf.mxu0
    %v1777 = vpop.f32.mrf.mxu0
    %v1778 = vadd.f32 0.0, %v1777
    %v1779 = vpop.f32.mrf.mxu0
    %1780 = vmatprep.mubr.bf16.mxu0 0
    %1781 = vmatmul.mubr.bf16.gmra.mxu0 %v1715
    %v1782 = vpop.f32.mrf.mxu0
    %v1783 = vadd.f32 0.0, %v1782
    %v1784 = vpop.f32.mrf.mxu0
    %v1785 = vpop.f32.mrf.mxu0
    %v1786 = vadd.f32 0.0, %v1785
    %v1787 = vpop.f32.mrf.mxu0
    %1788 = vmatprep.mubr.bf16.mxu0 0
    %1789 = vmatmul.mubr.bf16.gmra.mxu0 %v1718
    %v1790 = vpop.f32.mrf.mxu0
    %v1791 = vadd.f32 0.0, %v1790
    %v1792 = vpop.f32.mrf.mxu0
    %v1793 = vpop.f32.mrf.mxu0
    %v1794 = vadd.f32 0.0, %v1793
    %v1795 = vpop.f32.mrf.mxu0
    %1796 = vmatprep.mubr.bf16.mxu0 0
    %1797 = vmatmul.mubr.bf16.gmra.mxu0 %v1721
    %v1798 = vpop.f32.mrf.mxu0
    %v1799 = vadd.f32 0.0, %v1798
    %v1800 = vpop.f32.mrf.mxu0
    %v1801 = vpop.f32.mrf.mxu0
    %v1802 = vadd.f32 0.0, %v1801
    %v1803 = vpop.f32.mrf.mxu0
    %1804 = vmatprep.mubr.bf16.mxu0 0
    %1805 = vmatmul.mubr.bf16.gmra.mxu0 %v1724
    %v1806 = vpop.f32.mrf.mxu0
    %v1807 = vadd.f32 0.0, %v1806
    %v1808 = vpop.f32.mrf.mxu0
    %v1809 = vpop.f32.mrf.mxu0
    %v1810 = vadd.f32 0.0, %v1809
    %v1811 = vpop.f32.mrf.mxu0
    %1812 = vmatprep.mubr.bf16.mxu0 0
    %1813 = vmatmul.mubr.bf16.gmra.mxu0 %v1727
    %v1814 = vpop.f32.mrf.mxu0
    %v1815 = vadd.f32 0.0, %v1814
    %v1816 = vpop.f32.mrf.mxu0
    %v1817 = vpop.f32.mrf.mxu0
    %v1818 = vadd.f32 0.0, %v1817
    %v1819 = vpop.f32.mrf.mxu0
    %1820 = vmatprep.mubr.bf16.mxu0 0
    %1821 = vmatmul.mubr.bf16.gmra.mxu0 %v1730
    %v1822 = vpop.f32.mrf.mxu0
    %v1823 = vadd.f32 0.0, %v1822
    %v1824 = vpop.f32.mrf.mxu0
    %v1825 = vpop.f32.mrf.mxu0
    %v1826 = vadd.f32 0.0, %v1825
    %v1827 = vpop.f32.mrf.mxu0
    %1828 = vdwg.mxu0
    %v1833 = vunpack.c.l.b16 %v1663
    %v1834 = vunpack.c.l.b16 %v1664
    %v1835 = vunpack.c.l.b16 %v1665
    %v1836 = vunpack.c.l.b16 %v1666
    %v1837 = vpack.c.b16 %v1834, %v1833
    %v1838 = vpack.c.b16 %v1836, %v1835
    %v1842 = vsel %vm1560, %v1655, 0
    %v1845 = vsel %vm1560, %v1656, 0
    %v1848 = vsel %vm1560, %v1657, 0
    %v1851 = vsel %vm1560, %v1658, 0
    %v1854 = vsel %vm1560, %v1659, 0
    %v1857 = vsel %vm1560, %v1660, 0
    %v1860 = vsel %vm1560, %v1661, 0
    %v1863 = vsel %vm1560, %v1662, 0
    %1865 = vmatprep.subr.bf16.mxu0 0
    %1866 = vmatpush1.bf16.msra.mxu0 0
    %1867 = vmatprep.subr.bf16.mxu0 0
    %1868 = vmatpush1.bf16.msra.mxu0 0
    %1869 = vmatprep.subr.bf16.mxu0 0
    %1870 = vmatpush1.bf16.msra.mxu0 0
    %1871 = vmatprep.subr.bf16.mxu0 0
    %1872 = vmatpush1.bf16.msra.mxu0 0
    %1873 = vmatprep.subr.bf16.mxu0 0
    %1874 = vmatpush1.bf16.msra.mxu0 0
    %1875 = vmatprep.subr.bf16.mxu0 0
    %1876 = vmatpush1.bf16.msra.mxu0 0
    %1877 = vmatprep.subr.bf16.mxu0 0
    %1878 = vmatpush1.bf16.msra.mxu0 %v1838
    %1879 = vmatprep.subr.bf16.mxu0 0
    %1880 = vmatpush1.bf16.msra.mxu0 %v1837
    %1881 = vmatprep.subr.bf16.mxu0 0
    %1882 = vmatpush2.bf16.msra.mxu0 0
    %1883 = vmatprep.subr.bf16.mxu0 0
    %1884 = vmatpush2.bf16.msra.mxu0 0
    %1885 = vmatprep.subr.bf16.mxu0 0
    %1886 = vmatpush2.bf16.msra.mxu0 0
    %1887 = vmatprep.subr.bf16.mxu0 0
    %1888 = vmatpush2.bf16.msra.mxu0 0
    %1889 = vmatprep.subr.bf16.mxu0 0
    %1890 = vmatpush2.bf16.msra.mxu0 0
    %1891 = vmatprep.subr.bf16.mxu0 0
    %1892 = vmatpush2.bf16.msra.mxu0 0
    %1893 = vmatprep.subr.bf16.mxu0 0
    %1894 = vmatpush2.bf16.msra.mxu0 0
    %1895 = vmatprep.subr.bf16.mxu0 0
    %1896 = vmatpush2.bf16.msra.mxu0 0
    %1897 = vmatprep.mubr.bf16.mxu0 0
    %1898 = vmatmul.mubr.bf16.gmra.mxu0 %v1842
    %v1899 = vpop.f32.mrf.mxu0
    %v1900 = vadd.f32 %v1767, %v1899
    %v1901 = vpop.f32.mrf.mxu0
    %v1902 = vpop.f32.mrf.mxu0
    %v1903 = vadd.f32 %v1770, %v1902
    %v1904 = vpop.f32.mrf.mxu0
    %1905 = vmatprep.mubr.bf16.mxu0 0
    %1906 = vmatmul.mubr.bf16.gmra.mxu0 %v1845
    %v1907 = vpop.f32.mrf.mxu0
    %v1908 = vadd.f32 %v1775, %v1907
    %v1909 = vpop.f32.mrf.mxu0
    %v1910 = vpop.f32.mrf.mxu0
    %v1911 = vadd.f32 %v1778, %v1910
    %v1912 = vpop.f32.mrf.mxu0
    %1913 = vmatprep.mubr.bf16.mxu0 0
    %1914 = vmatmul.mubr.bf16.gmra.mxu0 %v1848
    %v1915 = vpop.f32.mrf.mxu0
    %v1916 = vadd.f32 %v1783, %v1915
    %v1917 = vpop.f32.mrf.mxu0
    %v1918 = vpop.f32.mrf.mxu0
    %v1919 = vadd.f32 %v1786, %v1918
    %v1920 = vpop.f32.mrf.mxu0
    %1921 = vmatprep.mubr.bf16.mxu0 0
    %1922 = vmatmul.mubr.bf16.gmra.mxu0 %v1851
    %v1923 = vpop.f32.mrf.mxu0
    %v1924 = vadd.f32 %v1791, %v1923
    %v1925 = vpop.f32.mrf.mxu0
    %v1926 = vpop.f32.mrf.mxu0
    %v1927 = vadd.f32 %v1794, %v1926
    %v1928 = vpop.f32.mrf.mxu0
    %1929 = vmatprep.mubr.bf16.mxu0 0
    %1930 = vmatmul.mubr.bf16.gmra.mxu0 %v1854
    %v1931 = vpop.f32.mrf.mxu0
    %v1932 = vadd.f32 %v1799, %v1931
    %v1933 = vpop.f32.mrf.mxu0
    %v1934 = vpop.f32.mrf.mxu0
    %v1935 = vadd.f32 %v1802, %v1934
    %v1936 = vpop.f32.mrf.mxu0
    %1937 = vmatprep.mubr.bf16.mxu0 0
    %1938 = vmatmul.mubr.bf16.gmra.mxu0 %v1857
    %v1939 = vpop.f32.mrf.mxu0
    %v1940 = vadd.f32 %v1807, %v1939
    %v1941 = vpop.f32.mrf.mxu0
    %v1942 = vpop.f32.mrf.mxu0
    %v1943 = vadd.f32 %v1810, %v1942
    %v1944 = vpop.f32.mrf.mxu0
    %1945 = vmatprep.mubr.bf16.mxu0 0
    %1946 = vmatmul.mubr.bf16.gmra.mxu0 %v1860
    %v1947 = vpop.f32.mrf.mxu0
    %v1948 = vadd.f32 %v1815, %v1947
    %v1949 = vpop.f32.mrf.mxu0
    %v1950 = vpop.f32.mrf.mxu0
    %v1951 = vadd.f32 %v1818, %v1950
    %v1952 = vpop.f32.mrf.mxu0
    %1953 = vmatprep.mubr.bf16.mxu0 0
    %1954 = vmatmul.mubr.bf16.gmra.mxu0 %v1863
    %v1955 = vpop.f32.mrf.mxu0
    %v1956 = vadd.f32 %v1823, %v1955
    %v1957 = vpop.f32.mrf.mxu0
    %v1958 = vpop.f32.mrf.mxu0
    %v1959 = vadd.f32 %v1826, %v1958
    %v1960 = vpop.f32.mrf.mxu0
    %1961 = vdwg.mxu0
    %v1962 = vld [vmem:[#allocation2 + $0x9] sm:$0xff]
    %v1963 = vld [vmem:[#allocation2 + $0x21] sm:$0xff]
    %v1964 = vld [vmem:[#allocation2 + $0x39] sm:$0xff]
    %v1965 = vld [vmem:[#allocation2 + $0x51] sm:$0xff]
    %v1966 = vld [vmem:[#allocation2 + $0x69] sm:$0xff]
    %v1967 = vld [vmem:[#allocation2 + $0x81] sm:$0xff]
    %v1968 = vld [vmem:[#allocation2 + $0x99] sm:$0xff]
    %v1969 = vld [vmem:[#allocation2 + $0xb1] sm:$0xff]
    %v1970 = vld [vmem:[#allocation2 + $0xf9] sm:$0xff]
    %v1971 = vld [vmem:[#allocation2 + $0x111] sm:$0xff]
    %v1972 = vld [vmem:[#allocation2 + $0x129] sm:$0xff]
    %v1973 = vld [vmem:[#allocation2 + $0x141] sm:$0xff]
    %v1974 = vld [vmem:[#allocation2 + $0x159] sm:$0xff]
    %v1975 = vld [vmem:[#allocation2 + $0x171] sm:$0xff]
    %v1976 = vld [vmem:[#allocation2 + $0x189] sm:$0xff]
    %v1977 = vld [vmem:[#allocation2 + $0x1a1] sm:$0xff]
    %v1978 = vpack.c.bf16 %v1963, %v1962
    %v1979 = vpack.c.bf16 %v1965, %v1964
    %v1980 = vpack.c.bf16 %v1967, %v1966
    %v1981 = vpack.c.bf16 %v1969, %v1968
    %v1982 = vpack.c.bf16 %v1971, %v1970
    %v1983 = vpack.c.bf16 %v1973, %v1972
    %v1984 = vpack.c.bf16 %v1975, %v1974
    %v1985 = vpack.c.bf16 %v1977, %v1976
    %s1986 = scalar_lea.vmem %s3, 32
    %v1987 = vld [vmem:[%s1986] sm:$0xf]
    %v1988 = vld [vmem:[%s1986 + $0x4] sm:$0xf]
    %v1989 = vld [vmem:[%s1986 + $0x8] sm:$0xf]
    %v1990 = vld [vmem:[%s1986 + $0xc] sm:$0xf]
    %v1995 = vunpack.c.l.b16 %v1987
    %v1996 = vunpack.c.l.b16 %v1988
    %v1997 = vunpack.c.l.b16 %v1989
    %v1998 = vunpack.c.l.b16 %v1990
    %v1999 = vpack.c.b16 %v1996, %v1995
    %v2000 = vpack.c.b16 %v1998, %v1997
    %v2004 = vsel %vm1560, %v1978, 0
    %v2007 = vsel %vm1560, %v1979, 0
    %v2010 = vsel %vm1560, %v1980, 0
    %v2013 = vsel %vm1560, %v1981, 0
    %v2016 = vsel %vm1560, %v1982, 0
    %v2019 = vsel %vm1560, %v1983, 0
    %v2022 = vsel %vm1560, %v1984, 0
    %v2025 = vsel %vm1560, %v1985, 0
    %2027 = vmatprep.subr.bf16.mxu0 0
    %2028 = vmatpush1.bf16.msra.mxu0 0
    %2029 = vmatprep.subr.bf16.mxu0 0
    %2030 = vmatpush1.bf16.msra.mxu0 0
    %2031 = vmatprep.subr.bf16.mxu0 0
    %2032 = vmatpush1.bf16.msra.mxu0 0
    %2033 = vmatprep.subr.bf16.mxu0 0
    %2034 = vmatpush1.bf16.msra.mxu0 0
    %2035 = vmatprep.subr.bf16.mxu0 0
    %2036 = vmatpush1.bf16.msra.mxu0 0
    %2037 = vmatprep.subr.bf16.mxu0 0
    %2038 = vmatpush1.bf16.msra.mxu0 0
    %2039 = vmatprep.subr.bf16.mxu0 0
    %2040 = vmatpush1.bf16.msra.mxu0 %v2000
    %2041 = vmatprep.subr.bf16.mxu0 0
    %2042 = vmatpush1.bf16.msra.mxu0 %v1999
    %2043 = vmatprep.subr.bf16.mxu0 0
    %2044 = vmatpush2.bf16.msra.mxu0 0
    %2045 = vmatprep.subr.bf16.mxu0 0
    %2046 = vmatpush2.bf16.msra.mxu0 0
    %2047 = vmatprep.subr.bf16.mxu0 0
    %2048 = vmatpush2.bf16.msra.mxu0 0
    %2049 = vmatprep.subr.bf16.mxu0 0
    %2050 = vmatpush2.bf16.msra.mxu0 0
    %2051 = vmatprep.subr.bf16.mxu0 0
    %2052 = vmatpush2.bf16.msra.mxu0 0
    %2053 = vmatprep.subr.bf16.mxu0 0
    %2054 = vmatpush2.bf16.msra.mxu0 0
    %2055 = vmatprep.subr.bf16.mxu0 0
    %2056 = vmatpush2.bf16.msra.mxu0 0
    %2057 = vmatprep.subr.bf16.mxu0 0
    %2058 = vmatpush2.bf16.msra.mxu0 0
    %2059 = vmatprep.mubr.bf16.mxu0 0
    %2060 = vmatmul.mubr.bf16.gmra.mxu0 %v2004
    %v2061 = vpop.f32.mrf.mxu0
    %v2062 = vadd.f32 0.0, %v2061
    %v2063 = vpop.f32.mrf.mxu0
    %v2064 = vpop.f32.mrf.mxu0
    %v2065 = vadd.f32 0.0, %v2064
    %v2066 = vpop.f32.mrf.mxu0
    %2067 = vmatprep.mubr.bf16.mxu0 0
    %2068 = vmatmul.mubr.bf16.gmra.mxu0 %v2007
    %v2069 = vpop.f32.mrf.mxu0
    %v2070 = vadd.f32 0.0, %v2069
    %v2071 = vpop.f32.mrf.mxu0
    %v2072 = vpop.f32.mrf.mxu0
    %v2073 = vadd.f32 0.0, %v2072
    %v2074 = vpop.f32.mrf.mxu0
    %2075 = vmatprep.mubr.bf16.mxu0 0
    %2076 = vmatmul.mubr.bf16.gmra.mxu0 %v2010
    %v2077 = vpop.f32.mrf.mxu0
    %v2078 = vadd.f32 0.0, %v2077
    %v2079 = vpop.f32.mrf.mxu0
    %v2080 = vpop.f32.mrf.mxu0
    %v2081 = vadd.f32 0.0, %v2080
    %v2082 = vpop.f32.mrf.mxu0
    %2083 = vmatprep.mubr.bf16.mxu0 0
    %2084 = vmatmul.mubr.bf16.gmra.mxu0 %v2013
    %v2085 = vpop.f32.mrf.mxu0
    %v2086 = vadd.f32 0.0, %v2085
    %v2087 = vpop.f32.mrf.mxu0
    %v2088 = vpop.f32.mrf.mxu0
    %v2089 = vadd.f32 0.0, %v2088
    %v2090 = vpop.f32.mrf.mxu0
    %2091 = vmatprep.mubr.bf16.mxu0 0
    %2092 = vmatmul.mubr.bf16.gmra.mxu0 %v2016
    %v2093 = vpop.f32.mrf.mxu0
    %v2094 = vadd.f32 0.0, %v2093
    %v2095 = vpop.f32.mrf.mxu0
    %v2096 = vpop.f32.mrf.mxu0
    %v2097 = vadd.f32 0.0, %v2096
    %v2098 = vpop.f32.mrf.mxu0
    %2099 = vmatprep.mubr.bf16.mxu0 0
    %2100 = vmatmul.mubr.bf16.gmra.mxu0 %v2019
    %v2101 = vpop.f32.mrf.mxu0
    %v2102 = vadd.f32 0.0, %v2101
    %v2103 = vpop.f32.mrf.mxu0
    %v2104 = vpop.f32.mrf.mxu0
    %v2105 = vadd.f32 0.0, %v2104
    %v2106 = vpop.f32.mrf.mxu0
    %2107 = vmatprep.mubr.bf16.mxu0 0
    %2108 = vmatmul.mubr.bf16.gmra.mxu0 %v2022
    %v2109 = vpop.f32.mrf.mxu0
    %v2110 = vadd.f32 0.0, %v2109
    %v2111 = vpop.f32.mrf.mxu0
    %v2112 = vpop.f32.mrf.mxu0
    %v2113 = vadd.f32 0.0, %v2112
    %v2114 = vpop.f32.mrf.mxu0
    %2115 = vmatprep.mubr.bf16.mxu0 0
    %2116 = vmatmul.mubr.bf16.gmra.mxu0 %v2025
    %v2117 = vpop.f32.mrf.mxu0
    %v2118 = vadd.f32 0.0, %v2117
    %v2119 = vpop.f32.mrf.mxu0
    %v2120 = vpop.f32.mrf.mxu0
    %v2121 = vadd.f32 0.0, %v2120
    %v2122 = vpop.f32.mrf.mxu0
    %2123 = vdwg.mxu0
    %v2124 = vadd.f32 %v1900, %v2062
    %v2125 = vadd.f32 %v1903, %v2065
    %v2126 = vadd.f32 %v1908, %v2070
    %v2127 = vadd.f32 %v1911, %v2073
    %v2128 = vadd.f32 %v1916, %v2078
    %v2129 = vadd.f32 %v1919, %v2081
    %v2130 = vadd.f32 %v1924, %v2086
    %v2131 = vadd.f32 %v1927, %v2089
    %v2132 = vadd.f32 %v1932, %v2094
    %v2133 = vadd.f32 %v1935, %v2097
    %v2134 = vadd.f32 %v1940, %v2102
    %v2135 = vadd.f32 %v1943, %v2105
    %v2136 = vadd.f32 %v1948, %v2110
    %v2137 = vadd.f32 %v1951, %v2113
    %v2138 = vadd.f32 %v1956, %v2118
    %v2139 = vadd.f32 %v1959, %v2121
    %v2140 = vld [vmem:[%s1622 + $0x7] sm:$0xff]
    %v2141 = vld [vmem:[%s1622 + $0x1f] sm:$0xff]
    %v2142 = vld [vmem:[%s1622 + $0x37] sm:$0xff]
    %v2143 = vld [vmem:[%s1622 + $0x4f] sm:$0xff]
    %v2144 = vld [vmem:[%s1622 + $0x67] sm:$0xff]
    %v2145 = vld [vmem:[%s1622 + $0x7f] sm:$0xff]
    %v2146 = vld [vmem:[%s1622 + $0x97] sm:$0xff]
    %v2147 = vld [vmem:[%s1622 + $0xaf] sm:$0xff]
    %v2148 = vld [vmem:[%s1622 + $0xf7] sm:$0xff]
    %v2149 = vld [vmem:[%s1622 + $0x10f] sm:$0xff]
    %v2150 = vld [vmem:[%s1622 + $0x127] sm:$0xff]
    %v2151 = vld [vmem:[%s1622 + $0x13f] sm:$0xff]
    %v2152 = vld [vmem:[%s1622 + $0x157] sm:$0xff]
    %v2153 = vld [vmem:[%s1622 + $0x16f] sm:$0xff]
    %v2154 = vld [vmem:[%s1622 + $0x187] sm:$0xff]
    %v2155 = vld [vmem:[%s1622 + $0x19f] sm:$0xff]
    %v2156 = vpack.c.bf16 %v2141, %v2140
    %v2157 = vpack.c.bf16 %v2143, %v2142
    %v2158 = vpack.c.bf16 %v2145, %v2144
    %v2159 = vpack.c.bf16 %v2147, %v2146
    %v2160 = vpack.c.bf16 %v2149, %v2148
    %v2161 = vpack.c.bf16 %v2151, %v2150
    %v2162 = vpack.c.bf16 %v2153, %v2152
    %v2163 = vpack.c.bf16 %v2155, %v2154
    %s2164 = scalar_lea.vmem %s3, 48
    %v2165 = vld [vmem:[%s2164] sm:$0xf]
    %v2166 = vld [vmem:[%s2164 + $0x4] sm:$0xf]
    %v2167 = vld [vmem:[%s2164 + $0x8] sm:$0xf]
    %v2168 = vld [vmem:[%s2164 + $0xc] sm:$0xf]
    %v2173 = vunpack.c.l.b16 %v2165
    %v2174 = vunpack.c.l.b16 %v2166
    %v2175 = vunpack.c.l.b16 %v2167
    %v2176 = vunpack.c.l.b16 %v2168
    %v2177 = vpack.c.b16 %v2174, %v2173
    %v2178 = vpack.c.b16 %v2176, %v2175
    %v2182 = vsel %vm1560, %v2156, 0
    %v2185 = vsel %vm1560, %v2157, 0
    %v2188 = vsel %vm1560, %v2158, 0
    %v2191 = vsel %vm1560, %v2159, 0
    %v2194 = vsel %vm1560, %v2160, 0
    %v2197 = vsel %vm1560, %v2161, 0
    %v2200 = vsel %vm1560, %v2162, 0
    %v2203 = vsel %vm1560, %v2163, 0
    %2205 = vmatprep.subr.bf16.mxu0 0
    %2206 = vmatpush1.bf16.msra.mxu0 0
    %2207 = vmatprep.subr.bf16.mxu0 0
    %2208 = vmatpush1.bf16.msra.mxu0 0
    %2209 = vmatprep.subr.bf16.mxu0 0
    %2210 = vmatpush1.bf16.msra.mxu0 0
    %2211 = vmatprep.subr.bf16.mxu0 0
    %2212 = vmatpush1.bf16.msra.mxu0 0
    %2213 = vmatprep.subr.bf16.mxu0 0
    %2214 = vmatpush1.bf16.msra.mxu0 0
    %2215 = vmatprep.subr.bf16.mxu0 0
    %2216 = vmatpush1.bf16.msra.mxu0 0
    %2217 = vmatprep.subr.bf16.mxu0 0
    %2218 = vmatpush1.bf16.msra.mxu0 %v2178
    %2219 = vmatprep.subr.bf16.mxu0 0
    %2220 = vmatpush1.bf16.msra.mxu0 %v2177
    %2221 = vmatprep.subr.bf16.mxu0 0
    %2222 = vmatpush2.bf16.msra.mxu0 0
    %2223 = vmatprep.subr.bf16.mxu0 0
    %2224 = vmatpush2.bf16.msra.mxu0 0
    %2225 = vmatprep.subr.bf16.mxu0 0
    %2226 = vmatpush2.bf16.msra.mxu0 0
    %2227 = vmatprep.subr.bf16.mxu0 0
    %2228 = vmatpush2.bf16.msra.mxu0 0
    %2229 = vmatprep.subr.bf16.mxu0 0
    %2230 = vmatpush2.bf16.msra.mxu0 0
    %2231 = vmatprep.subr.bf16.mxu0 0
    %2232 = vmatpush2.bf16.msra.mxu0 0
    %2233 = vmatprep.subr.bf16.mxu0 0
    %2234 = vmatpush2.bf16.msra.mxu0 0
    %2235 = vmatprep.subr.bf16.mxu0 0
    %2236 = vmatpush2.bf16.msra.mxu0 0
    %2237 = vmatprep.mubr.bf16.mxu0 0
    %2238 = vmatmul.mubr.bf16.gmra.mxu0 %v2182
    %v2239 = vpop.f32.mrf.mxu0
    %v2240 = vadd.f32 0.0, %v2239
    %v2241 = vpop.f32.mrf.mxu0
    %v2242 = vpop.f32.mrf.mxu0
    %v2243 = vadd.f32 0.0, %v2242
    %v2244 = vpop.f32.mrf.mxu0
    %2245 = vmatprep.mubr.bf16.mxu0 0
    %2246 = vmatmul.mubr.bf16.gmra.mxu0 %v2185
    %v2247 = vpop.f32.mrf.mxu0
    %v2248 = vadd.f32 0.0, %v2247
    %v2249 = vpop.f32.mrf.mxu0
    %v2250 = vpop.f32.mrf.mxu0
    %v2251 = vadd.f32 0.0, %v2250
    %v2252 = vpop.f32.mrf.mxu0
    %2253 = vmatprep.mubr.bf16.mxu0 0
    %2254 = vmatmul.mubr.bf16.gmra.mxu0 %v2188
    %v2255 = vpop.f32.mrf.mxu0
    %v2256 = vadd.f32 0.0, %v2255
    %v2257 = vpop.f32.mrf.mxu0
    %v2258 = vpop.f32.mrf.mxu0
    %v2259 = vadd.f32 0.0, %v2258
    %v2260 = vpop.f32.mrf.mxu0
    %2261 = vmatprep.mubr.bf16.mxu0 0
    %2262 = vmatmul.mubr.bf16.gmra.mxu0 %v2191
    %v2263 = vpop.f32.mrf.mxu0
    %v2264 = vadd.f32 0.0, %v2263
    %v2265 = vpop.f32.mrf.mxu0
    %v2266 = vpop.f32.mrf.mxu0
    %v2267 = vadd.f32 0.0, %v2266
    %v2268 = vpop.f32.mrf.mxu0
    %2269 = vmatprep.mubr.bf16.mxu0 0
    %2270 = vmatmul.mubr.bf16.gmra.mxu0 %v2194
    %v2271 = vpop.f32.mrf.mxu0
    %v2272 = vadd.f32 0.0, %v2271
    %v2273 = vpop.f32.mrf.mxu0
    %v2274 = vpop.f32.mrf.mxu0
    %v2275 = vadd.f32 0.0, %v2274
    %v2276 = vpop.f32.mrf.mxu0
    %2277 = vmatprep.mubr.bf16.mxu0 0
    %2278 = vmatmul.mubr.bf16.gmra.mxu0 %v2197
    %v2279 = vpop.f32.mrf.mxu0
    %v2280 = vadd.f32 0.0, %v2279
    %v2281 = vpop.f32.mrf.mxu0
    %v2282 = vpop.f32.mrf.mxu0
    %v2283 = vadd.f32 0.0, %v2282
    %v2284 = vpop.f32.mrf.mxu0
    %2285 = vmatprep.mubr.bf16.mxu0 0
    %2286 = vmatmul.mubr.bf16.gmra.mxu0 %v2200
    %v2287 = vpop.f32.mrf.mxu0
    %v2288 = vadd.f32 0.0, %v2287
    %v2289 = vpop.f32.mrf.mxu0
    %v2290 = vpop.f32.mrf.mxu0
    %v2291 = vadd.f32 0.0, %v2290
    %v2292 = vpop.f32.mrf.mxu0
    %2293 = vmatprep.mubr.bf16.mxu0 0
    %2294 = vmatmul.mubr.bf16.gmra.mxu0 %v2203
    %v2295 = vpop.f32.mrf.mxu0
    %v2296 = vadd.f32 0.0, %v2295
    %v2297 = vpop.f32.mrf.mxu0
    %v2298 = vpop.f32.mrf.mxu0
    %v2299 = vadd.f32 0.0, %v2298
    %v2300 = vpop.f32.mrf.mxu0
    %2301 = vdwg.mxu0
    %v2302 = vadd.f32 %v2124, %v2240
    %v2303 = vadd.f32 %v2125, %v2243
    %v2304 = vadd.f32 %v2126, %v2248
    %v2305 = vadd.f32 %v2127, %v2251
    %v2306 = vadd.f32 %v2128, %v2256
    %v2307 = vadd.f32 %v2129, %v2259
    %v2308 = vadd.f32 %v2130, %v2264
    %v2309 = vadd.f32 %v2131, %v2267
    %v2310 = vadd.f32 %v2132, %v2272
    %v2311 = vadd.f32 %v2133, %v2275
    %v2312 = vadd.f32 %v2134, %v2280
    %v2313 = vadd.f32 %v2135, %v2283
    %v2314 = vadd.f32 %v2136, %v2288
    %v2315 = vadd.f32 %v2137, %v2291
    %v2316 = vadd.f32 %v2138, %v2296
    %v2317 = vadd.f32 %v2139, %v2299
    %v2318 = vld [vmem:[%s1622 + $0x8] sm:$0xff]
    %v2319 = vld [vmem:[%s1622 + $0x20] sm:$0xff]
    %v2320 = vld [vmem:[%s1622 + $0x38] sm:$0xff]
    %v2321 = vld [vmem:[%s1622 + $0x50] sm:$0xff]
    %v2322 = vld [vmem:[%s1622 + $0x68] sm:$0xff]
    %v2323 = vld [vmem:[%s1622 + $0x80] sm:$0xff]
    %v2324 = vld [vmem:[%s1622 + $0x98] sm:$0xff]
    %v2325 = vld [vmem:[%s1622 + $0xb0] sm:$0xff]
    %v2326 = vld [vmem:[%s1622 + $0xf8] sm:$0xff]
    %v2327 = vld [vmem:[%s1622 + $0x110] sm:$0xff]
    %v2328 = vld [vmem:[%s1622 + $0x128] sm:$0xff]
    %v2329 = vld [vmem:[%s1622 + $0x140] sm:$0xff]
    %v2330 = vld [vmem:[%s1622 + $0x158] sm:$0xff]
    %v2331 = vld [vmem:[%s1622 + $0x170] sm:$0xff]
    %v2332 = vld [vmem:[%s1622 + $0x188] sm:$0xff]
    %v2333 = vld [vmem:[%s1622 + $0x1a0] sm:$0xff]
    %v2334 = vpack.c.bf16 %v2319, %v2318
    %v2335 = vpack.c.bf16 %v2321, %v2320
    %v2336 = vpack.c.bf16 %v2323, %v2322
    %v2337 = vpack.c.bf16 %v2325, %v2324
    %v2338 = vpack.c.bf16 %v2327, %v2326
    %v2339 = vpack.c.bf16 %v2329, %v2328
    %v2340 = vpack.c.bf16 %v2331, %v2330
    %v2341 = vpack.c.bf16 %v2333, %v2332
    %s2342 = scalar_lea.vmem %s3, 64
    %v2343 = vld [vmem:[%s2342] sm:$0xf]
    %v2344 = vld [vmem:[%s2342 + $0x4] sm:$0xf]
    %v2345 = vld [vmem:[%s2342 + $0x8] sm:$0xf]
    %v2346 = vld [vmem:[%s2342 + $0xc] sm:$0xf]
    %v2351 = vunpack.c.l.b16 %v2343
    %v2352 = vunpack.c.l.b16 %v2344
    %v2353 = vunpack.c.l.b16 %v2345
    %v2354 = vunpack.c.l.b16 %v2346
    %v2355 = vpack.c.b16 %v2352, %v2351
    %v2356 = vpack.c.b16 %v2354, %v2353
    %v2360 = vsel %vm1560, %v2334, 0
    %v2363 = vsel %vm1560, %v2335, 0
    %v2366 = vsel %vm1560, %v2336, 0
    %v2369 = vsel %vm1560, %v2337, 0
    %v2372 = vsel %vm1560, %v2338, 0
    %v2375 = vsel %vm1560, %v2339, 0
    %v2378 = vsel %vm1560, %v2340, 0
    %v2381 = vsel %vm1560, %v2341, 0
    %2383 = vmatprep.subr.bf16.mxu0 0
    %2384 = vmatpush1.bf16.msra.mxu0 0
    %2385 = vmatprep.subr.bf16.mxu0 0
    %2386 = vmatpush1.bf16.msra.mxu0 0
    %2387 = vmatprep.subr.bf16.mxu0 0
    %2388 = vmatpush1.bf16.msra.mxu0 0
    %2389 = vmatprep.subr.bf16.mxu0 0
    %2390 = vmatpush1.bf16.msra.mxu0 0
    %2391 = vmatprep.subr.bf16.mxu0 0
    %2392 = vmatpush1.bf16.msra.mxu0 0
    %2393 = vmatprep.subr.bf16.mxu0 0
    %2394 = vmatpush1.bf16.msra.mxu0 0
    %2395 = vmatprep.subr.bf16.mxu0 0
    %2396 = vmatpush1.bf16.msra.mxu0 %v2356
    %2397 = vmatprep.subr.bf16.mxu0 0
    %2398 = vmatpush1.bf16.msra.mxu0 %v2355
    %2399 = vmatprep.subr.bf16.mxu0 0
    %2400 = vmatpush2.bf16.msra.mxu0 0
    %2401 = vmatprep.subr.bf16.mxu0 0
    %2402 = vmatpush2.bf16.msra.mxu0 0
    %2403 = vmatprep.subr.bf16.mxu0 0
    %2404 = vmatpush2.bf16.msra.mxu0 0
    %2405 = vmatprep.subr.bf16.mxu0 0
    %2406 = vmatpush2.bf16.msra.mxu0 0
    %2407 = vmatprep.subr.bf16.mxu0 0
    %2408 = vmatpush2.bf16.msra.mxu0 0
    %2409 = vmatprep.subr.bf16.mxu0 0
    %2410 = vmatpush2.bf16.msra.mxu0 0
    %2411 = vmatprep.subr.bf16.mxu0 0
    %2412 = vmatpush2.bf16.msra.mxu0 0
    %2413 = vmatprep.subr.bf16.mxu0 0
    %2414 = vmatpush2.bf16.msra.mxu0 0
    %2415 = vmatprep.mubr.bf16.mxu0 0
    %2416 = vmatmul.mubr.bf16.gmra.mxu0 %v2360
    %v2417 = vpop.f32.mrf.mxu0
    %v2418 = vadd.f32 0.0, %v2417
    %v2419 = vpop.f32.mrf.mxu0
    %v2420 = vpop.f32.mrf.mxu0
    %v2421 = vadd.f32 0.0, %v2420
    %v2422 = vpop.f32.mrf.mxu0
    %2423 = vmatprep.mubr.bf16.mxu0 0
    %2424 = vmatmul.mubr.bf16.gmra.mxu0 %v2363
    %v2425 = vpop.f32.mrf.mxu0
    %v2426 = vadd.f32 0.0, %v2425
    %v2427 = vpop.f32.mrf.mxu0
    %v2428 = vpop.f32.mrf.mxu0
    %v2429 = vadd.f32 0.0, %v2428
    %v2430 = vpop.f32.mrf.mxu0
    %2431 = vmatprep.mubr.bf16.mxu0 0
    %2432 = vmatmul.mubr.bf16.gmra.mxu0 %v2366
    %v2433 = vpop.f32.mrf.mxu0
    %v2434 = vadd.f32 0.0, %v2433
    %v2435 = vpop.f32.mrf.mxu0
    %v2436 = vpop.f32.mrf.mxu0
    %v2437 = vadd.f32 0.0, %v2436
    %v2438 = vpop.f32.mrf.mxu0
    %2439 = vmatprep.mubr.bf16.mxu0 0
    %2440 = vmatmul.mubr.bf16.gmra.mxu0 %v2369
    %v2441 = vpop.f32.mrf.mxu0
    %v2442 = vadd.f32 0.0, %v2441
    %v2443 = vpop.f32.mrf.mxu0
    %v2444 = vpop.f32.mrf.mxu0
    %v2445 = vadd.f32 0.0, %v2444
    %v2446 = vpop.f32.mrf.mxu0
    %2447 = vmatprep.mubr.bf16.mxu0 0
    %2448 = vmatmul.mubr.bf16.gmra.mxu0 %v2372
    %v2449 = vpop.f32.mrf.mxu0
    %v2450 = vadd.f32 0.0, %v2449
    %v2451 = vpop.f32.mrf.mxu0
    %v2452 = vpop.f32.mrf.mxu0
    %v2453 = vadd.f32 0.0, %v2452
    %v2454 = vpop.f32.mrf.mxu0
    %2455 = vmatprep.mubr.bf16.mxu0 0
    %2456 = vmatmul.mubr.bf16.gmra.mxu0 %v2375
    %v2457 = vpop.f32.mrf.mxu0
    %v2458 = vadd.f32 0.0, %v2457
    %v2459 = vpop.f32.mrf.mxu0
    %v2460 = vpop.f32.mrf.mxu0
    %v2461 = vadd.f32 0.0, %v2460
    %v2462 = vpop.f32.mrf.mxu0
    %2463 = vmatprep.mubr.bf16.mxu0 0
    %2464 = vmatmul.mubr.bf16.gmra.mxu0 %v2378
    %v2465 = vpop.f32.mrf.mxu0
    %v2466 = vadd.f32 0.0, %v2465
    %v2467 = vpop.f32.mrf.mxu0
    %v2468 = vpop.f32.mrf.mxu0
    %v2469 = vadd.f32 0.0, %v2468
    %v2470 = vpop.f32.mrf.mxu0
    %2471 = vmatprep.mubr.bf16.mxu0 0
    %2472 = vmatmul.mubr.bf16.gmra.mxu0 %v2381
    %v2473 = vpop.f32.mrf.mxu0
    %v2474 = vadd.f32 0.0, %v2473
    %v2475 = vpop.f32.mrf.mxu0
    %v2476 = vpop.f32.mrf.mxu0
    %v2477 = vadd.f32 0.0, %v2476
    %v2478 = vpop.f32.mrf.mxu0
    %2479 = vdwg.mxu0
    %v2480 = vadd.f32 %v2302, %v2418
    %v2481 = vadd.f32 %v2303, %v2421
    %v2482 = vadd.f32 %v2304, %v2426
    %v2483 = vadd.f32 %v2305, %v2429
    %v2484 = vadd.f32 %v2306, %v2434
    %v2485 = vadd.f32 %v2307, %v2437
    %v2486 = vadd.f32 %v2308, %v2442
    %v2487 = vadd.f32 %v2309, %v2445
    %v2488 = vadd.f32 %v2310, %v2450
    %v2489 = vadd.f32 %v2311, %v2453
    %v2490 = vadd.f32 %v2312, %v2458
    %v2491 = vadd.f32 %v2313, %v2461
    %v2492 = vadd.f32 %v2314, %v2466
    %v2493 = vadd.f32 %v2315, %v2469
    %v2494 = vadd.f32 %v2316, %v2474
    %v2495 = vadd.f32 %v2317, %v2477
    %v2496 = vld [vmem:[%s1622 + $0x9] sm:$0xff]
    %v2497 = vld [vmem:[%s1622 + $0x21] sm:$0xff]
    %v2498 = vld [vmem:[%s1622 + $0x39] sm:$0xff]
    %v2499 = vld [vmem:[%s1622 + $0x51] sm:$0xff]
    %v2500 = vld [vmem:[%s1622 + $0x69] sm:$0xff]
    %v2501 = vld [vmem:[%s1622 + $0x81] sm:$0xff]
    %v2502 = vld [vmem:[%s1622 + $0x99] sm:$0xff]
    %v2503 = vld [vmem:[%s1622 + $0xb1] sm:$0xff]
    %v2504 = vld [vmem:[%s1622 + $0xf9] sm:$0xff]
    %v2505 = vld [vmem:[%s1622 + $0x111] sm:$0xff]
    %v2506 = vld [vmem:[%s1622 + $0x129] sm:$0xff]
    %v2507 = vld [vmem:[%s1622 + $0x141] sm:$0xff]
    %v2508 = vld [vmem:[%s1622 + $0x159] sm:$0xff]
    %v2509 = vld [vmem:[%s1622 + $0x171] sm:$0xff]
    %v2510 = vld [vmem:[%s1622 + $0x189] sm:$0xff]
    %v2511 = vld [vmem:[%s1622 + $0x1a1] sm:$0xff]
    %v2512 = vpack.c.bf16 %v2497, %v2496
    %v2513 = vpack.c.bf16 %v2499, %v2498
    %v2514 = vpack.c.bf16 %v2501, %v2500
    %v2515 = vpack.c.bf16 %v2503, %v2502
    %v2516 = vpack.c.bf16 %v2505, %v2504
    %v2517 = vpack.c.bf16 %v2507, %v2506
    %v2518 = vpack.c.bf16 %v2509, %v2508
    %v2519 = vpack.c.bf16 %v2511, %v2510
    %s2520 = scalar_lea.vmem %s3, 80
    %v2521 = vld [vmem:[%s2520] sm:$0xf]
    %v2522 = vld [vmem:[%s2520 + $0x4] sm:$0xf]
    %v2523 = vld [vmem:[%s2520 + $0x8] sm:$0xf]
    %v2524 = vld [vmem:[%s2520 + $0xc] sm:$0xf]
    %v2529 = vunpack.c.l.b16 %v2521
    %v2530 = vunpack.c.l.b16 %v2522
    %v2531 = vunpack.c.l.b16 %v2523
    %v2532 = vunpack.c.l.b16 %v2524
    %v2533 = vpack.c.b16 %v2530, %v2529
    %v2534 = vpack.c.b16 %v2532, %v2531
    %v2538 = vsel %vm1560, %v2512, 0
    %v2541 = vsel %vm1560, %v2513, 0
    %v2544 = vsel %vm1560, %v2514, 0
    %v2547 = vsel %vm1560, %v2515, 0
    %v2550 = vsel %vm1560, %v2516, 0
    %v2553 = vsel %vm1560, %v2517, 0
    %v2556 = vsel %vm1560, %v2518, 0
    %v2559 = vsel %vm1560, %v2519, 0
    %2561 = vmatprep.subr.bf16.mxu0 0
    %2562 = vmatpush1.bf16.msra.mxu0 0
    %2563 = vmatprep.subr.bf16.mxu0 0
    %2564 = vmatpush1.bf16.msra.mxu0 0
    %2565 = vmatprep.subr.bf16.mxu0 0
    %2566 = vmatpush1.bf16.msra.mxu0 0
    %2567 = vmatprep.subr.bf16.mxu0 0
    %2568 = vmatpush1.bf16.msra.mxu0 0
    %2569 = vmatprep.subr.bf16.mxu0 0
    %2570 = vmatpush1.bf16.msra.mxu0 0
    %2571 = vmatprep.subr.bf16.mxu0 0
    %2572 = vmatpush1.bf16.msra.mxu0 0
    %2573 = vmatprep.subr.bf16.mxu0 0
    %2574 = vmatpush1.bf16.msra.mxu0 %v2534
    %2575 = vmatprep.subr.bf16.mxu0 0
    %2576 = vmatpush1.bf16.msra.mxu0 %v2533
    %2577 = vmatprep.subr.bf16.mxu0 0
    %2578 = vmatpush2.bf16.msra.mxu0 0
    %2579 = vmatprep.subr.bf16.mxu0 0
    %2580 = vmatpush2.bf16.msra.mxu0 0
    %2581 = vmatprep.subr.bf16.mxu0 0
    %2582 = vmatpush2.bf16.msra.mxu0 0
    %2583 = vmatprep.subr.bf16.mxu0 0
    %2584 = vmatpush2.bf16.msra.mxu0 0
    %2585 = vmatprep.subr.bf16.mxu0 0
    %2586 = vmatpush2.bf16.msra.mxu0 0
    %2587 = vmatprep.subr.bf16.mxu0 0
    %2588 = vmatpush2.bf16.msra.mxu0 0
    %2589 = vmatprep.subr.bf16.mxu0 0
    %2590 = vmatpush2.bf16.msra.mxu0 0
    %2591 = vmatprep.subr.bf16.mxu0 0
    %2592 = vmatpush2.bf16.msra.mxu0 0
    %2593 = vmatprep.mubr.bf16.mxu0 0
    %2594 = vmatmul.mubr.bf16.gmra.mxu0 %v2538
    %v2595 = vpop.f32.mrf.mxu0
    %v2596 = vadd.f32 0.0, %v2595
    %v2597 = vpop.f32.mrf.mxu0
    %v2598 = vpop.f32.mrf.mxu0
    %v2599 = vadd.f32 0.0, %v2598
    %v2600 = vpop.f32.mrf.mxu0
    %2601 = vmatprep.mubr.bf16.mxu0 0
    %2602 = vmatmul.mubr.bf16.gmra.mxu0 %v2541
    %v2603 = vpop.f32.mrf.mxu0
    %v2604 = vadd.f32 0.0, %v2603
    %v2605 = vpop.f32.mrf.mxu0
    %v2606 = vpop.f32.mrf.mxu0
    %v2607 = vadd.f32 0.0, %v2606
    %v2608 = vpop.f32.mrf.mxu0
    %2609 = vmatprep.mubr.bf16.mxu0 0
    %2610 = vmatmul.mubr.bf16.gmra.mxu0 %v2544
    %v2611 = vpop.f32.mrf.mxu0
    %v2612 = vadd.f32 0.0, %v2611
    %v2613 = vpop.f32.mrf.mxu0
    %v2614 = vpop.f32.mrf.mxu0
    %v2615 = vadd.f32 0.0, %v2614
    %v2616 = vpop.f32.mrf.mxu0
    %2617 = vmatprep.mubr.bf16.mxu0 0
    %2618 = vmatmul.mubr.bf16.gmra.mxu0 %v2547
    %v2619 = vpop.f32.mrf.mxu0
    %v2620 = vadd.f32 0.0, %v2619
    %v2621 = vpop.f32.mrf.mxu0
    %v2622 = vpop.f32.mrf.mxu0
    %v2623 = vadd.f32 0.0, %v2622
    %v2624 = vpop.f32.mrf.mxu0
    %2625 = vmatprep.mubr.bf16.mxu0 0
    %2626 = vmatmul.mubr.bf16.gmra.mxu0 %v2550
    %v2627 = vpop.f32.mrf.mxu0
    %v2628 = vadd.f32 0.0, %v2627
    %v2629 = vpop.f32.mrf.mxu0
    %v2630 = vpop.f32.mrf.mxu0
    %v2631 = vadd.f32 0.0, %v2630
    %v2632 = vpop.f32.mrf.mxu0
    %2633 = vmatprep.mubr.bf16.mxu0 0
    %2634 = vmatmul.mubr.bf16.gmra.mxu0 %v2553
    %v2635 = vpop.f32.mrf.mxu0
    %v2636 = vadd.f32 0.0, %v2635
    %v2637 = vpop.f32.mrf.mxu0
    %v2638 = vpop.f32.mrf.mxu0
    %v2639 = vadd.f32 0.0, %v2638
    %v2640 = vpop.f32.mrf.mxu0
    %2641 = vmatprep.mubr.bf16.mxu0 0
    %2642 = vmatmul.mubr.bf16.gmra.mxu0 %v2556
    %v2643 = vpop.f32.mrf.mxu0
    %v2644 = vadd.f32 0.0, %v2643
    %v2645 = vpop.f32.mrf.mxu0
    %v2646 = vpop.f32.mrf.mxu0
    %v2647 = vadd.f32 0.0, %v2646
    %v2648 = vpop.f32.mrf.mxu0
    %2649 = vmatprep.mubr.bf16.mxu0 0
    %2650 = vmatmul.mubr.bf16.gmra.mxu0 %v2559
    %v2651 = vpop.f32.mrf.mxu0
    %v2652 = vadd.f32 0.0, %v2651
    %v2653 = vpop.f32.mrf.mxu0
    %v2654 = vpop.f32.mrf.mxu0
    %v2655 = vadd.f32 0.0, %v2654
    %v2656 = vpop.f32.mrf.mxu0
    %2657 = vdwg.mxu0
    %v2658 = vadd.f32 %v2480, %v2596
    %v2659 = vadd.f32 %v2481, %v2599
    %v2660 = vadd.f32 %v2482, %v2604
    %v2661 = vadd.f32 %v2483, %v2607
    %v2662 = vadd.f32 %v2484, %v2612
    %v2663 = vadd.f32 %v2485, %v2615
    %v2664 = vadd.f32 %v2486, %v2620
    %v2665 = vadd.f32 %v2487, %v2623
    %v2666 = vadd.f32 %v2488, %v2628
    %v2667 = vadd.f32 %v2489, %v2631
    %v2668 = vadd.f32 %v2490, %v2636
    %v2669 = vadd.f32 %v2491, %v2639
    %v2670 = vadd.f32 %v2492, %v2644
    %v2671 = vadd.f32 %v2493, %v2647
    %v2672 = vadd.f32 %v2494, %v2652
    %v2673 = vadd.f32 %v2495, %v2655
    %s2674 = scalar_lea.vmem [#allocation2], 48
    %v2675 = vld [vmem:[%s2674 + $0x7] sm:$0xff]
    %v2676 = vld [vmem:[%s2674 + $0x1f] sm:$0xff]
    %v2677 = vld [vmem:[%s2674 + $0x37] sm:$0xff]
    %v2678 = vld [vmem:[%s2674 + $0x4f] sm:$0xff]
    %v2679 = vld [vmem:[%s2674 + $0x67] sm:$0xff]
    %v2680 = vld [vmem:[%s2674 + $0x7f] sm:$0xff]
    %v2681 = vld [vmem:[%s2674 + $0x97] sm:$0xff]
    %v2682 = vld [vmem:[%s2674 + $0xaf] sm:$0xff]
    %v2683 = vld [vmem:[%s2674 + $0xf7] sm:$0xff]
    %v2684 = vld [vmem:[%s2674 + $0x10f] sm:$0xff]
    %v2685 = vld [vmem:[%s2674 + $0x127] sm:$0xff]
    %v2686 = vld [vmem:[%s2674 + $0x13f] sm:$0xff]
    %v2687 = vld [vmem:[%s2674 + $0x157] sm:$0xff]
    %v2688 = vld [vmem:[%s2674 + $0x16f] sm:$0xff]
    %v2689 = vld [vmem:[%s2674 + $0x187] sm:$0xff]
    %v2690 = vld [vmem:[%s2674 + $0x19f] sm:$0xff]
    %v2691 = vpack.c.bf16 %v2676, %v2675
    %v2692 = vpack.c.bf16 %v2678, %v2677
    %v2693 = vpack.c.bf16 %v2680, %v2679
    %v2694 = vpack.c.bf16 %v2682, %v2681
    %v2695 = vpack.c.bf16 %v2684, %v2683
    %v2696 = vpack.c.bf16 %v2686, %v2685
    %v2697 = vpack.c.bf16 %v2688, %v2687
    %v2698 = vpack.c.bf16 %v2690, %v2689
    %s2699 = scalar_lea.vmem %s3, 96
    %v2700 = vld [vmem:[%s2699] sm:$0xf]
    %v2701 = vld [vmem:[%s2699 + $0x4] sm:$0xf]
    %v2702 = vld [vmem:[%s2699 + $0x8] sm:$0xf]
    %v2703 = vld [vmem:[%s2699 + $0xc] sm:$0xf]
    %v2708 = vunpack.c.l.b16 %v2700
    %v2709 = vunpack.c.l.b16 %v2701
    %v2710 = vunpack.c.l.b16 %v2702
    %v2711 = vunpack.c.l.b16 %v2703
    %v2712 = vpack.c.b16 %v2709, %v2708
    %v2713 = vpack.c.b16 %v2711, %v2710
    %v2717 = vsel %vm1560, %v2691, 0
    %v2720 = vsel %vm1560, %v2692, 0
    %v2723 = vsel %vm1560, %v2693, 0
    %v2726 = vsel %vm1560, %v2694, 0
    %v2729 = vsel %vm1560, %v2695, 0
    %v2732 = vsel %vm1560, %v2696, 0
    %v2735 = vsel %vm1560, %v2697, 0
    %v2738 = vsel %vm1560, %v2698, 0
    %2740 = vmatprep.subr.bf16.mxu0 0
    %2741 = vmatpush1.bf16.msra.mxu0 0
    %2742 = vmatprep.subr.bf16.mxu0 0
    %2743 = vmatpush1.bf16.msra.mxu0 0
    %2744 = vmatprep.subr.bf16.mxu0 0
    %2745 = vmatpush1.bf16.msra.mxu0 0
    %2746 = vmatprep.subr.bf16.mxu0 0
    %2747 = vmatpush1.bf16.msra.mxu0 0
    %2748 = vmatprep.subr.bf16.mxu0 0
    %2749 = vmatpush1.bf16.msra.mxu0 0
    %2750 = vmatprep.subr.bf16.mxu0 0
    %2751 = vmatpush1.bf16.msra.mxu0 0
    %2752 = vmatprep.subr.bf16.mxu0 0
    %2753 = vmatpush1.bf16.msra.mxu0 %v2713
    %2754 = vmatprep.subr.bf16.mxu0 0
    %2755 = vmatpush1.bf16.msra.mxu0 %v2712
    %2756 = vmatprep.subr.bf16.mxu0 0
    %2757 = vmatpush2.bf16.msra.mxu0 0
    %2758 = vmatprep.subr.bf16.mxu0 0
    %2759 = vmatpush2.bf16.msra.mxu0 0
    %2760 = vmatprep.subr.bf16.mxu0 0
    %2761 = vmatpush2.bf16.msra.mxu0 0
    %2762 = vmatprep.subr.bf16.mxu0 0
    %2763 = vmatpush2.bf16.msra.mxu0 0
    %2764 = vmatprep.subr.bf16.mxu0 0
    %2765 = vmatpush2.bf16.msra.mxu0 0
    %2766 = vmatprep.subr.bf16.mxu0 0
    %2767 = vmatpush2.bf16.msra.mxu0 0
    %2768 = vmatprep.subr.bf16.mxu0 0
    %2769 = vmatpush2.bf16.msra.mxu0 0
    %2770 = vmatprep.subr.bf16.mxu0 0
    %2771 = vmatpush2.bf16.msra.mxu0 0
    %2772 = vmatprep.mubr.bf16.mxu0 0
    %2773 = vmatmul.mubr.bf16.gmra.mxu0 %v2717
    %v2774 = vpop.f32.mrf.mxu0
    %v2775 = vadd.f32 0.0, %v2774
    %v2776 = vpop.f32.mrf.mxu0
    %v2777 = vpop.f32.mrf.mxu0
    %v2778 = vadd.f32 0.0, %v2777
    %v2779 = vpop.f32.mrf.mxu0
    %2780 = vmatprep.mubr.bf16.mxu0 0
    %2781 = vmatmul.mubr.bf16.gmra.mxu0 %v2720
    %v2782 = vpop.f32.mrf.mxu0
    %v2783 = vadd.f32 0.0, %v2782
    %v2784 = vpop.f32.mrf.mxu0
    %v2785 = vpop.f32.mrf.mxu0
    %v2786 = vadd.f32 0.0, %v2785
    %v2787 = vpop.f32.mrf.mxu0
    %2788 = vmatprep.mubr.bf16.mxu0 0
    %2789 = vmatmul.mubr.bf16.gmra.mxu0 %v2723
    %v2790 = vpop.f32.mrf.mxu0
    %v2791 = vadd.f32 0.0, %v2790
    %v2792 = vpop.f32.mrf.mxu0
    %v2793 = vpop.f32.mrf.mxu0
    %v2794 = vadd.f32 0.0, %v2793
    %v2795 = vpop.f32.mrf.mxu0
    %2796 = vmatprep.mubr.bf16.mxu0 0
    %2797 = vmatmul.mubr.bf16.gmra.mxu0 %v2726
    %v2798 = vpop.f32.mrf.mxu0
    %v2799 = vadd.f32 0.0, %v2798
    %v2800 = vpop.f32.mrf.mxu0
    %v2801 = vpop.f32.mrf.mxu0
    %v2802 = vadd.f32 0.0, %v2801
    %v2803 = vpop.f32.mrf.mxu0
    %2804 = vmatprep.mubr.bf16.mxu0 0
    %2805 = vmatmul.mubr.bf16.gmra.mxu0 %v2729
    %v2806 = vpop.f32.mrf.mxu0
    %v2807 = vadd.f32 0.0, %v2806
    %v2808 = vpop.f32.mrf.mxu0
    %v2809 = vpop.f32.mrf.mxu0
    %v2810 = vadd.f32 0.0, %v2809
    %v2811 = vpop.f32.mrf.mxu0
    %2812 = vmatprep.mubr.bf16.mxu0 0
    %2813 = vmatmul.mubr.bf16.gmra.mxu0 %v2732
    %v2814 = vpop.f32.mrf.mxu0
    %v2815 = vadd.f32 0.0, %v2814
    %v2816 = vpop.f32.mrf.mxu0
    %v2817 = vpop.f32.mrf.mxu0
    %v2818 = vadd.f32 0.0, %v2817
    %v2819 = vpop.f32.mrf.mxu0
    %2820 = vmatprep.mubr.bf16.mxu0 0
    %2821 = vmatmul.mubr.bf16.gmra.mxu0 %v2735
    %v2822 = vpop.f32.mrf.mxu0
    %v2823 = vadd.f32 0.0, %v2822
    %v2824 = vpop.f32.mrf.mxu0
    %v2825 = vpop.f32.mrf.mxu0
    %v2826 = vadd.f32 0.0, %v2825
    %v2827 = vpop.f32.mrf.mxu0
    %2828 = vmatprep.mubr.bf16.mxu0 0
    %2829 = vmatmul.mubr.bf16.gmra.mxu0 %v2738
    %v2830 = vpop.f32.mrf.mxu0
    %v2831 = vadd.f32 0.0, %v2830
    %v2832 = vpop.f32.mrf.mxu0
    %v2833 = vpop.f32.mrf.mxu0
    %v2834 = vadd.f32 0.0, %v2833
    %v2835 = vpop.f32.mrf.mxu0
    %2836 = vdwg.mxu0
    %v2837 = vadd.f32 %v2658, %v2775
    %v2838 = vadd.f32 %v2659, %v2778
    %v2839 = vadd.f32 %v2660, %v2783
    %v2840 = vadd.f32 %v2661, %v2786
    %v2841 = vadd.f32 %v2662, %v2791
    %v2842 = vadd.f32 %v2663, %v2794
    %v2843 = vadd.f32 %v2664, %v2799
    %v2844 = vadd.f32 %v2665, %v2802
    %v2845 = vadd.f32 %v2666, %v2807
    %v2846 = vadd.f32 %v2667, %v2810
    %v2847 = vadd.f32 %v2668, %v2815
    %v2848 = vadd.f32 %v2669, %v2818
    %v2849 = vadd.f32 %v2670, %v2823
    %v2850 = vadd.f32 %v2671, %v2826
    %v2851 = vadd.f32 %v2672, %v2831
    %v2852 = vadd.f32 %v2673, %v2834
    %v2853 = vld [vmem:[%s2674 + $0x8] sm:$0xff]
    %v2854 = vld [vmem:[%s2674 + $0x20] sm:$0xff]
    %v2855 = vld [vmem:[%s2674 + $0x38] sm:$0xff]
    %v2856 = vld [vmem:[%s2674 + $0x50] sm:$0xff]
    %v2857 = vld [vmem:[%s2674 + $0x68] sm:$0xff]
    %v2858 = vld [vmem:[%s2674 + $0x80] sm:$0xff]
    %v2859 = vld [vmem:[%s2674 + $0x98] sm:$0xff]
    %v2860 = vld [vmem:[%s2674 + $0xb0] sm:$0xff]
    %v2861 = vld [vmem:[%s2674 + $0xf8] sm:$0xff]
    %v2862 = vld [vmem:[%s2674 + $0x110] sm:$0xff]
    %v2863 = vld [vmem:[%s2674 + $0x128] sm:$0xff]
    %v2864 = vld [vmem:[%s2674 + $0x140] sm:$0xff]
    %v2865 = vld [vmem:[%s2674 + $0x158] sm:$0xff]
    %v2866 = vld [vmem:[%s2674 + $0x170] sm:$0xff]
    %v2867 = vld [vmem:[%s2674 + $0x188] sm:$0xff]
    %v2868 = vld [vmem:[%s2674 + $0x1a0] sm:$0xff]
    %v2869 = vpack.c.bf16 %v2854, %v2853
    %v2870 = vpack.c.bf16 %v2856, %v2855
    %v2871 = vpack.c.bf16 %v2858, %v2857
    %v2872 = vpack.c.bf16 %v2860, %v2859
    %v2873 = vpack.c.bf16 %v2862, %v2861
    %v2874 = vpack.c.bf16 %v2864, %v2863
    %v2875 = vpack.c.bf16 %v2866, %v2865
    %v2876 = vpack.c.bf16 %v2868, %v2867
    %s2877 = scalar_lea.vmem %s3, 112
    %v2878 = vld [vmem:[%s2877] sm:$0xf]
    %v2879 = vld [vmem:[%s2877 + $0x4] sm:$0xf]
    %v2880 = vld [vmem:[%s2877 + $0x8] sm:$0xf]
    %v2881 = vld [vmem:[%s2877 + $0xc] sm:$0xf]
    %v2886 = vunpack.c.l.b16 %v2878
    %v2887 = vunpack.c.l.b16 %v2879
    %v2888 = vunpack.c.l.b16 %v2880
    %v2889 = vunpack.c.l.b16 %v2881
    %v2890 = vpack.c.b16 %v2887, %v2886
    %v2891 = vpack.c.b16 %v2889, %v2888
    %v2895 = vsel %vm1560, %v2869, 0
    %v2898 = vsel %vm1560, %v2870, 0
    %v2901 = vsel %vm1560, %v2871, 0
    %v2904 = vsel %vm1560, %v2872, 0
    %v2907 = vsel %vm1560, %v2873, 0
    %v2910 = vsel %vm1560, %v2874, 0
    %v2913 = vsel %vm1560, %v2875, 0
    %v2916 = vsel %vm1560, %v2876, 0
    %2918 = vmatprep.subr.bf16.mxu0 0
    %2919 = vmatpush1.bf16.msra.mxu0 0
    %2920 = vmatprep.subr.bf16.mxu0 0
    %2921 = vmatpush1.bf16.msra.mxu0 0
    %2922 = vmatprep.subr.bf16.mxu0 0
    %2923 = vmatpush1.bf16.msra.mxu0 0
    %2924 = vmatprep.subr.bf16.mxu0 0
    %2925 = vmatpush1.bf16.msra.mxu0 0
    %2926 = vmatprep.subr.bf16.mxu0 0
    %2927 = vmatpush1.bf16.msra.mxu0 0
    %2928 = vmatprep.subr.bf16.mxu0 0
    %2929 = vmatpush1.bf16.msra.mxu0 0
    %2930 = vmatprep.subr.bf16.mxu0 0
    %2931 = vmatpush1.bf16.msra.mxu0 %v2891
    %2932 = vmatprep.subr.bf16.mxu0 0
    %2933 = vmatpush1.bf16.msra.mxu0 %v2890
    %2934 = vmatprep.subr.bf16.mxu0 0
    %2935 = vmatpush2.bf16.msra.mxu0 0
    %2936 = vmatprep.subr.bf16.mxu0 0
    %2937 = vmatpush2.bf16.msra.mxu0 0
    %2938 = vmatprep.subr.bf16.mxu0 0
    %2939 = vmatpush2.bf16.msra.mxu0 0
    %2940 = vmatprep.subr.bf16.mxu0 0
    %2941 = vmatpush2.bf16.msra.mxu0 0
    %2942 = vmatprep.subr.bf16.mxu0 0
    %2943 = vmatpush2.bf16.msra.mxu0 0
    %2944 = vmatprep.subr.bf16.mxu0 0
    %2945 = vmatpush2.bf16.msra.mxu0 0
    %2946 = vmatprep.subr.bf16.mxu0 0
    %2947 = vmatpush2.bf16.msra.mxu0 0
    %2948 = vmatprep.subr.bf16.mxu0 0
    %2949 = vmatpush2.bf16.msra.mxu0 0
    %2950 = vmatprep.mubr.bf16.mxu0 0
    %2951 = vmatmul.mubr.bf16.gmra.mxu0 %v2895
    %v2952 = vpop.f32.mrf.mxu0
    %v2953 = vadd.f32 0.0, %v2952
    %v2954 = vpop.f32.mrf.mxu0
    %v2955 = vpop.f32.mrf.mxu0
    %v2956 = vadd.f32 0.0, %v2955
    %v2957 = vpop.f32.mrf.mxu0
    %2958 = vmatprep.mubr.bf16.mxu0 0
    %2959 = vmatmul.mubr.bf16.gmra.mxu0 %v2898
    %v2960 = vpop.f32.mrf.mxu0
    %v2961 = vadd.f32 0.0, %v2960
    %v2962 = vpop.f32.mrf.mxu0
    %v2963 = vpop.f32.mrf.mxu0
    %v2964 = vadd.f32 0.0, %v2963
    %v2965 = vpop.f32.mrf.mxu0
    %2966 = vmatprep.mubr.bf16.mxu0 0
    %2967 = vmatmul.mubr.bf16.gmra.mxu0 %v2901
    %v2968 = vpop.f32.mrf.mxu0
    %v2969 = vadd.f32 0.0, %v2968
    %v2970 = vpop.f32.mrf.mxu0
    %v2971 = vpop.f32.mrf.mxu0
    %v2972 = vadd.f32 0.0, %v2971
    %v2973 = vpop.f32.mrf.mxu0
    %2974 = vmatprep.mubr.bf16.mxu0 0
    %2975 = vmatmul.mubr.bf16.gmra.mxu0 %v2904
    %v2976 = vpop.f32.mrf.mxu0
    %v2977 = vadd.f32 0.0, %v2976
    %v2978 = vpop.f32.mrf.mxu0
    %v2979 = vpop.f32.mrf.mxu0
    %v2980 = vadd.f32 0.0, %v2979
    %v2981 = vpop.f32.mrf.mxu0
    %2982 = vmatprep.mubr.bf16.mxu0 0
    %2983 = vmatmul.mubr.bf16.gmra.mxu0 %v2907
    %v2984 = vpop.f32.mrf.mxu0
    %v2985 = vadd.f32 0.0, %v2984
    %v2986 = vpop.f32.mrf.mxu0
    %v2987 = vpop.f32.mrf.mxu0
    %v2988 = vadd.f32 0.0, %v2987
    %v2989 = vpop.f32.mrf.mxu0
    %2990 = vmatprep.mubr.bf16.mxu0 0
    %2991 = vmatmul.mubr.bf16.gmra.mxu0 %v2910
    %v2992 = vpop.f32.mrf.mxu0
    %v2993 = vadd.f32 0.0, %v2992
    %v2994 = vpop.f32.mrf.mxu0
    %v2995 = vpop.f32.mrf.mxu0
    %v2996 = vadd.f32 0.0, %v2995
    %v2997 = vpop.f32.mrf.mxu0
    %2998 = vmatprep.mubr.bf16.mxu0 0
    %2999 = vmatmul.mubr.bf16.gmra.mxu0 %v2913
    %v3000 = vpop.f32.mrf.mxu0
    %v3001 = vadd.f32 0.0, %v3000
    %v3002 = vpop.f32.mrf.mxu0
    %v3003 = vpop.f32.mrf.mxu0
    %v3004 = vadd.f32 0.0, %v3003
    %v3005 = vpop.f32.mrf.mxu0
    %3006 = vmatprep.mubr.bf16.mxu0 0
    %3007 = vmatmul.mubr.bf16.gmra.mxu0 %v2916
    %v3008 = vpop.f32.mrf.mxu0
    %v3009 = vadd.f32 0.0, %v3008
    %v3010 = vpop.f32.mrf.mxu0
    %v3011 = vpop.f32.mrf.mxu0
    %v3012 = vadd.f32 0.0, %v3011
    %v3013 = vpop.f32.mrf.mxu0
    %3014 = vdwg.mxu0
    %v3015 = vadd.f32 %v2837, %v2953
    %v3016 = vadd.f32 %v2838, %v2956
    %v3017 = vadd.f32 %v2839, %v2961
    %v3018 = vadd.f32 %v2840, %v2964
    %v3019 = vadd.f32 %v2841, %v2969
    %v3020 = vadd.f32 %v2842, %v2972
    %v3021 = vadd.f32 %v2843, %v2977
    %v3022 = vadd.f32 %v2844, %v2980
    %v3023 = vadd.f32 %v2845, %v2985
    %v3024 = vadd.f32 %v2846, %v2988
    %v3025 = vadd.f32 %v2847, %v2993
    %v3026 = vadd.f32 %v2848, %v2996
    %v3027 = vadd.f32 %v2849, %v3001
    %v3028 = vadd.f32 %v2850, %v3004
    %v3029 = vadd.f32 %v2851, %v3009
    %v3030 = vadd.f32 %v2852, %v3012
    %v3031 = vld [vmem:[%s2674 + $0x9] sm:$0xff]
    %v3032 = vld [vmem:[%s2674 + $0x21] sm:$0xff]
    %v3033 = vld [vmem:[%s2674 + $0x39] sm:$0xff]
    %v3034 = vld [vmem:[%s2674 + $0x51] sm:$0xff]
    %v3035 = vld [vmem:[%s2674 + $0x69] sm:$0xff]
    %v3036 = vld [vmem:[%s2674 + $0x81] sm:$0xff]
    %v3037 = vld [vmem:[%s2674 + $0x99] sm:$0xff]
    %v3038 = vld [vmem:[%s2674 + $0xb1] sm:$0xff]
    %v3039 = vld [vmem:[%s2674 + $0xf9] sm:$0xff]
    %v3040 = vld [vmem:[%s2674 + $0x111] sm:$0xff]
    %v3041 = vld [vmem:[%s2674 + $0x129] sm:$0xff]
    %v3042 = vld [vmem:[%s2674 + $0x141] sm:$0xff]
    %v3043 = vld [vmem:[%s2674 + $0x159] sm:$0xff]
    %v3044 = vld [vmem:[%s2674 + $0x171] sm:$0xff]
    %v3045 = vld [vmem:[%s2674 + $0x189] sm:$0xff]
    %v3046 = vld [vmem:[%s2674 + $0x1a1] sm:$0xff]
    %v3047 = vpack.c.bf16 %v3032, %v3031
    %v3048 = vpack.c.bf16 %v3034, %v3033
    %v3049 = vpack.c.bf16 %v3036, %v3035
    %v3050 = vpack.c.bf16 %v3038, %v3037
    %v3051 = vpack.c.bf16 %v3040, %v3039
    %v3052 = vpack.c.bf16 %v3042, %v3041
    %v3053 = vpack.c.bf16 %v3044, %v3043
    %v3054 = vpack.c.bf16 %v3046, %v3045
    %s3055 = scalar_lea.vmem %s3, 128
    %v3056 = vld [vmem:[%s3055] sm:$0xf]
    %v3057 = vld [vmem:[%s3055 + $0x4] sm:$0xf]
    %v3058 = vld [vmem:[%s3055 + $0x8] sm:$0xf]
    %v3059 = vld [vmem:[%s3055 + $0xc] sm:$0xf]
    %v3064 = vunpack.c.l.b16 %v3056
    %v3065 = vunpack.c.l.b16 %v3057
    %v3066 = vunpack.c.l.b16 %v3058
    %v3067 = vunpack.c.l.b16 %v3059
    %v3068 = vpack.c.b16 %v3065, %v3064
    %v3069 = vpack.c.b16 %v3067, %v3066
    %v3073 = vsel %vm1560, %v3047, 0
    %v3076 = vsel %vm1560, %v3048, 0
    %v3079 = vsel %vm1560, %v3049, 0
    %v3082 = vsel %vm1560, %v3050, 0
    %v3085 = vsel %vm1560, %v3051, 0
    %v3088 = vsel %vm1560, %v3052, 0
    %v3091 = vsel %vm1560, %v3053, 0
    %v3094 = vsel %vm1560, %v3054, 0
    %3096 = vmatprep.subr.bf16.mxu0 0
    %3097 = vmatpush1.bf16.msra.mxu0 0
    %3098 = vmatprep.subr.bf16.mxu0 0
    %3099 = vmatpush1.bf16.msra.mxu0 0
    %3100 = vmatprep.subr.bf16.mxu0 0
    %3101 = vmatpush1.bf16.msra.mxu0 0
    %3102 = vmatprep.subr.bf16.mxu0 0
    %3103 = vmatpush1.bf16.msra.mxu0 0
    %3104 = vmatprep.subr.bf16.mxu0 0
    %3105 = vmatpush1.bf16.msra.mxu0 0
    %3106 = vmatprep.subr.bf16.mxu0 0
    %3107 = vmatpush1.bf16.msra.mxu0 0
    %3108 = vmatprep.subr.bf16.mxu0 0
    %3109 = vmatpush1.bf16.msra.mxu0 %v3069
    %3110 = vmatprep.subr.bf16.mxu0 0
    %3111 = vmatpush1.bf16.msra.mxu0 %v3068
    %3112 = vmatprep.subr.bf16.mxu0 0
    %3113 = vmatpush2.bf16.msra.mxu0 0
    %3114 = vmatprep.subr.bf16.mxu0 0
    %3115 = vmatpush2.bf16.msra.mxu0 0
    %3116 = vmatprep.subr.bf16.mxu0 0
    %3117 = vmatpush2.bf16.msra.mxu0 0
    %3118 = vmatprep.subr.bf16.mxu0 0
    %3119 = vmatpush2.bf16.msra.mxu0 0
    %3120 = vmatprep.subr.bf16.mxu0 0
    %3121 = vmatpush2.bf16.msra.mxu0 0
    %3122 = vmatprep.subr.bf16.mxu0 0
    %3123 = vmatpush2.bf16.msra.mxu0 0
    %3124 = vmatprep.subr.bf16.mxu0 0
    %3125 = vmatpush2.bf16.msra.mxu0 0
    %3126 = vmatprep.subr.bf16.mxu0 0
    %3127 = vmatpush2.bf16.msra.mxu0 0
    %3128 = vmatprep.mubr.bf16.mxu0 0
    %3129 = vmatmul.mubr.bf16.gmra.mxu0 %v3073
    %v3130 = vpop.f32.mrf.mxu0
    %v3131 = vadd.f32 0.0, %v3130
    %v3132 = vpop.f32.mrf.mxu0
    %v3133 = vpop.f32.mrf.mxu0
    %v3134 = vadd.f32 0.0, %v3133
    %v3135 = vpop.f32.mrf.mxu0
    %3136 = vmatprep.mubr.bf16.mxu0 0
    %3137 = vmatmul.mubr.bf16.gmra.mxu0 %v3076
    %v3138 = vpop.f32.mrf.mxu0
    %v3139 = vadd.f32 0.0, %v3138
    %v3140 = vpop.f32.mrf.mxu0
    %v3141 = vpop.f32.mrf.mxu0
    %v3142 = vadd.f32 0.0, %v3141
    %v3143 = vpop.f32.mrf.mxu0
    %3144 = vmatprep.mubr.bf16.mxu0 0
    %3145 = vmatmul.mubr.bf16.gmra.mxu0 %v3079
    %v3146 = vpop.f32.mrf.mxu0
    %v3147 = vadd.f32 0.0, %v3146
    %v3148 = vpop.f32.mrf.mxu0
    %v3149 = vpop.f32.mrf.mxu0
    %v3150 = vadd.f32 0.0, %v3149
    %v3151 = vpop.f32.mrf.mxu0
    %3152 = vmatprep.mubr.bf16.mxu0 0
    %3153 = vmatmul.mubr.bf16.gmra.mxu0 %v3082
    %v3154 = vpop.f32.mrf.mxu0
    %v3155 = vadd.f32 0.0, %v3154
    %v3156 = vpop.f32.mrf.mxu0
    %v3157 = vpop.f32.mrf.mxu0
    %v3158 = vadd.f32 0.0, %v3157
    %v3159 = vpop.f32.mrf.mxu0
    %3160 = vmatprep.mubr.bf16.mxu0 0
    %3161 = vmatmul.mubr.bf16.gmra.mxu0 %v3085
    %v3162 = vpop.f32.mrf.mxu0
    %v3163 = vadd.f32 0.0, %v3162
    %v3164 = vpop.f32.mrf.mxu0
    %v3165 = vpop.f32.mrf.mxu0
    %v3166 = vadd.f32 0.0, %v3165
    %v3167 = vpop.f32.mrf.mxu0
    %3168 = vmatprep.mubr.bf16.mxu0 0
    %3169 = vmatmul.mubr.bf16.gmra.mxu0 %v3088
    %v3170 = vpop.f32.mrf.mxu0
    %v3171 = vadd.f32 0.0, %v3170
    %v3172 = vpop.f32.mrf.mxu0
    %v3173 = vpop.f32.mrf.mxu0
    %v3174 = vadd.f32 0.0, %v3173
    %v3175 = vpop.f32.mrf.mxu0
    %3176 = vmatprep.mubr.bf16.mxu0 0
    %3177 = vmatmul.mubr.bf16.gmra.mxu0 %v3091
    %v3178 = vpop.f32.mrf.mxu0
    %v3179 = vadd.f32 0.0, %v3178
    %v3180 = vpop.f32.mrf.mxu0
    %v3181 = vpop.f32.mrf.mxu0
    %v3182 = vadd.f32 0.0, %v3181
    %v3183 = vpop.f32.mrf.mxu0
    %3184 = vmatprep.mubr.bf16.mxu0 0
    %3185 = vmatmul.mubr.bf16.gmra.mxu0 %v3094
    %v3186 = vpop.f32.mrf.mxu0
    %v3187 = vadd.f32 0.0, %v3186
    %v3188 = vpop.f32.mrf.mxu0
    %v3189 = vpop.f32.mrf.mxu0
    %v3190 = vadd.f32 0.0, %v3189
    %v3191 = vpop.f32.mrf.mxu0
    %3192 = vdwg.mxu0
    %v3193 = vadd.f32 %v3015, %v3131
    %v3194 = vadd.f32 %v3016, %v3134
    %v3195 = vadd.f32 %v3017, %v3139
    %v3196 = vadd.f32 %v3018, %v3142
    %v3197 = vadd.f32 %v3019, %v3147
    %v3198 = vadd.f32 %v3020, %v3150
    %v3199 = vadd.f32 %v3021, %v3155
    %v3200 = vadd.f32 %v3022, %v3158
    %v3201 = vadd.f32 %v3023, %v3163
    %v3202 = vadd.f32 %v3024, %v3166
    %v3203 = vadd.f32 %v3025, %v3171
    %v3204 = vadd.f32 %v3026, %v3174
    %v3205 = vadd.f32 %v3027, %v3179
    %v3206 = vadd.f32 %v3028, %v3182
    %v3207 = vadd.f32 %v3029, %v3187
    %v3208 = vadd.f32 %v3030, %v3190
    %v3209 = vld [vmem:[%s4] sm:$0x1]
    %v3211 = vlaneseq
    %v3212 = vshrl.u32 %v3211, 7
    %v3213 = vsub.s32 0, %v3212
    %v3214 = vrot.slane %v3209, %v3213
    %v3216 = vadd.f32 %v3193, %v3214
    %v3217 = vadd.f32 %v3194, %v3214
    %v3218 = vadd.f32 %v3195, %v3214
    %v3219 = vadd.f32 %v3196, %v3214
    %v3220 = vadd.f32 %v3197, %v3214
    %v3221 = vadd.f32 %v3198, %v3214
    %v3222 = vadd.f32 %v3199, %v3214
    %v3223 = vadd.f32 %v3200, %v3214
    %v3224 = vadd.f32 %v3201, %v3214
    %v3225 = vadd.f32 %v3202, %v3214
    %v3226 = vadd.f32 %v3203, %v3214
    %v3227 = vadd.f32 %v3204, %v3214
    %v3228 = vadd.f32 %v3205, %v3214
    %v3229 = vadd.f32 %v3206, %v3214
    %v3230 = vadd.f32 %v3207, %v3214
    %v3231 = vadd.f32 %v3208, %v3214
    %v3232 = vmax.f32 %v3216, 0.0
    %v3233 = vmax.f32 %v3217, 0.0
    %v3234 = vmax.f32 %v3218, 0.0
    %v3235 = vmax.f32 %v3219, 0.0
    %v3236 = vmax.f32 %v3220, 0.0
    %v3237 = vmax.f32 %v3221, 0.0
    %v3238 = vmax.f32 %v3222, 0.0
    %v3239 = vmax.f32 %v3223, 0.0
    %v3240 = vmax.f32 %v3224, 0.0
    %v3241 = vmax.f32 %v3225, 0.0
    %v3242 = vmax.f32 %v3226, 0.0
    %v3243 = vmax.f32 %v3227, 0.0
    %v3244 = vmax.f32 %v3228, 0.0
    %v3245 = vmax.f32 %v3229, 0.0
    %v3246 = vmax.f32 %v3230, 0.0
    %v3247 = vmax.f32 %v3231, 0.0
    %vm3248 = vcmask 523264
    %3249 = vst.msk [vmem:[#allocation3] sm:$0xff] %vm3248, 0.0
    %3250 = vst.msk [vmem:[#allocation3 + $0x8] sm:$0xff] %vm3248, 0.0
    %vm3251 = vcmask 516096
    %3252 = vst.msk [vmem:[#allocation3 + $0x10] sm:$0x1] %vm3251, 0.0
    %3253 = vst.msk [vmem:[#allocation3 + $0x18] sm:$0xff] %vm3248, 0.0
    %3254 = vst.msk [vmem:[#allocation3 + $0x20] sm:$0xff] %vm3248, 0.0
    %3255 = vst.msk [vmem:[#allocation3 + $0x28] sm:$0x1] %vm3251, 0.0
    %3256 = vst.msk [vmem:[#allocation3 + $0x30] sm:$0xff] %vm3248, 0.0
    %3257 = vst.msk [vmem:[#allocation3 + $0x38] sm:$0xff] %vm3248, 0.0
    %3258 = vst.msk [vmem:[#allocation3 + $0x40] sm:$0x1] %vm3251, 0.0
    %3259 = vst.msk [vmem:[#allocation3 + $0x48] sm:$0xff] %vm3248, 0.0
    %3260 = vst.msk [vmem:[#allocation3 + $0x50] sm:$0xff] %vm3248, 0.0
    %3261 = vst.msk [vmem:[#allocation3 + $0x58] sm:$0x1] %vm3251, 0.0
    %3262 = vst.msk [vmem:[#allocation3 + $0x60] sm:$0xff] %vm3248, 0.0
    %3263 = vst.msk [vmem:[#allocation3 + $0x68] sm:$0xff] %vm3248, 0.0
    %3264 = vst.msk [vmem:[#allocation3 + $0x70] sm:$0x1] %vm3251, 0.0
    %3265 = vst.msk [vmem:[#allocation3 + $0x78] sm:$0xff] %vm3248, 0.0
    %3266 = vst.msk [vmem:[#allocation3 + $0x80] sm:$0xff] %vm3248, 0.0
    %3267 = vst.msk [vmem:[#allocation3 + $0x88] sm:$0x1] %vm3251, 0.0
    %3268 = vst.msk [vmem:[#allocation3 + $0x90] sm:$0xff] %vm3248, 0.0
    %3269 = vst.msk [vmem:[#allocation3 + $0x98] sm:$0xff] %vm3248, 0.0
    %3270 = vst.msk [vmem:[#allocation3 + $0xa0] sm:$0x1] %vm3251, 0.0
    %3271 = vst.msk [vmem:[#allocation3 + $0xa8] sm:$0xff] %vm3248, 0.0
    %3272 = vst.msk [vmem:[#allocation3 + $0xb0] sm:$0xff] %vm3248, 0.0
    %3273 = vst.msk [vmem:[#allocation3 + $0xb8] sm:$0x1] %vm3251, 0.0
    %3274 = vst.msk [vmem:[#allocation3 + $0xc0] sm:$0xff] %vm3248, 0.0
    %3275 = vst.msk [vmem:[#allocation3 + $0xc8] sm:$0xff] %vm3248, 0.0
    %3276 = vst.msk [vmem:[#allocation3 + $0xd0] sm:$0x1] %vm3251, 0.0
    %3277 = vst.msk [vmem:[#allocation3 + $0xd8] sm:$0xff] %vm3248, 0.0
    %3278 = vst.msk [vmem:[#allocation3 + $0xe0] sm:$0xff] %vm3248, 0.0
    %3279 = vst.msk [vmem:[#allocation3 + $0xe8] sm:$0x1] %vm3251, 0.0
    %3280 = vst.msk [vmem:[#allocation3 + $0xf0] sm:$0xff] %vm3248, 0.0
    %3281 = vst.msk [vmem:[#allocation3 + $0xf8] sm:$0xff] %vm3248, 0.0
    %3282 = vst.msk [vmem:[#allocation3 + $0x100] sm:$0x1] %vm3251, 0.0
    %3283 = vst.msk [vmem:[#allocation3 + $0x108] sm:$0xff] %vm3248, 0.0
    %3284 = vst.msk [vmem:[#allocation3 + $0x110] sm:$0xff] %vm3248, 0.0
    %3285 = vst.msk [vmem:[#allocation3 + $0x118] sm:$0x1] %vm3251, 0.0
    %3286 = vst.msk [vmem:[#allocation3 + $0x120] sm:$0xff] %vm3248, 0.0
    %3287 = vst.msk [vmem:[#allocation3 + $0x128] sm:$0xff] %vm3248, 0.0
    %3288 = vst.msk [vmem:[#allocation3 + $0x130] sm:$0x1] %vm3251, 0.0
    %3289 = vst.msk [vmem:[#allocation3 + $0x138] sm:$0xff] %vm3248, 0.0
    %3290 = vst.msk [vmem:[#allocation3 + $0x140] sm:$0xff] %vm3248, 0.0
    %3291 = vst.msk [vmem:[#allocation3 + $0x148] sm:$0x1] %vm3251, 0.0
    %3292 = vst.msk [vmem:[#allocation3 + $0x150] sm:$0xff] %vm3248, 0.0
    %3293 = vst.msk [vmem:[#allocation3 + $0x158] sm:$0xff] %vm3248, 0.0
    %3294 = vst.msk [vmem:[#allocation3 + $0x160] sm:$0x1] %vm3251, 0.0
    %3295 = vst.msk [vmem:[#allocation3 + $0x168] sm:$0xff] %vm3248, 0.0
    %3296 = vst.msk [vmem:[#allocation3 + $0x170] sm:$0xff] %vm3248, 0.0
    %3297 = vst.msk [vmem:[#allocation3 + $0x178] sm:$0x1] %vm3251, 0.0
    %3298 = vst.msk [vmem:[#allocation3 + $0x180] sm:$0xff] %vm3248, 0.0
    %3299 = vst.msk [vmem:[#allocation3 + $0x188] sm:$0xff] %vm3248, 0.0
    %3300 = vst.msk [vmem:[#allocation3 + $0x190] sm:$0x1] %vm3251, 0.0
    %3301 = vst.msk [vmem:[#allocation3 + $0x198] sm:$0xff] %vm3248, 0.0
    %3302 = vst.msk [vmem:[#allocation3 + $0x1a0] sm:$0xff] %vm3248, 0.0
    %3303 = vst.msk [vmem:[#allocation3 + $0x1a8] sm:$0x1] %vm3251, 0.0
    %3304 = vst.msk [vmem:[#allocation3 + $0x1b0] sm:$0xff] %vm3248, 0.0
    %3305 = vst.msk [vmem:[#allocation3 + $0x1b8] sm:$0xff] %vm3248, 0.0
    %3306 = vst.msk [vmem:[#allocation3 + $0x1c0] sm:$0x1] %vm3251, 0.0
    %3307 = vst.msk [vmem:[#allocation3 + $0x1c8] sm:$0xff] %vm3248, 0.0
    %3308 = vst.msk [vmem:[#allocation3 + $0x1d0] sm:$0xff] %vm3248, 0.0
    %3309 = vst.msk [vmem:[#allocation3 + $0x1d8] sm:$0x1] %vm3251, 0.0
    %s3310 = scalar_lea.vmem [#allocation3], 24
    %3311 = vst.msk [vmem:[%s3310 + $0x8] sm:$0xff] %vm3248, %v3232
    %3312 = vst.msk [vmem:[%s3310 + $0x20] sm:$0xff] %vm3248, %v3233
    %3313 = vst.msk [vmem:[%s3310 + $0x38] sm:$0xff] %vm3248, %v3234
    %3314 = vst.msk [vmem:[%s3310 + $0x50] sm:$0xff] %vm3248, %v3235
    %3315 = vst.msk [vmem:[%s3310 + $0x68] sm:$0xff] %vm3248, %v3236
    %3316 = vst.msk [vmem:[%s3310 + $0x80] sm:$0xff] %vm3248, %v3237
    %3317 = vst.msk [vmem:[%s3310 + $0x98] sm:$0xff] %vm3248, %v3238
    %3318 = vst.msk [vmem:[%s3310 + $0xb0] sm:$0xff] %vm3248, %v3239
    %3319 = vst.msk [vmem:[%s3310 + $0xf8] sm:$0xff] %vm3248, %v3240
    %3320 = vst.msk [vmem:[%s3310 + $0x110] sm:$0xff] %vm3248, %v3241
    %3321 = vst.msk [vmem:[%s3310 + $0x128] sm:$0xff] %vm3248, %v3242
    %3322 = vst.msk [vmem:[%s3310 + $0x140] sm:$0xff] %vm3248, %v3243
    %3323 = vst.msk [vmem:[%s3310 + $0x158] sm:$0xff] %vm3248, %v3244
    %3324 = vst.msk [vmem:[%s3310 + $0x170] sm:$0xff] %vm3248, %v3245
    %3325 = vst.msk [vmem:[%s3310 + $0x188] sm:$0xff] %vm3248, %v3246
    %3326 = vst.msk [vmem:[%s3310 + $0x1a0] sm:$0xff] %vm3248, %v3247
    %v3327 = vld [vmem:[#allocation3 + $0x7] sm:$0xff]
    %v3328 = vld [vmem:[#allocation3 + $0x1f] sm:$0xff]
    %v3329 = vld [vmem:[#allocation3 + $0x37] sm:$0xff]
    %v3330 = vld [vmem:[#allocation3 + $0x4f] sm:$0xff]
    %v3331 = vld [vmem:[#allocation3 + $0x67] sm:$0xff]
    %v3332 = vld [vmem:[#allocation3 + $0x7f] sm:$0xff]
    %v3333 = vld [vmem:[#allocation3 + $0x97] sm:$0xff]
    %v3334 = vld [vmem:[#allocation3 + $0xaf] sm:$0xff]
    %v3335 = vld [vmem:[#allocation3 + $0xf7] sm:$0xff]
    %v3336 = vld [vmem:[#allocation3 + $0x10f] sm:$0xff]
    %v3337 = vld [vmem:[#allocation3 + $0x127] sm:$0xff]
    %v3338 = vld [vmem:[#allocation3 + $0x13f] sm:$0xff]
    %v3339 = vld [vmem:[#allocation3 + $0x157] sm:$0xff]
    %v3340 = vld [vmem:[#allocation3 + $0x16f] sm:$0xff]
    %v3341 = vld [vmem:[#allocation3 + $0x187] sm:$0xff]
    %v3342 = vld [vmem:[#allocation3 + $0x19f] sm:$0xff]
    %v3343 = vpack.c.bf16 %v3328, %v3327
    %v3344 = vpack.c.bf16 %v3330, %v3329
    %v3345 = vpack.c.bf16 %v3332, %v3331
    %v3346 = vpack.c.bf16 %v3334, %v3333
    %v3347 = vpack.c.bf16 %v3336, %v3335
    %v3348 = vpack.c.bf16 %v3338, %v3337
    %v3349 = vpack.c.bf16 %v3340, %v3339
    %v3350 = vpack.c.bf16 %v3342, %v3341
    %v3351 = vld [vmem:[%s5] sm:$0xf]
    %v3352 = vld [vmem:[%s5 + $0x4] sm:$0xf]
    %v3353 = vld [vmem:[%s5 + $0x8] sm:$0xf]
    %v3354 = vld [vmem:[%s5 + $0xc] sm:$0xf]
    %v3355 = vld [vmem:[%s5 + $0x10] sm:$0xf]
    %v3356 = vld [vmem:[%s5 + $0x14] sm:$0xf]
    %v3357 = vld [vmem:[%s5 + $0x18] sm:$0xf]
    %v3358 = vld [vmem:[%s5 + $0x1c] sm:$0xf]
    %v3359 = vld [vmem:[#allocation3 + $0x8] sm:$0xff]
    %v3360 = vld [vmem:[#allocation3 + $0x20] sm:$0xff]
    %v3361 = vld [vmem:[#allocation3 + $0x38] sm:$0xff]
    %v3362 = vld [vmem:[#allocation3 + $0x50] sm:$0xff]
    %v3363 = vld [vmem:[#allocation3 + $0x68] sm:$0xff]
    %v3364 = vld [vmem:[#allocation3 + $0x80] sm:$0xff]
    %v3365 = vld [vmem:[#allocation3 + $0x98] sm:$0xff]
    %v3366 = vld [vmem:[#allocation3 + $0xb0] sm:$0xff]
    %v3367 = vld [vmem:[#allocation3 + $0xf8] sm:$0xff]
    %v3368 = vld [vmem:[#allocation3 + $0x110] sm:$0xff]
    %v3369 = vld [vmem:[#allocation3 + $0x128] sm:$0xff]
    %v3370 = vld [vmem:[#allocation3 + $0x140] sm:$0xff]
    %v3371 = vld [vmem:[#allocation3 + $0x158] sm:$0xff]
    %v3372 = vld [vmem:[#allocation3 + $0x170] sm:$0xff]
    %v3373 = vld [vmem:[#allocation3 + $0x188] sm:$0xff]
    %v3374 = vld [vmem:[#allocation3 + $0x1a0] sm:$0xff]
    %v3375 = vpack.c.bf16 %v3360, %v3359
    %v3376 = vpack.c.bf16 %v3362, %v3361
    %v3377 = vpack.c.bf16 %v3364, %v3363
    %v3378 = vpack.c.bf16 %v3366, %v3365
    %v3379 = vpack.c.bf16 %v3368, %v3367
    %v3380 = vpack.c.bf16 %v3370, %v3369
    %v3381 = vpack.c.bf16 %v3372, %v3371
    %v3382 = vpack.c.bf16 %v3374, %v3373
    %s3383 = scalar_lea.vmem %s5, 32
    %v3384 = vld [vmem:[%s3383] sm:$0xf]
    %v3385 = vld [vmem:[%s3383 + $0x4] sm:$0xf]
    %v3386 = vld [vmem:[%s3383 + $0x8] sm:$0xf]
    %v3387 = vld [vmem:[%s3383 + $0xc] sm:$0xf]
    %v3388 = vld [vmem:[%s3383 + $0x10] sm:$0xf]
    %v3389 = vld [vmem:[%s3383 + $0x14] sm:$0xf]
    %v3390 = vld [vmem:[%s3383 + $0x18] sm:$0xf]
    %v3391 = vld [vmem:[%s3383 + $0x1c] sm:$0xf]
    %v3400 = vunpack.c.l.b16 %v3384
    %v3401 = vunpack.c.l.b16 %v3385
    %v3402 = vunpack.c.l.b16 %v3386
    %v3403 = vunpack.c.l.b16 %v3387
    %v3404 = vunpack.c.l.b16 %v3388
    %v3405 = vunpack.c.l.b16 %v3389
    %v3406 = vunpack.c.l.b16 %v3390
    %v3407 = vunpack.c.l.b16 %v3391
    %v3408 = vpack.c.b16 %v3401, %v3400
    %v3409 = vpack.c.b16 %v3403, %v3402
    %v3410 = vpack.c.b16 %v3405, %v3404
    %v3411 = vpack.c.b16 %v3407, %v3406
    %v3417 = vsel %vm3248, %v3375, 0
    %v3420 = vsel %vm3248, %v3376, 0
    %v3423 = vsel %vm3248, %v3377, 0
    %v3426 = vsel %vm3248, %v3378, 0
    %v3429 = vsel %vm3248, %v3379, 0
    %v3432 = vsel %vm3248, %v3380, 0
    %v3435 = vsel %vm3248, %v3381, 0
    %v3438 = vsel %vm3248, %v3382, 0
    %3440 = vmatprep.subr.bf16.mxu0 0
    %3441 = vmatpush1.bf16.msra.mxu0 0
    %3442 = vmatprep.subr.bf16.mxu0 0
    %3443 = vmatpush1.bf16.msra.mxu0 0
    %3444 = vmatprep.subr.bf16.mxu0 0
    %3445 = vmatpush1.bf16.msra.mxu0 0
    %3446 = vmatprep.subr.bf16.mxu0 0
    %3447 = vmatpush1.bf16.msra.mxu0 0
    %3448 = vmatprep.subr.bf16.mxu0 0
    %3449 = vmatpush1.bf16.msra.mxu0 %v3411
    %3450 = vmatprep.subr.bf16.mxu0 0
    %3451 = vmatpush1.bf16.msra.mxu0 %v3410
    %3452 = vmatprep.subr.bf16.mxu0 0
    %3453 = vmatpush1.bf16.msra.mxu0 %v3409
    %3454 = vmatprep.subr.bf16.mxu0 0
    %3455 = vmatpush1.bf16.msra.mxu0 %v3408
    %3456 = vmatprep.subr.bf16.mxu0 0
    %3457 = vmatpush2.bf16.msra.mxu0 0
    %3458 = vmatprep.subr.bf16.mxu0 0
    %3459 = vmatpush2.bf16.msra.mxu0 0
    %3460 = vmatprep.subr.bf16.mxu0 0
    %3461 = vmatpush2.bf16.msra.mxu0 0
    %3462 = vmatprep.subr.bf16.mxu0 0
    %3463 = vmatpush2.bf16.msra.mxu0 0
    %3464 = vmatprep.subr.bf16.mxu0 0
    %3465 = vmatpush2.bf16.msra.mxu0 0
    %3466 = vmatprep.subr.bf16.mxu0 0
    %3467 = vmatpush2.bf16.msra.mxu0 0
    %3468 = vmatprep.subr.bf16.mxu0 0
    %3469 = vmatpush2.bf16.msra.mxu0 0
    %3470 = vmatprep.subr.bf16.mxu0 0
    %3471 = vmatpush2.bf16.msra.mxu0 0
    %3472 = vmatprep.mubr.bf16.mxu0 0
    %3473 = vmatmul.mubr.bf16.gmra.mxu0 %v3417
    %v3474 = vpop.f32.mrf.mxu0
    %v3475 = vadd.f32 0.0, %v3474
    %v3476 = vpop.f32.mrf.mxu0
    %v3477 = vpop.f32.mrf.mxu0
    %v3478 = vadd.f32 0.0, %v3477
    %v3479 = vpop.f32.mrf.mxu0
    %3480 = vmatprep.mubr.bf16.mxu0 0
    %3481 = vmatmul.mubr.bf16.gmra.mxu0 %v3420
    %v3482 = vpop.f32.mrf.mxu0
    %v3483 = vadd.f32 0.0, %v3482
    %v3484 = vpop.f32.mrf.mxu0
    %v3485 = vpop.f32.mrf.mxu0
    %v3486 = vadd.f32 0.0, %v3485
    %v3487 = vpop.f32.mrf.mxu0
    %3488 = vmatprep.mubr.bf16.mxu0 0
    %3489 = vmatmul.mubr.bf16.gmra.mxu0 %v3423
    %v3490 = vpop.f32.mrf.mxu0
    %v3491 = vadd.f32 0.0, %v3490
    %v3492 = vpop.f32.mrf.mxu0
    %v3493 = vpop.f32.mrf.mxu0
    %v3494 = vadd.f32 0.0, %v3493
    %v3495 = vpop.f32.mrf.mxu0
    %3496 = vmatprep.mubr.bf16.mxu0 0
    %3497 = vmatmul.mubr.bf16.gmra.mxu0 %v3426
    %v3498 = vpop.f32.mrf.mxu0
    %v3499 = vadd.f32 0.0, %v3498
    %v3500 = vpop.f32.mrf.mxu0
    %v3501 = vpop.f32.mrf.mxu0
    %v3502 = vadd.f32 0.0, %v3501
    %v3503 = vpop.f32.mrf.mxu0
    %3504 = vmatprep.mubr.bf16.mxu0 0
    %3505 = vmatmul.mubr.bf16.gmra.mxu0 %v3429
    %v3506 = vpop.f32.mrf.mxu0
    %v3507 = vadd.f32 0.0, %v3506
    %v3508 = vpop.f32.mrf.mxu0
    %v3509 = vpop.f32.mrf.mxu0
    %v3510 = vadd.f32 0.0, %v3509
    %v3511 = vpop.f32.mrf.mxu0
    %3512 = vmatprep.mubr.bf16.mxu0 0
    %3513 = vmatmul.mubr.bf16.gmra.mxu0 %v3432
    %v3514 = vpop.f32.mrf.mxu0
    %v3515 = vadd.f32 0.0, %v3514
    %v3516 = vpop.f32.mrf.mxu0
    %v3517 = vpop.f32.mrf.mxu0
    %v3518 = vadd.f32 0.0, %v3517
    %v3519 = vpop.f32.mrf.mxu0
    %3520 = vmatprep.mubr.bf16.mxu0 0
    %3521 = vmatmul.mubr.bf16.gmra.mxu0 %v3435
    %v3522 = vpop.f32.mrf.mxu0
    %v3523 = vadd.f32 0.0, %v3522
    %v3524 = vpop.f32.mrf.mxu0
    %v3525 = vpop.f32.mrf.mxu0
    %v3526 = vadd.f32 0.0, %v3525
    %v3527 = vpop.f32.mrf.mxu0
    %3528 = vmatprep.mubr.bf16.mxu0 0
    %3529 = vmatmul.mubr.bf16.gmra.mxu0 %v3438
    %v3530 = vpop.f32.mrf.mxu0
    %v3531 = vadd.f32 0.0, %v3530
    %v3532 = vpop.f32.mrf.mxu0
    %v3533 = vpop.f32.mrf.mxu0
    %v3534 = vadd.f32 0.0, %v3533
    %v3535 = vpop.f32.mrf.mxu0
    %3536 = vdwg.mxu0
    %v3545 = vunpack.c.l.b16 %v3351
    %v3546 = vunpack.c.l.b16 %v3352
    %v3547 = vunpack.c.l.b16 %v3353
    %v3548 = vunpack.c.l.b16 %v3354
    %v3549 = vunpack.c.l.b16 %v3355
    %v3550 = vunpack.c.l.b16 %v3356
    %v3551 = vunpack.c.l.b16 %v3357
    %v3552 = vunpack.c.l.b16 %v3358
    %v3553 = vpack.c.b16 %v3546, %v3545
    %v3554 = vpack.c.b16 %v3548, %v3547
    %v3555 = vpack.c.b16 %v3550, %v3549
    %v3556 = vpack.c.b16 %v3552, %v3551
    %v3562 = vsel %vm3248, %v3343, 0
    %v3565 = vsel %vm3248, %v3344, 0
    %v3568 = vsel %vm3248, %v3345, 0
    %v3571 = vsel %vm3248, %v3346, 0
    %v3574 = vsel %vm3248, %v3347, 0
    %v3577 = vsel %vm3248, %v3348, 0
    %v3580 = vsel %vm3248, %v3349, 0
    %v3583 = vsel %vm3248, %v3350, 0
    %3585 = vmatprep.subr.bf16.mxu0 0
    %3586 = vmatpush1.bf16.msra.mxu0 0
    %3587 = vmatprep.subr.bf16.mxu0 0
    %3588 = vmatpush1.bf16.msra.mxu0 0
    %3589 = vmatprep.subr.bf16.mxu0 0
    %3590 = vmatpush1.bf16.msra.mxu0 0
    %3591 = vmatprep.subr.bf16.mxu0 0
    %3592 = vmatpush1.bf16.msra.mxu0 0
    %3593 = vmatprep.subr.bf16.mxu0 0
    %3594 = vmatpush1.bf16.msra.mxu0 %v3556
    %3595 = vmatprep.subr.bf16.mxu0 0
    %3596 = vmatpush1.bf16.msra.mxu0 %v3555
    %3597 = vmatprep.subr.bf16.mxu0 0
    %3598 = vmatpush1.bf16.msra.mxu0 %v3554
    %3599 = vmatprep.subr.bf16.mxu0 0
    %3600 = vmatpush1.bf16.msra.mxu0 %v3553
    %3601 = vmatprep.subr.bf16.mxu0 0
    %3602 = vmatpush2.bf16.msra.mxu0 0
    %3603 = vmatprep.subr.bf16.mxu0 0
    %3604 = vmatpush2.bf16.msra.mxu0 0
    %3605 = vmatprep.subr.bf16.mxu0 0
    %3606 = vmatpush2.bf16.msra.mxu0 0
    %3607 = vmatprep.subr.bf16.mxu0 0
    %3608 = vmatpush2.bf16.msra.mxu0 0
    %3609 = vmatprep.subr.bf16.mxu0 0
    %3610 = vmatpush2.bf16.msra.mxu0 0
    %3611 = vmatprep.subr.bf16.mxu0 0
    %3612 = vmatpush2.bf16.msra.mxu0 0
    %3613 = vmatprep.subr.bf16.mxu0 0
    %3614 = vmatpush2.bf16.msra.mxu0 0
    %3615 = vmatprep.subr.bf16.mxu0 0
    %3616 = vmatpush2.bf16.msra.mxu0 0
    %3617 = vmatprep.mubr.bf16.mxu0 0
    %3618 = vmatmul.mubr.bf16.gmra.mxu0 %v3562
    %v3619 = vpop.f32.mrf.mxu0
    %v3620 = vadd.f32 %v3475, %v3619
    %v3621 = vpop.f32.mrf.mxu0
    %v3622 = vpop.f32.mrf.mxu0
    %v3623 = vadd.f32 %v3478, %v3622
    %v3624 = vpop.f32.mrf.mxu0
    %3625 = vmatprep.mubr.bf16.mxu0 0
    %3626 = vmatmul.mubr.bf16.gmra.mxu0 %v3565
    %v3627 = vpop.f32.mrf.mxu0
    %v3628 = vadd.f32 %v3483, %v3627
    %v3629 = vpop.f32.mrf.mxu0
    %v3630 = vpop.f32.mrf.mxu0
    %v3631 = vadd.f32 %v3486, %v3630
    %v3632 = vpop.f32.mrf.mxu0
    %3633 = vmatprep.mubr.bf16.mxu0 0
    %3634 = vmatmul.mubr.bf16.gmra.mxu0 %v3568
    %v3635 = vpop.f32.mrf.mxu0
    %v3636 = vadd.f32 %v3491, %v3635
    %v3637 = vpop.f32.mrf.mxu0
    %v3638 = vpop.f32.mrf.mxu0
    %v3639 = vadd.f32 %v3494, %v3638
    %v3640 = vpop.f32.mrf.mxu0
    %3641 = vmatprep.mubr.bf16.mxu0 0
    %3642 = vmatmul.mubr.bf16.gmra.mxu0 %v3571
    %v3643 = vpop.f32.mrf.mxu0
    %v3644 = vadd.f32 %v3499, %v3643
    %v3645 = vpop.f32.mrf.mxu0
    %v3646 = vpop.f32.mrf.mxu0
    %v3647 = vadd.f32 %v3502, %v3646
    %v3648 = vpop.f32.mrf.mxu0
    %3649 = vmatprep.mubr.bf16.mxu0 0
    %3650 = vmatmul.mubr.bf16.gmra.mxu0 %v3574
    %v3651 = vpop.f32.mrf.mxu0
    %v3652 = vadd.f32 %v3507, %v3651
    %v3653 = vpop.f32.mrf.mxu0
    %v3654 = vpop.f32.mrf.mxu0
    %v3655 = vadd.f32 %v3510, %v3654
    %v3656 = vpop.f32.mrf.mxu0
    %3657 = vmatprep.mubr.bf16.mxu0 0
    %3658 = vmatmul.mubr.bf16.gmra.mxu0 %v3577
    %v3659 = vpop.f32.mrf.mxu0
    %v3660 = vadd.f32 %v3515, %v3659
    %v3661 = vpop.f32.mrf.mxu0
    %v3662 = vpop.f32.mrf.mxu0
    %v3663 = vadd.f32 %v3518, %v3662
    %v3664 = vpop.f32.mrf.mxu0
    %3665 = vmatprep.mubr.bf16.mxu0 0
    %3666 = vmatmul.mubr.bf16.gmra.mxu0 %v3580
    %v3667 = vpop.f32.mrf.mxu0
    %v3668 = vadd.f32 %v3523, %v3667
    %v3669 = vpop.f32.mrf.mxu0
    %v3670 = vpop.f32.mrf.mxu0
    %v3671 = vadd.f32 %v3526, %v3670
    %v3672 = vpop.f32.mrf.mxu0
    %3673 = vmatprep.mubr.bf16.mxu0 0
    %3674 = vmatmul.mubr.bf16.gmra.mxu0 %v3583
    %v3675 = vpop.f32.mrf.mxu0
    %v3676 = vadd.f32 %v3531, %v3675
    %v3677 = vpop.f32.mrf.mxu0
    %v3678 = vpop.f32.mrf.mxu0
    %v3679 = vadd.f32 %v3534, %v3678
    %v3680 = vpop.f32.mrf.mxu0
    %3681 = vdwg.mxu0
    %v3682 = vld [vmem:[#allocation3 + $0x9] sm:$0xff]
    %v3683 = vld [vmem:[#allocation3 + $0x21] sm:$0xff]
    %v3684 = vld [vmem:[#allocation3 + $0x39] sm:$0xff]
    %v3685 = vld [vmem:[#allocation3 + $0x51] sm:$0xff]
    %v3686 = vld [vmem:[#allocation3 + $0x69] sm:$0xff]
    %v3687 = vld [vmem:[#allocation3 + $0x81] sm:$0xff]
    %v3688 = vld [vmem:[#allocation3 + $0x99] sm:$0xff]
    %v3689 = vld [vmem:[#allocation3 + $0xb1] sm:$0xff]
    %v3690 = vld [vmem:[#allocation3 + $0xf9] sm:$0xff]
    %v3691 = vld [vmem:[#allocation3 + $0x111] sm:$0xff]
    %v3692 = vld [vmem:[#allocation3 + $0x129] sm:$0xff]
    %v3693 = vld [vmem:[#allocation3 + $0x141] sm:$0xff]
    %v3694 = vld [vmem:[#allocation3 + $0x159] sm:$0xff]
    %v3695 = vld [vmem:[#allocation3 + $0x171] sm:$0xff]
    %v3696 = vld [vmem:[#allocation3 + $0x189] sm:$0xff]
    %v3697 = vld [vmem:[#allocation3 + $0x1a1] sm:$0xff]
    %v3698 = vpack.c.bf16 %v3683, %v3682
    %v3699 = vpack.c.bf16 %v3685, %v3684
    %v3700 = vpack.c.bf16 %v3687, %v3686
    %v3701 = vpack.c.bf16 %v3689, %v3688
    %v3702 = vpack.c.bf16 %v3691, %v3690
    %v3703 = vpack.c.bf16 %v3693, %v3692
    %v3704 = vpack.c.bf16 %v3695, %v3694
    %v3705 = vpack.c.bf16 %v3697, %v3696
    %s3706 = scalar_lea.vmem %s5, 64
    %v3707 = vld [vmem:[%s3706] sm:$0xf]
    %v3708 = vld [vmem:[%s3706 + $0x4] sm:$0xf]
    %v3709 = vld [vmem:[%s3706 + $0x8] sm:$0xf]
    %v3710 = vld [vmem:[%s3706 + $0xc] sm:$0xf]
    %v3711 = vld [vmem:[%s3706 + $0x10] sm:$0xf]
    %v3712 = vld [vmem:[%s3706 + $0x14] sm:$0xf]
    %v3713 = vld [vmem:[%s3706 + $0x18] sm:$0xf]
    %v3714 = vld [vmem:[%s3706 + $0x1c] sm:$0xf]
    %v3723 = vunpack.c.l.b16 %v3707
    %v3724 = vunpack.c.l.b16 %v3708
    %v3725 = vunpack.c.l.b16 %v3709
    %v3726 = vunpack.c.l.b16 %v3710
    %v3727 = vunpack.c.l.b16 %v3711
    %v3728 = vunpack.c.l.b16 %v3712
    %v3729 = vunpack.c.l.b16 %v3713
    %v3730 = vunpack.c.l.b16 %v3714
    %v3731 = vpack.c.b16 %v3724, %v3723
    %v3732 = vpack.c.b16 %v3726, %v3725
    %v3733 = vpack.c.b16 %v3728, %v3727
    %v3734 = vpack.c.b16 %v3730, %v3729
    %v3740 = vsel %vm3248, %v3698, 0
    %v3743 = vsel %vm3248, %v3699, 0
    %v3746 = vsel %vm3248, %v3700, 0
    %v3749 = vsel %vm3248, %v3701, 0
    %v3752 = vsel %vm3248, %v3702, 0
    %v3755 = vsel %vm3248, %v3703, 0
    %v3758 = vsel %vm3248, %v3704, 0
    %v3761 = vsel %vm3248, %v3705, 0
    %3763 = vmatprep.subr.bf16.mxu0 0
    %3764 = vmatpush1.bf16.msra.mxu0 0
    %3765 = vmatprep.subr.bf16.mxu0 0
    %3766 = vmatpush1.bf16.msra.mxu0 0
    %3767 = vmatprep.subr.bf16.mxu0 0
    %3768 = vmatpush1.bf16.msra.mxu0 0
    %3769 = vmatprep.subr.bf16.mxu0 0
    %3770 = vmatpush1.bf16.msra.mxu0 0
    %3771 = vmatprep.subr.bf16.mxu0 0
    %3772 = vmatpush1.bf16.msra.mxu0 %v3734
    %3773 = vmatprep.subr.bf16.mxu0 0
    %3774 = vmatpush1.bf16.msra.mxu0 %v3733
    %3775 = vmatprep.subr.bf16.mxu0 0
    %3776 = vmatpush1.bf16.msra.mxu0 %v3732
    %3777 = vmatprep.subr.bf16.mxu0 0
    %3778 = vmatpush1.bf16.msra.mxu0 %v3731
    %3779 = vmatprep.subr.bf16.mxu0 0
    %3780 = vmatpush2.bf16.msra.mxu0 0
    %3781 = vmatprep.subr.bf16.mxu0 0
    %3782 = vmatpush2.bf16.msra.mxu0 0
    %3783 = vmatprep.subr.bf16.mxu0 0
    %3784 = vmatpush2.bf16.msra.mxu0 0
    %3785 = vmatprep.subr.bf16.mxu0 0
    %3786 = vmatpush2.bf16.msra.mxu0 0
    %3787 = vmatprep.subr.bf16.mxu0 0
    %3788 = vmatpush2.bf16.msra.mxu0 0
    %3789 = vmatprep.subr.bf16.mxu0 0
    %3790 = vmatpush2.bf16.msra.mxu0 0
    %3791 = vmatprep.subr.bf16.mxu0 0
    %3792 = vmatpush2.bf16.msra.mxu0 0
    %3793 = vmatprep.subr.bf16.mxu0 0
    %3794 = vmatpush2.bf16.msra.mxu0 0
    %3795 = vmatprep.mubr.bf16.mxu0 0
    %3796 = vmatmul.mubr.bf16.gmra.mxu0 %v3740
    %v3797 = vpop.f32.mrf.mxu0
    %v3798 = vadd.f32 0.0, %v3797
    %v3799 = vpop.f32.mrf.mxu0
    %v3800 = vpop.f32.mrf.mxu0
    %v3801 = vadd.f32 0.0, %v3800
    %v3802 = vpop.f32.mrf.mxu0
    %3803 = vmatprep.mubr.bf16.mxu0 0
    %3804 = vmatmul.mubr.bf16.gmra.mxu0 %v3743
    %v3805 = vpop.f32.mrf.mxu0
    %v3806 = vadd.f32 0.0, %v3805
    %v3807 = vpop.f32.mrf.mxu0
    %v3808 = vpop.f32.mrf.mxu0
    %v3809 = vadd.f32 0.0, %v3808
    %v3810 = vpop.f32.mrf.mxu0
    %3811 = vmatprep.mubr.bf16.mxu0 0
    %3812 = vmatmul.mubr.bf16.gmra.mxu0 %v3746
    %v3813 = vpop.f32.mrf.mxu0
    %v3814 = vadd.f32 0.0, %v3813
    %v3815 = vpop.f32.mrf.mxu0
    %v3816 = vpop.f32.mrf.mxu0
    %v3817 = vadd.f32 0.0, %v3816
    %v3818 = vpop.f32.mrf.mxu0
    %3819 = vmatprep.mubr.bf16.mxu0 0
    %3820 = vmatmul.mubr.bf16.gmra.mxu0 %v3749
    %v3821 = vpop.f32.mrf.mxu0
    %v3822 = vadd.f32 0.0, %v3821
    %v3823 = vpop.f32.mrf.mxu0
    %v3824 = vpop.f32.mrf.mxu0
    %v3825 = vadd.f32 0.0, %v3824
    %v3826 = vpop.f32.mrf.mxu0
    %3827 = vmatprep.mubr.bf16.mxu0 0
    %3828 = vmatmul.mubr.bf16.gmra.mxu0 %v3752
    %v3829 = vpop.f32.mrf.mxu0
    %v3830 = vadd.f32 0.0, %v3829
    %v3831 = vpop.f32.mrf.mxu0
    %v3832 = vpop.f32.mrf.mxu0
    %v3833 = vadd.f32 0.0, %v3832
    %v3834 = vpop.f32.mrf.mxu0
    %3835 = vmatprep.mubr.bf16.mxu0 0
    %3836 = vmatmul.mubr.bf16.gmra.mxu0 %v3755
    %v3837 = vpop.f32.mrf.mxu0
    %v3838 = vadd.f32 0.0, %v3837
    %v3839 = vpop.f32.mrf.mxu0
    %v3840 = vpop.f32.mrf.mxu0
    %v3841 = vadd.f32 0.0, %v3840
    %v3842 = vpop.f32.mrf.mxu0
    %3843 = vmatprep.mubr.bf16.mxu0 0
    %3844 = vmatmul.mubr.bf16.gmra.mxu0 %v3758
    %v3845 = vpop.f32.mrf.mxu0
    %v3846 = vadd.f32 0.0, %v3845
    %v3847 = vpop.f32.mrf.mxu0
    %v3848 = vpop.f32.mrf.mxu0
    %v3849 = vadd.f32 0.0, %v3848
    %v3850 = vpop.f32.mrf.mxu0
    %3851 = vmatprep.mubr.bf16.mxu0 0
    %3852 = vmatmul.mubr.bf16.gmra.mxu0 %v3761
    %v3853 = vpop.f32.mrf.mxu0
    %v3854 = vadd.f32 0.0, %v3853
    %v3855 = vpop.f32.mrf.mxu0
    %v3856 = vpop.f32.mrf.mxu0
    %v3857 = vadd.f32 0.0, %v3856
    %v3858 = vpop.f32.mrf.mxu0
    %3859 = vdwg.mxu0
    %v3860 = vadd.f32 %v3620, %v3798
    %v3861 = vadd.f32 %v3623, %v3801
    %v3862 = vadd.f32 %v3628, %v3806
    %v3863 = vadd.f32 %v3631, %v3809
    %v3864 = vadd.f32 %v3636, %v3814
    %v3865 = vadd.f32 %v3639, %v3817
    %v3866 = vadd.f32 %v3644, %v3822
    %v3867 = vadd.f32 %v3647, %v3825
    %v3868 = vadd.f32 %v3652, %v3830
    %v3869 = vadd.f32 %v3655, %v3833
    %v3870 = vadd.f32 %v3660, %v3838
    %v3871 = vadd.f32 %v3663, %v3841
    %v3872 = vadd.f32 %v3668, %v3846
    %v3873 = vadd.f32 %v3671, %v3849
    %v3874 = vadd.f32 %v3676, %v3854
    %v3875 = vadd.f32 %v3679, %v3857
    %v3876 = vld [vmem:[%s3310 + $0x7] sm:$0xff]
    %v3877 = vld [vmem:[%s3310 + $0x1f] sm:$0xff]
    %v3878 = vld [vmem:[%s3310 + $0x37] sm:$0xff]
    %v3879 = vld [vmem:[%s3310 + $0x4f] sm:$0xff]
    %v3880 = vld [vmem:[%s3310 + $0x67] sm:$0xff]
    %v3881 = vld [vmem:[%s3310 + $0x7f] sm:$0xff]
    %v3882 = vld [vmem:[%s3310 + $0x97] sm:$0xff]
    %v3883 = vld [vmem:[%s3310 + $0xaf] sm:$0xff]
    %v3884 = vld [vmem:[%s3310 + $0xf7] sm:$0xff]
    %v3885 = vld [vmem:[%s3310 + $0x10f] sm:$0xff]
    %v3886 = vld [vmem:[%s3310 + $0x127] sm:$0xff]
    %v3887 = vld [vmem:[%s3310 + $0x13f] sm:$0xff]
    %v3888 = vld [vmem:[%s3310 + $0x157] sm:$0xff]
    %v3889 = vld [vmem:[%s3310 + $0x16f] sm:$0xff]
    %v3890 = vld [vmem:[%s3310 + $0x187] sm:$0xff]
    %v3891 = vld [vmem:[%s3310 + $0x19f] sm:$0xff]
    %v3892 = vpack.c.bf16 %v3877, %v3876
    %v3893 = vpack.c.bf16 %v3879, %v3878
    %v3894 = vpack.c.bf16 %v3881, %v3880
    %v3895 = vpack.c.bf16 %v3883, %v3882
    %v3896 = vpack.c.bf16 %v3885, %v3884
    %v3897 = vpack.c.bf16 %v3887, %v3886
    %v3898 = vpack.c.bf16 %v3889, %v3888
    %v3899 = vpack.c.bf16 %v3891, %v3890
    %s3900 = scalar_lea.vmem %s5, 96
    %v3901 = vld [vmem:[%s3900] sm:$0xf]
    %v3902 = vld [vmem:[%s3900 + $0x4] sm:$0xf]
    %v3903 = vld [vmem:[%s3900 + $0x8] sm:$0xf]
    %v3904 = vld [vmem:[%s3900 + $0xc] sm:$0xf]
    %v3905 = vld [vmem:[%s3900 + $0x10] sm:$0xf]
    %v3906 = vld [vmem:[%s3900 + $0x14] sm:$0xf]
    %v3907 = vld [vmem:[%s3900 + $0x18] sm:$0xf]
    %v3908 = vld [vmem:[%s3900 + $0x1c] sm:$0xf]
    %v3917 = vunpack.c.l.b16 %v3901
    %v3918 = vunpack.c.l.b16 %v3902
    %v3919 = vunpack.c.l.b16 %v3903
    %v3920 = vunpack.c.l.b16 %v3904
    %v3921 = vunpack.c.l.b16 %v3905
    %v3922 = vunpack.c.l.b16 %v3906
    %v3923 = vunpack.c.l.b16 %v3907
    %v3924 = vunpack.c.l.b16 %v3908
    %v3925 = vpack.c.b16 %v3918, %v3917
    %v3926 = vpack.c.b16 %v3920, %v3919
    %v3927 = vpack.c.b16 %v3922, %v3921
    %v3928 = vpack.c.b16 %v3924, %v3923
    %v3934 = vsel %vm3248, %v3892, 0
    %v3937 = vsel %vm3248, %v3893, 0
    %v3940 = vsel %vm3248, %v3894, 0
    %v3943 = vsel %vm3248, %v3895, 0
    %v3946 = vsel %vm3248, %v3896, 0
    %v3949 = vsel %vm3248, %v3897, 0
    %v3952 = vsel %vm3248, %v3898, 0
    %v3955 = vsel %vm3248, %v3899, 0
    %3957 = vmatprep.subr.bf16.mxu0 0
    %3958 = vmatpush1.bf16.msra.mxu0 0
    %3959 = vmatprep.subr.bf16.mxu0 0
    %3960 = vmatpush1.bf16.msra.mxu0 0
    %3961 = vmatprep.subr.bf16.mxu0 0
    %3962 = vmatpush1.bf16.msra.mxu0 0
    %3963 = vmatprep.subr.bf16.mxu0 0
    %3964 = vmatpush1.bf16.msra.mxu0 0
    %3965 = vmatprep.subr.bf16.mxu0 0
    %3966 = vmatpush1.bf16.msra.mxu0 %v3928
    %3967 = vmatprep.subr.bf16.mxu0 0
    %3968 = vmatpush1.bf16.msra.mxu0 %v3927
    %3969 = vmatprep.subr.bf16.mxu0 0
    %3970 = vmatpush1.bf16.msra.mxu0 %v3926
    %3971 = vmatprep.subr.bf16.mxu0 0
    %3972 = vmatpush1.bf16.msra.mxu0 %v3925
    %3973 = vmatprep.subr.bf16.mxu0 0
    %3974 = vmatpush2.bf16.msra.mxu0 0
    %3975 = vmatprep.subr.bf16.mxu0 0
    %3976 = vmatpush2.bf16.msra.mxu0 0
    %3977 = vmatprep.subr.bf16.mxu0 0
    %3978 = vmatpush2.bf16.msra.mxu0 0
    %3979 = vmatprep.subr.bf16.mxu0 0
    %3980 = vmatpush2.bf16.msra.mxu0 0
    %3981 = vmatprep.subr.bf16.mxu0 0
    %3982 = vmatpush2.bf16.msra.mxu0 0
    %3983 = vmatprep.subr.bf16.mxu0 0
    %3984 = vmatpush2.bf16.msra.mxu0 0
    %3985 = vmatprep.subr.bf16.mxu0 0
    %3986 = vmatpush2.bf16.msra.mxu0 0
    %3987 = vmatprep.subr.bf16.mxu0 0
    %3988 = vmatpush2.bf16.msra.mxu0 0
    %3989 = vmatprep.mubr.bf16.mxu0 0
    %3990 = vmatmul.mubr.bf16.gmra.mxu0 %v3934
    %v3991 = vpop.f32.mrf.mxu0
    %v3992 = vadd.f32 0.0, %v3991
    %v3993 = vpop.f32.mrf.mxu0
    %v3994 = vpop.f32.mrf.mxu0
    %v3995 = vadd.f32 0.0, %v3994
    %v3996 = vpop.f32.mrf.mxu0
    %3997 = vmatprep.mubr.bf16.mxu0 0
    %3998 = vmatmul.mubr.bf16.gmra.mxu0 %v3937
    %v3999 = vpop.f32.mrf.mxu0
    %v4000 = vadd.f32 0.0, %v3999
    %v4001 = vpop.f32.mrf.mxu0
    %v4002 = vpop.f32.mrf.mxu0
    %v4003 = vadd.f32 0.0, %v4002
    %v4004 = vpop.f32.mrf.mxu0
    %4005 = vmatprep.mubr.bf16.mxu0 0
    %4006 = vmatmul.mubr.bf16.gmra.mxu0 %v3940
    %v4007 = vpop.f32.mrf.mxu0
    %v4008 = vadd.f32 0.0, %v4007
    %v4009 = vpop.f32.mrf.mxu0
    %v4010 = vpop.f32.mrf.mxu0
    %v4011 = vadd.f32 0.0, %v4010
    %v4012 = vpop.f32.mrf.mxu0
    %4013 = vmatprep.mubr.bf16.mxu0 0
    %4014 = vmatmul.mubr.bf16.gmra.mxu0 %v3943
    %v4015 = vpop.f32.mrf.mxu0
    %v4016 = vadd.f32 0.0, %v4015
    %v4017 = vpop.f32.mrf.mxu0
    %v4018 = vpop.f32.mrf.mxu0
    %v4019 = vadd.f32 0.0, %v4018
    %v4020 = vpop.f32.mrf.mxu0
    %4021 = vmatprep.mubr.bf16.mxu0 0
    %4022 = vmatmul.mubr.bf16.gmra.mxu0 %v3946
    %v4023 = vpop.f32.mrf.mxu0
    %v4024 = vadd.f32 0.0, %v4023
    %v4025 = vpop.f32.mrf.mxu0
    %v4026 = vpop.f32.mrf.mxu0
    %v4027 = vadd.f32 0.0, %v4026
    %v4028 = vpop.f32.mrf.mxu0
    %4029 = vmatprep.mubr.bf16.mxu0 0
    %4030 = vmatmul.mubr.bf16.gmra.mxu0 %v3949
    %v4031 = vpop.f32.mrf.mxu0
    %v4032 = vadd.f32 0.0, %v4031
    %v4033 = vpop.f32.mrf.mxu0
    %v4034 = vpop.f32.mrf.mxu0
    %v4035 = vadd.f32 0.0, %v4034
    %v4036 = vpop.f32.mrf.mxu0
    %4037 = vmatprep.mubr.bf16.mxu0 0
    %4038 = vmatmul.mubr.bf16.gmra.mxu0 %v3952
    %v4039 = vpop.f32.mrf.mxu0
    %v4040 = vadd.f32 0.0, %v4039
    %v4041 = vpop.f32.mrf.mxu0
    %v4042 = vpop.f32.mrf.mxu0
    %v4043 = vadd.f32 0.0, %v4042
    %v4044 = vpop.f32.mrf.mxu0
    %4045 = vmatprep.mubr.bf16.mxu0 0
    %4046 = vmatmul.mubr.bf16.gmra.mxu0 %v3955
    %v4047 = vpop.f32.mrf.mxu0
    %v4048 = vadd.f32 0.0, %v4047
    %v4049 = vpop.f32.mrf.mxu0
    %v4050 = vpop.f32.mrf.mxu0
    %v4051 = vadd.f32 0.0, %v4050
    %v4052 = vpop.f32.mrf.mxu0
    %4053 = vdwg.mxu0
    %v4054 = vadd.f32 %v3860, %v3992
    %v4055 = vadd.f32 %v3861, %v3995
    %v4056 = vadd.f32 %v3862, %v4000
    %v4057 = vadd.f32 %v3863, %v4003
    %v4058 = vadd.f32 %v3864, %v4008
    %v4059 = vadd.f32 %v3865, %v4011
    %v4060 = vadd.f32 %v3866, %v4016
    %v4061 = vadd.f32 %v3867, %v4019
    %v4062 = vadd.f32 %v3868, %v4024
    %v4063 = vadd.f32 %v3869, %v4027
    %v4064 = vadd.f32 %v3870, %v4032
    %v4065 = vadd.f32 %v3871, %v4035
    %v4066 = vadd.f32 %v3872, %v4040
    %v4067 = vadd.f32 %v3873, %v4043
    %v4068 = vadd.f32 %v3874, %v4048
    %v4069 = vadd.f32 %v3875, %v4051
    %v4070 = vld [vmem:[%s3310 + $0x8] sm:$0xff]
    %v4071 = vld [vmem:[%s3310 + $0x20] sm:$0xff]
    %v4072 = vld [vmem:[%s3310 + $0x38] sm:$0xff]
    %v4073 = vld [vmem:[%s3310 + $0x50] sm:$0xff]
    %v4074 = vld [vmem:[%s3310 + $0x68] sm:$0xff]
    %v4075 = vld [vmem:[%s3310 + $0x80] sm:$0xff]
    %v4076 = vld [vmem:[%s3310 + $0x98] sm:$0xff]
    %v4077 = vld [vmem:[%s3310 + $0xb0] sm:$0xff]
    %v4078 = vld [vmem:[%s3310 + $0xf8] sm:$0xff]
    %v4079 = vld [vmem:[%s3310 + $0x110] sm:$0xff]
    %v4080 = vld [vmem:[%s3310 + $0x128] sm:$0xff]
    %v4081 = vld [vmem:[%s3310 + $0x140] sm:$0xff]
    %v4082 = vld [vmem:[%s3310 + $0x158] sm:$0xff]
    %v4083 = vld [vmem:[%s3310 + $0x170] sm:$0xff]
    %v4084 = vld [vmem:[%s3310 + $0x188] sm:$0xff]
    %v4085 = vld [vmem:[%s3310 + $0x1a0] sm:$0xff]
    %v4086 = vpack.c.bf16 %v4071, %v4070
    %v4087 = vpack.c.bf16 %v4073, %v4072
    %v4088 = vpack.c.bf16 %v4075, %v4074
    %v4089 = vpack.c.bf16 %v4077, %v4076
    %v4090 = vpack.c.bf16 %v4079, %v4078
    %v4091 = vpack.c.bf16 %v4081, %v4080
    %v4092 = vpack.c.bf16 %v4083, %v4082
    %v4093 = vpack.c.bf16 %v4085, %v4084
    %s4094 = scalar_lea.vmem %s5, 128
    %v4095 = vld [vmem:[%s4094] sm:$0xf]
    %v4096 = vld [vmem:[%s4094 + $0x4] sm:$0xf]
    %v4097 = vld [vmem:[%s4094 + $0x8] sm:$0xf]
    %v4098 = vld [vmem:[%s4094 + $0xc] sm:$0xf]
    %v4099 = vld [vmem:[%s4094 + $0x10] sm:$0xf]
    %v4100 = vld [vmem:[%s4094 + $0x14] sm:$0xf]
    %v4101 = vld [vmem:[%s4094 + $0x18] sm:$0xf]
    %v4102 = vld [vmem:[%s4094 + $0x1c] sm:$0xf]
    %v4111 = vunpack.c.l.b16 %v4095
    %v4112 = vunpack.c.l.b16 %v4096
    %v4113 = vunpack.c.l.b16 %v4097
    %v4114 = vunpack.c.l.b16 %v4098
    %v4115 = vunpack.c.l.b16 %v4099
    %v4116 = vunpack.c.l.b16 %v4100
    %v4117 = vunpack.c.l.b16 %v4101
    %v4118 = vunpack.c.l.b16 %v4102
    %v4119 = vpack.c.b16 %v4112, %v4111
    %v4120 = vpack.c.b16 %v4114, %v4113
    %v4121 = vpack.c.b16 %v4116, %v4115
    %v4122 = vpack.c.b16 %v4118, %v4117
    %v4128 = vsel %vm3248, %v4086, 0
    %v4131 = vsel %vm3248, %v4087, 0
    %v4134 = vsel %vm3248, %v4088, 0
    %v4137 = vsel %vm3248, %v4089, 0
    %v4140 = vsel %vm3248, %v4090, 0
    %v4143 = vsel %vm3248, %v4091, 0
    %v4146 = vsel %vm3248, %v4092, 0
    %v4149 = vsel %vm3248, %v4093, 0
    %4151 = vmatprep.subr.bf16.mxu0 0
    %4152 = vmatpush1.bf16.msra.mxu0 0
    %4153 = vmatprep.subr.bf16.mxu0 0
    %4154 = vmatpush1.bf16.msra.mxu0 0
    %4155 = vmatprep.subr.bf16.mxu0 0
    %4156 = vmatpush1.bf16.msra.mxu0 0
    %4157 = vmatprep.subr.bf16.mxu0 0
    %4158 = vmatpush1.bf16.msra.mxu0 0
    %4159 = vmatprep.subr.bf16.mxu0 0
    %4160 = vmatpush1.bf16.msra.mxu0 %v4122
    %4161 = vmatprep.subr.bf16.mxu0 0
    %4162 = vmatpush1.bf16.msra.mxu0 %v4121
    %4163 = vmatprep.subr.bf16.mxu0 0
    %4164 = vmatpush1.bf16.msra.mxu0 %v4120
    %4165 = vmatprep.subr.bf16.mxu0 0
    %4166 = vmatpush1.bf16.msra.mxu0 %v4119
    %4167 = vmatprep.subr.bf16.mxu0 0
    %4168 = vmatpush2.bf16.msra.mxu0 0
    %4169 = vmatprep.subr.bf16.mxu0 0
    %4170 = vmatpush2.bf16.msra.mxu0 0
    %4171 = vmatprep.subr.bf16.mxu0 0
    %4172 = vmatpush2.bf16.msra.mxu0 0
    %4173 = vmatprep.subr.bf16.mxu0 0
    %4174 = vmatpush2.bf16.msra.mxu0 0
    %4175 = vmatprep.subr.bf16.mxu0 0
    %4176 = vmatpush2.bf16.msra.mxu0 0
    %4177 = vmatprep.subr.bf16.mxu0 0
    %4178 = vmatpush2.bf16.msra.mxu0 0
    %4179 = vmatprep.subr.bf16.mxu0 0
    %4180 = vmatpush2.bf16.msra.mxu0 0
    %4181 = vmatprep.subr.bf16.mxu0 0
    %4182 = vmatpush2.bf16.msra.mxu0 0
    %4183 = vmatprep.mubr.bf16.mxu0 0
    %4184 = vmatmul.mubr.bf16.gmra.mxu0 %v4128
    %v4185 = vpop.f32.mrf.mxu0
    %v4186 = vadd.f32 0.0, %v4185
    %v4187 = vpop.f32.mrf.mxu0
    %v4188 = vpop.f32.mrf.mxu0
    %v4189 = vadd.f32 0.0, %v4188
    %v4190 = vpop.f32.mrf.mxu0
    %4191 = vmatprep.mubr.bf16.mxu0 0
    %4192 = vmatmul.mubr.bf16.gmra.mxu0 %v4131
    %v4193 = vpop.f32.mrf.mxu0
    %v4194 = vadd.f32 0.0, %v4193
    %v4195 = vpop.f32.mrf.mxu0
    %v4196 = vpop.f32.mrf.mxu0
    %v4197 = vadd.f32 0.0, %v4196
    %v4198 = vpop.f32.mrf.mxu0
    %4199 = vmatprep.mubr.bf16.mxu0 0
    %4200 = vmatmul.mubr.bf16.gmra.mxu0 %v4134
    %v4201 = vpop.f32.mrf.mxu0
    %v4202 = vadd.f32 0.0, %v4201
    %v4203 = vpop.f32.mrf.mxu0
    %v4204 = vpop.f32.mrf.mxu0
    %v4205 = vadd.f32 0.0, %v4204
    %v4206 = vpop.f32.mrf.mxu0
    %4207 = vmatprep.mubr.bf16.mxu0 0
    %4208 = vmatmul.mubr.bf16.gmra.mxu0 %v4137
    %v4209 = vpop.f32.mrf.mxu0
    %v4210 = vadd.f32 0.0, %v4209
    %v4211 = vpop.f32.mrf.mxu0
    %v4212 = vpop.f32.mrf.mxu0
    %v4213 = vadd.f32 0.0, %v4212
    %v4214 = vpop.f32.mrf.mxu0
    %4215 = vmatprep.mubr.bf16.mxu0 0
    %4216 = vmatmul.mubr.bf16.gmra.mxu0 %v4140
    %v4217 = vpop.f32.mrf.mxu0
    %v4218 = vadd.f32 0.0, %v4217
    %v4219 = vpop.f32.mrf.mxu0
    %v4220 = vpop.f32.mrf.mxu0
    %v4221 = vadd.f32 0.0, %v4220
    %v4222 = vpop.f32.mrf.mxu0
    %4223 = vmatprep.mubr.bf16.mxu0 0
    %4224 = vmatmul.mubr.bf16.gmra.mxu0 %v4143
    %v4225 = vpop.f32.mrf.mxu0
    %v4226 = vadd.f32 0.0, %v4225
    %v4227 = vpop.f32.mrf.mxu0
    %v4228 = vpop.f32.mrf.mxu0
    %v4229 = vadd.f32 0.0, %v4228
    %v4230 = vpop.f32.mrf.mxu0
    %4231 = vmatprep.mubr.bf16.mxu0 0
    %4232 = vmatmul.mubr.bf16.gmra.mxu0 %v4146
    %v4233 = vpop.f32.mrf.mxu0
    %v4234 = vadd.f32 0.0, %v4233
    %v4235 = vpop.f32.mrf.mxu0
    %v4236 = vpop.f32.mrf.mxu0
    %v4237 = vadd.f32 0.0, %v4236
    %v4238 = vpop.f32.mrf.mxu0
    %4239 = vmatprep.mubr.bf16.mxu0 0
    %4240 = vmatmul.mubr.bf16.gmra.mxu0 %v4149
    %v4241 = vpop.f32.mrf.mxu0
    %v4242 = vadd.f32 0.0, %v4241
    %v4243 = vpop.f32.mrf.mxu0
    %v4244 = vpop.f32.mrf.mxu0
    %v4245 = vadd.f32 0.0, %v4244
    %v4246 = vpop.f32.mrf.mxu0
    %4247 = vdwg.mxu0
    %v4248 = vadd.f32 %v4054, %v4186
    %v4249 = vadd.f32 %v4055, %v4189
    %v4250 = vadd.f32 %v4056, %v4194
    %v4251 = vadd.f32 %v4057, %v4197
    %v4252 = vadd.f32 %v4058, %v4202
    %v4253 = vadd.f32 %v4059, %v4205
    %v4254 = vadd.f32 %v4060, %v4210
    %v4255 = vadd.f32 %v4061, %v4213
    %v4256 = vadd.f32 %v4062, %v4218
    %v4257 = vadd.f32 %v4063, %v4221
    %v4258 = vadd.f32 %v4064, %v4226
    %v4259 = vadd.f32 %v4065, %v4229
    %v4260 = vadd.f32 %v4066, %v4234
    %v4261 = vadd.f32 %v4067, %v4237
    %v4262 = vadd.f32 %v4068, %v4242
    %v4263 = vadd.f32 %v4069, %v4245
    %v4264 = vld [vmem:[%s3310 + $0x9] sm:$0xff]
    %v4265 = vld [vmem:[%s3310 + $0x21] sm:$0xff]
    %v4266 = vld [vmem:[%s3310 + $0x39] sm:$0xff]
    %v4267 = vld [vmem:[%s3310 + $0x51] sm:$0xff]
    %v4268 = vld [vmem:[%s3310 + $0x69] sm:$0xff]
    %v4269 = vld [vmem:[%s3310 + $0x81] sm:$0xff]
    %v4270 = vld [vmem:[%s3310 + $0x99] sm:$0xff]
    %v4271 = vld [vmem:[%s3310 + $0xb1] sm:$0xff]
    %v4272 = vld [vmem:[%s3310 + $0xf9] sm:$0xff]
    %v4273 = vld [vmem:[%s3310 + $0x111] sm:$0xff]
    %v4274 = vld [vmem:[%s3310 + $0x129] sm:$0xff]
    %v4275 = vld [vmem:[%s3310 + $0x141] sm:$0xff]
    %v4276 = vld [vmem:[%s3310 + $0x159] sm:$0xff]
    %v4277 = vld [vmem:[%s3310 + $0x171] sm:$0xff]
    %v4278 = vld [vmem:[%s3310 + $0x189] sm:$0xff]
    %v4279 = vld [vmem:[%s3310 + $0x1a1] sm:$0xff]
    %v4280 = vpack.c.bf16 %v4265, %v4264
    %v4281 = vpack.c.bf16 %v4267, %v4266
    %v4282 = vpack.c.bf16 %v4269, %v4268
    %v4283 = vpack.c.bf16 %v4271, %v4270
    %v4284 = vpack.c.bf16 %v4273, %v4272
    %v4285 = vpack.c.bf16 %v4275, %v4274
    %v4286 = vpack.c.bf16 %v4277, %v4276
    %v4287 = vpack.c.bf16 %v4279, %v4278
    %s4288 = scalar_lea.vmem %s5, 160
    %v4289 = vld [vmem:[%s4288] sm:$0xf]
    %v4290 = vld [vmem:[%s4288 + $0x4] sm:$0xf]
    %v4291 = vld [vmem:[%s4288 + $0x8] sm:$0xf]
    %v4292 = vld [vmem:[%s4288 + $0xc] sm:$0xf]
    %v4293 = vld [vmem:[%s4288 + $0x10] sm:$0xf]
    %v4294 = vld [vmem:[%s4288 + $0x14] sm:$0xf]
    %v4295 = vld [vmem:[%s4288 + $0x18] sm:$0xf]
    %v4296 = vld [vmem:[%s4288 + $0x1c] sm:$0xf]
    %v4305 = vunpack.c.l.b16 %v4289
    %v4306 = vunpack.c.l.b16 %v4290
    %v4307 = vunpack.c.l.b16 %v4291
    %v4308 = vunpack.c.l.b16 %v4292
    %v4309 = vunpack.c.l.b16 %v4293
    %v4310 = vunpack.c.l.b16 %v4294
    %v4311 = vunpack.c.l.b16 %v4295
    %v4312 = vunpack.c.l.b16 %v4296
    %v4313 = vpack.c.b16 %v4306, %v4305
    %v4314 = vpack.c.b16 %v4308, %v4307
    %v4315 = vpack.c.b16 %v4310, %v4309
    %v4316 = vpack.c.b16 %v4312, %v4311
    %v4322 = vsel %vm3248, %v4280, 0
    %v4325 = vsel %vm3248, %v4281, 0
    %v4328 = vsel %vm3248, %v4282, 0
    %v4331 = vsel %vm3248, %v4283, 0
    %v4334 = vsel %vm3248, %v4284, 0
    %v4337 = vsel %vm3248, %v4285, 0
    %v4340 = vsel %vm3248, %v4286, 0
    %v4343 = vsel %vm3248, %v4287, 0
    %4345 = vmatprep.subr.bf16.mxu0 0
    %4346 = vmatpush1.bf16.msra.mxu0 0
    %4347 = vmatprep.subr.bf16.mxu0 0
    %4348 = vmatpush1.bf16.msra.mxu0 0
    %4349 = vmatprep.subr.bf16.mxu0 0
    %4350 = vmatpush1.bf16.msra.mxu0 0
    %4351 = vmatprep.subr.bf16.mxu0 0
    %4352 = vmatpush1.bf16.msra.mxu0 0
    %4353 = vmatprep.subr.bf16.mxu0 0
    %4354 = vmatpush1.bf16.msra.mxu0 %v4316
    %4355 = vmatprep.subr.bf16.mxu0 0
    %4356 = vmatpush1.bf16.msra.mxu0 %v4315
    %4357 = vmatprep.subr.bf16.mxu0 0
    %4358 = vmatpush1.bf16.msra.mxu0 %v4314
    %4359 = vmatprep.subr.bf16.mxu0 0
    %4360 = vmatpush1.bf16.msra.mxu0 %v4313
    %4361 = vmatprep.subr.bf16.mxu0 0
    %4362 = vmatpush2.bf16.msra.mxu0 0
    %4363 = vmatprep.subr.bf16.mxu0 0
    %4364 = vmatpush2.bf16.msra.mxu0 0
    %4365 = vmatprep.subr.bf16.mxu0 0
    %4366 = vmatpush2.bf16.msra.mxu0 0
    %4367 = vmatprep.subr.bf16.mxu0 0
    %4368 = vmatpush2.bf16.msra.mxu0 0
    %4369 = vmatprep.subr.bf16.mxu0 0
    %4370 = vmatpush2.bf16.msra.mxu0 0
    %4371 = vmatprep.subr.bf16.mxu0 0
    %4372 = vmatpush2.bf16.msra.mxu0 0
    %4373 = vmatprep.subr.bf16.mxu0 0
    %4374 = vmatpush2.bf16.msra.mxu0 0
    %4375 = vmatprep.subr.bf16.mxu0 0
    %4376 = vmatpush2.bf16.msra.mxu0 0
    %4377 = vmatprep.mubr.bf16.mxu0 0
    %4378 = vmatmul.mubr.bf16.gmra.mxu0 %v4322
    %v4379 = vpop.f32.mrf.mxu0
    %v4380 = vadd.f32 0.0, %v4379
    %v4381 = vpop.f32.mrf.mxu0
    %v4382 = vpop.f32.mrf.mxu0
    %v4383 = vadd.f32 0.0, %v4382
    %v4384 = vpop.f32.mrf.mxu0
    %4385 = vmatprep.mubr.bf16.mxu0 0
    %4386 = vmatmul.mubr.bf16.gmra.mxu0 %v4325
    %v4387 = vpop.f32.mrf.mxu0
    %v4388 = vadd.f32 0.0, %v4387
    %v4389 = vpop.f32.mrf.mxu0
    %v4390 = vpop.f32.mrf.mxu0
    %v4391 = vadd.f32 0.0, %v4390
    %v4392 = vpop.f32.mrf.mxu0
    %4393 = vmatprep.mubr.bf16.mxu0 0
    %4394 = vmatmul.mubr.bf16.gmra.mxu0 %v4328
    %v4395 = vpop.f32.mrf.mxu0
    %v4396 = vadd.f32 0.0, %v4395
    %v4397 = vpop.f32.mrf.mxu0
    %v4398 = vpop.f32.mrf.mxu0
    %v4399 = vadd.f32 0.0, %v4398
    %v4400 = vpop.f32.mrf.mxu0
    %4401 = vmatprep.mubr.bf16.mxu0 0
    %4402 = vmatmul.mubr.bf16.gmra.mxu0 %v4331
    %v4403 = vpop.f32.mrf.mxu0
    %v4404 = vadd.f32 0.0, %v4403
    %v4405 = vpop.f32.mrf.mxu0
    %v4406 = vpop.f32.mrf.mxu0
    %v4407 = vadd.f32 0.0, %v4406
    %v4408 = vpop.f32.mrf.mxu0
    %4409 = vmatprep.mubr.bf16.mxu0 0
    %4410 = vmatmul.mubr.bf16.gmra.mxu0 %v4334
    %v4411 = vpop.f32.mrf.mxu0
    %v4412 = vadd.f32 0.0, %v4411
    %v4413 = vpop.f32.mrf.mxu0
    %v4414 = vpop.f32.mrf.mxu0
    %v4415 = vadd.f32 0.0, %v4414
    %v4416 = vpop.f32.mrf.mxu0
    %4417 = vmatprep.mubr.bf16.mxu0 0
    %4418 = vmatmul.mubr.bf16.gmra.mxu0 %v4337
    %v4419 = vpop.f32.mrf.mxu0
    %v4420 = vadd.f32 0.0, %v4419
    %v4421 = vpop.f32.mrf.mxu0
    %v4422 = vpop.f32.mrf.mxu0
    %v4423 = vadd.f32 0.0, %v4422
    %v4424 = vpop.f32.mrf.mxu0
    %4425 = vmatprep.mubr.bf16.mxu0 0
    %4426 = vmatmul.mubr.bf16.gmra.mxu0 %v4340
    %v4427 = vpop.f32.mrf.mxu0
    %v4428 = vadd.f32 0.0, %v4427
    %v4429 = vpop.f32.mrf.mxu0
    %v4430 = vpop.f32.mrf.mxu0
    %v4431 = vadd.f32 0.0, %v4430
    %v4432 = vpop.f32.mrf.mxu0
    %4433 = vmatprep.mubr.bf16.mxu0 0
    %4434 = vmatmul.mubr.bf16.gmra.mxu0 %v4343
    %v4435 = vpop.f32.mrf.mxu0
    %v4436 = vadd.f32 0.0, %v4435
    %v4437 = vpop.f32.mrf.mxu0
    %v4438 = vpop.f32.mrf.mxu0
    %v4439 = vadd.f32 0.0, %v4438
    %v4440 = vpop.f32.mrf.mxu0
    %4441 = vdwg.mxu0
    %v4442 = vadd.f32 %v4248, %v4380
    %v4443 = vadd.f32 %v4249, %v4383
    %v4444 = vadd.f32 %v4250, %v4388
    %v4445 = vadd.f32 %v4251, %v4391
    %v4446 = vadd.f32 %v4252, %v4396
    %v4447 = vadd.f32 %v4253, %v4399
    %v4448 = vadd.f32 %v4254, %v4404
    %v4449 = vadd.f32 %v4255, %v4407
    %v4450 = vadd.f32 %v4256, %v4412
    %v4451 = vadd.f32 %v4257, %v4415
    %v4452 = vadd.f32 %v4258, %v4420
    %v4453 = vadd.f32 %v4259, %v4423
    %v4454 = vadd.f32 %v4260, %v4428
    %v4455 = vadd.f32 %v4261, %v4431
    %v4456 = vadd.f32 %v4262, %v4436
    %v4457 = vadd.f32 %v4263, %v4439
    %s4458 = scalar_lea.vmem [#allocation3], 48
    %v4459 = vld [vmem:[%s4458 + $0x7] sm:$0xff]
    %v4460 = vld [vmem:[%s4458 + $0x1f] sm:$0xff]
    %v4461 = vld [vmem:[%s4458 + $0x37] sm:$0xff]
    %v4462 = vld [vmem:[%s4458 + $0x4f] sm:$0xff]
    %v4463 = vld [vmem:[%s4458 + $0x67] sm:$0xff]
    %v4464 = vld [vmem:[%s4458 + $0x7f] sm:$0xff]
    %v4465 = vld [vmem:[%s4458 + $0x97] sm:$0xff]
    %v4466 = vld [vmem:[%s4458 + $0xaf] sm:$0xff]
    %v4467 = vld [vmem:[%s4458 + $0xf7] sm:$0xff]
    %v4468 = vld [vmem:[%s4458 + $0x10f] sm:$0xff]
    %v4469 = vld [vmem:[%s4458 + $0x127] sm:$0xff]
    %v4470 = vld [vmem:[%s4458 + $0x13f] sm:$0xff]
    %v4471 = vld [vmem:[%s4458 + $0x157] sm:$0xff]
    %v4472 = vld [vmem:[%s4458 + $0x16f] sm:$0xff]
    %v4473 = vld [vmem:[%s4458 + $0x187] sm:$0xff]
    %v4474 = vld [vmem:[%s4458 + $0x19f] sm:$0xff]
    %v4475 = vpack.c.bf16 %v4460, %v4459
    %v4476 = vpack.c.bf16 %v4462, %v4461
    %v4477 = vpack.c.bf16 %v4464, %v4463
    %v4478 = vpack.c.bf16 %v4466, %v4465
    %v4479 = vpack.c.bf16 %v4468, %v4467
    %v4480 = vpack.c.bf16 %v4470, %v4469
    %v4481 = vpack.c.bf16 %v4472, %v4471
    %v4482 = vpack.c.bf16 %v4474, %v4473
    %s4483 = scalar_lea.vmem %s5, 192
    %v4484 = vld [vmem:[%s4483] sm:$0xf]
    %v4485 = vld [vmem:[%s4483 + $0x4] sm:$0xf]
    %v4486 = vld [vmem:[%s4483 + $0x8] sm:$0xf]
    %v4487 = vld [vmem:[%s4483 + $0xc] sm:$0xf]
    %v4488 = vld [vmem:[%s4483 + $0x10] sm:$0xf]
    %v4489 = vld [vmem:[%s4483 + $0x14] sm:$0xf]
    %v4490 = vld [vmem:[%s4483 + $0x18] sm:$0xf]
    %v4491 = vld [vmem:[%s4483 + $0x1c] sm:$0xf]
    %v4500 = vunpack.c.l.b16 %v4484
    %v4501 = vunpack.c.l.b16 %v4485
    %v4502 = vunpack.c.l.b16 %v4486
    %v4503 = vunpack.c.l.b16 %v4487
    %v4504 = vunpack.c.l.b16 %v4488
    %v4505 = vunpack.c.l.b16 %v4489
    %v4506 = vunpack.c.l.b16 %v4490
    %v4507 = vunpack.c.l.b16 %v4491
    %v4508 = vpack.c.b16 %v4501, %v4500
    %v4509 = vpack.c.b16 %v4503, %v4502
    %v4510 = vpack.c.b16 %v4505, %v4504
    %v4511 = vpack.c.b16 %v4507, %v4506
    %v4517 = vsel %vm3248, %v4475, 0
    %v4520 = vsel %vm3248, %v4476, 0
    %v4523 = vsel %vm3248, %v4477, 0
    %v4526 = vsel %vm3248, %v4478, 0
    %v4529 = vsel %vm3248, %v4479, 0
    %v4532 = vsel %vm3248, %v4480, 0
    %v4535 = vsel %vm3248, %v4481, 0
    %v4538 = vsel %vm3248, %v4482, 0
    %4540 = vmatprep.subr.bf16.mxu0 0
    %4541 = vmatpush1.bf16.msra.mxu0 0
    %4542 = vmatprep.subr.bf16.mxu0 0
    %4543 = vmatpush1.bf16.msra.mxu0 0
    %4544 = vmatprep.subr.bf16.mxu0 0
    %4545 = vmatpush1.bf16.msra.mxu0 0
    %4546 = vmatprep.subr.bf16.mxu0 0
    %4547 = vmatpush1.bf16.msra.mxu0 0
    %4548 = vmatprep.subr.bf16.mxu0 0
    %4549 = vmatpush1.bf16.msra.mxu0 %v4511
    %4550 = vmatprep.subr.bf16.mxu0 0
    %4551 = vmatpush1.bf16.msra.mxu0 %v4510
    %4552 = vmatprep.subr.bf16.mxu0 0
    %4553 = vmatpush1.bf16.msra.mxu0 %v4509
    %4554 = vmatprep.subr.bf16.mxu0 0
    %4555 = vmatpush1.bf16.msra.mxu0 %v4508
    %4556 = vmatprep.subr.bf16.mxu0 0
    %4557 = vmatpush2.bf16.msra.mxu0 0
    %4558 = vmatprep.subr.bf16.mxu0 0
    %4559 = vmatpush2.bf16.msra.mxu0 0
    %4560 = vmatprep.subr.bf16.mxu0 0
    %4561 = vmatpush2.bf16.msra.mxu0 0
    %4562 = vmatprep.subr.bf16.mxu0 0
    %4563 = vmatpush2.bf16.msra.mxu0 0
    %4564 = vmatprep.subr.bf16.mxu0 0
    %4565 = vmatpush2.bf16.msra.mxu0 0
    %4566 = vmatprep.subr.bf16.mxu0 0
    %4567 = vmatpush2.bf16.msra.mxu0 0
    %4568 = vmatprep.subr.bf16.mxu0 0
    %4569 = vmatpush2.bf16.msra.mxu0 0
    %4570 = vmatprep.subr.bf16.mxu0 0
    %4571 = vmatpush2.bf16.msra.mxu0 0
    %4572 = vmatprep.mubr.bf16.mxu0 0
    %4573 = vmatmul.mubr.bf16.gmra.mxu0 %v4517
    %v4574 = vpop.f32.mrf.mxu0
    %v4575 = vadd.f32 0.0, %v4574
    %v4576 = vpop.f32.mrf.mxu0
    %v4577 = vpop.f32.mrf.mxu0
    %v4578 = vadd.f32 0.0, %v4577
    %v4579 = vpop.f32.mrf.mxu0
    %4580 = vmatprep.mubr.bf16.mxu0 0
    %4581 = vmatmul.mubr.bf16.gmra.mxu0 %v4520
    %v4582 = vpop.f32.mrf.mxu0
    %v4583 = vadd.f32 0.0, %v4582
    %v4584 = vpop.f32.mrf.mxu0
    %v4585 = vpop.f32.mrf.mxu0
    %v4586 = vadd.f32 0.0, %v4585
    %v4587 = vpop.f32.mrf.mxu0
    %4588 = vmatprep.mubr.bf16.mxu0 0
    %4589 = vmatmul.mubr.bf16.gmra.mxu0 %v4523
    %v4590 = vpop.f32.mrf.mxu0
    %v4591 = vadd.f32 0.0, %v4590
    %v4592 = vpop.f32.mrf.mxu0
    %v4593 = vpop.f32.mrf.mxu0
    %v4594 = vadd.f32 0.0, %v4593
    %v4595 = vpop.f32.mrf.mxu0
    %4596 = vmatprep.mubr.bf16.mxu0 0
    %4597 = vmatmul.mubr.bf16.gmra.mxu0 %v4526
    %v4598 = vpop.f32.mrf.mxu0
    %v4599 = vadd.f32 0.0, %v4598
    %v4600 = vpop.f32.mrf.mxu0
    %v4601 = vpop.f32.mrf.mxu0
    %v4602 = vadd.f32 0.0, %v4601
    %v4603 = vpop.f32.mrf.mxu0
    %4604 = vmatprep.mubr.bf16.mxu0 0
    %4605 = vmatmul.mubr.bf16.gmra.mxu0 %v4529
    %v4606 = vpop.f32.mrf.mxu0
    %v4607 = vadd.f32 0.0, %v4606
    %v4608 = vpop.f32.mrf.mxu0
    %v4609 = vpop.f32.mrf.mxu0
    %v4610 = vadd.f32 0.0, %v4609
    %v4611 = vpop.f32.mrf.mxu0
    %4612 = vmatprep.mubr.bf16.mxu0 0
    %4613 = vmatmul.mubr.bf16.gmra.mxu0 %v4532
    %v4614 = vpop.f32.mrf.mxu0
    %v4615 = vadd.f32 0.0, %v4614
    %v4616 = vpop.f32.mrf.mxu0
    %v4617 = vpop.f32.mrf.mxu0
    %v4618 = vadd.f32 0.0, %v4617
    %v4619 = vpop.f32.mrf.mxu0
    %4620 = vmatprep.mubr.bf16.mxu0 0
    %4621 = vmatmul.mubr.bf16.gmra.mxu0 %v4535
    %v4622 = vpop.f32.mrf.mxu0
    %v4623 = vadd.f32 0.0, %v4622
    %v4624 = vpop.f32.mrf.mxu0
    %v4625 = vpop.f32.mrf.mxu0
    %v4626 = vadd.f32 0.0, %v4625
    %v4627 = vpop.f32.mrf.mxu0
    %4628 = vmatprep.mubr.bf16.mxu0 0
    %4629 = vmatmul.mubr.bf16.gmra.mxu0 %v4538
    %v4630 = vpop.f32.mrf.mxu0
    %v4631 = vadd.f32 0.0, %v4630
    %v4632 = vpop.f32.mrf.mxu0
    %v4633 = vpop.f32.mrf.mxu0
    %v4634 = vadd.f32 0.0, %v4633
    %v4635 = vpop.f32.mrf.mxu0
    %4636 = vdwg.mxu0
    %v4637 = vadd.f32 %v4442, %v4575
    %v4638 = vadd.f32 %v4443, %v4578
    %v4639 = vadd.f32 %v4444, %v4583
    %v4640 = vadd.f32 %v4445, %v4586
    %v4641 = vadd.f32 %v4446, %v4591
    %v4642 = vadd.f32 %v4447, %v4594
    %v4643 = vadd.f32 %v4448, %v4599
    %v4644 = vadd.f32 %v4449, %v4602
    %v4645 = vadd.f32 %v4450, %v4607
    %v4646 = vadd.f32 %v4451, %v4610
    %v4647 = vadd.f32 %v4452, %v4615
    %v4648 = vadd.f32 %v4453, %v4618
    %v4649 = vadd.f32 %v4454, %v4623
    %v4650 = vadd.f32 %v4455, %v4626
    %v4651 = vadd.f32 %v4456, %v4631
    %v4652 = vadd.f32 %v4457, %v4634
    %v4653 = vld [vmem:[%s4458 + $0x8] sm:$0xff]
    %v4654 = vld [vmem:[%s4458 + $0x20] sm:$0xff]
    %v4655 = vld [vmem:[%s4458 + $0x38] sm:$0xff]
    %v4656 = vld [vmem:[%s4458 + $0x50] sm:$0xff]
    %v4657 = vld [vmem:[%s4458 + $0x68] sm:$0xff]
    %v4658 = vld [vmem:[%s4458 + $0x80] sm:$0xff]
    %v4659 = vld [vmem:[%s4458 + $0x98] sm:$0xff]
    %v4660 = vld [vmem:[%s4458 + $0xb0] sm:$0xff]
    %v4661 = vld [vmem:[%s4458 + $0xf8] sm:$0xff]
    %v4662 = vld [vmem:[%s4458 + $0x110] sm:$0xff]
    %v4663 = vld [vmem:[%s4458 + $0x128] sm:$0xff]
    %v4664 = vld [vmem:[%s4458 + $0x140] sm:$0xff]
    %v4665 = vld [vmem:[%s4458 + $0x158] sm:$0xff]
    %v4666 = vld [vmem:[%s4458 + $0x170] sm:$0xff]
    %v4667 = vld [vmem:[%s4458 + $0x188] sm:$0xff]
    %v4668 = vld [vmem:[%s4458 + $0x1a0] sm:$0xff]
    %v4669 = vpack.c.bf16 %v4654, %v4653
    %v4670 = vpack.c.bf16 %v4656, %v4655
    %v4671 = vpack.c.bf16 %v4658, %v4657
    %v4672 = vpack.c.bf16 %v4660, %v4659
    %v4673 = vpack.c.bf16 %v4662, %v4661
    %v4674 = vpack.c.bf16 %v4664, %v4663
    %v4675 = vpack.c.bf16 %v4666, %v4665
    %v4676 = vpack.c.bf16 %v4668, %v4667
    %s4677 = scalar_lea.vmem %s5, 224
    %v4678 = vld [vmem:[%s4677] sm:$0xf]
    %v4679 = vld [vmem:[%s4677 + $0x4] sm:$0xf]
    %v4680 = vld [vmem:[%s4677 + $0x8] sm:$0xf]
    %v4681 = vld [vmem:[%s4677 + $0xc] sm:$0xf]
    %v4682 = vld [vmem:[%s4677 + $0x10] sm:$0xf]
    %v4683 = vld [vmem:[%s4677 + $0x14] sm:$0xf]
    %v4684 = vld [vmem:[%s4677 + $0x18] sm:$0xf]
    %v4685 = vld [vmem:[%s4677 + $0x1c] sm:$0xf]
    %v4694 = vunpack.c.l.b16 %v4678
    %v4695 = vunpack.c.l.b16 %v4679
    %v4696 = vunpack.c.l.b16 %v4680
    %v4697 = vunpack.c.l.b16 %v4681
    %v4698 = vunpack.c.l.b16 %v4682
    %v4699 = vunpack.c.l.b16 %v4683
    %v4700 = vunpack.c.l.b16 %v4684
    %v4701 = vunpack.c.l.b16 %v4685
    %v4702 = vpack.c.b16 %v4695, %v4694
    %v4703 = vpack.c.b16 %v4697, %v4696
    %v4704 = vpack.c.b16 %v4699, %v4698
    %v4705 = vpack.c.b16 %v4701, %v4700
    %v4711 = vsel %vm3248, %v4669, 0
    %v4714 = vsel %vm3248, %v4670, 0
    %v4717 = vsel %vm3248, %v4671, 0
    %v4720 = vsel %vm3248, %v4672, 0
    %v4723 = vsel %vm3248, %v4673, 0
    %v4726 = vsel %vm3248, %v4674, 0
    %v4729 = vsel %vm3248, %v4675, 0
    %v4732 = vsel %vm3248, %v4676, 0
    %4734 = vmatprep.subr.bf16.mxu0 0
    %4735 = vmatpush1.bf16.msra.mxu0 0
    %4736 = vmatprep.subr.bf16.mxu0 0
    %4737 = vmatpush1.bf16.msra.mxu0 0
    %4738 = vmatprep.subr.bf16.mxu0 0
    %4739 = vmatpush1.bf16.msra.mxu0 0
    %4740 = vmatprep.subr.bf16.mxu0 0
    %4741 = vmatpush1.bf16.msra.mxu0 0
    %4742 = vmatprep.subr.bf16.mxu0 0
    %4743 = vmatpush1.bf16.msra.mxu0 %v4705
    %4744 = vmatprep.subr.bf16.mxu0 0
    %4745 = vmatpush1.bf16.msra.mxu0 %v4704
    %4746 = vmatprep.subr.bf16.mxu0 0
    %4747 = vmatpush1.bf16.msra.mxu0 %v4703
    %4748 = vmatprep.subr.bf16.mxu0 0
    %4749 = vmatpush1.bf16.msra.mxu0 %v4702
    %4750 = vmatprep.subr.bf16.mxu0 0
    %4751 = vmatpush2.bf16.msra.mxu0 0
    %4752 = vmatprep.subr.bf16.mxu0 0
    %4753 = vmatpush2.bf16.msra.mxu0 0
    %4754 = vmatprep.subr.bf16.mxu0 0
    %4755 = vmatpush2.bf16.msra.mxu0 0
    %4756 = vmatprep.subr.bf16.mxu0 0
    %4757 = vmatpush2.bf16.msra.mxu0 0
    %4758 = vmatprep.subr.bf16.mxu0 0
    %4759 = vmatpush2.bf16.msra.mxu0 0
    %4760 = vmatprep.subr.bf16.mxu0 0
    %4761 = vmatpush2.bf16.msra.mxu0 0
    %4762 = vmatprep.subr.bf16.mxu0 0
    %4763 = vmatpush2.bf16.msra.mxu0 0
    %4764 = vmatprep.subr.bf16.mxu0 0
    %4765 = vmatpush2.bf16.msra.mxu0 0
    %4766 = vmatprep.mubr.bf16.mxu0 0
    %4767 = vmatmul.mubr.bf16.gmra.mxu0 %v4711
    %v4768 = vpop.f32.mrf.mxu0
    %v4769 = vadd.f32 0.0, %v4768
    %v4770 = vpop.f32.mrf.mxu0
    %v4771 = vpop.f32.mrf.mxu0
    %v4772 = vadd.f32 0.0, %v4771
    %v4773 = vpop.f32.mrf.mxu0
    %4774 = vmatprep.mubr.bf16.mxu0 0
    %4775 = vmatmul.mubr.bf16.gmra.mxu0 %v4714
    %v4776 = vpop.f32.mrf.mxu0
    %v4777 = vadd.f32 0.0, %v4776
    %v4778 = vpop.f32.mrf.mxu0
    %v4779 = vpop.f32.mrf.mxu0
    %v4780 = vadd.f32 0.0, %v4779
    %v4781 = vpop.f32.mrf.mxu0
    %4782 = vmatprep.mubr.bf16.mxu0 0
    %4783 = vmatmul.mubr.bf16.gmra.mxu0 %v4717
    %v4784 = vpop.f32.mrf.mxu0
    %v4785 = vadd.f32 0.0, %v4784
    %v4786 = vpop.f32.mrf.mxu0
    %v4787 = vpop.f32.mrf.mxu0
    %v4788 = vadd.f32 0.0, %v4787
    %v4789 = vpop.f32.mrf.mxu0
    %4790 = vmatprep.mubr.bf16.mxu0 0
    %4791 = vmatmul.mubr.bf16.gmra.mxu0 %v4720
    %v4792 = vpop.f32.mrf.mxu0
    %v4793 = vadd.f32 0.0, %v4792
    %v4794 = vpop.f32.mrf.mxu0
    %v4795 = vpop.f32.mrf.mxu0
    %v4796 = vadd.f32 0.0, %v4795
    %v4797 = vpop.f32.mrf.mxu0
    %4798 = vmatprep.mubr.bf16.mxu0 0
    %4799 = vmatmul.mubr.bf16.gmra.mxu0 %v4723
    %v4800 = vpop.f32.mrf.mxu0
    %v4801 = vadd.f32 0.0, %v4800
    %v4802 = vpop.f32.mrf.mxu0
    %v4803 = vpop.f32.mrf.mxu0
    %v4804 = vadd.f32 0.0, %v4803
    %v4805 = vpop.f32.mrf.mxu0
    %4806 = vmatprep.mubr.bf16.mxu0 0
    %4807 = vmatmul.mubr.bf16.gmra.mxu0 %v4726
    %v4808 = vpop.f32.mrf.mxu0
    %v4809 = vadd.f32 0.0, %v4808
    %v4810 = vpop.f32.mrf.mxu0
    %v4811 = vpop.f32.mrf.mxu0
    %v4812 = vadd.f32 0.0, %v4811
    %v4813 = vpop.f32.mrf.mxu0
    %4814 = vmatprep.mubr.bf16.mxu0 0
    %4815 = vmatmul.mubr.bf16.gmra.mxu0 %v4729
    %v4816 = vpop.f32.mrf.mxu0
    %v4817 = vadd.f32 0.0, %v4816
    %v4818 = vpop.f32.mrf.mxu0
    %v4819 = vpop.f32.mrf.mxu0
    %v4820 = vadd.f32 0.0, %v4819
    %v4821 = vpop.f32.mrf.mxu0
    %4822 = vmatprep.mubr.bf16.mxu0 0
    %4823 = vmatmul.mubr.bf16.gmra.mxu0 %v4732
    %v4824 = vpop.f32.mrf.mxu0
    %v4825 = vadd.f32 0.0, %v4824
    %v4826 = vpop.f32.mrf.mxu0
    %v4827 = vpop.f32.mrf.mxu0
    %v4828 = vadd.f32 0.0, %v4827
    %v4829 = vpop.f32.mrf.mxu0
    %4830 = vdwg.mxu0
    %v4831 = vadd.f32 %v4637, %v4769
    %v4832 = vadd.f32 %v4638, %v4772
    %v4833 = vadd.f32 %v4639, %v4777
    %v4834 = vadd.f32 %v4640, %v4780
    %v4835 = vadd.f32 %v4641, %v4785
    %v4836 = vadd.f32 %v4642, %v4788
    %v4837 = vadd.f32 %v4643, %v4793
    %v4838 = vadd.f32 %v4644, %v4796
    %v4839 = vadd.f32 %v4645, %v4801
    %v4840 = vadd.f32 %v4646, %v4804
    %v4841 = vadd.f32 %v4647, %v4809
    %v4842 = vadd.f32 %v4648, %v4812
    %v4843 = vadd.f32 %v4649, %v4817
    %v4844 = vadd.f32 %v4650, %v4820
    %v4845 = vadd.f32 %v4651, %v4825
    %v4846 = vadd.f32 %v4652, %v4828
    %v4847 = vld [vmem:[%s4458 + $0x9] sm:$0xff]
    %v4848 = vld [vmem:[%s4458 + $0x21] sm:$0xff]
    %v4849 = vld [vmem:[%s4458 + $0x39] sm:$0xff]
    %v4850 = vld [vmem:[%s4458 + $0x51] sm:$0xff]
    %v4851 = vld [vmem:[%s4458 + $0x69] sm:$0xff]
    %v4852 = vld [vmem:[%s4458 + $0x81] sm:$0xff]
    %v4853 = vld [vmem:[%s4458 + $0x99] sm:$0xff]
    %v4854 = vld [vmem:[%s4458 + $0xb1] sm:$0xff]
    %v4855 = vld [vmem:[%s4458 + $0xf9] sm:$0xff]
    %v4856 = vld [vmem:[%s4458 + $0x111] sm:$0xff]
    %v4857 = vld [vmem:[%s4458 + $0x129] sm:$0xff]
    %v4858 = vld [vmem:[%s4458 + $0x141] sm:$0xff]
    %v4859 = vld [vmem:[%s4458 + $0x159] sm:$0xff]
    %v4860 = vld [vmem:[%s4458 + $0x171] sm:$0xff]
    %v4861 = vld [vmem:[%s4458 + $0x189] sm:$0xff]
    %v4862 = vld [vmem:[%s4458 + $0x1a1] sm:$0xff]
    %v4863 = vpack.c.bf16 %v4848, %v4847
    %v4864 = vpack.c.bf16 %v4850, %v4849
    %v4865 = vpack.c.bf16 %v4852, %v4851
    %v4866 = vpack.c.bf16 %v4854, %v4853
    %v4867 = vpack.c.bf16 %v4856, %v4855
    %v4868 = vpack.c.bf16 %v4858, %v4857
    %v4869 = vpack.c.bf16 %v4860, %v4859
    %v4870 = vpack.c.bf16 %v4862, %v4861
    %s4871 = scalar_lea.vmem %s5, 256
    %v4872 = vld [vmem:[%s4871] sm:$0xf]
    %v4873 = vld [vmem:[%s4871 + $0x4] sm:$0xf]
    %v4874 = vld [vmem:[%s4871 + $0x8] sm:$0xf]
    %v4875 = vld [vmem:[%s4871 + $0xc] sm:$0xf]
    %v4876 = vld [vmem:[%s4871 + $0x10] sm:$0xf]
    %v4877 = vld [vmem:[%s4871 + $0x14] sm:$0xf]
    %v4878 = vld [vmem:[%s4871 + $0x18] sm:$0xf]
    %v4879 = vld [vmem:[%s4871 + $0x1c] sm:$0xf]
    %v4888 = vunpack.c.l.b16 %v4872
    %v4889 = vunpack.c.l.b16 %v4873
    %v4890 = vunpack.c.l.b16 %v4874
    %v4891 = vunpack.c.l.b16 %v4875
    %v4892 = vunpack.c.l.b16 %v4876
    %v4893 = vunpack.c.l.b16 %v4877
    %v4894 = vunpack.c.l.b16 %v4878
    %v4895 = vunpack.c.l.b16 %v4879
    %v4896 = vpack.c.b16 %v4889, %v4888
    %v4897 = vpack.c.b16 %v4891, %v4890
    %v4898 = vpack.c.b16 %v4893, %v4892
    %v4899 = vpack.c.b16 %v4895, %v4894
    %v4905 = vsel %vm3248, %v4863, 0
    %v4908 = vsel %vm3248, %v4864, 0
    %v4911 = vsel %vm3248, %v4865, 0
    %v4914 = vsel %vm3248, %v4866, 0
    %v4917 = vsel %vm3248, %v4867, 0
    %v4920 = vsel %vm3248, %v4868, 0
    %v4923 = vsel %vm3248, %v4869, 0
    %v4926 = vsel %vm3248, %v4870, 0
    %4928 = vmatprep.subr.bf16.mxu0 0
    %4929 = vmatpush1.bf16.msra.mxu0 0
    %4930 = vmatprep.subr.bf16.mxu0 0
    %4931 = vmatpush1.bf16.msra.mxu0 0
    %4932 = vmatprep.subr.bf16.mxu0 0
    %4933 = vmatpush1.bf16.msra.mxu0 0
    %4934 = vmatprep.subr.bf16.mxu0 0
    %4935 = vmatpush1.bf16.msra.mxu0 0
    %4936 = vmatprep.subr.bf16.mxu0 0
    %4937 = vmatpush1.bf16.msra.mxu0 %v4899
    %4938 = vmatprep.subr.bf16.mxu0 0
    %4939 = vmatpush1.bf16.msra.mxu0 %v4898
    %4940 = vmatprep.subr.bf16.mxu0 0
    %4941 = vmatpush1.bf16.msra.mxu0 %v4897
    %4942 = vmatprep.subr.bf16.mxu0 0
    %4943 = vmatpush1.bf16.msra.mxu0 %v4896
    %4944 = vmatprep.subr.bf16.mxu0 0
    %4945 = vmatpush2.bf16.msra.mxu0 0
    %4946 = vmatprep.subr.bf16.mxu0 0
    %4947 = vmatpush2.bf16.msra.mxu0 0
    %4948 = vmatprep.subr.bf16.mxu0 0
    %4949 = vmatpush2.bf16.msra.mxu0 0
    %4950 = vmatprep.subr.bf16.mxu0 0
    %4951 = vmatpush2.bf16.msra.mxu0 0
    %4952 = vmatprep.subr.bf16.mxu0 0
    %4953 = vmatpush2.bf16.msra.mxu0 0
    %4954 = vmatprep.subr.bf16.mxu0 0
    %4955 = vmatpush2.bf16.msra.mxu0 0
    %4956 = vmatprep.subr.bf16.mxu0 0
    %4957 = vmatpush2.bf16.msra.mxu0 0
    %4958 = vmatprep.subr.bf16.mxu0 0
    %4959 = vmatpush2.bf16.msra.mxu0 0
    %4960 = vmatprep.mubr.bf16.mxu0 0
    %4961 = vmatmul.mubr.bf16.gmra.mxu0 %v4905
    %v4962 = vpop.f32.mrf.mxu0
    %v4963 = vadd.f32 0.0, %v4962
    %v4964 = vpop.f32.mrf.mxu0
    %v4965 = vpop.f32.mrf.mxu0
    %v4966 = vadd.f32 0.0, %v4965
    %v4967 = vpop.f32.mrf.mxu0
    %4968 = vmatprep.mubr.bf16.mxu0 0
    %4969 = vmatmul.mubr.bf16.gmra.mxu0 %v4908
    %v4970 = vpop.f32.mrf.mxu0
    %v4971 = vadd.f32 0.0, %v4970
    %v4972 = vpop.f32.mrf.mxu0
    %v4973 = vpop.f32.mrf.mxu0
    %v4974 = vadd.f32 0.0, %v4973
    %v4975 = vpop.f32.mrf.mxu0
    %4976 = vmatprep.mubr.bf16.mxu0 0
    %4977 = vmatmul.mubr.bf16.gmra.mxu0 %v4911
    %v4978 = vpop.f32.mrf.mxu0
    %v4979 = vadd.f32 0.0, %v4978
    %v4980 = vpop.f32.mrf.mxu0
    %v4981 = vpop.f32.mrf.mxu0
    %v4982 = vadd.f32 0.0, %v4981
    %v4983 = vpop.f32.mrf.mxu0
    %4984 = vmatprep.mubr.bf16.mxu0 0
    %4985 = vmatmul.mubr.bf16.gmra.mxu0 %v4914
    %v4986 = vpop.f32.mrf.mxu0
    %v4987 = vadd.f32 0.0, %v4986
    %v4988 = vpop.f32.mrf.mxu0
    %v4989 = vpop.f32.mrf.mxu0
    %v4990 = vadd.f32 0.0, %v4989
    %v4991 = vpop.f32.mrf.mxu0
    %4992 = vmatprep.mubr.bf16.mxu0 0
    %4993 = vmatmul.mubr.bf16.gmra.mxu0 %v4917
    %v4994 = vpop.f32.mrf.mxu0
    %v4995 = vadd.f32 0.0, %v4994
    %v4996 = vpop.f32.mrf.mxu0
    %v4997 = vpop.f32.mrf.mxu0
    %v4998 = vadd.f32 0.0, %v4997
    %v4999 = vpop.f32.mrf.mxu0
    %5000 = vmatprep.mubr.bf16.mxu0 0
    %5001 = vmatmul.mubr.bf16.gmra.mxu0 %v4920
    %v5002 = vpop.f32.mrf.mxu0
    %v5003 = vadd.f32 0.0, %v5002
    %v5004 = vpop.f32.mrf.mxu0
    %v5005 = vpop.f32.mrf.mxu0
    %v5006 = vadd.f32 0.0, %v5005
    %v5007 = vpop.f32.mrf.mxu0
    %5008 = vmatprep.mubr.bf16.mxu0 0
    %5009 = vmatmul.mubr.bf16.gmra.mxu0 %v4923
    %v5010 = vpop.f32.mrf.mxu0
    %v5011 = vadd.f32 0.0, %v5010
    %v5012 = vpop.f32.mrf.mxu0
    %v5013 = vpop.f32.mrf.mxu0
    %v5014 = vadd.f32 0.0, %v5013
    %v5015 = vpop.f32.mrf.mxu0
    %5016 = vmatprep.mubr.bf16.mxu0 0
    %5017 = vmatmul.mubr.bf16.gmra.mxu0 %v4926
    %v5018 = vpop.f32.mrf.mxu0
    %v5019 = vadd.f32 0.0, %v5018
    %v5020 = vpop.f32.mrf.mxu0
    %v5021 = vpop.f32.mrf.mxu0
    %v5022 = vadd.f32 0.0, %v5021
    %v5023 = vpop.f32.mrf.mxu0
    %5024 = vdwg.mxu0
    %v5025 = vadd.f32 %v4831, %v4963
    %v5026 = vadd.f32 %v4832, %v4966
    %v5027 = vadd.f32 %v4833, %v4971
    %v5028 = vadd.f32 %v4834, %v4974
    %v5029 = vadd.f32 %v4835, %v4979
    %v5030 = vadd.f32 %v4836, %v4982
    %v5031 = vadd.f32 %v4837, %v4987
    %v5032 = vadd.f32 %v4838, %v4990
    %v5033 = vadd.f32 %v4839, %v4995
    %v5034 = vadd.f32 %v4840, %v4998
    %v5035 = vadd.f32 %v4841, %v5003
    %v5036 = vadd.f32 %v4842, %v5006
    %v5037 = vadd.f32 %v4843, %v5011
    %v5038 = vadd.f32 %v4844, %v5014
    %v5039 = vadd.f32 %v4845, %v5019
    %v5040 = vadd.f32 %v4846, %v5022
    %v5041 = vld [vmem:[%s6] sm:$0x1]
    %v5043 = vlaneseq
    %v5044 = vshrl.u32 %v5043, 7
    %v5045 = vsub.s32 0, %v5044
    %v5046 = vrot.slane %v5041, %v5045
    %v5048 = vadd.f32 %v5025, %v5046
    %v5049 = vadd.f32 %v5026, %v5046
    %v5050 = vadd.f32 %v5027, %v5046
    %v5051 = vadd.f32 %v5028, %v5046
    %v5052 = vadd.f32 %v5029, %v5046
    %v5053 = vadd.f32 %v5030, %v5046
    %v5054 = vadd.f32 %v5031, %v5046
    %v5055 = vadd.f32 %v5032, %v5046
    %v5056 = vadd.f32 %v5033, %v5046
    %v5057 = vadd.f32 %v5034, %v5046
    %v5058 = vadd.f32 %v5035, %v5046
    %v5059 = vadd.f32 %v5036, %v5046
    %v5060 = vadd.f32 %v5037, %v5046
    %v5061 = vadd.f32 %v5038, %v5046
    %v5062 = vadd.f32 %v5039, %v5046
    %v5063 = vadd.f32 %v5040, %v5046
    %v5064 = vmax.f32 %v5048, 0.0
    %v5065 = vmax.f32 %v5049, 0.0
    %v5066 = vmax.f32 %v5050, 0.0
    %v5067 = vmax.f32 %v5051, 0.0
    %v5068 = vmax.f32 %v5052, 0.0
    %v5069 = vmax.f32 %v5053, 0.0
    %v5070 = vmax.f32 %v5054, 0.0
    %v5071 = vmax.f32 %v5055, 0.0
    %v5072 = vmax.f32 %v5056, 0.0
    %v5073 = vmax.f32 %v5057, 0.0
    %v5074 = vmax.f32 %v5058, 0.0
    %v5075 = vmax.f32 %v5059, 0.0
    %v5076 = vmax.f32 %v5060, 0.0
    %v5077 = vmax.f32 %v5061, 0.0
    %v5078 = vmax.f32 %v5062, 0.0
    %v5079 = vmax.f32 %v5063, 0.0
    %v5080 = vld [vmem:[%s7] sm:$0x1]
    %v5082 = vlaneseq
    %v5083 = vshrl.u32 %v5082, 7
    %v5084 = vsub.s32 0, %v5083
    %v5085 = vrot.slane %v5080, %v5084
    %v5087 = vmul.f32 %v5064, %v5085
    %v5088 = vmul.f32 %v5065, %v5085
    %v5089 = vmul.f32 %v5066, %v5085
    %v5090 = vmul.f32 %v5067, %v5085
    %v5091 = vmul.f32 %v5068, %v5085
    %v5092 = vmul.f32 %v5069, %v5085
    %v5093 = vmul.f32 %v5070, %v5085
    %v5094 = vmul.f32 %v5071, %v5085
    %v5095 = vmul.f32 %v5072, %v5085
    %v5096 = vmul.f32 %v5073, %v5085
    %v5097 = vmul.f32 %v5074, %v5085
    %v5098 = vmul.f32 %v5075, %v5085
    %v5099 = vmul.f32 %v5076, %v5085
    %v5100 = vmul.f32 %v5077, %v5085
    %v5101 = vmul.f32 %v5078, %v5085
    %v5102 = vmul.f32 %v5079, %v5085
    %5103 = vadd.xlane.f32.xlu0 %v5087
    %v5104 = vpop.xlane.xlu0 %5103
    %5105 = vadd.xlane.f32.xlu0 %v5088
    %v5106 = vpop.xlane.xlu0 %5105
    %5107 = vadd.xlane.f32.xlu0 %v5089
    %v5108 = vpop.xlane.xlu0 %5107
    %5109 = vadd.xlane.f32.xlu0 %v5090
    %v5110 = vpop.xlane.xlu0 %5109
    %5111 = vadd.xlane.f32.xlu0 %v5091
    %v5112 = vpop.xlane.xlu0 %5111
    %5113 = vadd.xlane.f32.xlu0 %v5092
    %v5114 = vpop.xlane.xlu0 %5113
    %5115 = vadd.xlane.f32.xlu0 %v5093
    %v5116 = vpop.xlane.xlu0 %5115
    %5117 = vadd.xlane.f32.xlu0 %v5094
    %v5118 = vpop.xlane.xlu0 %5117
    %5119 = vadd.xlane.f32.xlu0 %v5095
    %v5120 = vpop.xlane.xlu0 %5119
    %5121 = vadd.xlane.f32.xlu0 %v5096
    %v5122 = vpop.xlane.xlu0 %5121
    %5123 = vadd.xlane.f32.xlu0 %v5097
    %v5124 = vpop.xlane.xlu0 %5123
    %5125 = vadd.xlane.f32.xlu0 %v5098
    %v5126 = vpop.xlane.xlu0 %5125
    %5127 = vadd.xlane.f32.xlu0 %v5099
    %v5128 = vpop.xlane.xlu0 %5127
    %5129 = vadd.xlane.f32.xlu0 %v5100
    %v5130 = vpop.xlane.xlu0 %5129
    %5131 = vadd.xlane.f32.xlu0 %v5101
    %v5132 = vpop.xlane.xlu0 %5131
    %5133 = vadd.xlane.f32.xlu0 %v5102
    %v5134 = vpop.xlane.xlu0 %5133
    %v5135 = vld [vmem:[%s8] sm:$0x1]
    %v5137 = vlaneseq
    %v5138 = vshrl.u32 %v5137, 7
    %v5139 = vsub.s32 0, %v5138
    %v5140 = vrot.slane %v5135, %v5139
    %5142 = vbcast.lane.b32.xlu0 %v5140, 256
    %v5143 = vpop.permute.xlu0 %5142
    %s5145 = sor.u32 256, 8
    %5146 = vbcast.lane.b32.xlu0 %v5140, %s5145
    %v5147 = vpop.permute.xlu0 %5146
    %s5149 = sor.u32 256, 16
    %5150 = vbcast.lane.b32.xlu0 %v5140, %s5149
    %v5151 = vpop.permute.xlu0 %5150
    %s5153 = sor.u32 256, 24
    %5154 = vbcast.lane.b32.xlu0 %v5140, %s5153
    %v5155 = vpop.permute.xlu0 %5154
    %s5157 = sor.u32 256, 32
    %5158 = vbcast.lane.b32.xlu0 %v5140, %s5157
    %v5159 = vpop.permute.xlu0 %5158
    %s5161 = sor.u32 256, 40
    %5162 = vbcast.lane.b32.xlu0 %v5140, %s5161
    %v5163 = vpop.permute.xlu0 %5162
    %s5165 = sor.u32 256, 48
    %5166 = vbcast.lane.b32.xlu0 %v5140, %s5165
    %v5167 = vpop.permute.xlu0 %5166
    %s5169 = sor.u32 256, 56
    %5170 = vbcast.lane.b32.xlu0 %v5140, %s5169
    %v5171 = vpop.permute.xlu0 %5170
    %v5180 = vadd.f32 %v5104, %v5143
    %v5181 = vadd.f32 %v5106, %v5147
    %v5182 = vadd.f32 %v5108, %v5151
    %v5183 = vadd.f32 %v5110, %v5155
    %v5184 = vadd.f32 %v5112, %v5159
    %v5185 = vadd.f32 %v5114, %v5163
    %v5186 = vadd.f32 %v5116, %v5167
    %v5187 = vadd.f32 %v5118, %v5171
    %v5188 = vadd.f32 %v5120, %v5143
    %v5189 = vadd.f32 %v5122, %v5147
    %v5190 = vadd.f32 %v5124, %v5151
    %v5191 = vadd.f32 %v5126, %v5155
    %v5192 = vadd.f32 %v5128, %v5159
    %v5193 = vadd.f32 %v5130, %v5163
    %v5194 = vadd.f32 %v5132, %v5167
    %v5195 = vadd.f32 %v5134, %v5171
    %v5196 = vmax.f32 %v5180, 0.0
    %v5197 = vmax.f32 %v5181, 0.0
    %v5198 = vmax.f32 %v5182, 0.0
    %v5199 = vmax.f32 %v5183, 0.0
    %v5200 = vmax.f32 %v5184, 0.0
    %v5201 = vmax.f32 %v5185, 0.0
    %v5202 = vmax.f32 %v5186, 0.0
    %v5203 = vmax.f32 %v5187, 0.0
    %v5204 = vmax.f32 %v5188, 0.0
    %v5205 = vmax.f32 %v5189, 0.0
    %v5206 = vmax.f32 %v5190, 0.0
    %v5207 = vmax.f32 %v5191, 0.0
    %v5208 = vmax.f32 %v5192, 0.0
    %v5209 = vmax.f32 %v5193, 0.0
    %v5210 = vmax.f32 %v5194, 0.0
    %v5211 = vmax.f32 %v5195, 0.0
    %s5212 = scalar_lea.vmem %s7, 1
    %v5213 = vld [vmem:[%s5212] sm:$0x1]
    %v5215 = vlaneseq
    %v5216 = vshrl.u32 %v5215, 7
    %v5217 = vsub.s32 0, %v5216
    %v5218 = vrot.slane %v5213, %v5217
    %v5220 = vmul.f32 %v5064, %v5218
    %v5221 = vmul.f32 %v5065, %v5218
    %v5222 = vmul.f32 %v5066, %v5218
    %v5223 = vmul.f32 %v5067, %v5218
    %v5224 = vmul.f32 %v5068, %v5218
    %v5225 = vmul.f32 %v5069, %v5218
    %v5226 = vmul.f32 %v5070, %v5218
    %v5227 = vmul.f32 %v5071, %v5218
    %v5228 = vmul.f32 %v5072, %v5218
    %v5229 = vmul.f32 %v5073, %v5218
    %v5230 = vmul.f32 %v5074, %v5218
    %v5231 = vmul.f32 %v5075, %v5218
    %v5232 = vmul.f32 %v5076, %v5218
    %v5233 = vmul.f32 %v5077, %v5218
    %v5234 = vmul.f32 %v5078, %v5218
    %v5235 = vmul.f32 %v5079, %v5218
    %5236 = vadd.xlane.f32.xlu0 %v5220
    %v5237 = vpop.xlane.xlu0 %5236
    %5238 = vadd.xlane.f32.xlu0 %v5221
    %v5239 = vpop.xlane.xlu0 %5238
    %5240 = vadd.xlane.f32.xlu0 %v5222
    %v5241 = vpop.xlane.xlu0 %5240
    %5242 = vadd.xlane.f32.xlu0 %v5223
    %v5243 = vpop.xlane.xlu0 %5242
    %5244 = vadd.xlane.f32.xlu0 %v5224
    %v5245 = vpop.xlane.xlu0 %5244
    %5246 = vadd.xlane.f32.xlu0 %v5225
    %v5247 = vpop.xlane.xlu0 %5246
    %5248 = vadd.xlane.f32.xlu0 %v5226
    %v5249 = vpop.xlane.xlu0 %5248
    %5250 = vadd.xlane.f32.xlu0 %v5227
    %v5251 = vpop.xlane.xlu0 %5250
    %5252 = vadd.xlane.f32.xlu0 %v5228
    %v5253 = vpop.xlane.xlu0 %5252
    %5254 = vadd.xlane.f32.xlu0 %v5229
    %v5255 = vpop.xlane.xlu0 %5254
    %5256 = vadd.xlane.f32.xlu0 %v5230
    %v5257 = vpop.xlane.xlu0 %5256
    %5258 = vadd.xlane.f32.xlu0 %v5231
    %v5259 = vpop.xlane.xlu0 %5258
    %5260 = vadd.xlane.f32.xlu0 %v5232
    %v5261 = vpop.xlane.xlu0 %5260
    %5262 = vadd.xlane.f32.xlu0 %v5233
    %v5263 = vpop.xlane.xlu0 %5262
    %5264 = vadd.xlane.f32.xlu0 %v5234
    %v5265 = vpop.xlane.xlu0 %5264
    %5266 = vadd.xlane.f32.xlu0 %v5235
    %v5267 = vpop.xlane.xlu0 %5266
    %s5268 = scalar_lea.vmem %s8, 1
    %v5269 = vld [vmem:[%s5268] sm:$0x1]
    %v5271 = vlaneseq
    %v5272 = vshrl.u32 %v5271, 7
    %v5273 = vsub.s32 0, %v5272
    %v5274 = vrot.slane %v5269, %v5273
    %5276 = vbcast.lane.b32.xlu0 %v5274, 256
    %v5277 = vpop.permute.xlu0 %5276
    %s5279 = sor.u32 256, 8
    %5280 = vbcast.lane.b32.xlu0 %v5274, %s5279
    %v5281 = vpop.permute.xlu0 %5280
    %s5283 = sor.u32 256, 16
    %5284 = vbcast.lane.b32.xlu0 %v5274, %s5283
    %v5285 = vpop.permute.xlu0 %5284
    %s5287 = sor.u32 256, 24
    %5288 = vbcast.lane.b32.xlu0 %v5274, %s5287
    %v5289 = vpop.permute.xlu0 %5288
    %s5291 = sor.u32 256, 32
    %5292 = vbcast.lane.b32.xlu0 %v5274, %s5291
    %v5293 = vpop.permute.xlu0 %5292
    %s5295 = sor.u32 256, 40
    %5296 = vbcast.lane.b32.xlu0 %v5274, %s5295
    %v5297 = vpop.permute.xlu0 %5296
    %s5299 = sor.u32 256, 48
    %5300 = vbcast.lane.b32.xlu0 %v5274, %s5299
    %v5301 = vpop.permute.xlu0 %5300
    %s5303 = sor.u32 256, 56
    %5304 = vbcast.lane.b32.xlu0 %v5274, %s5303
    %v5305 = vpop.permute.xlu0 %5304
    %v5314 = vadd.f32 %v5237, %v5277
    %v5315 = vadd.f32 %v5239, %v5281
    %v5316 = vadd.f32 %v5241, %v5285
    %v5317 = vadd.f32 %v5243, %v5289
    %v5318 = vadd.f32 %v5245, %v5293
    %v5319 = vadd.f32 %v5247, %v5297
    %v5320 = vadd.f32 %v5249, %v5301
    %v5321 = vadd.f32 %v5251, %v5305
    %v5322 = vadd.f32 %v5253, %v5277
    %v5323 = vadd.f32 %v5255, %v5281
    %v5324 = vadd.f32 %v5257, %v5285
    %v5325 = vadd.f32 %v5259, %v5289
    %v5326 = vadd.f32 %v5261, %v5293
    %v5327 = vadd.f32 %v5263, %v5297
    %v5328 = vadd.f32 %v5265, %v5301
    %v5329 = vadd.f32 %v5267, %v5305
    %v5330 = vmax.f32 %v5314, 0.0
    %v5331 = vmax.f32 %v5315, 0.0
    %v5332 = vmax.f32 %v5316, 0.0
    %v5333 = vmax.f32 %v5317, 0.0
    %v5334 = vmax.f32 %v5318, 0.0
    %v5335 = vmax.f32 %v5319, 0.0
    %v5336 = vmax.f32 %v5320, 0.0
    %v5337 = vmax.f32 %v5321, 0.0
    %v5338 = vmax.f32 %v5322, 0.0
    %v5339 = vmax.f32 %v5323, 0.0
    %v5340 = vmax.f32 %v5324, 0.0
    %v5341 = vmax.f32 %v5325, 0.0
    %v5342 = vmax.f32 %v5326, 0.0
    %v5343 = vmax.f32 %v5327, 0.0
    %v5344 = vmax.f32 %v5328, 0.0
    %v5345 = vmax.f32 %v5329, 0.0
    %s5346 = scalar_lea.vmem %s7, 2
    %v5347 = vld [vmem:[%s5346] sm:$0x1]
    %v5349 = vlaneseq
    %v5350 = vshrl.u32 %v5349, 7
    %v5351 = vsub.s32 0, %v5350
    %v5352 = vrot.slane %v5347, %v5351
    %v5354 = vmul.f32 %v5064, %v5352
    %v5355 = vmul.f32 %v5065, %v5352
    %v5356 = vmul.f32 %v5066, %v5352
    %v5357 = vmul.f32 %v5067, %v5352
    %v5358 = vmul.f32 %v5068, %v5352
    %v5359 = vmul.f32 %v5069, %v5352
    %v5360 = vmul.f32 %v5070, %v5352
    %v5361 = vmul.f32 %v5071, %v5352
    %v5362 = vmul.f32 %v5072, %v5352
    %v5363 = vmul.f32 %v5073, %v5352
    %v5364 = vmul.f32 %v5074, %v5352
    %v5365 = vmul.f32 %v5075, %v5352
    %v5366 = vmul.f32 %v5076, %v5352
    %v5367 = vmul.f32 %v5077, %v5352
    %v5368 = vmul.f32 %v5078, %v5352
    %v5369 = vmul.f32 %v5079, %v5352
    %5370 = vadd.xlane.f32.xlu0 %v5354
    %v5371 = vpop.xlane.xlu0 %5370
    %5372 = vadd.xlane.f32.xlu0 %v5355
    %v5373 = vpop.xlane.xlu0 %5372
    %5374 = vadd.xlane.f32.xlu0 %v5356
    %v5375 = vpop.xlane.xlu0 %5374
    %5376 = vadd.xlane.f32.xlu0 %v5357
    %v5377 = vpop.xlane.xlu0 %5376
    %5378 = vadd.xlane.f32.xlu0 %v5358
    %v5379 = vpop.xlane.xlu0 %5378
    %5380 = vadd.xlane.f32.xlu0 %v5359
    %v5381 = vpop.xlane.xlu0 %5380
    %5382 = vadd.xlane.f32.xlu0 %v5360
    %v5383 = vpop.xlane.xlu0 %5382
    %5384 = vadd.xlane.f32.xlu0 %v5361
    %v5385 = vpop.xlane.xlu0 %5384
    %5386 = vadd.xlane.f32.xlu0 %v5362
    %v5387 = vpop.xlane.xlu0 %5386
    %5388 = vadd.xlane.f32.xlu0 %v5363
    %v5389 = vpop.xlane.xlu0 %5388
    %5390 = vadd.xlane.f32.xlu0 %v5364
    %v5391 = vpop.xlane.xlu0 %5390
    %5392 = vadd.xlane.f32.xlu0 %v5365
    %v5393 = vpop.xlane.xlu0 %5392
    %5394 = vadd.xlane.f32.xlu0 %v5366
    %v5395 = vpop.xlane.xlu0 %5394
    %5396 = vadd.xlane.f32.xlu0 %v5367
    %v5397 = vpop.xlane.xlu0 %5396
    %5398 = vadd.xlane.f32.xlu0 %v5368
    %v5399 = vpop.xlane.xlu0 %5398
    %5400 = vadd.xlane.f32.xlu0 %v5369
    %v5401 = vpop.xlane.xlu0 %5400
    %s5402 = scalar_lea.vmem %s8, 2
    %v5403 = vld [vmem:[%s5402] sm:$0x1]
    %v5405 = vlaneseq
    %v5406 = vshrl.u32 %v5405, 7
    %v5407 = vsub.s32 0, %v5406
    %v5408 = vrot.slane %v5403, %v5407
    %5410 = vbcast.lane.b32.xlu0 %v5408, 256
    %v5411 = vpop.permute.xlu0 %5410
    %s5413 = sor.u32 256, 8
    %5414 = vbcast.lane.b32.xlu0 %v5408, %s5413
    %v5415 = vpop.permute.xlu0 %5414
    %s5417 = sor.u32 256, 16
    %5418 = vbcast.lane.b32.xlu0 %v5408, %s5417
    %v5419 = vpop.permute.xlu0 %5418
    %s5421 = sor.u32 256, 24
    %5422 = vbcast.lane.b32.xlu0 %v5408, %s5421
    %v5423 = vpop.permute.xlu0 %5422
    %s5425 = sor.u32 256, 32
    %5426 = vbcast.lane.b32.xlu0 %v5408, %s5425
    %v5427 = vpop.permute.xlu0 %5426
    %s5429 = sor.u32 256, 40
    %5430 = vbcast.lane.b32.xlu0 %v5408, %s5429
    %v5431 = vpop.permute.xlu0 %5430
    %s5433 = sor.u32 256, 48
    %5434 = vbcast.lane.b32.xlu0 %v5408, %s5433
    %v5435 = vpop.permute.xlu0 %5434
    %s5437 = sor.u32 256, 56
    %5438 = vbcast.lane.b32.xlu0 %v5408, %s5437
    %v5439 = vpop.permute.xlu0 %5438
    %v5448 = vadd.f32 %v5371, %v5411
    %v5449 = vadd.f32 %v5373, %v5415
    %v5450 = vadd.f32 %v5375, %v5419
    %v5451 = vadd.f32 %v5377, %v5423
    %v5452 = vadd.f32 %v5379, %v5427
    %v5453 = vadd.f32 %v5381, %v5431
    %v5454 = vadd.f32 %v5383, %v5435
    %v5455 = vadd.f32 %v5385, %v5439
    %v5456 = vadd.f32 %v5387, %v5411
    %v5457 = vadd.f32 %v5389, %v5415
    %v5458 = vadd.f32 %v5391, %v5419
    %v5459 = vadd.f32 %v5393, %v5423
    %v5460 = vadd.f32 %v5395, %v5427
    %v5461 = vadd.f32 %v5397, %v5431
    %v5462 = vadd.f32 %v5399, %v5435
    %v5463 = vadd.f32 %v5401, %v5439
    %v5464 = vmax.f32 %v5448, 0.0
    %v5465 = vmax.f32 %v5449, 0.0
    %v5466 = vmax.f32 %v5450, 0.0
    %v5467 = vmax.f32 %v5451, 0.0
    %v5468 = vmax.f32 %v5452, 0.0
    %v5469 = vmax.f32 %v5453, 0.0
    %v5470 = vmax.f32 %v5454, 0.0
    %v5471 = vmax.f32 %v5455, 0.0
    %v5472 = vmax.f32 %v5456, 0.0
    %v5473 = vmax.f32 %v5457, 0.0
    %v5474 = vmax.f32 %v5458, 0.0
    %v5475 = vmax.f32 %v5459, 0.0
    %v5476 = vmax.f32 %v5460, 0.0
    %v5477 = vmax.f32 %v5461, 0.0
    %v5478 = vmax.f32 %v5462, 0.0
    %v5479 = vmax.f32 %v5463, 0.0
    %s5480 = scalar_lea.vmem %s7, 3
    %v5481 = vld [vmem:[%s5480] sm:$0x1]
    %v5483 = vlaneseq
    %v5484 = vshrl.u32 %v5483, 7
    %v5485 = vsub.s32 0, %v5484
    %v5486 = vrot.slane %v5481, %v5485
    %v5488 = vmul.f32 %v5064, %v5486
    %v5489 = vmul.f32 %v5065, %v5486
    %v5490 = vmul.f32 %v5066, %v5486
    %v5491 = vmul.f32 %v5067, %v5486
    %v5492 = vmul.f32 %v5068, %v5486
    %v5493 = vmul.f32 %v5069, %v5486
    %v5494 = vmul.f32 %v5070, %v5486
    %v5495 = vmul.f32 %v5071, %v5486
    %v5496 = vmul.f32 %v5072, %v5486
    %v5497 = vmul.f32 %v5073, %v5486
    %v5498 = vmul.f32 %v5074, %v5486
    %v5499 = vmul.f32 %v5075, %v5486
    %v5500 = vmul.f32 %v5076, %v5486
    %v5501 = vmul.f32 %v5077, %v5486
    %v5502 = vmul.f32 %v5078, %v5486
    %v5503 = vmul.f32 %v5079, %v5486
    %5504 = vadd.xlane.f32.xlu0 %v5488
    %v5505 = vpop.xlane.xlu0 %5504
    %5506 = vadd.xlane.f32.xlu0 %v5489
    %v5507 = vpop.xlane.xlu0 %5506
    %5508 = vadd.xlane.f32.xlu0 %v5490
    %v5509 = vpop.xlane.xlu0 %5508
    %5510 = vadd.xlane.f32.xlu0 %v5491
    %v5511 = vpop.xlane.xlu0 %5510
    %5512 = vadd.xlane.f32.xlu0 %v5492
    %v5513 = vpop.xlane.xlu0 %5512
    %5514 = vadd.xlane.f32.xlu0 %v5493
    %v5515 = vpop.xlane.xlu0 %5514
    %5516 = vadd.xlane.f32.xlu0 %v5494
    %v5517 = vpop.xlane.xlu0 %5516
    %5518 = vadd.xlane.f32.xlu0 %v5495
    %v5519 = vpop.xlane.xlu0 %5518
    %5520 = vadd.xlane.f32.xlu0 %v5496
    %v5521 = vpop.xlane.xlu0 %5520
    %5522 = vadd.xlane.f32.xlu0 %v5497
    %v5523 = vpop.xlane.xlu0 %5522
    %5524 = vadd.xlane.f32.xlu0 %v5498
    %v5525 = vpop.xlane.xlu0 %5524
    %5526 = vadd.xlane.f32.xlu0 %v5499
    %v5527 = vpop.xlane.xlu0 %5526
    %5528 = vadd.xlane.f32.xlu0 %v5500
    %v5529 = vpop.xlane.xlu0 %5528
    %5530 = vadd.xlane.f32.xlu0 %v5501
    %v5531 = vpop.xlane.xlu0 %5530
    %5532 = vadd.xlane.f32.xlu0 %v5502
    %v5533 = vpop.xlane.xlu0 %5532
    %5534 = vadd.xlane.f32.xlu0 %v5503
    %v5535 = vpop.xlane.xlu0 %5534
    %s5536 = scalar_lea.vmem %s8, 3
    %v5537 = vld [vmem:[%s5536] sm:$0x1]
    %v5539 = vlaneseq
    %v5540 = vshrl.u32 %v5539, 7
    %v5541 = vsub.s32 0, %v5540
    %v5542 = vrot.slane %v5537, %v5541
    %5544 = vbcast.lane.b32.xlu0 %v5542, 256
    %v5545 = vpop.permute.xlu0 %5544
    %s5547 = sor.u32 256, 8
    %5548 = vbcast.lane.b32.xlu0 %v5542, %s5547
    %v5549 = vpop.permute.xlu0 %5548
    %s5551 = sor.u32 256, 16
    %5552 = vbcast.lane.b32.xlu0 %v5542, %s5551
    %v5553 = vpop.permute.xlu0 %5552
    %s5555 = sor.u32 256, 24
    %5556 = vbcast.lane.b32.xlu0 %v5542, %s5555
    %v5557 = vpop.permute.xlu0 %5556
    %s5559 = sor.u32 256, 32
    %5560 = vbcast.lane.b32.xlu0 %v5542, %s5559
    %v5561 = vpop.permute.xlu0 %5560
    %s5563 = sor.u32 256, 40
    %5564 = vbcast.lane.b32.xlu0 %v5542, %s5563
    %v5565 = vpop.permute.xlu0 %5564
    %s5567 = sor.u32 256, 48
    %5568 = vbcast.lane.b32.xlu0 %v5542, %s5567
    %v5569 = vpop.permute.xlu0 %5568
    %s5571 = sor.u32 256, 56
    %5572 = vbcast.lane.b32.xlu0 %v5542, %s5571
    %v5573 = vpop.permute.xlu0 %5572
    %v5582 = vadd.f32 %v5505, %v5545
    %v5583 = vadd.f32 %v5507, %v5549
    %v5584 = vadd.f32 %v5509, %v5553
    %v5585 = vadd.f32 %v5511, %v5557
    %v5586 = vadd.f32 %v5513, %v5561
    %v5587 = vadd.f32 %v5515, %v5565
    %v5588 = vadd.f32 %v5517, %v5569
    %v5589 = vadd.f32 %v5519, %v5573
    %v5590 = vadd.f32 %v5521, %v5545
    %v5591 = vadd.f32 %v5523, %v5549
    %v5592 = vadd.f32 %v5525, %v5553
    %v5593 = vadd.f32 %v5527, %v5557
    %v5594 = vadd.f32 %v5529, %v5561
    %v5595 = vadd.f32 %v5531, %v5565
    %v5596 = vadd.f32 %v5533, %v5569
    %v5597 = vadd.f32 %v5535, %v5573
    %v5598 = vmax.f32 %v5582, 0.0
    %v5599 = vmax.f32 %v5583, 0.0
    %v5600 = vmax.f32 %v5584, 0.0
    %v5601 = vmax.f32 %v5585, 0.0
    %v5602 = vmax.f32 %v5586, 0.0
    %v5603 = vmax.f32 %v5587, 0.0
    %v5604 = vmax.f32 %v5588, 0.0
    %v5605 = vmax.f32 %v5589, 0.0
    %v5606 = vmax.f32 %v5590, 0.0
    %v5607 = vmax.f32 %v5591, 0.0
    %v5608 = vmax.f32 %v5592, 0.0
    %v5609 = vmax.f32 %v5593, 0.0
    %v5610 = vmax.f32 %v5594, 0.0
    %v5611 = vmax.f32 %v5595, 0.0
    %v5612 = vmax.f32 %v5596, 0.0
    %v5613 = vmax.f32 %v5597, 0.0
    %s5614 = scalar_lea.vmem %s7, 4
    %v5615 = vld [vmem:[%s5614] sm:$0x1]
    %v5617 = vlaneseq
    %v5618 = vshrl.u32 %v5617, 7
    %v5619 = vsub.s32 0, %v5618
    %v5620 = vrot.slane %v5615, %v5619
    %v5622 = vmul.f32 %v5064, %v5620
    %v5623 = vmul.f32 %v5065, %v5620
    %v5624 = vmul.f32 %v5066, %v5620
    %v5625 = vmul.f32 %v5067, %v5620
    %v5626 = vmul.f32 %v5068, %v5620
    %v5627 = vmul.f32 %v5069, %v5620
    %v5628 = vmul.f32 %v5070, %v5620
    %v5629 = vmul.f32 %v5071, %v5620
    %v5630 = vmul.f32 %v5072, %v5620
    %v5631 = vmul.f32 %v5073, %v5620
    %v5632 = vmul.f32 %v5074, %v5620
    %v5633 = vmul.f32 %v5075, %v5620
    %v5634 = vmul.f32 %v5076, %v5620
    %v5635 = vmul.f32 %v5077, %v5620
    %v5636 = vmul.f32 %v5078, %v5620
    %v5637 = vmul.f32 %v5079, %v5620
    %5638 = vadd.xlane.f32.xlu0 %v5622
    %v5639 = vpop.xlane.xlu0 %5638
    %5640 = vadd.xlane.f32.xlu0 %v5623
    %v5641 = vpop.xlane.xlu0 %5640
    %5642 = vadd.xlane.f32.xlu0 %v5624
    %v5643 = vpop.xlane.xlu0 %5642
    %5644 = vadd.xlane.f32.xlu0 %v5625
    %v5645 = vpop.xlane.xlu0 %5644
    %5646 = vadd.xlane.f32.xlu0 %v5626
    %v5647 = vpop.xlane.xlu0 %5646
    %5648 = vadd.xlane.f32.xlu0 %v5627
    %v5649 = vpop.xlane.xlu0 %5648
    %5650 = vadd.xlane.f32.xlu0 %v5628
    %v5651 = vpop.xlane.xlu0 %5650
    %5652 = vadd.xlane.f32.xlu0 %v5629
    %v5653 = vpop.xlane.xlu0 %5652
    %5654 = vadd.xlane.f32.xlu0 %v5630
    %v5655 = vpop.xlane.xlu0 %5654
    %5656 = vadd.xlane.f32.xlu0 %v5631
    %v5657 = vpop.xlane.xlu0 %5656
    %5658 = vadd.xlane.f32.xlu0 %v5632
    %v5659 = vpop.xlane.xlu0 %5658
    %5660 = vadd.xlane.f32.xlu0 %v5633
    %v5661 = vpop.xlane.xlu0 %5660
    %5662 = vadd.xlane.f32.xlu0 %v5634
    %v5663 = vpop.xlane.xlu0 %5662
    %5664 = vadd.xlane.f32.xlu0 %v5635
    %v5665 = vpop.xlane.xlu0 %5664
    %5666 = vadd.xlane.f32.xlu0 %v5636
    %v5667 = vpop.xlane.xlu0 %5666
    %5668 = vadd.xlane.f32.xlu0 %v5637
    %v5669 = vpop.xlane.xlu0 %5668
    %s5670 = scalar_lea.vmem %s8, 4
    %v5671 = vld [vmem:[%s5670] sm:$0x1]
    %v5673 = vlaneseq
    %v5674 = vshrl.u32 %v5673, 7
    %v5675 = vsub.s32 0, %v5674
    %v5676 = vrot.slane %v5671, %v5675
    %5678 = vbcast.lane.b32.xlu0 %v5676, 256
    %v5679 = vpop.permute.xlu0 %5678
    %s5681 = sor.u32 256, 8
    %5682 = vbcast.lane.b32.xlu0 %v5676, %s5681
    %v5683 = vpop.permute.xlu0 %5682
    %s5685 = sor.u32 256, 16
    %5686 = vbcast.lane.b32.xlu0 %v5676, %s5685
    %v5687 = vpop.permute.xlu0 %5686
    %s5689 = sor.u32 256, 24
    %5690 = vbcast.lane.b32.xlu0 %v5676, %s5689
    %v5691 = vpop.permute.xlu0 %5690
    %s5693 = sor.u32 256, 32
    %5694 = vbcast.lane.b32.xlu0 %v5676, %s5693
    %v5695 = vpop.permute.xlu0 %5694
    %s5697 = sor.u32 256, 40
    %5698 = vbcast.lane.b32.xlu0 %v5676, %s5697
    %v5699 = vpop.permute.xlu0 %5698
    %s5701 = sor.u32 256, 48
    %5702 = vbcast.lane.b32.xlu0 %v5676, %s5701
    %v5703 = vpop.permute.xlu0 %5702
    %s5705 = sor.u32 256, 56
    %5706 = vbcast.lane.b32.xlu0 %v5676, %s5705
    %v5707 = vpop.permute.xlu0 %5706
    %v5716 = vadd.f32 %v5639, %v5679
    %v5717 = vadd.f32 %v5641, %v5683
    %v5718 = vadd.f32 %v5643, %v5687
    %v5719 = vadd.f32 %v5645, %v5691
    %v5720 = vadd.f32 %v5647, %v5695
    %v5721 = vadd.f32 %v5649, %v5699
    %v5722 = vadd.f32 %v5651, %v5703
    %v5723 = vadd.f32 %v5653, %v5707
    %v5724 = vadd.f32 %v5655, %v5679
    %v5725 = vadd.f32 %v5657, %v5683
    %v5726 = vadd.f32 %v5659, %v5687
    %v5727 = vadd.f32 %v5661, %v5691
    %v5728 = vadd.f32 %v5663, %v5695
    %v5729 = vadd.f32 %v5665, %v5699
    %v5730 = vadd.f32 %v5667, %v5703
    %v5731 = vadd.f32 %v5669, %v5707
    %v5732 = vmax.f32 %v5716, 0.0
    %v5733 = vmax.f32 %v5717, 0.0
    %v5734 = vmax.f32 %v5718, 0.0
    %v5735 = vmax.f32 %v5719, 0.0
    %v5736 = vmax.f32 %v5720, 0.0
    %v5737 = vmax.f32 %v5721, 0.0
    %v5738 = vmax.f32 %v5722, 0.0
    %v5739 = vmax.f32 %v5723, 0.0
    %v5740 = vmax.f32 %v5724, 0.0
    %v5741 = vmax.f32 %v5725, 0.0
    %v5742 = vmax.f32 %v5726, 0.0
    %v5743 = vmax.f32 %v5727, 0.0
    %v5744 = vmax.f32 %v5728, 0.0
    %v5745 = vmax.f32 %v5729, 0.0
    %v5746 = vmax.f32 %v5730, 0.0
    %v5747 = vmax.f32 %v5731, 0.0
    %s5748 = scalar_lea.vmem %s7, 5
    %v5749 = vld [vmem:[%s5748] sm:$0x1]
    %v5751 = vlaneseq
    %v5752 = vshrl.u32 %v5751, 7
    %v5753 = vsub.s32 0, %v5752
    %v5754 = vrot.slane %v5749, %v5753
    %v5756 = vmul.f32 %v5064, %v5754
    %v5757 = vmul.f32 %v5065, %v5754
    %v5758 = vmul.f32 %v5066, %v5754
    %v5759 = vmul.f32 %v5067, %v5754
    %v5760 = vmul.f32 %v5068, %v5754
    %v5761 = vmul.f32 %v5069, %v5754
    %v5762 = vmul.f32 %v5070, %v5754
    %v5763 = vmul.f32 %v5071, %v5754
    %v5764 = vmul.f32 %v5072, %v5754
    %v5765 = vmul.f32 %v5073, %v5754
    %v5766 = vmul.f32 %v5074, %v5754
    %v5767 = vmul.f32 %v5075, %v5754
    %v5768 = vmul.f32 %v5076, %v5754
    %v5769 = vmul.f32 %v5077, %v5754
    %v5770 = vmul.f32 %v5078, %v5754
    %v5771 = vmul.f32 %v5079, %v5754
    %5772 = vadd.xlane.f32.xlu0 %v5756
    %v5773 = vpop.xlane.xlu0 %5772
    %5774 = vadd.xlane.f32.xlu0 %v5757
    %v5775 = vpop.xlane.xlu0 %5774
    %5776 = vadd.xlane.f32.xlu0 %v5758
    %v5777 = vpop.xlane.xlu0 %5776
    %5778 = vadd.xlane.f32.xlu0 %v5759
    %v5779 = vpop.xlane.xlu0 %5778
    %5780 = vadd.xlane.f32.xlu0 %v5760
    %v5781 = vpop.xlane.xlu0 %5780
    %5782 = vadd.xlane.f32.xlu0 %v5761
    %v5783 = vpop.xlane.xlu0 %5782
    %5784 = vadd.xlane.f32.xlu0 %v5762
    %v5785 = vpop.xlane.xlu0 %5784
    %5786 = vadd.xlane.f32.xlu0 %v5763
    %v5787 = vpop.xlane.xlu0 %5786
    %5788 = vadd.xlane.f32.xlu0 %v5764
    %v5789 = vpop.xlane.xlu0 %5788
    %5790 = vadd.xlane.f32.xlu0 %v5765
    %v5791 = vpop.xlane.xlu0 %5790
    %5792 = vadd.xlane.f32.xlu0 %v5766
    %v5793 = vpop.xlane.xlu0 %5792
    %5794 = vadd.xlane.f32.xlu0 %v5767
    %v5795 = vpop.xlane.xlu0 %5794
    %5796 = vadd.xlane.f32.xlu0 %v5768
    %v5797 = vpop.xlane.xlu0 %5796
    %5798 = vadd.xlane.f32.xlu0 %v5769
    %v5799 = vpop.xlane.xlu0 %5798
    %5800 = vadd.xlane.f32.xlu0 %v5770
    %v5801 = vpop.xlane.xlu0 %5800
    %5802 = vadd.xlane.f32.xlu0 %v5771
    %v5803 = vpop.xlane.xlu0 %5802
    %s5804 = scalar_lea.vmem %s8, 5
    %v5805 = vld [vmem:[%s5804] sm:$0x1]
    %v5807 = vlaneseq
    %v5808 = vshrl.u32 %v5807, 7
    %v5809 = vsub.s32 0, %v5808
    %v5810 = vrot.slane %v5805, %v5809
    %5812 = vbcast.lane.b32.xlu0 %v5810, 256
    %v5813 = vpop.permute.xlu0 %5812
    %s5815 = sor.u32 256, 8
    %5816 = vbcast.lane.b32.xlu0 %v5810, %s5815
    %v5817 = vpop.permute.xlu0 %5816
    %s5819 = sor.u32 256, 16
    %5820 = vbcast.lane.b32.xlu0 %v5810, %s5819
    %v5821 = vpop.permute.xlu0 %5820
    %s5823 = sor.u32 256, 24
    %5824 = vbcast.lane.b32.xlu0 %v5810, %s5823
    %v5825 = vpop.permute.xlu0 %5824
    %s5827 = sor.u32 256, 32
    %5828 = vbcast.lane.b32.xlu0 %v5810, %s5827
    %v5829 = vpop.permute.xlu0 %5828
    %s5831 = sor.u32 256, 40
    %5832 = vbcast.lane.b32.xlu0 %v5810, %s5831
    %v5833 = vpop.permute.xlu0 %5832
    %s5835 = sor.u32 256, 48
    %5836 = vbcast.lane.b32.xlu0 %v5810, %s5835
    %v5837 = vpop.permute.xlu0 %5836
    %s5839 = sor.u32 256, 56
    %5840 = vbcast.lane.b32.xlu0 %v5810, %s5839
    %v5841 = vpop.permute.xlu0 %5840
    %v5850 = vadd.f32 %v5773, %v5813
    %v5851 = vadd.f32 %v5775, %v5817
    %v5852 = vadd.f32 %v5777, %v5821
    %v5853 = vadd.f32 %v5779, %v5825
    %v5854 = vadd.f32 %v5781, %v5829
    %v5855 = vadd.f32 %v5783, %v5833
    %v5856 = vadd.f32 %v5785, %v5837
    %v5857 = vadd.f32 %v5787, %v5841
    %v5858 = vadd.f32 %v5789, %v5813
    %v5859 = vadd.f32 %v5791, %v5817
    %v5860 = vadd.f32 %v5793, %v5821
    %v5861 = vadd.f32 %v5795, %v5825
    %v5862 = vadd.f32 %v5797, %v5829
    %v5863 = vadd.f32 %v5799, %v5833
    %v5864 = vadd.f32 %v5801, %v5837
    %v5865 = vadd.f32 %v5803, %v5841
    %v5866 = vmax.f32 %v5850, 0.0
    %v5867 = vmax.f32 %v5851, 0.0
    %v5868 = vmax.f32 %v5852, 0.0
    %v5869 = vmax.f32 %v5853, 0.0
    %v5870 = vmax.f32 %v5854, 0.0
    %v5871 = vmax.f32 %v5855, 0.0
    %v5872 = vmax.f32 %v5856, 0.0
    %v5873 = vmax.f32 %v5857, 0.0
    %v5874 = vmax.f32 %v5858, 0.0
    %v5875 = vmax.f32 %v5859, 0.0
    %v5876 = vmax.f32 %v5860, 0.0
    %v5877 = vmax.f32 %v5861, 0.0
    %v5878 = vmax.f32 %v5862, 0.0
    %v5879 = vmax.f32 %v5863, 0.0
    %v5880 = vmax.f32 %v5864, 0.0
    %v5881 = vmax.f32 %v5865, 0.0
    %v5882 = vpack.c.bf16 %v5197, %v5196
    %v5883 = vpack.c.bf16 %v5199, %v5198
    %v5884 = vpack.c.bf16 %v5201, %v5200
    %v5885 = vpack.c.bf16 %v5203, %v5202
    %v5886 = vpack.c.bf16 %v5205, %v5204
    %v5887 = vpack.c.bf16 %v5207, %v5206
    %v5888 = vpack.c.bf16 %v5209, %v5208
    %v5889 = vpack.c.bf16 %v5211, %v5210
    %v5890 = vld [vmem:[%s9] sm:$0xf]
    %v5891 = vld [vmem:[%s9 + $0x4] sm:$0xf]
    %v5892 = vld [vmem:[%s9 + $0x8] sm:$0xf]
    %v5893 = vld [vmem:[%s9 + $0xc] sm:$0xf]
    %v5894 = vld [vmem:[%s9 + $0x10] sm:$0xf]
    %v5895 = vld [vmem:[%s9 + $0x14] sm:$0xf]
    %v5896 = vld [vmem:[%s9 + $0x18] sm:$0xf]
    %v5897 = vld [vmem:[%s9 + $0x1c] sm:$0xf]
    %v5898 = vpack.c.bf16 %v5331, %v5330
    %v5899 = vpack.c.bf16 %v5333, %v5332
    %v5900 = vpack.c.bf16 %v5335, %v5334
    %v5901 = vpack.c.bf16 %v5337, %v5336
    %v5902 = vpack.c.bf16 %v5339, %v5338
    %v5903 = vpack.c.bf16 %v5341, %v5340
    %v5904 = vpack.c.bf16 %v5343, %v5342
    %v5905 = vpack.c.bf16 %v5345, %v5344
    %s5906 = scalar_lea.vmem %s9, 32
    %v5907 = vld [vmem:[%s5906] sm:$0xf]
    %v5908 = vld [vmem:[%s5906 + $0x4] sm:$0xf]
    %v5909 = vld [vmem:[%s5906 + $0x8] sm:$0xf]
    %v5910 = vld [vmem:[%s5906 + $0xc] sm:$0xf]
    %v5911 = vld [vmem:[%s5906 + $0x10] sm:$0xf]
    %v5912 = vld [vmem:[%s5906 + $0x14] sm:$0xf]
    %v5913 = vld [vmem:[%s5906 + $0x18] sm:$0xf]
    %v5914 = vld [vmem:[%s5906 + $0x1c] sm:$0xf]
    %v5923 = vunpack.c.l.b16 %v5898
    %v5924 = vunpack.c.h.b16 %v5898
    %v5925 = vunpack.c.l.b16 %v5899
    %v5926 = vunpack.c.h.b16 %v5899
    %v5927 = vunpack.c.l.b16 %v5900
    %v5928 = vunpack.c.h.b16 %v5900
    %v5929 = vunpack.c.l.b16 %v5901
    %v5930 = vunpack.c.h.b16 %v5901
    %v5931 = vunpack.c.l.b16 %v5902
    %v5932 = vunpack.c.h.b16 %v5902
    %v5933 = vunpack.c.l.b16 %v5903
    %v5934 = vunpack.c.h.b16 %v5903
    %v5935 = vunpack.c.l.b16 %v5904
    %v5936 = vunpack.c.h.b16 %v5904
    %v5937 = vunpack.c.l.b16 %v5905
    %v5938 = vunpack.c.h.b16 %v5905
    %5939 = vset.pattern.permute.xlu0 0
    %5940 = vperm.xlu0 %5939, %v5923
    %v5941 = vpop.permute.xlu0 %5940
    %5942 = vset.pattern.permute.xlu0 0
    %5943 = vperm.xlu0 %5942, %v5924
    %v5944 = vpop.permute.xlu0 %5943
    %5945 = vset.pattern.permute.xlu0 0
    %5946 = vperm.xlu0 %5945, %v5925
    %v5947 = vpop.permute.xlu0 %5946
    %5948 = vset.pattern.permute.xlu0 0
    %5949 = vperm.xlu0 %5948, %v5926
    %v5950 = vpop.permute.xlu0 %5949
    %5951 = vset.pattern.permute.xlu0 0
    %5952 = vperm.xlu0 %5951, %v5927
    %v5953 = vpop.permute.xlu0 %5952
    %5954 = vset.pattern.permute.xlu0 0
    %5955 = vperm.xlu0 %5954, %v5928
    %v5956 = vpop.permute.xlu0 %5955
    %5957 = vset.pattern.permute.xlu0 0
    %5958 = vperm.xlu0 %5957, %v5929
    %v5959 = vpop.permute.xlu0 %5958
    %5960 = vset.pattern.permute.xlu0 0
    %5961 = vperm.xlu0 %5960, %v5930
    %v5962 = vpop.permute.xlu0 %5961
    %5963 = vset.pattern.permute.xlu0 0
    %5964 = vperm.xlu0 %5963, %v5931
    %v5965 = vpop.permute.xlu0 %5964
    %5966 = vset.pattern.permute.xlu0 0
    %5967 = vperm.xlu0 %5966, %v5932
    %v5968 = vpop.permute.xlu0 %5967
    %5969 = vset.pattern.permute.xlu0 0
    %5970 = vperm.xlu0 %5969, %v5933
    %v5971 = vpop.permute.xlu0 %5970
    %5972 = vset.pattern.permute.xlu0 0
    %5973 = vperm.xlu0 %5972, %v5934
    %v5974 = vpop.permute.xlu0 %5973
    %5975 = vset.pattern.permute.xlu0 0
    %5976 = vperm.xlu0 %5975, %v5935
    %v5977 = vpop.permute.xlu0 %5976
    %5978 = vset.pattern.permute.xlu0 0
    %5979 = vperm.xlu0 %5978, %v5936
    %v5980 = vpop.permute.xlu0 %5979
    %5981 = vset.pattern.permute.xlu0 0
    %5982 = vperm.xlu0 %5981, %v5937
    %v5983 = vpop.permute.xlu0 %5982
    %5984 = vset.pattern.permute.xlu0 0
    %5985 = vperm.xlu0 %5984, %v5938
    %v5986 = vpop.permute.xlu0 %5985
    %v5987 = vlaneseq
    %v5988 = vand.u32 %v5987, 127
    %v5989 = vlaneseq
    %v5990 = vshrl.u32 %v5989, 7
    %v5991 = vsub.s32 %v5988, %v5990
    %v5992 = vrot.slane %v5941, %v5991
    %v5993 = vadd.s32 %v5988, 4294967288
    %v5994 = vlaneseq
    %v5995 = vshrl.u32 %v5994, 7
    %v5996 = vsub.s32 %v5993, %v5995
    %v5997 = vrot.slane %v5944, %v5996
    %vm5998 = vcmask 130112
    %v5999 = vsel %vm5998, %v5997, %v5992
    %v6000 = vadd.s32 %v5988, 4294967280
    %v6001 = vlaneseq
    %v6002 = vshrl.u32 %v6001, 7
    %v6003 = vsub.s32 %v6000, %v6002
    %v6004 = vrot.slane %v5947, %v6003
    %vm6005 = vcmask 195712
    %v6006 = vsel %vm6005, %v6004, %v5999
    %v6007 = vadd.s32 %v5988, 4294967272
    %v6008 = vlaneseq
    %v6009 = vshrl.u32 %v6008, 7
    %v6010 = vsub.s32 %v6007, %v6009
    %v6011 = vrot.slane %v5950, %v6010
    %vm6012 = vcmask 261312
    %v6013 = vsel %vm6012, %v6011, %v6006
    %v6014 = vadd.s32 %v5988, 4294967264
    %v6015 = vlaneseq
    %v6016 = vshrl.u32 %v6015, 7
    %v6017 = vsub.s32 %v6014, %v6016
    %v6018 = vrot.slane %v5953, %v6017
    %vm6019 = vcmask 326912
    %v6020 = vsel %vm6019, %v6018, %v6013
    %v6021 = vadd.s32 %v5988, 4294967256
    %v6022 = vlaneseq
    %v6023 = vshrl.u32 %v6022, 7
    %v6024 = vsub.s32 %v6021, %v6023
    %v6025 = vrot.slane %v5956, %v6024
    %vm6026 = vcmask 392512
    %v6027 = vsel %vm6026, %v6025, %v6020
    %v6028 = vadd.s32 %v5988, 4294967248
    %v6029 = vlaneseq
    %v6030 = vshrl.u32 %v6029, 7
    %v6031 = vsub.s32 %v6028, %v6030
    %v6032 = vrot.slane %v5959, %v6031
    %vm6033 = vcmask 458112
    %v6034 = vsel %vm6033, %v6032, %v6027
    %v6035 = vadd.s32 %v5988, 4294967240
    %v6036 = vlaneseq
    %v6037 = vshrl.u32 %v6036, 7
    %v6038 = vsub.s32 %v6035, %v6037
    %v6039 = vrot.slane %v5962, %v6038
    %vm6040 = vcmask 523712
    %v6041 = vsel %vm6040, %v6039, %v6034
    %v6042 = vlaneseq
    %v6043 = vshrl.u32 %v6042, 7
    %v6044 = vsub.s32 %v5988, %v6043
    %v6045 = vrot.slane %v5965, %v6044
    %v6046 = vlaneseq
    %v6047 = vshrl.u32 %v6046, 7
    %v6048 = vsub.s32 %v5993, %v6047
    %v6049 = vrot.slane %v5968, %v6048
    %v6050 = vsel %vm5998, %v6049, %v6045
    %v6051 = vlaneseq
    %v6052 = vshrl.u32 %v6051, 7
    %v6053 = vsub.s32 %v6000, %v6052
    %v6054 = vrot.slane %v5971, %v6053
    %v6055 = vsel %vm6005, %v6054, %v6050
    %v6056 = vlaneseq
    %v6057 = vshrl.u32 %v6056, 7
    %v6058 = vsub.s32 %v6007, %v6057
    %v6059 = vrot.slane %v5974, %v6058
    %v6060 = vsel %vm6012, %v6059, %v6055
    %v6061 = vlaneseq
    %v6062 = vshrl.u32 %v6061, 7
    %v6063 = vsub.s32 %v6014, %v6062
    %v6064 = vrot.slane %v5977, %v6063
    %v6065 = vsel %vm6019, %v6064, %v6060
    %v6066 = vlaneseq
    %v6067 = vshrl.u32 %v6066, 7
    %v6068 = vsub.s32 %v6021, %v6067
    %v6069 = vrot.slane %v5980, %v6068
    %v6070 = vsel %vm6026, %v6069, %v6065
    %v6071 = vlaneseq
    %v6072 = vshrl.u32 %v6071, 7
    %v6073 = vsub.s32 %v6028, %v6072
    %v6074 = vrot.slane %v5983, %v6073
    %v6075 = vsel %vm6033, %v6074, %v6070
    %v6076 = vlaneseq
    %v6077 = vshrl.u32 %v6076, 7
    %v6078 = vsub.s32 %v6035, %v6077
    %v6079 = vrot.slane %v5986, %v6078
    %v6080 = vsel %vm6040, %v6079, %v6075
    %vm6081 = vcmask 1041409
    %v6082 = vsel %vm6081, %v6080, %v6041
    %v6083 = vpack.c.b16 %v6082, %v6082
    %v6092 = vunpack.c.l.b16 %v5907
    %v6093 = vunpack.c.l.b16 %v5908
    %v6094 = vunpack.c.l.b16 %v5909
    %v6095 = vunpack.c.l.b16 %v5910
    %v6096 = vunpack.c.l.b16 %v5911
    %v6097 = vunpack.c.l.b16 %v5912
    %v6098 = vunpack.c.l.b16 %v5913
    %v6099 = vunpack.c.l.b16 %v5914
    %v6100 = vpack.c.b16 %v6093, %v6092
    %v6101 = vpack.c.b16 %v6095, %v6094
    %v6102 = vpack.c.b16 %v6097, %v6096
    %v6103 = vpack.c.b16 %v6099, %v6098
    %v6109 = vsel %vm3248, %v6083, 0
    %6111 = vmatprep.subr.bf16.mxu0 0
    %6112 = vmatpush1.bf16.msra.mxu0 0
    %6113 = vmatprep.subr.bf16.mxu0 0
    %6114 = vmatpush1.bf16.msra.mxu0 0
    %6115 = vmatprep.subr.bf16.mxu0 0
    %6116 = vmatpush1.bf16.msra.mxu0 0
    %6117 = vmatprep.subr.bf16.mxu0 0
    %6118 = vmatpush1.bf16.msra.mxu0 0
    %6119 = vmatprep.subr.bf16.mxu0 0
    %6120 = vmatpush1.bf16.msra.mxu0 %v6103
    %6121 = vmatprep.subr.bf16.mxu0 0
    %6122 = vmatpush1.bf16.msra.mxu0 %v6102
    %6123 = vmatprep.subr.bf16.mxu0 0
    %6124 = vmatpush1.bf16.msra.mxu0 %v6101
    %6125 = vmatprep.subr.bf16.mxu0 0
    %6126 = vmatpush1.bf16.msra.mxu0 %v6100
    %6127 = vmatprep.subr.bf16.mxu0 0
    %6128 = vmatpush2.bf16.msra.mxu0 0
    %6129 = vmatprep.subr.bf16.mxu0 0
    %6130 = vmatpush2.bf16.msra.mxu0 0
    %6131 = vmatprep.subr.bf16.mxu0 0
    %6132 = vmatpush2.bf16.msra.mxu0 0
    %6133 = vmatprep.subr.bf16.mxu0 0
    %6134 = vmatpush2.bf16.msra.mxu0 0
    %6135 = vmatprep.subr.bf16.mxu0 0
    %6136 = vmatpush2.bf16.msra.mxu0 0
    %6137 = vmatprep.subr.bf16.mxu0 0
    %6138 = vmatpush2.bf16.msra.mxu0 0
    %6139 = vmatprep.subr.bf16.mxu0 0
    %6140 = vmatpush2.bf16.msra.mxu0 0
    %6141 = vmatprep.subr.bf16.mxu0 0
    %6142 = vmatpush2.bf16.msra.mxu0 0
    %6143 = vmatprep.mubr.bf16.mxu0 0
    %6144 = vmatmul.mubr.bf16.gmra.mxu0 %v6109
    %v6145 = vpop.f32.mrf.mxu0
    %v6146 = vadd.f32 0.0, %v6145
    %v6147 = vpop.f32.mrf.mxu0
    %v6148 = vpop.f32.mrf.mxu0
    %v6149 = vpop.f32.mrf.mxu0
    %6150 = vdwg.mxu0
    %v6159 = vunpack.c.l.b16 %v5882
    %v6160 = vunpack.c.h.b16 %v5882
    %v6161 = vunpack.c.l.b16 %v5883
    %v6162 = vunpack.c.h.b16 %v5883
    %v6163 = vunpack.c.l.b16 %v5884
    %v6164 = vunpack.c.h.b16 %v5884
    %v6165 = vunpack.c.l.b16 %v5885
    %v6166 = vunpack.c.h.b16 %v5885
    %v6167 = vunpack.c.l.b16 %v5886
    %v6168 = vunpack.c.h.b16 %v5886
    %v6169 = vunpack.c.l.b16 %v5887
    %v6170 = vunpack.c.h.b16 %v5887
    %v6171 = vunpack.c.l.b16 %v5888
    %v6172 = vunpack.c.h.b16 %v5888
    %v6173 = vunpack.c.l.b16 %v5889
    %v6174 = vunpack.c.h.b16 %v5889
    %6175 = vset.pattern.permute.xlu0 0
    %6176 = vperm.xlu0 %6175, %v6159
    %v6177 = vpop.permute.xlu0 %6176
    %6178 = vset.pattern.permute.xlu0 0
    %6179 = vperm.xlu0 %6178, %v6160
    %v6180 = vpop.permute.xlu0 %6179
    %6181 = vset.pattern.permute.xlu0 0
    %6182 = vperm.xlu0 %6181, %v6161
    %v6183 = vpop.permute.xlu0 %6182
    %6184 = vset.pattern.permute.xlu0 0
    %6185 = vperm.xlu0 %6184, %v6162
    %v6186 = vpop.permute.xlu0 %6185
    %6187 = vset.pattern.permute.xlu0 0
    %6188 = vperm.xlu0 %6187, %v6163
    %v6189 = vpop.permute.xlu0 %6188
    %6190 = vset.pattern.permute.xlu0 0
    %6191 = vperm.xlu0 %6190, %v6164
    %v6192 = vpop.permute.xlu0 %6191
    %6193 = vset.pattern.permute.xlu0 0
    %6194 = vperm.xlu0 %6193, %v6165
    %v6195 = vpop.permute.xlu0 %6194
    %6196 = vset.pattern.permute.xlu0 0
    %6197 = vperm.xlu0 %6196, %v6166
    %v6198 = vpop.permute.xlu0 %6197
    %6199 = vset.pattern.permute.xlu0 0
    %6200 = vperm.xlu0 %6199, %v6167
    %v6201 = vpop.permute.xlu0 %6200
    %6202 = vset.pattern.permute.xlu0 0
    %6203 = vperm.xlu0 %6202, %v6168
    %v6204 = vpop.permute.xlu0 %6203
    %6205 = vset.pattern.permute.xlu0 0
    %6206 = vperm.xlu0 %6205, %v6169
    %v6207 = vpop.permute.xlu0 %6206
    %6208 = vset.pattern.permute.xlu0 0
    %6209 = vperm.xlu0 %6208, %v6170
    %v6210 = vpop.permute.xlu0 %6209
    %6211 = vset.pattern.permute.xlu0 0
    %6212 = vperm.xlu0 %6211, %v6171
    %v6213 = vpop.permute.xlu0 %6212
    %6214 = vset.pattern.permute.xlu0 0
    %6215 = vperm.xlu0 %6214, %v6172
    %v6216 = vpop.permute.xlu0 %6215
    %6217 = vset.pattern.permute.xlu0 0
    %6218 = vperm.xlu0 %6217, %v6173
    %v6219 = vpop.permute.xlu0 %6218
    %6220 = vset.pattern.permute.xlu0 0
    %6221 = vperm.xlu0 %6220, %v6174
    %v6222 = vpop.permute.xlu0 %6221
    %v6223 = vlaneseq
    %v6224 = vshrl.u32 %v6223, 7
    %v6225 = vsub.s32 %v5988, %v6224
    %v6226 = vrot.slane %v6177, %v6225
    %v6227 = vlaneseq
    %v6228 = vshrl.u32 %v6227, 7
    %v6229 = vsub.s32 %v5993, %v6228
    %v6230 = vrot.slane %v6180, %v6229
    %v6231 = vsel %vm5998, %v6230, %v6226
    %v6232 = vlaneseq
    %v6233 = vshrl.u32 %v6232, 7
    %v6234 = vsub.s32 %v6000, %v6233
    %v6235 = vrot.slane %v6183, %v6234
    %v6236 = vsel %vm6005, %v6235, %v6231
    %v6237 = vlaneseq
    %v6238 = vshrl.u32 %v6237, 7
    %v6239 = vsub.s32 %v6007, %v6238
    %v6240 = vrot.slane %v6186, %v6239
    %v6241 = vsel %vm6012, %v6240, %v6236
    %v6242 = vlaneseq
    %v6243 = vshrl.u32 %v6242, 7
    %v6244 = vsub.s32 %v6014, %v6243
    %v6245 = vrot.slane %v6189, %v6244
    %v6246 = vsel %vm6019, %v6245, %v6241
    %v6247 = vlaneseq
    %v6248 = vshrl.u32 %v6247, 7
    %v6249 = vsub.s32 %v6021, %v6248
    %v6250 = vrot.slane %v6192, %v6249
    %v6251 = vsel %vm6026, %v6250, %v6246
    %v6252 = vlaneseq
    %v6253 = vshrl.u32 %v6252, 7
    %v6254 = vsub.s32 %v6028, %v6253
    %v6255 = vrot.slane %v6195, %v6254
    %v6256 = vsel %vm6033, %v6255, %v6251
    %v6257 = vlaneseq
    %v6258 = vshrl.u32 %v6257, 7
    %v6259 = vsub.s32 %v6035, %v6258
    %v6260 = vrot.slane %v6198, %v6259
    %v6261 = vsel %vm6040, %v6260, %v6256
    %v6262 = vlaneseq
    %v6263 = vshrl.u32 %v6262, 7
    %v6264 = vsub.s32 %v5988, %v6263
    %v6265 = vrot.slane %v6201, %v6264
    %v6266 = vlaneseq
    %v6267 = vshrl.u32 %v6266, 7
    %v6268 = vsub.s32 %v5993, %v6267
    %v6269 = vrot.slane %v6204, %v6268
    %v6270 = vsel %vm5998, %v6269, %v6265
    %v6271 = vlaneseq
    %v6272 = vshrl.u32 %v6271, 7
    %v6273 = vsub.s32 %v6000, %v6272
    %v6274 = vrot.slane %v6207, %v6273
    %v6275 = vsel %vm6005, %v6274, %v6270
    %v6276 = vlaneseq
    %v6277 = vshrl.u32 %v6276, 7
    %v6278 = vsub.s32 %v6007, %v6277
    %v6279 = vrot.slane %v6210, %v6278
    %v6280 = vsel %vm6012, %v6279, %v6275
    %v6281 = vlaneseq
    %v6282 = vshrl.u32 %v6281, 7
    %v6283 = vsub.s32 %v6014, %v6282
    %v6284 = vrot.slane %v6213, %v6283
    %v6285 = vsel %vm6019, %v6284, %v6280
    %v6286 = vlaneseq
    %v6287 = vshrl.u32 %v6286, 7
    %v6288 = vsub.s32 %v6021, %v6287
    %v6289 = vrot.slane %v6216, %v6288
    %v6290 = vsel %vm6026, %v6289, %v6285
    %v6291 = vlaneseq
    %v6292 = vshrl.u32 %v6291, 7
    %v6293 = vsub.s32 %v6028, %v6292
    %v6294 = vrot.slane %v6219, %v6293
    %v6295 = vsel %vm6033, %v6294, %v6290
    %v6296 = vlaneseq
    %v6297 = vshrl.u32 %v6296, 7
    %v6298 = vsub.s32 %v6035, %v6297
    %v6299 = vrot.slane %v6222, %v6298
    %v6300 = vsel %vm6040, %v6299, %v6295
    %v6301 = vsel %vm6081, %v6300, %v6261
    %v6302 = vpack.c.b16 %v6301, %v6301
    %v6311 = vunpack.c.l.b16 %v5890
    %v6312 = vunpack.c.l.b16 %v5891
    %v6313 = vunpack.c.l.b16 %v5892
    %v6314 = vunpack.c.l.b16 %v5893
    %v6315 = vunpack.c.l.b16 %v5894
    %v6316 = vunpack.c.l.b16 %v5895
    %v6317 = vunpack.c.l.b16 %v5896
    %v6318 = vunpack.c.l.b16 %v5897
    %v6319 = vpack.c.b16 %v6312, %v6311
    %v6320 = vpack.c.b16 %v6314, %v6313
    %v6321 = vpack.c.b16 %v6316, %v6315
    %v6322 = vpack.c.b16 %v6318, %v6317
    %v6328 = vsel %vm3248, %v6302, 0
    %6330 = vmatprep.subr.bf16.mxu0 0
    %6331 = vmatpush1.bf16.msra.mxu0 0
    %6332 = vmatprep.subr.bf16.mxu0 0
    %6333 = vmatpush1.bf16.msra.mxu0 0
    %6334 = vmatprep.subr.bf16.mxu0 0
    %6335 = vmatpush1.bf16.msra.mxu0 0
    %6336 = vmatprep.subr.bf16.mxu0 0
    %6337 = vmatpush1.bf16.msra.mxu0 0
    %6338 = vmatprep.subr.bf16.mxu0 0
    %6339 = vmatpush1.bf16.msra.mxu0 %v6322
    %6340 = vmatprep.subr.bf16.mxu0 0
    %6341 = vmatpush1.bf16.msra.mxu0 %v6321
    %6342 = vmatprep.subr.bf16.mxu0 0
    %6343 = vmatpush1.bf16.msra.mxu0 %v6320
    %6344 = vmatprep.subr.bf16.mxu0 0
    %6345 = vmatpush1.bf16.msra.mxu0 %v6319
    %6346 = vmatprep.subr.bf16.mxu0 0
    %6347 = vmatpush2.bf16.msra.mxu0 0
    %6348 = vmatprep.subr.bf16.mxu0 0
    %6349 = vmatpush2.bf16.msra.mxu0 0
    %6350 = vmatprep.subr.bf16.mxu0 0
    %6351 = vmatpush2.bf16.msra.mxu0 0
    %6352 = vmatprep.subr.bf16.mxu0 0
    %6353 = vmatpush2.bf16.msra.mxu0 0
    %6354 = vmatprep.subr.bf16.mxu0 0
    %6355 = vmatpush2.bf16.msra.mxu0 0
    %6356 = vmatprep.subr.bf16.mxu0 0
    %6357 = vmatpush2.bf16.msra.mxu0 0
    %6358 = vmatprep.subr.bf16.mxu0 0
    %6359 = vmatpush2.bf16.msra.mxu0 0
    %6360 = vmatprep.subr.bf16.mxu0 0
    %6361 = vmatpush2.bf16.msra.mxu0 0
    %6362 = vmatprep.mubr.bf16.mxu0 0
    %6363 = vmatmul.mubr.bf16.gmra.mxu0 %v6328
    %v6364 = vpop.f32.mrf.mxu0
    %v6365 = vadd.f32 %v6146, %v6364
    %v6366 = vpop.f32.mrf.mxu0
    %v6367 = vpop.f32.mrf.mxu0
    %v6368 = vpop.f32.mrf.mxu0
    %6369 = vdwg.mxu0
    %v6370 = vpack.c.bf16 %v5465, %v5464
    %v6371 = vpack.c.bf16 %v5467, %v5466
    %v6372 = vpack.c.bf16 %v5469, %v5468
    %v6373 = vpack.c.bf16 %v5471, %v5470
    %v6374 = vpack.c.bf16 %v5473, %v5472
    %v6375 = vpack.c.bf16 %v5475, %v5474
    %v6376 = vpack.c.bf16 %v5477, %v5476
    %v6377 = vpack.c.bf16 %v5479, %v5478
    %s6378 = scalar_lea.vmem %s9, 64
    %v6379 = vld [vmem:[%s6378] sm:$0xf]
    %v6380 = vld [vmem:[%s6378 + $0x4] sm:$0xf]
    %v6381 = vld [vmem:[%s6378 + $0x8] sm:$0xf]
    %v6382 = vld [vmem:[%s6378 + $0xc] sm:$0xf]
    %v6383 = vld [vmem:[%s6378 + $0x10] sm:$0xf]
    %v6384 = vld [vmem:[%s6378 + $0x14] sm:$0xf]
    %v6385 = vld [vmem:[%s6378 + $0x18] sm:$0xf]
    %v6386 = vld [vmem:[%s6378 + $0x1c] sm:$0xf]
    %v6395 = vunpack.c.l.b16 %v6370
    %v6396 = vunpack.c.h.b16 %v6370
    %v6397 = vunpack.c.l.b16 %v6371
    %v6398 = vunpack.c.h.b16 %v6371
    %v6399 = vunpack.c.l.b16 %v6372
    %v6400 = vunpack.c.h.b16 %v6372
    %v6401 = vunpack.c.l.b16 %v6373
    %v6402 = vunpack.c.h.b16 %v6373
    %v6403 = vunpack.c.l.b16 %v6374
    %v6404 = vunpack.c.h.b16 %v6374
    %v6405 = vunpack.c.l.b16 %v6375
    %v6406 = vunpack.c.h.b16 %v6375
    %v6407 = vunpack.c.l.b16 %v6376
    %v6408 = vunpack.c.h.b16 %v6376
    %v6409 = vunpack.c.l.b16 %v6377
    %v6410 = vunpack.c.h.b16 %v6377
    %6411 = vset.pattern.permute.xlu0 0
    %6412 = vperm.xlu0 %6411, %v6395
    %v6413 = vpop.permute.xlu0 %6412
    %6414 = vset.pattern.permute.xlu0 0
    %6415 = vperm.xlu0 %6414, %v6396
    %v6416 = vpop.permute.xlu0 %6415
    %6417 = vset.pattern.permute.xlu0 0
    %6418 = vperm.xlu0 %6417, %v6397
    %v6419 = vpop.permute.xlu0 %6418
    %6420 = vset.pattern.permute.xlu0 0
    %6421 = vperm.xlu0 %6420, %v6398
    %v6422 = vpop.permute.xlu0 %6421
    %6423 = vset.pattern.permute.xlu0 0
    %6424 = vperm.xlu0 %6423, %v6399
    %v6425 = vpop.permute.xlu0 %6424
    %6426 = vset.pattern.permute.xlu0 0
    %6427 = vperm.xlu0 %6426, %v6400
    %v6428 = vpop.permute.xlu0 %6427
    %6429 = vset.pattern.permute.xlu0 0
    %6430 = vperm.xlu0 %6429, %v6401
    %v6431 = vpop.permute.xlu0 %6430
    %6432 = vset.pattern.permute.xlu0 0
    %6433 = vperm.xlu0 %6432, %v6402
    %v6434 = vpop.permute.xlu0 %6433
    %6435 = vset.pattern.permute.xlu0 0
    %6436 = vperm.xlu0 %6435, %v6403
    %v6437 = vpop.permute.xlu0 %6436
    %6438 = vset.pattern.permute.xlu0 0
    %6439 = vperm.xlu0 %6438, %v6404
    %v6440 = vpop.permute.xlu0 %6439
    %6441 = vset.pattern.permute.xlu0 0
    %6442 = vperm.xlu0 %6441, %v6405
    %v6443 = vpop.permute.xlu0 %6442
    %6444 = vset.pattern.permute.xlu0 0
    %6445 = vperm.xlu0 %6444, %v6406
    %v6446 = vpop.permute.xlu0 %6445
    %6447 = vset.pattern.permute.xlu0 0
    %6448 = vperm.xlu0 %6447, %v6407
    %v6449 = vpop.permute.xlu0 %6448
    %6450 = vset.pattern.permute.xlu0 0
    %6451 = vperm.xlu0 %6450, %v6408
    %v6452 = vpop.permute.xlu0 %6451
    %6453 = vset.pattern.permute.xlu0 0
    %6454 = vperm.xlu0 %6453, %v6409
    %v6455 = vpop.permute.xlu0 %6454
    %6456 = vset.pattern.permute.xlu0 0
    %6457 = vperm.xlu0 %6456, %v6410
    %v6458 = vpop.permute.xlu0 %6457
    %v6459 = vlaneseq
    %v6460 = vshrl.u32 %v6459, 7
    %v6461 = vsub.s32 %v5988, %v6460
    %v6462 = vrot.slane %v6413, %v6461
    %v6463 = vlaneseq
    %v6464 = vshrl.u32 %v6463, 7
    %v6465 = vsub.s32 %v5993, %v6464
    %v6466 = vrot.slane %v6416, %v6465
    %v6467 = vsel %vm5998, %v6466, %v6462
    %v6468 = vlaneseq
    %v6469 = vshrl.u32 %v6468, 7
    %v6470 = vsub.s32 %v6000, %v6469
    %v6471 = vrot.slane %v6419, %v6470
    %v6472 = vsel %vm6005, %v6471, %v6467
    %v6473 = vlaneseq
    %v6474 = vshrl.u32 %v6473, 7
    %v6475 = vsub.s32 %v6007, %v6474
    %v6476 = vrot.slane %v6422, %v6475
    %v6477 = vsel %vm6012, %v6476, %v6472
    %v6478 = vlaneseq
    %v6479 = vshrl.u32 %v6478, 7
    %v6480 = vsub.s32 %v6014, %v6479
    %v6481 = vrot.slane %v6425, %v6480
    %v6482 = vsel %vm6019, %v6481, %v6477
    %v6483 = vlaneseq
    %v6484 = vshrl.u32 %v6483, 7
    %v6485 = vsub.s32 %v6021, %v6484
    %v6486 = vrot.slane %v6428, %v6485
    %v6487 = vsel %vm6026, %v6486, %v6482
    %v6488 = vlaneseq
    %v6489 = vshrl.u32 %v6488, 7
    %v6490 = vsub.s32 %v6028, %v6489
    %v6491 = vrot.slane %v6431, %v6490
    %v6492 = vsel %vm6033, %v6491, %v6487
    %v6493 = vlaneseq
    %v6494 = vshrl.u32 %v6493, 7
    %v6495 = vsub.s32 %v6035, %v6494
    %v6496 = vrot.slane %v6434, %v6495
    %v6497 = vsel %vm6040, %v6496, %v6492
    %v6498 = vlaneseq
    %v6499 = vshrl.u32 %v6498, 7
    %v6500 = vsub.s32 %v5988, %v6499
    %v6501 = vrot.slane %v6437, %v6500
    %v6502 = vlaneseq
    %v6503 = vshrl.u32 %v6502, 7
    %v6504 = vsub.s32 %v5993, %v6503
    %v6505 = vrot.slane %v6440, %v6504
    %v6506 = vsel %vm5998, %v6505, %v6501
    %v6507 = vlaneseq
    %v6508 = vshrl.u32 %v6507, 7
    %v6509 = vsub.s32 %v6000, %v6508
    %v6510 = vrot.slane %v6443, %v6509
    %v6511 = vsel %vm6005, %v6510, %v6506
    %v6512 = vlaneseq
    %v6513 = vshrl.u32 %v6512, 7
    %v6514 = vsub.s32 %v6007, %v6513
    %v6515 = vrot.slane %v6446, %v6514
    %v6516 = vsel %vm6012, %v6515, %v6511
    %v6517 = vlaneseq
    %v6518 = vshrl.u32 %v6517, 7
    %v6519 = vsub.s32 %v6014, %v6518
    %v6520 = vrot.slane %v6449, %v6519
    %v6521 = vsel %vm6019, %v6520, %v6516
    %v6522 = vlaneseq
    %v6523 = vshrl.u32 %v6522, 7
    %v6524 = vsub.s32 %v6021, %v6523
    %v6525 = vrot.slane %v6452, %v6524
    %v6526 = vsel %vm6026, %v6525, %v6521
    %v6527 = vlaneseq
    %v6528 = vshrl.u32 %v6527, 7
    %v6529 = vsub.s32 %v6028, %v6528
    %v6530 = vrot.slane %v6455, %v6529
    %v6531 = vsel %vm6033, %v6530, %v6526
    %v6532 = vlaneseq
    %v6533 = vshrl.u32 %v6532, 7
    %v6534 = vsub.s32 %v6035, %v6533
    %v6535 = vrot.slane %v6458, %v6534
    %v6536 = vsel %vm6040, %v6535, %v6531
    %v6537 = vsel %vm6081, %v6536, %v6497
    %v6538 = vpack.c.b16 %v6537, %v6537
    %v6547 = vunpack.c.l.b16 %v6379
    %v6548 = vunpack.c.l.b16 %v6380
    %v6549 = vunpack.c.l.b16 %v6381
    %v6550 = vunpack.c.l.b16 %v6382
    %v6551 = vunpack.c.l.b16 %v6383
    %v6552 = vunpack.c.l.b16 %v6384
    %v6553 = vunpack.c.l.b16 %v6385
    %v6554 = vunpack.c.l.b16 %v6386
    %v6555 = vpack.c.b16 %v6548, %v6547
    %v6556 = vpack.c.b16 %v6550, %v6549
    %v6557 = vpack.c.b16 %v6552, %v6551
    %v6558 = vpack.c.b16 %v6554, %v6553
    %v6564 = vsel %vm3248, %v6538, 0
    %6566 = vmatprep.subr.bf16.mxu0 0
    %6567 = vmatpush1.bf16.msra.mxu0 0
    %6568 = vmatprep.subr.bf16.mxu0 0
    %6569 = vmatpush1.bf16.msra.mxu0 0
    %6570 = vmatprep.subr.bf16.mxu0 0
    %6571 = vmatpush1.bf16.msra.mxu0 0
    %6572 = vmatprep.subr.bf16.mxu0 0
    %6573 = vmatpush1.bf16.msra.mxu0 0
    %6574 = vmatprep.subr.bf16.mxu0 0
    %6575 = vmatpush1.bf16.msra.mxu0 %v6558
    %6576 = vmatprep.subr.bf16.mxu0 0
    %6577 = vmatpush1.bf16.msra.mxu0 %v6557
    %6578 = vmatprep.subr.bf16.mxu0 0
    %6579 = vmatpush1.bf16.msra.mxu0 %v6556
    %6580 = vmatprep.subr.bf16.mxu0 0
    %6581 = vmatpush1.bf16.msra.mxu0 %v6555
    %6582 = vmatprep.subr.bf16.mxu0 0
    %6583 = vmatpush2.bf16.msra.mxu0 0
    %6584 = vmatprep.subr.bf16.mxu0 0
    %6585 = vmatpush2.bf16.msra.mxu0 0
    %6586 = vmatprep.subr.bf16.mxu0 0
    %6587 = vmatpush2.bf16.msra.mxu0 0
    %6588 = vmatprep.subr.bf16.mxu0 0
    %6589 = vmatpush2.bf16.msra.mxu0 0
    %6590 = vmatprep.subr.bf16.mxu0 0
    %6591 = vmatpush2.bf16.msra.mxu0 0
    %6592 = vmatprep.subr.bf16.mxu0 0
    %6593 = vmatpush2.bf16.msra.mxu0 0
    %6594 = vmatprep.subr.bf16.mxu0 0
    %6595 = vmatpush2.bf16.msra.mxu0 0
    %6596 = vmatprep.subr.bf16.mxu0 0
    %6597 = vmatpush2.bf16.msra.mxu0 0
    %6598 = vmatprep.mubr.bf16.mxu0 0
    %6599 = vmatmul.mubr.bf16.gmra.mxu0 %v6564
    %v6600 = vpop.f32.mrf.mxu0
    %v6601 = vadd.f32 0.0, %v6600
    %v6602 = vpop.f32.mrf.mxu0
    %v6603 = vpop.f32.mrf.mxu0
    %v6604 = vpop.f32.mrf.mxu0
    %6605 = vdwg.mxu0
    %v6606 = vadd.f32 %v6365, %v6601
    %v6607 = vpack.c.bf16 %v5599, %v5598
    %v6608 = vpack.c.bf16 %v5601, %v5600
    %v6609 = vpack.c.bf16 %v5603, %v5602
    %v6610 = vpack.c.bf16 %v5605, %v5604
    %v6611 = vpack.c.bf16 %v5607, %v5606
    %v6612 = vpack.c.bf16 %v5609, %v5608
    %v6613 = vpack.c.bf16 %v5611, %v5610
    %v6614 = vpack.c.bf16 %v5613, %v5612
    %s6615 = scalar_lea.vmem %s9, 96
    %v6616 = vld [vmem:[%s6615] sm:$0xf]
    %v6617 = vld [vmem:[%s6615 + $0x4] sm:$0xf]
    %v6618 = vld [vmem:[%s6615 + $0x8] sm:$0xf]
    %v6619 = vld [vmem:[%s6615 + $0xc] sm:$0xf]
    %v6620 = vld [vmem:[%s6615 + $0x10] sm:$0xf]
    %v6621 = vld [vmem:[%s6615 + $0x14] sm:$0xf]
    %v6622 = vld [vmem:[%s6615 + $0x18] sm:$0xf]
    %v6623 = vld [vmem:[%s6615 + $0x1c] sm:$0xf]
    %v6632 = vunpack.c.l.b16 %v6607
    %v6633 = vunpack.c.h.b16 %v6607
    %v6634 = vunpack.c.l.b16 %v6608
    %v6635 = vunpack.c.h.b16 %v6608
    %v6636 = vunpack.c.l.b16 %v6609
    %v6637 = vunpack.c.h.b16 %v6609
    %v6638 = vunpack.c.l.b16 %v6610
    %v6639 = vunpack.c.h.b16 %v6610
    %v6640 = vunpack.c.l.b16 %v6611
    %v6641 = vunpack.c.h.b16 %v6611
    %v6642 = vunpack.c.l.b16 %v6612
    %v6643 = vunpack.c.h.b16 %v6612
    %v6644 = vunpack.c.l.b16 %v6613
    %v6645 = vunpack.c.h.b16 %v6613
    %v6646 = vunpack.c.l.b16 %v6614
    %v6647 = vunpack.c.h.b16 %v6614
    %6648 = vset.pattern.permute.xlu0 0
    %6649 = vperm.xlu0 %6648, %v6632
    %v6650 = vpop.permute.xlu0 %6649
    %6651 = vset.pattern.permute.xlu0 0
    %6652 = vperm.xlu0 %6651, %v6633
    %v6653 = vpop.permute.xlu0 %6652
    %6654 = vset.pattern.permute.xlu0 0
    %6655 = vperm.xlu0 %6654, %v6634
    %v6656 = vpop.permute.xlu0 %6655
    %6657 = vset.pattern.permute.xlu0 0
    %6658 = vperm.xlu0 %6657, %v6635
    %v6659 = vpop.permute.xlu0 %6658
    %6660 = vset.pattern.permute.xlu0 0
    %6661 = vperm.xlu0 %6660, %v6636
    %v6662 = vpop.permute.xlu0 %6661
    %6663 = vset.pattern.permute.xlu0 0
    %6664 = vperm.xlu0 %6663, %v6637
    %v6665 = vpop.permute.xlu0 %6664
    %6666 = vset.pattern.permute.xlu0 0
    %6667 = vperm.xlu0 %6666, %v6638
    %v6668 = vpop.permute.xlu0 %6667
    %6669 = vset.pattern.permute.xlu0 0
    %6670 = vperm.xlu0 %6669, %v6639
    %v6671 = vpop.permute.xlu0 %6670
    %6672 = vset.pattern.permute.xlu0 0
    %6673 = vperm.xlu0 %6672, %v6640
    %v6674 = vpop.permute.xlu0 %6673
    %6675 = vset.pattern.permute.xlu0 0
    %6676 = vperm.xlu0 %6675, %v6641
    %v6677 = vpop.permute.xlu0 %6676
    %6678 = vset.pattern.permute.xlu0 0
    %6679 = vperm.xlu0 %6678, %v6642
    %v6680 = vpop.permute.xlu0 %6679
    %6681 = vset.pattern.permute.xlu0 0
    %6682 = vperm.xlu0 %6681, %v6643
    %v6683 = vpop.permute.xlu0 %6682
    %6684 = vset.pattern.permute.xlu0 0
    %6685 = vperm.xlu0 %6684, %v6644
    %v6686 = vpop.permute.xlu0 %6685
    %6687 = vset.pattern.permute.xlu0 0
    %6688 = vperm.xlu0 %6687, %v6645
    %v6689 = vpop.permute.xlu0 %6688
    %6690 = vset.pattern.permute.xlu0 0
    %6691 = vperm.xlu0 %6690, %v6646
    %v6692 = vpop.permute.xlu0 %6691
    %6693 = vset.pattern.permute.xlu0 0
    %6694 = vperm.xlu0 %6693, %v6647
    %v6695 = vpop.permute.xlu0 %6694
    %v6696 = vlaneseq
    %v6697 = vshrl.u32 %v6696, 7
    %v6698 = vsub.s32 %v5988, %v6697
    %v6699 = vrot.slane %v6650, %v6698
    %v6700 = vlaneseq
    %v6701 = vshrl.u32 %v6700, 7
    %v6702 = vsub.s32 %v5993, %v6701
    %v6703 = vrot.slane %v6653, %v6702
    %v6704 = vsel %vm5998, %v6703, %v6699
    %v6705 = vlaneseq
    %v6706 = vshrl.u32 %v6705, 7
    %v6707 = vsub.s32 %v6000, %v6706
    %v6708 = vrot.slane %v6656, %v6707
    %v6709 = vsel %vm6005, %v6708, %v6704
    %v6710 = vlaneseq
    %v6711 = vshrl.u32 %v6710, 7
    %v6712 = vsub.s32 %v6007, %v6711
    %v6713 = vrot.slane %v6659, %v6712
    %v6714 = vsel %vm6012, %v6713, %v6709
    %v6715 = vlaneseq
    %v6716 = vshrl.u32 %v6715, 7
    %v6717 = vsub.s32 %v6014, %v6716
    %v6718 = vrot.slane %v6662, %v6717
    %v6719 = vsel %vm6019, %v6718, %v6714
    %v6720 = vlaneseq
    %v6721 = vshrl.u32 %v6720, 7
    %v6722 = vsub.s32 %v6021, %v6721
    %v6723 = vrot.slane %v6665, %v6722
    %v6724 = vsel %vm6026, %v6723, %v6719
    %v6725 = vlaneseq
    %v6726 = vshrl.u32 %v6725, 7
    %v6727 = vsub.s32 %v6028, %v6726
    %v6728 = vrot.slane %v6668, %v6727
    %v6729 = vsel %vm6033, %v6728, %v6724
    %v6730 = vlaneseq
    %v6731 = vshrl.u32 %v6730, 7
    %v6732 = vsub.s32 %v6035, %v6731
    %v6733 = vrot.slane %v6671, %v6732
    %v6734 = vsel %vm6040, %v6733, %v6729
    %v6735 = vlaneseq
    %v6736 = vshrl.u32 %v6735, 7
    %v6737 = vsub.s32 %v5988, %v6736
    %v6738 = vrot.slane %v6674, %v6737
    %v6739 = vlaneseq
    %v6740 = vshrl.u32 %v6739, 7
    %v6741 = vsub.s32 %v5993, %v6740
    %v6742 = vrot.slane %v6677, %v6741
    %v6743 = vsel %vm5998, %v6742, %v6738
    %v6744 = vlaneseq
    %v6745 = vshrl.u32 %v6744, 7
    %v6746 = vsub.s32 %v6000, %v6745
    %v6747 = vrot.slane %v6680, %v6746
    %v6748 = vsel %vm6005, %v6747, %v6743
    %v6749 = vlaneseq
    %v6750 = vshrl.u32 %v6749, 7
    %v6751 = vsub.s32 %v6007, %v6750
    %v6752 = vrot.slane %v6683, %v6751
    %v6753 = vsel %vm6012, %v6752, %v6748
    %v6754 = vlaneseq
    %v6755 = vshrl.u32 %v6754, 7
    %v6756 = vsub.s32 %v6014, %v6755
    %v6757 = vrot.slane %v6686, %v6756
    %v6758 = vsel %vm6019, %v6757, %v6753
    %v6759 = vlaneseq
    %v6760 = vshrl.u32 %v6759, 7
    %v6761 = vsub.s32 %v6021, %v6760
    %v6762 = vrot.slane %v6689, %v6761
    %v6763 = vsel %vm6026, %v6762, %v6758
    %v6764 = vlaneseq
    %v6765 = vshrl.u32 %v6764, 7
    %v6766 = vsub.s32 %v6028, %v6765
    %v6767 = vrot.slane %v6692, %v6766
    %v6768 = vsel %vm6033, %v6767, %v6763
    %v6769 = vlaneseq
    %v6770 = vshrl.u32 %v6769, 7
    %v6771 = vsub.s32 %v6035, %v6770
    %v6772 = vrot.slane %v6695, %v6771
    %v6773 = vsel %vm6040, %v6772, %v6768
    %v6774 = vsel %vm6081, %v6773, %v6734
    %v6775 = vpack.c.b16 %v6774, %v6774
    %v6784 = vunpack.c.l.b16 %v6616
    %v6785 = vunpack.c.l.b16 %v6617
    %v6786 = vunpack.c.l.b16 %v6618
    %v6787 = vunpack.c.l.b16 %v6619
    %v6788 = vunpack.c.l.b16 %v6620
    %v6789 = vunpack.c.l.b16 %v6621
    %v6790 = vunpack.c.l.b16 %v6622
    %v6791 = vunpack.c.l.b16 %v6623
    %v6792 = vpack.c.b16 %v6785, %v6784
    %v6793 = vpack.c.b16 %v6787, %v6786
    %v6794 = vpack.c.b16 %v6789, %v6788
    %v6795 = vpack.c.b16 %v6791, %v6790
    %v6801 = vsel %vm3248, %v6775, 0
    %6803 = vmatprep.subr.bf16.mxu0 0
    %6804 = vmatpush1.bf16.msra.mxu0 0
    %6805 = vmatprep.subr.bf16.mxu0 0
    %6806 = vmatpush1.bf16.msra.mxu0 0
    %6807 = vmatprep.subr.bf16.mxu0 0
    %6808 = vmatpush1.bf16.msra.mxu0 0
    %6809 = vmatprep.subr.bf16.mxu0 0
    %6810 = vmatpush1.bf16.msra.mxu0 0
    %6811 = vmatprep.subr.bf16.mxu0 0
    %6812 = vmatpush1.bf16.msra.mxu0 %v6795
    %6813 = vmatprep.subr.bf16.mxu0 0
    %6814 = vmatpush1.bf16.msra.mxu0 %v6794
    %6815 = vmatprep.subr.bf16.mxu0 0
    %6816 = vmatpush1.bf16.msra.mxu0 %v6793
    %6817 = vmatprep.subr.bf16.mxu0 0
    %6818 = vmatpush1.bf16.msra.mxu0 %v6792
    %6819 = vmatprep.subr.bf16.mxu0 0
    %6820 = vmatpush2.bf16.msra.mxu0 0
    %6821 = vmatprep.subr.bf16.mxu0 0
    %6822 = vmatpush2.bf16.msra.mxu0 0
    %6823 = vmatprep.subr.bf16.mxu0 0
    %6824 = vmatpush2.bf16.msra.mxu0 0
    %6825 = vmatprep.subr.bf16.mxu0 0
    %6826 = vmatpush2.bf16.msra.mxu0 0
    %6827 = vmatprep.subr.bf16.mxu0 0
    %6828 = vmatpush2.bf16.msra.mxu0 0
    %6829 = vmatprep.subr.bf16.mxu0 0
    %6830 = vmatpush2.bf16.msra.mxu0 0
    %6831 = vmatprep.subr.bf16.mxu0 0
    %6832 = vmatpush2.bf16.msra.mxu0 0
    %6833 = vmatprep.subr.bf16.mxu0 0
    %6834 = vmatpush2.bf16.msra.mxu0 0
    %6835 = vmatprep.mubr.bf16.mxu0 0
    %6836 = vmatmul.mubr.bf16.gmra.mxu0 %v6801
    %v6837 = vpop.f32.mrf.mxu0
    %v6838 = vadd.f32 0.0, %v6837
    %v6839 = vpop.f32.mrf.mxu0
    %v6840 = vpop.f32.mrf.mxu0
    %v6841 = vpop.f32.mrf.mxu0
    %6842 = vdwg.mxu0
    %v6843 = vadd.f32 %v6606, %v6838
    %v6844 = vld [vmem:[%s10] sm:$0x1]
    %v6846 = vlaneseq
    %v6847 = vshrl.u32 %v6846, 7
    %v6848 = vsub.s32 0, %v6847
    %v6849 = vrot.slane %v6844, %v6848
    %v6851 = vadd.f32 %v6843, %v6849
    %vm6852 = vcmask 517120
    %v6853 = vsel %vm6852, %v6851, -inf
    %6854 = vmax.xlane.f32.xlu0 %v6853
    %v6855 = vpop.xlane.xlu0 %6854
    %v6856 = vsub.f32 %v6851, %v6855
    %v6857 = vmul.f32 %v6856, 1.442695
    %v6858 = vpow.pop %v6857
    %v6859 = vsel %vm6852, %v6858, 0.0
    %6860 = vadd.xlane.f32.xlu0 %v6859
    %v6861 = vpop.xlane.xlu0 %6860
    %v6862 = vlog2.pop %v6861
    %v6863 = vmul.f32 %v6862, 0.6931472
    %v6864 = vsub.f32 %v6856, %v6863
    %6865 = vst.msk [vmem:[#allocation5] sm:$0x3] %vm6852, %v6864
    %v6866 = vpack.c.bf16 %v5733, %v5732
    %v6867 = vpack.c.bf16 %v5735, %v5734
    %v6868 = vpack.c.bf16 %v5737, %v5736
    %v6869 = vpack.c.bf16 %v5739, %v5738
    %v6870 = vpack.c.bf16 %v5741, %v5740
    %v6871 = vpack.c.bf16 %v5743, %v5742
    %v6872 = vpack.c.bf16 %v5745, %v5744
    %v6873 = vpack.c.bf16 %v5747, %v5746
    %v6874 = vld [vmem:[%s11] sm:$0xf]
    %v6875 = vld [vmem:[%s11 + $0x4] sm:$0xf]
    %v6876 = vld [vmem:[%s11 + $0x8] sm:$0xf]
    %v6877 = vld [vmem:[%s11 + $0xc] sm:$0xf]
    %v6878 = vld [vmem:[%s11 + $0x10] sm:$0xf]
    %v6879 = vld [vmem:[%s11 + $0x14] sm:$0xf]
    %v6880 = vld [vmem:[%s11 + $0x18] sm:$0xf]
    %v6881 = vld [vmem:[%s11 + $0x1c] sm:$0xf]
    %v6882 = vpack.c.bf16 %v5867, %v5866
    %v6883 = vpack.c.bf16 %v5869, %v5868
    %v6884 = vpack.c.bf16 %v5871, %v5870
    %v6885 = vpack.c.bf16 %v5873, %v5872
    %v6886 = vpack.c.bf16 %v5875, %v5874
    %v6887 = vpack.c.bf16 %v5877, %v5876
    %v6888 = vpack.c.bf16 %v5879, %v5878
    %v6889 = vpack.c.bf16 %v5881, %v5880
    %s6890 = scalar_lea.vmem %s11, 32
    %v6891 = vld [vmem:[%s6890] sm:$0xf]
    %v6892 = vld [vmem:[%s6890 + $0x4] sm:$0xf]
    %v6893 = vld [vmem:[%s6890 + $0x8] sm:$0xf]
    %v6894 = vld [vmem:[%s6890 + $0xc] sm:$0xf]
    %v6895 = vld [vmem:[%s6890 + $0x10] sm:$0xf]
    %v6896 = vld [vmem:[%s6890 + $0x14] sm:$0xf]
    %v6897 = vld [vmem:[%s6890 + $0x18] sm:$0xf]
    %v6898 = vld [vmem:[%s6890 + $0x1c] sm:$0xf]
    %v6907 = vunpack.c.l.b16 %v6882
    %v6908 = vunpack.c.h.b16 %v6882
    %v6909 = vunpack.c.l.b16 %v6883
    %v6910 = vunpack.c.h.b16 %v6883
    %v6911 = vunpack.c.l.b16 %v6884
    %v6912 = vunpack.c.h.b16 %v6884
    %v6913 = vunpack.c.l.b16 %v6885
    %v6914 = vunpack.c.h.b16 %v6885
    %v6915 = vunpack.c.l.b16 %v6886
    %v6916 = vunpack.c.h.b16 %v6886
    %v6917 = vunpack.c.l.b16 %v6887
    %v6918 = vunpack.c.h.b16 %v6887
    %v6919 = vunpack.c.l.b16 %v6888
    %v6920 = vunpack.c.h.b16 %v6888
    %v6921 = vunpack.c.l.b16 %v6889
    %v6922 = vunpack.c.h.b16 %v6889
    %6923 = vset.pattern.permute.xlu0 0
    %6924 = vperm.xlu0 %6923, %v6907
    %v6925 = vpop.permute.xlu0 %6924
    %6926 = vset.pattern.permute.xlu0 0
    %6927 = vperm.xlu0 %6926, %v6908
    %v6928 = vpop.permute.xlu0 %6927
    %6929 = vset.pattern.permute.xlu0 0
    %6930 = vperm.xlu0 %6929, %v6909
    %v6931 = vpop.permute.xlu0 %6930
    %6932 = vset.pattern.permute.xlu0 0
    %6933 = vperm.xlu0 %6932, %v6910
    %v6934 = vpop.permute.xlu0 %6933
    %6935 = vset.pattern.permute.xlu0 0
    %6936 = vperm.xlu0 %6935, %v6911
    %v6937 = vpop.permute.xlu0 %6936
    %6938 = vset.pattern.permute.xlu0 0
    %6939 = vperm.xlu0 %6938, %v6912
    %v6940 = vpop.permute.xlu0 %6939
    %6941 = vset.pattern.permute.xlu0 0
    %6942 = vperm.xlu0 %6941, %v6913
    %v6943 = vpop.permute.xlu0 %6942
    %6944 = vset.pattern.permute.xlu0 0
    %6945 = vperm.xlu0 %6944, %v6914
    %v6946 = vpop.permute.xlu0 %6945
    %6947 = vset.pattern.permute.xlu0 0
    %6948 = vperm.xlu0 %6947, %v6915
    %v6949 = vpop.permute.xlu0 %6948
    %6950 = vset.pattern.permute.xlu0 0
    %6951 = vperm.xlu0 %6950, %v6916
    %v6952 = vpop.permute.xlu0 %6951
    %6953 = vset.pattern.permute.xlu0 0
    %6954 = vperm.xlu0 %6953, %v6917
    %v6955 = vpop.permute.xlu0 %6954
    %6956 = vset.pattern.permute.xlu0 0
    %6957 = vperm.xlu0 %6956, %v6918
    %v6958 = vpop.permute.xlu0 %6957
    %6959 = vset.pattern.permute.xlu0 0
    %6960 = vperm.xlu0 %6959, %v6919
    %v6961 = vpop.permute.xlu0 %6960
    %6962 = vset.pattern.permute.xlu0 0
    %6963 = vperm.xlu0 %6962, %v6920
    %v6964 = vpop.permute.xlu0 %6963
    %6965 = vset.pattern.permute.xlu0 0
    %6966 = vperm.xlu0 %6965, %v6921
    %v6967 = vpop.permute.xlu0 %6966
    %6968 = vset.pattern.permute.xlu0 0
    %6969 = vperm.xlu0 %6968, %v6922
    %v6970 = vpop.permute.xlu0 %6969
    %v6971 = vlaneseq
    %v6972 = vshrl.u32 %v6971, 7
    %v6973 = vsub.s32 %v5988, %v6972
    %v6974 = vrot.slane %v6925, %v6973
    %v6975 = vlaneseq
    %v6976 = vshrl.u32 %v6975, 7
    %v6977 = vsub.s32 %v5993, %v6976
    %v6978 = vrot.slane %v6928, %v6977
    %v6979 = vsel %vm5998, %v6978, %v6974
    %v6980 = vlaneseq
    %v6981 = vshrl.u32 %v6980, 7
    %v6982 = vsub.s32 %v6000, %v6981
    %v6983 = vrot.slane %v6931, %v6982
    %v6984 = vsel %vm6005, %v6983, %v6979
    %v6985 = vlaneseq
    %v6986 = vshrl.u32 %v6985, 7
    %v6987 = vsub.s32 %v6007, %v6986
    %v6988 = vrot.slane %v6934, %v6987
    %v6989 = vsel %vm6012, %v6988, %v6984
    %v6990 = vlaneseq
    %v6991 = vshrl.u32 %v6990, 7
    %v6992 = vsub.s32 %v6014, %v6991
    %v6993 = vrot.slane %v6937, %v6992
    %v6994 = vsel %vm6019, %v6993, %v6989
    %v6995 = vlaneseq
    %v6996 = vshrl.u32 %v6995, 7
    %v6997 = vsub.s32 %v6021, %v6996
    %v6998 = vrot.slane %v6940, %v6997
    %v6999 = vsel %vm6026, %v6998, %v6994
    %v7000 = vlaneseq
    %v7001 = vshrl.u32 %v7000, 7
    %v7002 = vsub.s32 %v6028, %v7001
    %v7003 = vrot.slane %v6943, %v7002
    %v7004 = vsel %vm6033, %v7003, %v6999
    %v7005 = vlaneseq
    %v7006 = vshrl.u32 %v7005, 7
    %v7007 = vsub.s32 %v6035, %v7006
    %v7008 = vrot.slane %v6946, %v7007
    %v7009 = vsel %vm6040, %v7008, %v7004
    %v7010 = vlaneseq
    %v7011 = vshrl.u32 %v7010, 7
    %v7012 = vsub.s32 %v5988, %v7011
    %v7013 = vrot.slane %v6949, %v7012
    %v7014 = vlaneseq
    %v7015 = vshrl.u32 %v7014, 7
    %v7016 = vsub.s32 %v5993, %v7015
    %v7017 = vrot.slane %v6952, %v7016
    %v7018 = vsel %vm5998, %v7017, %v7013
    %v7019 = vlaneseq
    %v7020 = vshrl.u32 %v7019, 7
    %v7021 = vsub.s32 %v6000, %v7020
    %v7022 = vrot.slane %v6955, %v7021
    %v7023 = vsel %vm6005, %v7022, %v7018
    %v7024 = vlaneseq
    %v7025 = vshrl.u32 %v7024, 7
    %v7026 = vsub.s32 %v6007, %v7025
    %v7027 = vrot.slane %v6958, %v7026
    %v7028 = vsel %vm6012, %v7027, %v7023
    %v7029 = vlaneseq
    %v7030 = vshrl.u32 %v7029, 7
    %v7031 = vsub.s32 %v6014, %v7030
    %v7032 = vrot.slane %v6961, %v7031
    %v7033 = vsel %vm6019, %v7032, %v7028
    %v7034 = vlaneseq
    %v7035 = vshrl.u32 %v7034, 7
    %v7036 = vsub.s32 %v6021, %v7035
    %v7037 = vrot.slane %v6964, %v7036
    %v7038 = vsel %vm6026, %v7037, %v7033
    %v7039 = vlaneseq
    %v7040 = vshrl.u32 %v7039, 7
    %v7041 = vsub.s32 %v6028, %v7040
    %v7042 = vrot.slane %v6967, %v7041
    %v7043 = vsel %vm6033, %v7042, %v7038
    %v7044 = vlaneseq
    %v7045 = vshrl.u32 %v7044, 7
    %v7046 = vsub.s32 %v6035, %v7045
    %v7047 = vrot.slane %v6970, %v7046
    %v7048 = vsel %vm6040, %v7047, %v7043
    %v7049 = vsel %vm6081, %v7048, %v7009
    %v7050 = vpack.c.b16 %v7049, %v7049
    %v7059 = vunpack.c.l.b16 %v6891
    %v7060 = vunpack.c.l.b16 %v6892
    %v7061 = vunpack.c.l.b16 %v6893
    %v7062 = vunpack.c.l.b16 %v6894
    %v7063 = vunpack.c.l.b16 %v6895
    %v7064 = vunpack.c.l.b16 %v6896
    %v7065 = vunpack.c.l.b16 %v6897
    %v7066 = vunpack.c.l.b16 %v6898
    %v7067 = vpack.c.b16 %v7060, %v7059
    %v7068 = vpack.c.b16 %v7062, %v7061
    %v7069 = vpack.c.b16 %v7064, %v7063
    %v7070 = vpack.c.b16 %v7066, %v7065
    %v7076 = vsel %vm3248, %v7050, 0
    %7078 = vmatprep.subr.bf16.mxu0 0
    %7079 = vmatpush1.bf16.msra.mxu0 0
    %7080 = vmatprep.subr.bf16.mxu0 0
    %7081 = vmatpush1.bf16.msra.mxu0 0
    %7082 = vmatprep.subr.bf16.mxu0 0
    %7083 = vmatpush1.bf16.msra.mxu0 0
    %7084 = vmatprep.subr.bf16.mxu0 0
    %7085 = vmatpush1.bf16.msra.mxu0 0
    %7086 = vmatprep.subr.bf16.mxu0 0
    %7087 = vmatpush1.bf16.msra.mxu0 %v7070
    %7088 = vmatprep.subr.bf16.mxu0 0
    %7089 = vmatpush1.bf16.msra.mxu0 %v7069
    %7090 = vmatprep.subr.bf16.mxu0 0
    %7091 = vmatpush1.bf16.msra.mxu0 %v7068
    %7092 = vmatprep.subr.bf16.mxu0 0
    %7093 = vmatpush1.bf16.msra.mxu0 %v7067
    %7094 = vmatprep.subr.bf16.mxu0 0
    %7095 = vmatpush2.bf16.msra.mxu0 0
    %7096 = vmatprep.subr.bf16.mxu0 0
    %7097 = vmatpush2.bf16.msra.mxu0 0
    %7098 = vmatprep.subr.bf16.mxu0 0
    %7099 = vmatpush2.bf16.msra.mxu0 0
    %7100 = vmatprep.subr.bf16.mxu0 0
    %7101 = vmatpush2.bf16.msra.mxu0 0
    %7102 = vmatprep.subr.bf16.mxu0 0
    %7103 = vmatpush2.bf16.msra.mxu0 0
    %7104 = vmatprep.subr.bf16.mxu0 0
    %7105 = vmatpush2.bf16.msra.mxu0 0
    %7106 = vmatprep.subr.bf16.mxu0 0
    %7107 = vmatpush2.bf16.msra.mxu0 0
    %7108 = vmatprep.subr.bf16.mxu0 0
    %7109 = vmatpush2.bf16.msra.mxu0 0
    %7110 = vmatprep.mubr.bf16.mxu0 0
    %7111 = vmatmul.mubr.bf16.gmra.mxu0 %v7076
    %v7112 = vpop.f32.mrf.mxu0
    %v7113 = vadd.f32 0.0, %v7112
    %v7114 = vpop.f32.mrf.mxu0
    %v7115 = vpop.f32.mrf.mxu0
    %v7116 = vpop.f32.mrf.mxu0
    %7117 = vdwg.mxu0
    %v7126 = vunpack.c.l.b16 %v6866
    %v7127 = vunpack.c.h.b16 %v6866
    %v7128 = vunpack.c.l.b16 %v6867
    %v7129 = vunpack.c.h.b16 %v6867
    %v7130 = vunpack.c.l.b16 %v6868
    %v7131 = vunpack.c.h.b16 %v6868
    %v7132 = vunpack.c.l.b16 %v6869
    %v7133 = vunpack.c.h.b16 %v6869
    %v7134 = vunpack.c.l.b16 %v6870
    %v7135 = vunpack.c.h.b16 %v6870
    %v7136 = vunpack.c.l.b16 %v6871
    %v7137 = vunpack.c.h.b16 %v6871
    %v7138 = vunpack.c.l.b16 %v6872
    %v7139 = vunpack.c.h.b16 %v6872
    %v7140 = vunpack.c.l.b16 %v6873
    %v7141 = vunpack.c.h.b16 %v6873
    %7142 = vset.pattern.permute.xlu0 0
    %7143 = vperm.xlu0 %7142, %v7126
    %v7144 = vpop.permute.xlu0 %7143
    %7145 = vset.pattern.permute.xlu0 0
    %7146 = vperm.xlu0 %7145, %v7127
    %v7147 = vpop.permute.xlu0 %7146
    %7148 = vset.pattern.permute.xlu0 0
    %7149 = vperm.xlu0 %7148, %v7128
    %v7150 = vpop.permute.xlu0 %7149
    %7151 = vset.pattern.permute.xlu0 0
    %7152 = vperm.xlu0 %7151, %v7129
    %v7153 = vpop.permute.xlu0 %7152
    %7154 = vset.pattern.permute.xlu0 0
    %7155 = vperm.xlu0 %7154, %v7130
    %v7156 = vpop.permute.xlu0 %7155
    %7157 = vset.pattern.permute.xlu0 0
    %7158 = vperm.xlu0 %7157, %v7131
    %v7159 = vpop.permute.xlu0 %7158
    %7160 = vset.pattern.permute.xlu0 0
    %7161 = vperm.xlu0 %7160, %v7132
    %v7162 = vpop.permute.xlu0 %7161
    %7163 = vset.pattern.permute.xlu0 0
    %7164 = vperm.xlu0 %7163, %v7133
    %v7165 = vpop.permute.xlu0 %7164
    %7166 = vset.pattern.permute.xlu0 0
    %7167 = vperm.xlu0 %7166, %v7134
    %v7168 = vpop.permute.xlu0 %7167
    %7169 = vset.pattern.permute.xlu0 0
    %7170 = vperm.xlu0 %7169, %v7135
    %v7171 = vpop.permute.xlu0 %7170
    %7172 = vset.pattern.permute.xlu0 0
    %7173 = vperm.xlu0 %7172, %v7136
    %v7174 = vpop.permute.xlu0 %7173
    %7175 = vset.pattern.permute.xlu0 0
    %7176 = vperm.xlu0 %7175, %v7137
    %v7177 = vpop.permute.xlu0 %7176
    %7178 = vset.pattern.permute.xlu0 0
    %7179 = vperm.xlu0 %7178, %v7138
    %v7180 = vpop.permute.xlu0 %7179
    %7181 = vset.pattern.permute.xlu0 0
    %7182 = vperm.xlu0 %7181, %v7139
    %v7183 = vpop.permute.xlu0 %7182
    %7184 = vset.pattern.permute.xlu0 0
    %7185 = vperm.xlu0 %7184, %v7140
    %v7186 = vpop.permute.xlu0 %7185
    %7187 = vset.pattern.permute.xlu0 0
    %7188 = vperm.xlu0 %7187, %v7141
    %v7189 = vpop.permute.xlu0 %7188
    %v7190 = vlaneseq
    %v7191 = vshrl.u32 %v7190, 7
    %v7192 = vsub.s32 %v5988, %v7191
    %v7193 = vrot.slane %v7144, %v7192
    %v7194 = vlaneseq
    %v7195 = vshrl.u32 %v7194, 7
    %v7196 = vsub.s32 %v5993, %v7195
    %v7197 = vrot.slane %v7147, %v7196
    %v7198 = vsel %vm5998, %v7197, %v7193
    %v7199 = vlaneseq
    %v7200 = vshrl.u32 %v7199, 7
    %v7201 = vsub.s32 %v6000, %v7200
    %v7202 = vrot.slane %v7150, %v7201
    %v7203 = vsel %vm6005, %v7202, %v7198
    %v7204 = vlaneseq
    %v7205 = vshrl.u32 %v7204, 7
    %v7206 = vsub.s32 %v6007, %v7205
    %v7207 = vrot.slane %v7153, %v7206
    %v7208 = vsel %vm6012, %v7207, %v7203
    %v7209 = vlaneseq
    %v7210 = vshrl.u32 %v7209, 7
    %v7211 = vsub.s32 %v6014, %v7210
    %v7212 = vrot.slane %v7156, %v7211
    %v7213 = vsel %vm6019, %v7212, %v7208
    %v7214 = vlaneseq
    %v7215 = vshrl.u32 %v7214, 7
    %v7216 = vsub.s32 %v6021, %v7215
    %v7217 = vrot.slane %v7159, %v7216
    %v7218 = vsel %vm6026, %v7217, %v7213
    %v7219 = vlaneseq
    %v7220 = vshrl.u32 %v7219, 7
    %v7221 = vsub.s32 %v6028, %v7220
    %v7222 = vrot.slane %v7162, %v7221
    %v7223 = vsel %vm6033, %v7222, %v7218
    %v7224 = vlaneseq
    %v7225 = vshrl.u32 %v7224, 7
    %v7226 = vsub.s32 %v6035, %v7225
    %v7227 = vrot.slane %v7165, %v7226
    %v7228 = vsel %vm6040, %v7227, %v7223
    %v7229 = vlaneseq
    %v7230 = vshrl.u32 %v7229, 7
    %v7231 = vsub.s32 %v5988, %v7230
    %v7232 = vrot.slane %v7168, %v7231
    %v7233 = vlaneseq
    %v7234 = vshrl.u32 %v7233, 7
    %v7235 = vsub.s32 %v5993, %v7234
    %v7236 = vrot.slane %v7171, %v7235
    %v7237 = vsel %vm5998, %v7236, %v7232
    %v7238 = vlaneseq
    %v7239 = vshrl.u32 %v7238, 7
    %v7240 = vsub.s32 %v6000, %v7239
    %v7241 = vrot.slane %v7174, %v7240
    %v7242 = vsel %vm6005, %v7241, %v7237
    %v7243 = vlaneseq
    %v7244 = vshrl.u32 %v7243, 7
    %v7245 = vsub.s32 %v6007, %v7244
    %v7246 = vrot.slane %v7177, %v7245
    %v7247 = vsel %vm6012, %v7246, %v7242
    %v7248 = vlaneseq
    %v7249 = vshrl.u32 %v7248, 7
    %v7250 = vsub.s32 %v6014, %v7249
    %v7251 = vrot.slane %v7180, %v7250
    %v7252 = vsel %vm6019, %v7251, %v7247
    %v7253 = vlaneseq
    %v7254 = vshrl.u32 %v7253, 7
    %v7255 = vsub.s32 %v6021, %v7254
    %v7256 = vrot.slane %v7183, %v7255
    %v7257 = vsel %vm6026, %v7256, %v7252
    %v7258 = vlaneseq
    %v7259 = vshrl.u32 %v7258, 7
    %v7260 = vsub.s32 %v6028, %v7259
    %v7261 = vrot.slane %v7186, %v7260
    %v7262 = vsel %vm6033, %v7261, %v7257
    %v7263 = vlaneseq
    %v7264 = vshrl.u32 %v7263, 7
    %v7265 = vsub.s32 %v6035, %v7264
    %v7266 = vrot.slane %v7189, %v7265
    %v7267 = vsel %vm6040, %v7266, %v7262
    %v7268 = vsel %vm6081, %v7267, %v7228
    %v7269 = vpack.c.b16 %v7268, %v7268
    %v7278 = vunpack.c.l.b16 %v6874
    %v7279 = vunpack.c.l.b16 %v6875
    %v7280 = vunpack.c.l.b16 %v6876
    %v7281 = vunpack.c.l.b16 %v6877
    %v7282 = vunpack.c.l.b16 %v6878
    %v7283 = vunpack.c.l.b16 %v6879
    %v7284 = vunpack.c.l.b16 %v6880
    %v7285 = vunpack.c.l.b16 %v6881
    %v7286 = vpack.c.b16 %v7279, %v7278
    %v7287 = vpack.c.b16 %v7281, %v7280
    %v7288 = vpack.c.b16 %v7283, %v7282
    %v7289 = vpack.c.b16 %v7285, %v7284
    %v7295 = vsel %vm3248, %v7269, 0
    %7297 = vmatprep.subr.bf16.mxu0 0
    %7298 = vmatpush1.bf16.msra.mxu0 0
    %7299 = vmatprep.subr.bf16.mxu0 0
    %7300 = vmatpush1.bf16.msra.mxu0 0
    %7301 = vmatprep.subr.bf16.mxu0 0
    %7302 = vmatpush1.bf16.msra.mxu0 0
    %7303 = vmatprep.subr.bf16.mxu0 0
    %7304 = vmatpush1.bf16.msra.mxu0 0
    %7305 = vmatprep.subr.bf16.mxu0 0
    %7306 = vmatpush1.bf16.msra.mxu0 %v7289
    %7307 = vmatprep.subr.bf16.mxu0 0
    %7308 = vmatpush1.bf16.msra.mxu0 %v7288
    %7309 = vmatprep.subr.bf16.mxu0 0
    %7310 = vmatpush1.bf16.msra.mxu0 %v7287
    %7311 = vmatprep.subr.bf16.mxu0 0
    %7312 = vmatpush1.bf16.msra.mxu0 %v7286
    %7313 = vmatprep.subr.bf16.mxu0 0
    %7314 = vmatpush2.bf16.msra.mxu0 0
    %7315 = vmatprep.subr.bf16.mxu0 0
    %7316 = vmatpush2.bf16.msra.mxu0 0
    %7317 = vmatprep.subr.bf16.mxu0 0
    %7318 = vmatpush2.bf16.msra.mxu0 0
    %7319 = vmatprep.subr.bf16.mxu0 0
    %7320 = vmatpush2.bf16.msra.mxu0 0
    %7321 = vmatprep.subr.bf16.mxu0 0
    %7322 = vmatpush2.bf16.msra.mxu0 0
    %7323 = vmatprep.subr.bf16.mxu0 0
    %7324 = vmatpush2.bf16.msra.mxu0 0
    %7325 = vmatprep.subr.bf16.mxu0 0
    %7326 = vmatpush2.bf16.msra.mxu0 0
    %7327 = vmatprep.subr.bf16.mxu0 0
    %7328 = vmatpush2.bf16.msra.mxu0 0
    %7329 = vmatprep.mubr.bf16.mxu0 0
    %7330 = vmatmul.mubr.bf16.gmra.mxu0 %v7295
    %v7331 = vpop.f32.mrf.mxu0
    %v7332 = vadd.f32 %v7113, %v7331
    %v7333 = vpop.f32.mrf.mxu0
    %v7334 = vpop.f32.mrf.mxu0
    %v7335 = vpop.f32.mrf.mxu0
    %7336 = vdwg.mxu0
    %v7337 = vld [vmem:[%s12] sm:$0x1]
    %v7339 = vlaneseq
    %v7340 = vshrl.u32 %v7339, 7
    %v7341 = vsub.s32 0, %v7340
    %v7342 = vrot.slane %v7337, %v7341
    %v7344 = vadd.f32 %v7332, %v7342
    %v7345 = vmax.f32 %v7344, 0.0
    %v7346 = vld [vmem:[%s13] sm:$0x1]
    %v7348 = vlaneseq
    %v7349 = vshrl.u32 %v7348, 7
    %v7350 = vsub.s32 0, %v7349
    %v7351 = vrot.slane %v7346, %v7350
    %v7353 = vmul.f32 %v7345, %v7351
    %v7354 = vsel %vm6852, %v7353, 0.0
    %7355 = vadd.xlane.f32.xlu0 %v7354
    %v7356 = vpop.xlane.xlu0 %7355
    %v7357 = vld [vmem:[#allocation4] sm:$0x1]
    %v7359 = vlaneseq
    %v7360 = vshrl.u32 %v7359, 7
    %v7361 = vsub.s32 0, %v7360
    %v7362 = vrot.slane %v7357, %v7361
    %v7364 = vadd.f32 %v7356, %v7362
    %v7365 = vtanh.pop %v7364
    %vm7366 = vcmask 1024
    %7367 = vst.msk [vmem:[%s16] sm:$0x3] %vm7366, %v7365
    // Predicated region
    $region62: #{net_forward.1} parent=1 // pred_check
      _
    $region63: #{net_forward.1} parent=1 // pred_check_branch
      %7369 = sbr.rel (0) target = $region65
    $region64: #{net_forward.1} parent=1 // pred_region
      %s7371 = ssub.s32 32, 32
      %7372 = vsyncadd [#allocation6], %s7371
      %s7374 = sshll.u32 [#allocation5], 4
      %s7375 = int_to_ptr.vmem [resolvable:$true] %s7374
      %7377 = dma.vmem_to_hbm [thread:$0]  %s7375, 32, %s15, [#allocation6]
    $region65: #{net_forward.1} parent=1 // pred_fallthru
      _
    // Predicated region
    $region66: #{net_forward.1} parent=1 // pred_check
      _
    $region67: #{net_forward.1} parent=1 // pred_check_branch
      %7379 = sbr.rel (0) target = $region69
    $region68: #{net_forward.1} parent=1 // pred_region
      _
    $region69: #{net_forward.1} parent=1 // pred_fallthru
      _
    // Predicated region
    $region70: #{net_forward.1} parent=1 // pred_check
      _
    $region71: #{net_forward.1} parent=1 // pred_check_branch
      %7381 = sbr.rel (0) target = $region73
    $region72: #{net_forward.1} parent=1 // pred_region
      %7382 = dma.done [#allocation6], 32
    $region73: #{net_forward.1} parent=1 // pred_fallthru
      _
    // Predicated region
    $region74: #{net_forward.1} parent=1 // pred_check
      _
    $region75: #{net_forward.1} parent=1 // pred_check_branch
      %7384 = sbr.rel (0) target = $region77
    $region76: #{net_forward.1} parent=1 // pred_region
      _
    $region77: #{net_forward.1} parent=1 // pred_fallthru
      _
    %7385 = vsyncpa [#allocation6], 1

</llo_original>
